<compile_context>
chip_gen: v5e
topology: v5e:2x2
jax: 0.10.0
libtpu: 0.0.40
codegen_flags: <defaults>
</compile_context>

<pallas_src>
import math

import jax
import jax.numpy as jnp
from jax.experimental import pallas as pl
from jax.experimental.pallas import tpu as pltpu

LANE = 128  # lane width; padded feature width for layers 3/4 and the output.


# -----------------------------------------------------------------------------
# Kernel: full MLP forward for one batch tile.
# -----------------------------------------------------------------------------
def discriminator_kernel(
    x_ref,                      # (TM, 784)   bf16
    w1_ref, b1_ref,             # (784, 512) bf16, (1, 512) bf16
    w2_ref, b2_ref,             # (512, 256) bf16, (1, 256) bf16
    w3_ref, b3_ref,             # (256, 128) bf16 (cols 64.. zero), (1, 128) bf16
    w4_ref, b4_ref,             # (128, 128) bf16 (only [:64,:1] real), (1, 128) f32
    o_ref,                      # (TM//128, 128) f32 -- lane-dense compact logits
):
    x = x_ref[...]

    # bf16 MXU matmuls with f32 accumulation; bias add + ReLU in bf16 on the
    # VPU, so the activation handed to the next matmul is already bf16.
    a1 = jnp.dot(x, w1_ref[...], preferred_element_type=jnp.float32)
    h1 = jnp.maximum(a1.astype(jnp.bfloat16) + b1_ref[...], 0)

    a2 = jnp.dot(h1, w2_ref[...], preferred_element_type=jnp.float32)
    h2 = jnp.maximum(a2.astype(jnp.bfloat16) + b2_ref[...], 0)

    a3 = jnp.dot(h2, w3_ref[...], preferred_element_type=jnp.float32)
    h3 = jnp.maximum(a3.astype(jnp.bfloat16) + b3_ref[...], 0)   # padded cols stay 0

    # Final layer stays in f32: logit lives in column 0, the other 127 columns
    # are zero-padding (zero w4 columns).
    z4 = jnp.dot(h3, w4_ref[...], preferred_element_type=jnp.float32) + b4_ref[...]

    # Compact the logit column to a lane-dense (TM//128, 128) layout: for each
    # 128-row chunk, a 128x128 XLU transpose turns column 0 into row 0.
    tm = z4.shape[0]
    nblk = tm // LANE
    rows = [z4[r * LANE:(r + 1) * LANE, :].T[0:1, :] for r in range(nblk)]
    z = rows[0] if nblk == 1 else jnp.concatenate(rows, axis=0)   # (nblk, 128) f32

    # Sigmoid on the compact layout: exp on the EUP, approx-reciprocal divide.
    o_ref[...] = pl.reciprocal(1.0 + jnp.exp(-z), approx=True)


# -----------------------------------------------------------------------------
# Wrapper
# -----------------------------------------------------------------------------
def _round_up(n, m):
    return ((n + m - 1) // m) * m


def _tensorcores_per_chip():
    # v7x has 2 TensorCores per chip; v5e/v6e have 1. Heuristic, fail-safe to 1.
    try:
        kind = jax.devices()[0].device_kind.lower()
    except Exception:
        return 1
    return 2 if "v7" in kind else 1


def discriminator_forward(x, params, *, tile_m=1024):
    """x: any shape whose trailing dims flatten to 784 (e.g. (B, 1, 28, 28))."""
    # Single wrapper pass over x: reshape + bf16 cast; the pad is done in bf16.
    x2d = x.reshape(-1, 784).astype(jnp.bfloat16)
    B = x2d.shape[0]

    # Batch tile: multiple of 256 (packs the MXU on all chips), clamped to the
    # padded batch so small batches don't over-compute.
    B_ceil = _round_up(B, 256)
    tm = max(256, min(_round_up(tile_m, 256), B_ceil))
    # v7x (2 TCs/chip): ensure the grid has >= 2 steps when the batch allows it,
    # so the "parallel" batch axis actually shards across both cores.
    if _tensorcores_per_chip() >= 2 and B_ceil >= 512:
        tm = min(tm, max(256, _round_up(B_ceil // 2, 256)))
    B_pad = _round_up(B, tm)
    steps = B_pad // tm

    if B_pad != B:
        x2d = jnp.pad(x2d, ((0, B_pad - B), (0, 0)))

    (w1, b1), (w2, b2), (w3, b3), (w4, b4) = params

    # Lane-dense layers 3/4: zero-pad w3 (256,64)->(256,128), b3 (1,64)->(1,128)
    # and w4 (64,1)->(128,128). ReLU of the zero-padded columns stays zero and
    # the zero rows of w4 ignore them, so results are unchanged.
    w3p = jnp.zeros((256, LANE), jnp.float32).at[:, :64].set(w3)
    b3p = jnp.zeros((1, LANE), jnp.float32).at[:, :64].set(b3)
    w4p = jnp.zeros((LANE, LANE), jnp.float32).at[:64, :1].set(w4)
    b4p = jnp.zeros((1, LANE), jnp.float32).at[:, :1].set(b4)

    # bf16 matmul operands and hidden-layer biases; final bias stays f32.
    w1b, w2b, w3b, w4b = (w.astype(jnp.bfloat16) for w in (w1, w2, w3p, w4p))
    b1b, b2b, b3b = (b.astype(jnp.bfloat16) for b in (b1, b2, b3p))
    b4f = b4p.astype(jnp.float32)

    def bcast(arr):
        # Full-array block, identical for every grid step (stays VMEM-resident).
        return pl.BlockSpec(arr.shape, lambda i: (0, 0))

    out = pl.pallas_call(
        discriminator_kernel,
        out_shape=jax.ShapeDtypeStruct((steps, tm // LANE, LANE), jnp.float32),
        grid_spec=pltpu.PrefetchScalarGridSpec(
            num_scalar_prefetch=0,
            grid=(steps,),
            in_specs=[
                pl.BlockSpec((tm, 784), lambda i: (i, 0)),    # x batch tile
                bcast(w1b), bcast(b1b),
                bcast(w2b), bcast(b2b),
                bcast(w3b), bcast(b3b),
                bcast(w4b), bcast(b4f),
            ],
            # Compact lane-dense output: one 128-wide row per 128 batch rows.
            out_specs=pl.BlockSpec((None, tm // LANE, LANE), lambda i: (i, 0, 0)),
        ),
        compiler_params=pltpu.CompilerParams(
            dimension_semantics=("parallel",),     # batch axis shards across TCs
            vmem_limit_bytes=32 * 1024 * 1024,     # fits tm=1024 on v5e/v6e/v7x
        ),
    )(x2d, w1b, b1b, w2b, b2b, w3b, b3b, w4b, b4f)

    # out[step, r, c] holds the logit of batch row step*tm + r*128 + c.
    return out.reshape(B_pad, 1)[:B]


# -----------------------------------------------------------------------------
# Deterministic parameter initialization (mirrors the PyTorch init semantics):
#   weight ~ N(0, sqrt(1/fan_in))   (from _initialize_submodules)
#   bias   ~ U(-1/sqrt(fan_in), 1/sqrt(fan_in))   (nn.Linear default)
# Stored as (in, out) so the kernel computes x @ W + b (== x @ W_torch.T + b).
# -----------------------------------------------------------------------------
def init_params(key):
    dims = [(784, 512), (512, 256), (256, 64), (64, 1)]
    params = []
    for fan_in, fan_out in dims:
        key, kw, kb = jax.random.split(key, 3)
        w = jax.random.normal(kw, (fan_in, fan_out), jnp.float32) * math.sqrt(1.0 / fan_in)
        bound = 1.0 / math.sqrt(fan_in)
        b = jax.random.uniform(kb, (1, fan_out), jnp.float32, -bound, bound)
        params.append((w, b))
    return params


# -----------------------------------------------------------------------------
# Pure-JAX f32 reference for the correctness check.
# -----------------------------------------------------------------------------
def discriminator_ref(x, params):
    h = x.reshape(-1, 784).astype(jnp.float32)
    (w1, b1), (w2, b2), (w3, b3), (w4, b4) = params
    h = jax.nn.relu(h @ w1 + b1)
    h = jax.nn.relu(h @ w2 + b2)
    h = jax.nn.relu(h @ w3 + b3)
    return jax.nn.sigmoid(h @ w4 + b4)


if __name__ == "__main__":
    key = jax.random.PRNGKey(0)
    key, kx1, kx2 = jax.random.split(key, 3)
    params = init_params(key)

    fwd = jax.jit(discriminator_forward, static_argnames=("tile_m",))

    # Case 1: small MNIST-like NCHW batch, single grid step.
    B1 = 8
    x1 = jax.random.normal(kx1, (B1, 1, 28, 28), jnp.float32)
    y1 = jax.block_until_ready(fwd(x1, params))
    ref1 = discriminator_ref(x1, params)
    assert y1.shape == (B1, 1)
    assert jnp.allclose(y1, ref1, atol=3e-2, rtol=3e-2), "mismatch vs reference (B=8)"

    # Case 2: non-multiple batch with a small tile to exercise the multi-step
    # (tiled) grid path and the ragged-batch padding.
    B2 = 300
    x2 = jax.random.normal(kx2, (B2, 784), jnp.float32)
    y2 = jax.block_until_ready(fwd(x2, params, tile_m=256))
    ref2 = discriminator_ref(x2, params)
    assert y2.shape == (B2, 1)
    assert jnp.allclose(y2, ref2, atol=3e-2, rtol=3e-2), "mismatch vs reference (B=300)"

    print("KERNEL_OK")
</pallas_src>

<mosaic_0001>
module attributes {stable_mosaic.version = 11 : i64} {
  func.func @discriminator_kernel(%arg0: i32, %arg1: memref<256x784xbf16, #tpu.memory_space<vmem>>, %arg2: memref<784x512xbf16, #tpu.memory_space<vmem>>, %arg3: memref<1x512xbf16, #tpu.memory_space<vmem>>, %arg4: memref<512x256xbf16, #tpu.memory_space<vmem>>, %arg5: memref<1x256xbf16, #tpu.memory_space<vmem>>, %arg6: memref<256x128xbf16, #tpu.memory_space<vmem>>, %arg7: memref<1x128xbf16, #tpu.memory_space<vmem>>, %arg8: memref<128x128xbf16, #tpu.memory_space<vmem>>, %arg9: memref<1x128xf32, #tpu.memory_space<vmem>>, %arg10: memref<1x2x128xf32, #tpu.memory_space<vmem>>) attributes {dimension_semantics = [#tpu.dimension_semantics<parallel>], iteration_bounds = array<i64: 1>, scalar_prefetch = 0 : i64, scratch_operands = 0 : i64, tpu.core_type = #tpu.core_type<tc>, window_params = [{transform_indices = @transform_0, window_bounds = array<i64: 256, 784>}, {pipeline_mode = #tpu.pipeline_mode<synchronous>, transform_indices = @transform_1, window_bounds = array<i64: 784, 512>}, {pipeline_mode = #tpu.pipeline_mode<synchronous>, transform_indices = @transform_2, window_bounds = array<i64: 1, 512>}, {pipeline_mode = #tpu.pipeline_mode<synchronous>, transform_indices = @transform_3, window_bounds = array<i64: 512, 256>}, {pipeline_mode = #tpu.pipeline_mode<synchronous>, transform_indices = @transform_4, window_bounds = array<i64: 1, 256>}, {pipeline_mode = #tpu.pipeline_mode<synchronous>, transform_indices = @transform_5, window_bounds = array<i64: 256, 128>}, {pipeline_mode = #tpu.pipeline_mode<synchronous>, transform_indices = @transform_6, window_bounds = array<i64: 1, 128>}, {pipeline_mode = #tpu.pipeline_mode<synchronous>, transform_indices = @transform_7, window_bounds = array<i64: 128, 128>}, {pipeline_mode = #tpu.pipeline_mode<synchronous>, transform_indices = @transform_8, window_bounds = array<i64: 1, 128>}, {transform_indices = @transform_9, window_bounds = array<i64: 1, 2, 128>}]} {
    %c0 = arith.constant 0 : index
    %c0_0 = arith.constant 0 : index
    %0 = vector.load %arg1[%c0, %c0_0] : memref<256x784xbf16, #tpu.memory_space<vmem>>, vector<256x784xbf16>
    %c0_1 = arith.constant 0 : index
    %c0_2 = arith.constant 0 : index
    %1 = vector.load %arg2[%c0_1, %c0_2] : memref<784x512xbf16, #tpu.memory_space<vmem>>, vector<784x512xbf16>
    %cst = arith.constant dense<0.000000e+00> : vector<256x512xf32>
    %2 = tpu.matmul %0, %1, %cst {dimension_numbers = #tpu.dot_dimension_numbers<[1], [0], [0], [1], [0, 0, 1, 1], [], []>} : vector<256x784xbf16>, vector<784x512xbf16>, vector<256x512xf32> -> vector<256x512xf32>
    %3 = arith.truncf %2 : vector<256x512xf32> to vector<256x512xbf16>
    %c0_3 = arith.constant 0 : index
    %c0_4 = arith.constant 0 : index
    %4 = vector.load %arg3[%c0_3, %c0_4] : memref<1x512xbf16, #tpu.memory_space<vmem>>, vector<1x512xbf16>
    %5 = vector.broadcast %4 : vector<1x512xbf16> to vector<256x512xbf16>
    %6 = arith.addf %3, %5 : vector<256x512xbf16>
    %cst_5 = arith.constant 0.000000e+00 : bf16
    %7 = vector.broadcast %cst_5 : bf16 to vector<256x512xbf16>
    %8 = arith.maximumf %6, %7 : vector<256x512xbf16>
    %c0_6 = arith.constant 0 : index
    %c0_7 = arith.constant 0 : index
    %9 = vector.load %arg4[%c0_6, %c0_7] : memref<512x256xbf16, #tpu.memory_space<vmem>>, vector<512x256xbf16>
    %cst_8 = arith.constant dense<0.000000e+00> : vector<256x256xf32>
    %10 = tpu.matmul %8, %9, %cst_8 {dimension_numbers = #tpu.dot_dimension_numbers<[1], [0], [0], [1], [0, 0, 1, 1], [], []>} : vector<256x512xbf16>, vector<512x256xbf16>, vector<256x256xf32> -> vector<256x256xf32>
    %11 = arith.truncf %10 : vector<256x256xf32> to vector<256x256xbf16>
    %c0_9 = arith.constant 0 : index
    %c0_10 = arith.constant 0 : index
    %12 = vector.load %arg5[%c0_9, %c0_10] : memref<1x256xbf16, #tpu.memory_space<vmem>>, vector<1x256xbf16>
    %13 = vector.broadcast %12 : vector<1x256xbf16> to vector<256x256xbf16>
    %14 = arith.addf %11, %13 : vector<256x256xbf16>
    %cst_11 = arith.constant 0.000000e+00 : bf16
    %15 = vector.broadcast %cst_11 : bf16 to vector<256x256xbf16>
    %16 = arith.maximumf %14, %15 : vector<256x256xbf16>
    %c0_12 = arith.constant 0 : index
    %c0_13 = arith.constant 0 : index
    %17 = vector.load %arg6[%c0_12, %c0_13] : memref<256x128xbf16, #tpu.memory_space<vmem>>, vector<256x128xbf16>
    %cst_14 = arith.constant dense<0.000000e+00> : vector<256x128xf32>
    %18 = tpu.matmul %16, %17, %cst_14 {dimension_numbers = #tpu.dot_dimension_numbers<[1], [0], [0], [1], [0, 0, 1, 1], [], []>} : vector<256x256xbf16>, vector<256x128xbf16>, vector<256x128xf32> -> vector<256x128xf32>
    %19 = arith.truncf %18 : vector<256x128xf32> to vector<256x128xbf16>
    %c0_15 = arith.constant 0 : index
    %c0_16 = arith.constant 0 : index
    %20 = vector.load %arg7[%c0_15, %c0_16] : memref<1x128xbf16, #tpu.memory_space<vmem>>, vector<1x128xbf16>
    %21 = vector.broadcast %20 : vector<1x128xbf16> to vector<256x128xbf16>
    %22 = arith.addf %19, %21 : vector<256x128xbf16>
    %cst_17 = arith.constant 0.000000e+00 : bf16
    %23 = vector.broadcast %cst_17 : bf16 to vector<256x128xbf16>
    %24 = arith.maximumf %22, %23 : vector<256x128xbf16>
    %c0_18 = arith.constant 0 : index
    %c0_19 = arith.constant 0 : index
    %25 = vector.load %arg8[%c0_18, %c0_19] : memref<128x128xbf16, #tpu.memory_space<vmem>>, vector<128x128xbf16>
    %cst_20 = arith.constant dense<0.000000e+00> : vector<256x128xf32>
    %26 = tpu.matmul %24, %25, %cst_20 {dimension_numbers = #tpu.dot_dimension_numbers<[1], [0], [0], [1], [0, 0, 1, 1], [], []>} : vector<256x128xbf16>, vector<128x128xbf16>, vector<256x128xf32> -> vector<256x128xf32>
    %c0_21 = arith.constant 0 : index
    %c0_22 = arith.constant 0 : index
    %27 = vector.load %arg9[%c0_21, %c0_22] : memref<1x128xf32, #tpu.memory_space<vmem>>, vector<1x128xf32>
    %28 = vector.broadcast %27 : vector<1x128xf32> to vector<256x128xf32>
    %29 = arith.addf %26, %28 : vector<256x128xf32>
    %30 = vector.extract_strided_slice %29 {offsets = [0, 0], sizes = [128, 128], strides = [1, 1]} : vector<256x128xf32> to vector<128x128xf32>
    %31 = tpu.transpose %30, [1, 0] : vector<128x128xf32> -> vector<128x128xf32>
    %32 = vector.extract_strided_slice %31 {offsets = [0, 0], sizes = [1, 128], strides = [1, 1]} : vector<128x128xf32> to vector<1x128xf32>
    %33 = vector.extract_strided_slice %29 {offsets = [128, 0], sizes = [128, 128], strides = [1, 1]} : vector<256x128xf32> to vector<128x128xf32>
    %34 = tpu.transpose %33, [1, 0] : vector<128x128xf32> -> vector<128x128xf32>
    %35 = vector.extract_strided_slice %34 {offsets = [0, 0], sizes = [1, 128], strides = [1, 1]} : vector<128x128xf32> to vector<1x128xf32>
    %36 = tpu.concatenate %32, %35 in 0 : vector<1x128xf32>, vector<1x128xf32> -> vector<2x128xf32>
    %cst_23 = arith.constant 0.000000e+00 : f32
    %37 = vector.broadcast %cst_23 : f32 to vector<2x128xf32>
    %38 = arith.subf %37, %36 : vector<2x128xf32>
    %39 = math.exp %38 : vector<2x128xf32>
    %cst_24 = arith.constant 1.000000e+00 : f32
    %40 = vector.broadcast %cst_24 : f32 to vector<2x128xf32>
    %41 = arith.addf %40, %39 : vector<2x128xf32>
    %42 = tpu.reciprocal %41 {approx = true} : vector<2x128xf32> -> vector<2x128xf32>
    %c0_25 = arith.constant 0 : index
    %c0_26 = arith.constant 0 : index
    %c0_27 = arith.constant 0 : index
    %43 = vector.load %arg10[%c0_25, %c0_26, %c0_27] : memref<1x2x128xf32, #tpu.memory_space<vmem>>, vector<1x2x128xf32>
    %44 = vector.shape_cast %43 : vector<1x2x128xf32> to vector<2x128xf32>
    %45 = vector.shape_cast %42 : vector<2x128xf32> to vector<1x2x128xf32>
    tpu.vector_store %arg10[%c0_25, %c0_26, %c0_27], %45 {strides = array<i32>} : memref<1x2x128xf32, #tpu.memory_space<vmem>>, vector<1x2x128xf32>,
    return
  }
  func.func @transform_0(%arg0: i32) -> (i32, i32) {
    %c0_i32 = arith.constant 0 : i32
    %c0_i32_0 = arith.constant 0 : i32
    return %arg0, %c0_i32 : i32, i32
  }
  func.func @transform_1(%arg0: i32) -> (i32, i32) {
    %c0_i32 = arith.constant 0 : i32
    %c0_i32_0 = arith.constant 0 : i32
    %c0_i32_1 = arith.constant 0 : i32
    return %c0_i32, %c0_i32_0 : i32, i32
  }
  func.func @transform_2(%arg0: i32) -> (i32, i32) {
    %c0_i32 = arith.constant 0 : i32
    %c0_i32_0 = arith.constant 0 : i32
    %c0_i32_1 = arith.constant 0 : i32
    return %c0_i32, %c0_i32_0 : i32, i32
  }
  func.func @transform_3(%arg0: i32) -> (i32, i32) {
    %c0_i32 = arith.constant 0 : i32
    %c0_i32_0 = arith.constant 0 : i32
    %c0_i32_1 = arith.constant 0 : i32
    return %c0_i32, %c0_i32_0 : i32, i32
  }
  func.func @transform_4(%arg0: i32) -> (i32, i32) {
    %c0_i32 = arith.constant 0 : i32
    %c0_i32_0 = arith.constant 0 : i32
    %c0_i32_1 = arith.constant 0 : i32
    return %c0_i32, %c0_i32_0 : i32, i32
  }
  func.func @transform_5(%arg0: i32) -> (i32, i32) {
    %c0_i32 = arith.constant 0 : i32
    %c0_i32_0 = arith.constant 0 : i32
    %c0_i32_1 = arith.constant 0 : i32
    return %c0_i32, %c0_i32_0 : i32, i32
  }
  func.func @transform_6(%arg0: i32) -> (i32, i32) {
    %c0_i32 = arith.constant 0 : i32
    %c0_i32_0 = arith.constant 0 : i32
    %c0_i32_1 = arith.constant 0 : i32
    return %c0_i32, %c0_i32_0 : i32, i32
  }
  func.func @transform_7(%arg0: i32) -> (i32, i32) {
    %c0_i32 = arith.constant 0 : i32
    %c0_i32_0 = arith.constant 0 : i32
    %c0_i32_1 = arith.constant 0 : i32
    return %c0_i32, %c0_i32_0 : i32, i32
  }
  func.func @transform_8(%arg0: i32) -> (i32, i32) {
    %c0_i32 = arith.constant 0 : i32
    %c0_i32_0 = arith.constant 0 : i32
    %c0_i32_1 = arith.constant 0 : i32
    return %c0_i32, %c0_i32_0 : i32, i32
  }
  func.func @transform_9(%arg0: i32) -> (i32, i32, i32) {
    %c0_i32 = arith.constant 0 : i32
    %c0_i32_0 = arith.constant 0 : i32
    %c0_i32_1 = arith.constant 0 : i32
    return %arg0, %c0_i32, %c0_i32_0 : i32, i32, i32
  }
}

</mosaic_0001>

<llo_original>
// kernel: discriminator_forward.1
$region0: #{discriminator_forward.1}
  #allocation0 [shape = 'u32[]', space=smem, size = 0x4, offset = 0x4, fixed_abs, tag = 'smem constant byte address 0x4 - core index']
  #allocation1 [shape = 'u32[72,128]{1,0:T(1,128)}', space=vmem, size = 0x9000, scoped, tag = 'internal scratch']
  %s0 = inlined_call_operand.vmem [shape: bf16[256,784], index: 0, kind: input, shape index: {}]
  %s1 = inlined_call_operand.vmem [shape: bf16[784,512], index: 1, kind: input, shape index: {}]
  %s2 = inlined_call_operand.vmem [shape: bf16[1,512], index: 2, kind: input, shape index: {}]
  %s3 = inlined_call_operand.vmem [shape: bf16[512,256], index: 3, kind: input, shape index: {}]
  %s4 = inlined_call_operand.vmem [shape: bf16[1,256], index: 4, kind: input, shape index: {}]
  %s5 = inlined_call_operand.vmem [shape: bf16[256,128], index: 5, kind: input, shape index: {}]
  %s6 = inlined_call_operand.vmem [shape: bf16[1,128], index: 6, kind: input, shape index: {}]
  %s7 = inlined_call_operand.vmem [shape: bf16[128,128], index: 7, kind: input, shape index: {}]
  %s8 = inlined_call_operand.vmem [shape: f32[1,128], index: 8, kind: input, shape index: {}]
  %s9 = inlined_call_operand.vmem [shape: f32[1,2,128], index: 9, kind: output, shape index: {}]
  %s10 = sld [smem:[#allocation0]]
  $region46: #{discriminator_forward.1} parent=0
    _
  %s12 = ssub.s32 1, %s10
  %s13 = scalar_select 0, %s12, %s10
  // Predicated region
  $region2: #{discriminator_forward.1} parent=0 // pred_check
    _
  $region3: #{discriminator_forward.1} parent=0 // pred_check_branch
    %15 = sbr.rel (0) target = $region5
  $region4: #{discriminator_forward.1} parent=0 // pred_region
    _
  $region5: #{discriminator_forward.1} parent=0 // pred_fallthru
    _
  // Predicated region
  $region6: #{discriminator_forward.1} parent=0 // pred_check
    _
  $region7: #{discriminator_forward.1} parent=0 // pred_check_branch
    %17 = sbr.rel (0) target = $region9
  $region8: #{discriminator_forward.1} parent=0 // pred_region
    _
  $region9: #{discriminator_forward.1} parent=0 // pred_fallthru
    _
  // Predicated region
  $region10: #{discriminator_forward.1} parent=0 // pred_check
    _
  $region11: #{discriminator_forward.1} parent=0 // pred_check_branch
    %19 = sbr.rel (0) target = $region13
  $region12: #{discriminator_forward.1} parent=0 // pred_region
    _
  $region13: #{discriminator_forward.1} parent=0 // pred_fallthru
    _
  // Predicated region
  $region14: #{discriminator_forward.1} parent=0 // pred_check
    _
  $region15: #{discriminator_forward.1} parent=0 // pred_check_branch
    %21 = sbr.rel (0) target = $region17
  $region16: #{discriminator_forward.1} parent=0 // pred_region
    _
  $region17: #{discriminator_forward.1} parent=0 // pred_fallthru
    _
  // Predicated region
  $region18: #{discriminator_forward.1} parent=0 // pred_check
    _
  $region19: #{discriminator_forward.1} parent=0 // pred_check_branch
    %23 = sbr.rel (0) target = $region21
  $region20: #{discriminator_forward.1} parent=0 // pred_region
    _
  $region21: #{discriminator_forward.1} parent=0 // pred_fallthru
    _
  // Predicated region
  $region22: #{discriminator_forward.1} parent=0 // pred_check
    _
  $region23: #{discriminator_forward.1} parent=0 // pred_check_branch
    %25 = sbr.rel (0) target = $region25
  $region24: #{discriminator_forward.1} parent=0 // pred_region
    _
  $region25: #{discriminator_forward.1} parent=0 // pred_fallthru
    _
  // Predicated region
  $region26: #{discriminator_forward.1} parent=0 // pred_check
    _
  $region27: #{discriminator_forward.1} parent=0 // pred_check_branch
    %27 = sbr.rel (0) target = $region29
  $region28: #{discriminator_forward.1} parent=0 // pred_region
    _
  $region29: #{discriminator_forward.1} parent=0 // pred_fallthru
    _
  // Predicated region
  $region30: #{discriminator_forward.1} parent=0 // pred_check
    _
  $region31: #{discriminator_forward.1} parent=0 // pred_check_branch
    %29 = sbr.rel (0) target = $region33
  $region32: #{discriminator_forward.1} parent=0 // pred_region
    _
  $region33: #{discriminator_forward.1} parent=0 // pred_fallthru
    _
  // Predicated region
  $region34: #{discriminator_forward.1} parent=0 // pred_check
    _
  $region35: #{discriminator_forward.1} parent=0 // pred_check_branch
    %31 = sbr.rel (0) target = $region37
  $region36: #{discriminator_forward.1} parent=0 // pred_region
    _
  $region37: #{discriminator_forward.1} parent=0 // pred_fallthru
    _
  %v33 = vld [vmem:[%s0] sm:$0xff]
  %v34 = vld [vmem:[%s0 + $0x8] sm:$0xff]
  %v35 = vld [vmem:[%s0 + $0x10] sm:$0xff]
  %v36 = vld [vmem:[%s0 + $0x18] sm:$0xf]
  %v37 = vld [vmem:[%s0 + $0x1c] sm:$0xff]
  %v38 = vld [vmem:[%s0 + $0x24] sm:$0xff]
  %v39 = vld [vmem:[%s0 + $0x2c] sm:$0xff]
  %v40 = vld [vmem:[%s0 + $0x34] sm:$0xf]
  %v41 = vld [vmem:[%s0 + $0x38] sm:$0xff]
  %v42 = vld [vmem:[%s0 + $0x40] sm:$0xff]
  %v43 = vld [vmem:[%s0 + $0x48] sm:$0xff]
  %v44 = vld [vmem:[%s0 + $0x50] sm:$0xf]
  %v45 = vld [vmem:[%s0 + $0x54] sm:$0xff]
  %v46 = vld [vmem:[%s0 + $0x5c] sm:$0xff]
  %v47 = vld [vmem:[%s0 + $0x64] sm:$0xff]
  %v48 = vld [vmem:[%s0 + $0x6c] sm:$0xf]
  %v49 = vld [vmem:[%s0 + $0x70] sm:$0xff]
  %v50 = vld [vmem:[%s0 + $0x78] sm:$0xff]
  %v51 = vld [vmem:[%s0 + $0x80] sm:$0xff]
  %v52 = vld [vmem:[%s0 + $0x88] sm:$0xf]
  %v53 = vld [vmem:[%s0 + $0x8c] sm:$0xff]
  %v54 = vld [vmem:[%s0 + $0x94] sm:$0xff]
  %v55 = vld [vmem:[%s0 + $0x9c] sm:$0xff]
  %v56 = vld [vmem:[%s0 + $0xa4] sm:$0xf]
  %v57 = vld [vmem:[%s0 + $0xa8] sm:$0xff]
  %v58 = vld [vmem:[%s0 + $0xb0] sm:$0xff]
  %v59 = vld [vmem:[%s0 + $0xb8] sm:$0xff]
  %v60 = vld [vmem:[%s0 + $0xc0] sm:$0xf]
  %v61 = vld [vmem:[%s0 + $0xc4] sm:$0xff]
  %v62 = vld [vmem:[%s0 + $0xcc] sm:$0xff]
  %v63 = vld [vmem:[%s0 + $0xd4] sm:$0xff]
  %v64 = vld [vmem:[%s0 + $0xdc] sm:$0xf]
  %v65 = vld [vmem:[%s0 + $0xe0] sm:$0xff]
  %v66 = vld [vmem:[%s0 + $0xe8] sm:$0xff]
  %v67 = vld [vmem:[%s0 + $0xf0] sm:$0xff]
  %v68 = vld [vmem:[%s0 + $0xf8] sm:$0xf]
  %v69 = vld [vmem:[%s0 + $0xfc] sm:$0xff]
  %v70 = vld [vmem:[%s0 + $0x104] sm:$0xff]
  %v71 = vld [vmem:[%s0 + $0x10c] sm:$0xff]
  %v72 = vld [vmem:[%s0 + $0x114] sm:$0xf]
  %v73 = vld [vmem:[%s0 + $0x118] sm:$0xff]
  %v74 = vld [vmem:[%s0 + $0x120] sm:$0xff]
  %v75 = vld [vmem:[%s0 + $0x128] sm:$0xff]
  %v76 = vld [vmem:[%s0 + $0x130] sm:$0xf]
  %v77 = vld [vmem:[%s0 + $0x134] sm:$0xff]
  %v78 = vld [vmem:[%s0 + $0x13c] sm:$0xff]
  %v79 = vld [vmem:[%s0 + $0x144] sm:$0xff]
  %v80 = vld [vmem:[%s0 + $0x14c] sm:$0xf]
  %v81 = vld [vmem:[%s0 + $0x150] sm:$0xff]
  %v82 = vld [vmem:[%s0 + $0x158] sm:$0xff]
  %v83 = vld [vmem:[%s0 + $0x160] sm:$0xff]
  %v84 = vld [vmem:[%s0 + $0x168] sm:$0xf]
  %v85 = vld [vmem:[%s0 + $0x16c] sm:$0xff]
  %v86 = vld [vmem:[%s0 + $0x174] sm:$0xff]
  %v87 = vld [vmem:[%s0 + $0x17c] sm:$0xff]
  %v88 = vld [vmem:[%s0 + $0x184] sm:$0xf]
  %v89 = vld [vmem:[%s0 + $0x188] sm:$0xff]
  %v90 = vld [vmem:[%s0 + $0x190] sm:$0xff]
  %v91 = vld [vmem:[%s0 + $0x198] sm:$0xff]
  %v92 = vld [vmem:[%s0 + $0x1a0] sm:$0xf]
  %v93 = vld [vmem:[%s0 + $0x1a4] sm:$0xff]
  %v94 = vld [vmem:[%s0 + $0x1ac] sm:$0xff]
  %v95 = vld [vmem:[%s0 + $0x1b4] sm:$0xff]
  %v96 = vld [vmem:[%s0 + $0x1bc] sm:$0xf]
  %v97 = vld [vmem:[%s0 + $0x1c0] sm:$0xff]
  %v98 = vld [vmem:[%s0 + $0x1c8] sm:$0xff]
  %v99 = vld [vmem:[%s0 + $0x1d0] sm:$0xff]
  %v100 = vld [vmem:[%s0 + $0x1d8] sm:$0xf]
  %v101 = vld [vmem:[%s0 + $0x1dc] sm:$0xff]
  %v102 = vld [vmem:[%s0 + $0x1e4] sm:$0xff]
  %v103 = vld [vmem:[%s0 + $0x1ec] sm:$0xff]
  %v104 = vld [vmem:[%s0 + $0x1f4] sm:$0xf]
  %v105 = vld [vmem:[%s0 + $0x1f8] sm:$0xff]
  %v106 = vld [vmem:[%s0 + $0x200] sm:$0xff]
  %v107 = vld [vmem:[%s0 + $0x208] sm:$0xff]
  %v108 = vld [vmem:[%s0 + $0x210] sm:$0xf]
  %v109 = vld [vmem:[%s0 + $0x214] sm:$0xff]
  %v110 = vld [vmem:[%s0 + $0x21c] sm:$0xff]
  %v111 = vld [vmem:[%s0 + $0x224] sm:$0xff]
  %v112 = vld [vmem:[%s0 + $0x22c] sm:$0xf]
  %v113 = vld [vmem:[%s0 + $0x230] sm:$0xff]
  %v114 = vld [vmem:[%s0 + $0x238] sm:$0xff]
  %v115 = vld [vmem:[%s0 + $0x240] sm:$0xff]
  %v116 = vld [vmem:[%s0 + $0x248] sm:$0xf]
  %v117 = vld [vmem:[%s0 + $0x24c] sm:$0xff]
  %v118 = vld [vmem:[%s0 + $0x254] sm:$0xff]
  %v119 = vld [vmem:[%s0 + $0x25c] sm:$0xff]
  %v120 = vld [vmem:[%s0 + $0x264] sm:$0xf]
  %v121 = vld [vmem:[%s0 + $0x268] sm:$0xff]
  %v122 = vld [vmem:[%s0 + $0x270] sm:$0xff]
  %v123 = vld [vmem:[%s0 + $0x278] sm:$0xff]
  %v124 = vld [vmem:[%s0 + $0x280] sm:$0xf]
  %v125 = vld [vmem:[%s0 + $0x284] sm:$0xff]
  %v126 = vld [vmem:[%s0 + $0x28c] sm:$0xff]
  %v127 = vld [vmem:[%s0 + $0x294] sm:$0xff]
  %v128 = vld [vmem:[%s0 + $0x29c] sm:$0xf]
  %v129 = vld [vmem:[%s0 + $0x2a0] sm:$0xff]
  %v130 = vld [vmem:[%s0 + $0x2a8] sm:$0xff]
  %v131 = vld [vmem:[%s0 + $0x2b0] sm:$0xff]
  %v132 = vld [vmem:[%s0 + $0x2b8] sm:$0xf]
  %v133 = vld [vmem:[%s0 + $0x2bc] sm:$0xff]
  %v134 = vld [vmem:[%s0 + $0x2c4] sm:$0xff]
  %v135 = vld [vmem:[%s0 + $0x2cc] sm:$0xff]
  %v136 = vld [vmem:[%s0 + $0x2d4] sm:$0xf]
  %v137 = vld [vmem:[%s0 + $0x2d8] sm:$0xff]
  %v138 = vld [vmem:[%s0 + $0x2e0] sm:$0xff]
  %v139 = vld [vmem:[%s0 + $0x2e8] sm:$0xff]
  %v140 = vld [vmem:[%s0 + $0x2f0] sm:$0xf]
  %v141 = vld [vmem:[%s0 + $0x2f4] sm:$0xff]
  %v142 = vld [vmem:[%s0 + $0x2fc] sm:$0xff]
  %v143 = vld [vmem:[%s0 + $0x304] sm:$0xff]
  %v144 = vld [vmem:[%s0 + $0x30c] sm:$0xf]
  %v145 = vld [vmem:[%s0 + $0x310] sm:$0xff]
  %v146 = vld [vmem:[%s0 + $0x318] sm:$0xff]
  %v147 = vld [vmem:[%s0 + $0x320] sm:$0xff]
  %v148 = vld [vmem:[%s0 + $0x328] sm:$0xf]
  %v149 = vld [vmem:[%s0 + $0x32c] sm:$0xff]
  %v150 = vld [vmem:[%s0 + $0x334] sm:$0xff]
  %v151 = vld [vmem:[%s0 + $0x33c] sm:$0xff]
  %v152 = vld [vmem:[%s0 + $0x344] sm:$0xf]
  %v153 = vld [vmem:[%s0 + $0x348] sm:$0xff]
  %v154 = vld [vmem:[%s0 + $0x350] sm:$0xff]
  %v155 = vld [vmem:[%s0 + $0x358] sm:$0xff]
  %v156 = vld [vmem:[%s0 + $0x360] sm:$0xf]
  %v157 = vld [vmem:[%s0 + $0x364] sm:$0xff]
  %v158 = vld [vmem:[%s0 + $0x36c] sm:$0xff]
  %v159 = vld [vmem:[%s0 + $0x374] sm:$0xff]
  %v160 = vld [vmem:[%s0 + $0x37c] sm:$0xf]
  %v161 = vld [vmem:[%s1] sm:$0xff]
  %v162 = vld [vmem:[%s1 + $0x8] sm:$0xff]
  %v163 = vld [vmem:[%s1 + $0x10] sm:$0xff]
  %v164 = vld [vmem:[%s1 + $0x18] sm:$0xff]
  %v165 = vld [vmem:[%s1 + $0x20] sm:$0xff]
  %v166 = vld [vmem:[%s1 + $0x28] sm:$0xff]
  %v167 = vld [vmem:[%s1 + $0x30] sm:$0xff]
  %v168 = vld [vmem:[%s1 + $0x38] sm:$0xff]
  %v169 = vld [vmem:[%s1 + $0x40] sm:$0xff]
  %v170 = vld [vmem:[%s1 + $0x48] sm:$0xff]
  %v171 = vld [vmem:[%s1 + $0x50] sm:$0xff]
  %v172 = vld [vmem:[%s1 + $0x58] sm:$0xff]
  %v173 = vld [vmem:[%s1 + $0x60] sm:$0xff]
  %v174 = vld [vmem:[%s1 + $0x68] sm:$0xff]
  %v175 = vld [vmem:[%s1 + $0x70] sm:$0xff]
  %v176 = vld [vmem:[%s1 + $0x78] sm:$0xff]
  %v177 = vld [vmem:[%s1 + $0x80] sm:$0xff]
  %v178 = vld [vmem:[%s1 + $0x88] sm:$0xff]
  %v179 = vld [vmem:[%s1 + $0x90] sm:$0xff]
  %v180 = vld [vmem:[%s1 + $0x98] sm:$0xff]
  %v181 = vld [vmem:[%s1 + $0xa0] sm:$0xff]
  %v182 = vld [vmem:[%s1 + $0xa8] sm:$0xff]
  %v183 = vld [vmem:[%s1 + $0xb0] sm:$0xff]
  %v184 = vld [vmem:[%s1 + $0xb8] sm:$0xff]
  %v185 = vld [vmem:[%s1 + $0xc0] sm:$0xff]
  %v186 = vld [vmem:[%s1 + $0xc8] sm:$0xff]
  %v187 = vld [vmem:[%s1 + $0xd0] sm:$0xff]
  %v188 = vld [vmem:[%s1 + $0xd8] sm:$0xff]
  %v189 = vld [vmem:[%s1 + $0xe0] sm:$0xff]
  %v190 = vld [vmem:[%s1 + $0xe8] sm:$0xff]
  %v191 = vld [vmem:[%s1 + $0xf0] sm:$0xff]
  %v192 = vld [vmem:[%s1 + $0xf8] sm:$0xff]
  %v193 = vld [vmem:[%s1 + $0x100] sm:$0xff]
  %v194 = vld [vmem:[%s1 + $0x108] sm:$0xff]
  %v195 = vld [vmem:[%s1 + $0x110] sm:$0xff]
  %v196 = vld [vmem:[%s1 + $0x118] sm:$0xff]
  %v197 = vld [vmem:[%s1 + $0x120] sm:$0xff]
  %v198 = vld [vmem:[%s1 + $0x128] sm:$0xff]
  %v199 = vld [vmem:[%s1 + $0x130] sm:$0xff]
  %v200 = vld [vmem:[%s1 + $0x138] sm:$0xff]
  %v201 = vld [vmem:[%s1 + $0x140] sm:$0xff]
  %v202 = vld [vmem:[%s1 + $0x148] sm:$0xff]
  %v203 = vld [vmem:[%s1 + $0x150] sm:$0xff]
  %v204 = vld [vmem:[%s1 + $0x158] sm:$0xff]
  %v205 = vld [vmem:[%s1 + $0x160] sm:$0xff]
  %v206 = vld [vmem:[%s1 + $0x168] sm:$0xff]
  %v207 = vld [vmem:[%s1 + $0x170] sm:$0xff]
  %v208 = vld [vmem:[%s1 + $0x178] sm:$0xff]
  %v209 = vld [vmem:[%s1 + $0x180] sm:$0xff]
  %v210 = vld [vmem:[%s1 + $0x188] sm:$0xff]
  %v211 = vld [vmem:[%s1 + $0x190] sm:$0xff]
  %v212 = vld [vmem:[%s1 + $0x198] sm:$0xff]
  %v213 = vld [vmem:[%s1 + $0x1a0] sm:$0xff]
  %v214 = vld [vmem:[%s1 + $0x1a8] sm:$0xff]
  %v215 = vld [vmem:[%s1 + $0x1b0] sm:$0xff]
  %v216 = vld [vmem:[%s1 + $0x1b8] sm:$0xff]
  %v217 = vld [vmem:[%s1 + $0x1c0] sm:$0xff]
  %v218 = vld [vmem:[%s1 + $0x1c8] sm:$0xff]
  %v219 = vld [vmem:[%s1 + $0x1d0] sm:$0xff]
  %v220 = vld [vmem:[%s1 + $0x1d8] sm:$0xff]
  %v221 = vld [vmem:[%s1 + $0x1e0] sm:$0xff]
  %v222 = vld [vmem:[%s1 + $0x1e8] sm:$0xff]
  %v223 = vld [vmem:[%s1 + $0x1f0] sm:$0xff]
  %v224 = vld [vmem:[%s1 + $0x1f8] sm:$0xff]
  %v225 = vld [vmem:[%s1 + $0x200] sm:$0xff]
  %v226 = vld [vmem:[%s1 + $0x208] sm:$0xff]
  %v227 = vld [vmem:[%s1 + $0x210] sm:$0xff]
  %v228 = vld [vmem:[%s1 + $0x218] sm:$0xff]
  %v229 = vld [vmem:[%s1 + $0x220] sm:$0xff]
  %v230 = vld [vmem:[%s1 + $0x228] sm:$0xff]
  %v231 = vld [vmem:[%s1 + $0x230] sm:$0xff]
  %v232 = vld [vmem:[%s1 + $0x238] sm:$0xff]
  %v233 = vld [vmem:[%s1 + $0x240] sm:$0xff]
  %v234 = vld [vmem:[%s1 + $0x248] sm:$0xff]
  %v235 = vld [vmem:[%s1 + $0x250] sm:$0xff]
  %v236 = vld [vmem:[%s1 + $0x258] sm:$0xff]
  %v237 = vld [vmem:[%s1 + $0x260] sm:$0xff]
  %v238 = vld [vmem:[%s1 + $0x268] sm:$0xff]
  %v239 = vld [vmem:[%s1 + $0x270] sm:$0xff]
  %v240 = vld [vmem:[%s1 + $0x278] sm:$0xff]
  %v241 = vld [vmem:[%s1 + $0x280] sm:$0xff]
  %v242 = vld [vmem:[%s1 + $0x288] sm:$0xff]
  %v243 = vld [vmem:[%s1 + $0x290] sm:$0xff]
  %v244 = vld [vmem:[%s1 + $0x298] sm:$0xff]
  %v245 = vld [vmem:[%s1 + $0x2a0] sm:$0xff]
  %v246 = vld [vmem:[%s1 + $0x2a8] sm:$0xff]
  %v247 = vld [vmem:[%s1 + $0x2b0] sm:$0xff]
  %v248 = vld [vmem:[%s1 + $0x2b8] sm:$0xff]
  %v249 = vld [vmem:[%s1 + $0x2c0] sm:$0xff]
  %v250 = vld [vmem:[%s1 + $0x2c8] sm:$0xff]
  %v251 = vld [vmem:[%s1 + $0x2d0] sm:$0xff]
  %v252 = vld [vmem:[%s1 + $0x2d8] sm:$0xff]
  %v253 = vld [vmem:[%s1 + $0x2e0] sm:$0xff]
  %v254 = vld [vmem:[%s1 + $0x2e8] sm:$0xff]
  %v255 = vld [vmem:[%s1 + $0x2f0] sm:$0xff]
  %v256 = vld [vmem:[%s1 + $0x2f8] sm:$0xff]
  %v257 = vld [vmem:[%s1 + $0x300] sm:$0xff]
  %v258 = vld [vmem:[%s1 + $0x308] sm:$0xff]
  %v259 = vld [vmem:[%s1 + $0x310] sm:$0xff]
  %v260 = vld [vmem:[%s1 + $0x318] sm:$0xff]
  %v261 = vld [vmem:[%s1 + $0x320] sm:$0xff]
  %v262 = vld [vmem:[%s1 + $0x328] sm:$0xff]
  %v263 = vld [vmem:[%s1 + $0x330] sm:$0xff]
  %v264 = vld [vmem:[%s1 + $0x338] sm:$0xff]
  %v265 = vld [vmem:[%s1 + $0x340] sm:$0xff]
  %v266 = vld [vmem:[%s1 + $0x348] sm:$0xff]
  %v267 = vld [vmem:[%s1 + $0x350] sm:$0xff]
  %v268 = vld [vmem:[%s1 + $0x358] sm:$0xff]
  %v269 = vld [vmem:[%s1 + $0x360] sm:$0xff]
  %v270 = vld [vmem:[%s1 + $0x368] sm:$0xff]
  %v271 = vld [vmem:[%s1 + $0x370] sm:$0xff]
  %v272 = vld [vmem:[%s1 + $0x378] sm:$0xff]
  %v273 = vld [vmem:[%s1 + $0x380] sm:$0xff]
  %v274 = vld [vmem:[%s1 + $0x388] sm:$0xff]
  %v275 = vld [vmem:[%s1 + $0x390] sm:$0xff]
  %v276 = vld [vmem:[%s1 + $0x398] sm:$0xff]
  %v277 = vld [vmem:[%s1 + $0x3a0] sm:$0xff]
  %v278 = vld [vmem:[%s1 + $0x3a8] sm:$0xff]
  %v279 = vld [vmem:[%s1 + $0x3b0] sm:$0xff]
  %v280 = vld [vmem:[%s1 + $0x3b8] sm:$0xff]
  %v281 = vld [vmem:[%s1 + $0x3c0] sm:$0xff]
  %v282 = vld [vmem:[%s1 + $0x3c8] sm:$0xff]
  %v283 = vld [vmem:[%s1 + $0x3d0] sm:$0xff]
  %v284 = vld [vmem:[%s1 + $0x3d8] sm:$0xff]
  %v285 = vld [vmem:[%s1 + $0x3e0] sm:$0xff]
  %v286 = vld [vmem:[%s1 + $0x3e8] sm:$0xff]
  %v287 = vld [vmem:[%s1 + $0x3f0] sm:$0xff]
  %v288 = vld [vmem:[%s1 + $0x3f8] sm:$0xff]
  %v289 = vld [vmem:[%s1 + $0x400] sm:$0xff]
  %v290 = vld [vmem:[%s1 + $0x408] sm:$0xff]
  %v291 = vld [vmem:[%s1 + $0x410] sm:$0xff]
  %v292 = vld [vmem:[%s1 + $0x418] sm:$0xff]
  %v293 = vld [vmem:[%s1 + $0x420] sm:$0xff]
  %v294 = vld [vmem:[%s1 + $0x428] sm:$0xff]
  %v295 = vld [vmem:[%s1 + $0x430] sm:$0xff]
  %v296 = vld [vmem:[%s1 + $0x438] sm:$0xff]
  %v297 = vld [vmem:[%s1 + $0x440] sm:$0xff]
  %v298 = vld [vmem:[%s1 + $0x448] sm:$0xff]
  %v299 = vld [vmem:[%s1 + $0x450] sm:$0xff]
  %v300 = vld [vmem:[%s1 + $0x458] sm:$0xff]
  %v301 = vld [vmem:[%s1 + $0x460] sm:$0xff]
  %v302 = vld [vmem:[%s1 + $0x468] sm:$0xff]
  %v303 = vld [vmem:[%s1 + $0x470] sm:$0xff]
  %v304 = vld [vmem:[%s1 + $0x478] sm:$0xff]
  %v305 = vld [vmem:[%s1 + $0x480] sm:$0xff]
  %v306 = vld [vmem:[%s1 + $0x488] sm:$0xff]
  %v307 = vld [vmem:[%s1 + $0x490] sm:$0xff]
  %v308 = vld [vmem:[%s1 + $0x498] sm:$0xff]
  %v309 = vld [vmem:[%s1 + $0x4a0] sm:$0xff]
  %v310 = vld [vmem:[%s1 + $0x4a8] sm:$0xff]
  %v311 = vld [vmem:[%s1 + $0x4b0] sm:$0xff]
  %v312 = vld [vmem:[%s1 + $0x4b8] sm:$0xff]
  %v313 = vld [vmem:[%s1 + $0x4c0] sm:$0xff]
  %v314 = vld [vmem:[%s1 + $0x4c8] sm:$0xff]
  %v315 = vld [vmem:[%s1 + $0x4d0] sm:$0xff]
  %v316 = vld [vmem:[%s1 + $0x4d8] sm:$0xff]
  %v317 = vld [vmem:[%s1 + $0x4e0] sm:$0xff]
  %v318 = vld [vmem:[%s1 + $0x4e8] sm:$0xff]
  %v319 = vld [vmem:[%s1 + $0x4f0] sm:$0xff]
  %v320 = vld [vmem:[%s1 + $0x4f8] sm:$0xff]
  %v321 = vld [vmem:[%s1 + $0x500] sm:$0xff]
  %v322 = vld [vmem:[%s1 + $0x508] sm:$0xff]
  %v323 = vld [vmem:[%s1 + $0x510] sm:$0xff]
  %v324 = vld [vmem:[%s1 + $0x518] sm:$0xff]
  %v325 = vld [vmem:[%s1 + $0x520] sm:$0xff]
  %v326 = vld [vmem:[%s1 + $0x528] sm:$0xff]
  %v327 = vld [vmem:[%s1 + $0x530] sm:$0xff]
  %v328 = vld [vmem:[%s1 + $0x538] sm:$0xff]
  %v329 = vld [vmem:[%s1 + $0x540] sm:$0xff]
  %v330 = vld [vmem:[%s1 + $0x548] sm:$0xff]
  %v331 = vld [vmem:[%s1 + $0x550] sm:$0xff]
  %v332 = vld [vmem:[%s1 + $0x558] sm:$0xff]
  %v333 = vld [vmem:[%s1 + $0x560] sm:$0xff]
  %v334 = vld [vmem:[%s1 + $0x568] sm:$0xff]
  %v335 = vld [vmem:[%s1 + $0x570] sm:$0xff]
  %v336 = vld [vmem:[%s1 + $0x578] sm:$0xff]
  %v337 = vld [vmem:[%s1 + $0x580] sm:$0xff]
  %v338 = vld [vmem:[%s1 + $0x588] sm:$0xff]
  %v339 = vld [vmem:[%s1 + $0x590] sm:$0xff]
  %v340 = vld [vmem:[%s1 + $0x598] sm:$0xff]
  %v341 = vld [vmem:[%s1 + $0x5a0] sm:$0xff]
  %v342 = vld [vmem:[%s1 + $0x5a8] sm:$0xff]
  %v343 = vld [vmem:[%s1 + $0x5b0] sm:$0xff]
  %v344 = vld [vmem:[%s1 + $0x5b8] sm:$0xff]
  %v345 = vld [vmem:[%s1 + $0x5c0] sm:$0xff]
  %v346 = vld [vmem:[%s1 + $0x5c8] sm:$0xff]
  %v347 = vld [vmem:[%s1 + $0x5d0] sm:$0xff]
  %v348 = vld [vmem:[%s1 + $0x5d8] sm:$0xff]
  %v349 = vld [vmem:[%s1 + $0x5e0] sm:$0xff]
  %v350 = vld [vmem:[%s1 + $0x5e8] sm:$0xff]
  %v351 = vld [vmem:[%s1 + $0x5f0] sm:$0xff]
  %v352 = vld [vmem:[%s1 + $0x5f8] sm:$0xff]
  %v353 = vld [vmem:[%s1 + $0x600] sm:$0xff]
  %v354 = vld [vmem:[%s1 + $0x608] sm:$0xff]
  %v355 = vld [vmem:[%s1 + $0x610] sm:$0xff]
  %v356 = vld [vmem:[%s1 + $0x618] sm:$0xff]
  %v485 = vunpack.c.l.b16 %v33
  %v486 = vunpack.c.h.b16 %v33
  %v487 = vunpack.c.l.b16 %v34
  %v488 = vunpack.c.h.b16 %v34
  %v489 = vunpack.c.l.b16 %v35
  %v490 = vunpack.c.h.b16 %v35
  %v491 = vunpack.c.l.b16 %v36
  %v492 = vunpack.c.l.b16 %v37
  %v493 = vunpack.c.h.b16 %v37
  %v494 = vunpack.c.l.b16 %v38
  %v495 = vunpack.c.h.b16 %v38
  %v496 = vunpack.c.l.b16 %v39
  %v497 = vunpack.c.h.b16 %v39
  %v498 = vunpack.c.l.b16 %v40
  %v499 = vunpack.c.l.b16 %v41
  %v500 = vunpack.c.h.b16 %v41
  %v501 = vunpack.c.l.b16 %v42
  %v502 = vunpack.c.h.b16 %v42
  %v503 = vunpack.c.l.b16 %v43
  %v504 = vunpack.c.h.b16 %v43
  %v505 = vunpack.c.l.b16 %v44
  %v506 = vunpack.c.l.b16 %v45
  %v507 = vunpack.c.h.b16 %v45
  %v508 = vunpack.c.l.b16 %v46
  %v509 = vunpack.c.h.b16 %v46
  %v510 = vunpack.c.l.b16 %v47
  %v511 = vunpack.c.h.b16 %v47
  %v512 = vunpack.c.l.b16 %v48
  %v513 = vunpack.c.l.b16 %v49
  %v514 = vunpack.c.h.b16 %v49
  %v515 = vunpack.c.l.b16 %v50
  %v516 = vunpack.c.h.b16 %v50
  %v517 = vunpack.c.l.b16 %v51
  %v518 = vunpack.c.h.b16 %v51
  %v519 = vunpack.c.l.b16 %v52
  %v520 = vunpack.c.l.b16 %v53
  %v521 = vunpack.c.h.b16 %v53
  %v522 = vunpack.c.l.b16 %v54
  %v523 = vunpack.c.h.b16 %v54
  %v524 = vunpack.c.l.b16 %v55
  %v525 = vunpack.c.h.b16 %v55
  %v526 = vunpack.c.l.b16 %v56
  %v527 = vunpack.c.l.b16 %v57
  %v528 = vunpack.c.h.b16 %v57
  %v529 = vunpack.c.l.b16 %v58
  %v530 = vunpack.c.h.b16 %v58
  %v531 = vunpack.c.l.b16 %v59
  %v532 = vunpack.c.h.b16 %v59
  %v533 = vunpack.c.l.b16 %v60
  %v534 = vunpack.c.l.b16 %v61
  %v535 = vunpack.c.h.b16 %v61
  %v536 = vunpack.c.l.b16 %v62
  %v537 = vunpack.c.h.b16 %v62
  %v538 = vunpack.c.l.b16 %v63
  %v539 = vunpack.c.h.b16 %v63
  %v540 = vunpack.c.l.b16 %v64
  %v541 = vunpack.c.l.b16 %v65
  %v542 = vunpack.c.h.b16 %v65
  %v543 = vunpack.c.l.b16 %v66
  %v544 = vunpack.c.h.b16 %v66
  %v545 = vunpack.c.l.b16 %v67
  %v546 = vunpack.c.h.b16 %v67
  %v547 = vunpack.c.l.b16 %v68
  %v548 = vunpack.c.l.b16 %v69
  %v549 = vunpack.c.h.b16 %v69
  %v550 = vunpack.c.l.b16 %v70
  %v551 = vunpack.c.h.b16 %v70
  %v552 = vunpack.c.l.b16 %v71
  %v553 = vunpack.c.h.b16 %v71
  %v554 = vunpack.c.l.b16 %v72
  %v555 = vunpack.c.l.b16 %v73
  %v556 = vunpack.c.h.b16 %v73
  %v557 = vunpack.c.l.b16 %v74
  %v558 = vunpack.c.h.b16 %v74
  %v559 = vunpack.c.l.b16 %v75
  %v560 = vunpack.c.h.b16 %v75
  %v561 = vunpack.c.l.b16 %v76
  %v562 = vunpack.c.l.b16 %v77
  %v563 = vunpack.c.h.b16 %v77
  %v564 = vunpack.c.l.b16 %v78
  %v565 = vunpack.c.h.b16 %v78
  %v566 = vunpack.c.l.b16 %v79
  %v567 = vunpack.c.h.b16 %v79
  %v568 = vunpack.c.l.b16 %v80
  %v569 = vunpack.c.l.b16 %v81
  %v570 = vunpack.c.h.b16 %v81
  %v571 = vunpack.c.l.b16 %v82
  %v572 = vunpack.c.h.b16 %v82
  %v573 = vunpack.c.l.b16 %v83
  %v574 = vunpack.c.h.b16 %v83
  %v575 = vunpack.c.l.b16 %v84
  %v576 = vunpack.c.l.b16 %v85
  %v577 = vunpack.c.h.b16 %v85
  %v578 = vunpack.c.l.b16 %v86
  %v579 = vunpack.c.h.b16 %v86
  %v580 = vunpack.c.l.b16 %v87
  %v581 = vunpack.c.h.b16 %v87
  %v582 = vunpack.c.l.b16 %v88
  %v583 = vunpack.c.l.b16 %v89
  %v584 = vunpack.c.h.b16 %v89
  %v585 = vunpack.c.l.b16 %v90
  %v586 = vunpack.c.h.b16 %v90
  %v587 = vunpack.c.l.b16 %v91
  %v588 = vunpack.c.h.b16 %v91
  %v589 = vunpack.c.l.b16 %v92
  %v590 = vunpack.c.l.b16 %v93
  %v591 = vunpack.c.h.b16 %v93
  %v592 = vunpack.c.l.b16 %v94
  %v593 = vunpack.c.h.b16 %v94
  %v594 = vunpack.c.l.b16 %v95
  %v595 = vunpack.c.h.b16 %v95
  %v596 = vunpack.c.l.b16 %v96
  %v597 = vunpack.c.l.b16 %v97
  %v598 = vunpack.c.h.b16 %v97
  %v599 = vunpack.c.l.b16 %v98
  %v600 = vunpack.c.h.b16 %v98
  %v601 = vunpack.c.l.b16 %v99
  %v602 = vunpack.c.h.b16 %v99
  %v603 = vunpack.c.l.b16 %v100
  %v604 = vunpack.c.l.b16 %v101
  %v605 = vunpack.c.h.b16 %v101
  %v606 = vunpack.c.l.b16 %v102
  %v607 = vunpack.c.h.b16 %v102
  %v608 = vunpack.c.l.b16 %v103
  %v609 = vunpack.c.h.b16 %v103
  %v610 = vunpack.c.l.b16 %v104
  %v611 = vunpack.c.l.b16 %v105
  %v612 = vunpack.c.h.b16 %v105
  %v613 = vunpack.c.l.b16 %v106
  %v614 = vunpack.c.h.b16 %v106
  %v615 = vunpack.c.l.b16 %v107
  %v616 = vunpack.c.h.b16 %v107
  %v617 = vunpack.c.l.b16 %v108
  %v618 = vunpack.c.l.b16 %v109
  %v619 = vunpack.c.h.b16 %v109
  %v620 = vunpack.c.l.b16 %v110
  %v621 = vunpack.c.h.b16 %v110
  %v622 = vunpack.c.l.b16 %v111
  %v623 = vunpack.c.h.b16 %v111
  %v624 = vunpack.c.l.b16 %v112
  %v625 = vunpack.c.l.b16 %v113
  %v626 = vunpack.c.h.b16 %v113
  %v627 = vunpack.c.l.b16 %v114
  %v628 = vunpack.c.h.b16 %v114
  %v629 = vunpack.c.l.b16 %v115
  %v630 = vunpack.c.h.b16 %v115
  %v631 = vunpack.c.l.b16 %v116
  %v632 = vunpack.c.l.b16 %v117
  %v633 = vunpack.c.h.b16 %v117
  %v634 = vunpack.c.l.b16 %v118
  %v635 = vunpack.c.h.b16 %v118
  %v636 = vunpack.c.l.b16 %v119
  %v637 = vunpack.c.h.b16 %v119
  %v638 = vunpack.c.l.b16 %v120
  %v639 = vunpack.c.l.b16 %v121
  %v640 = vunpack.c.h.b16 %v121
  %v641 = vunpack.c.l.b16 %v122
  %v642 = vunpack.c.h.b16 %v122
  %v643 = vunpack.c.l.b16 %v123
  %v644 = vunpack.c.h.b16 %v123
  %v645 = vunpack.c.l.b16 %v124
  %v646 = vunpack.c.l.b16 %v125
  %v647 = vunpack.c.h.b16 %v125
  %v648 = vunpack.c.l.b16 %v126
  %v649 = vunpack.c.h.b16 %v126
  %v650 = vunpack.c.l.b16 %v127
  %v651 = vunpack.c.h.b16 %v127
  %v652 = vunpack.c.l.b16 %v128
  %v653 = vunpack.c.l.b16 %v129
  %v654 = vunpack.c.h.b16 %v129
  %v655 = vunpack.c.l.b16 %v130
  %v656 = vunpack.c.h.b16 %v130
  %v657 = vunpack.c.l.b16 %v131
  %v658 = vunpack.c.h.b16 %v131
  %v659 = vunpack.c.l.b16 %v132
  %v660 = vunpack.c.l.b16 %v133
  %v661 = vunpack.c.h.b16 %v133
  %v662 = vunpack.c.l.b16 %v134
  %v663 = vunpack.c.h.b16 %v134
  %v664 = vunpack.c.l.b16 %v135
  %v665 = vunpack.c.h.b16 %v135
  %v666 = vunpack.c.l.b16 %v136
  %v667 = vunpack.c.l.b16 %v137
  %v668 = vunpack.c.h.b16 %v137
  %v669 = vunpack.c.l.b16 %v138
  %v670 = vunpack.c.h.b16 %v138
  %v671 = vunpack.c.l.b16 %v139
  %v672 = vunpack.c.h.b16 %v139
  %v673 = vunpack.c.l.b16 %v140
  %v674 = vunpack.c.l.b16 %v141
  %v675 = vunpack.c.h.b16 %v141
  %v676 = vunpack.c.l.b16 %v142
  %v677 = vunpack.c.h.b16 %v142
  %v678 = vunpack.c.l.b16 %v143
  %v679 = vunpack.c.h.b16 %v143
  %v680 = vunpack.c.l.b16 %v144
  %v681 = vunpack.c.l.b16 %v145
  %v682 = vunpack.c.h.b16 %v145
  %v683 = vunpack.c.l.b16 %v146
  %v684 = vunpack.c.h.b16 %v146
  %v685 = vunpack.c.l.b16 %v147
  %v686 = vunpack.c.h.b16 %v147
  %v687 = vunpack.c.l.b16 %v148
  %v688 = vunpack.c.l.b16 %v149
  %v689 = vunpack.c.h.b16 %v149
  %v690 = vunpack.c.l.b16 %v150
  %v691 = vunpack.c.h.b16 %v150
  %v692 = vunpack.c.l.b16 %v151
  %v693 = vunpack.c.h.b16 %v151
  %v694 = vunpack.c.l.b16 %v152
  %v695 = vunpack.c.l.b16 %v153
  %v696 = vunpack.c.h.b16 %v153
  %v697 = vunpack.c.l.b16 %v154
  %v698 = vunpack.c.h.b16 %v154
  %v699 = vunpack.c.l.b16 %v155
  %v700 = vunpack.c.h.b16 %v155
  %v701 = vunpack.c.l.b16 %v156
  %v702 = vunpack.c.l.b16 %v157
  %v703 = vunpack.c.h.b16 %v157
  %v704 = vunpack.c.l.b16 %v158
  %v705 = vunpack.c.h.b16 %v158
  %v706 = vunpack.c.l.b16 %v159
  %v707 = vunpack.c.h.b16 %v159
  %v708 = vunpack.c.l.b16 %v160
  %v709 = vpack.c.b16 %v492, %v485
  %v710 = vpack.c.b16 %v493, %v486
  %v711 = vpack.c.b16 %v494, %v487
  %v712 = vpack.c.b16 %v495, %v488
  %v713 = vpack.c.b16 %v496, %v489
  %v714 = vpack.c.b16 %v497, %v490
  %v715 = vpack.c.b16 %v498, %v491
  %v716 = vpack.c.b16 %v506, %v499
  %v717 = vpack.c.b16 %v507, %v500
  %v718 = vpack.c.b16 %v508, %v501
  %v719 = vpack.c.b16 %v509, %v502
  %v720 = vpack.c.b16 %v510, %v503
  %v721 = vpack.c.b16 %v511, %v504
  %v722 = vpack.c.b16 %v512, %v505
  %v723 = vpack.c.b16 %v520, %v513
  %v724 = vpack.c.b16 %v521, %v514
  %v725 = vpack.c.b16 %v522, %v515
  %v726 = vpack.c.b16 %v523, %v516
  %v727 = vpack.c.b16 %v524, %v517
  %v728 = vpack.c.b16 %v525, %v518
  %v729 = vpack.c.b16 %v526, %v519
  %v730 = vpack.c.b16 %v534, %v527
  %v731 = vpack.c.b16 %v535, %v528
  %v732 = vpack.c.b16 %v536, %v529
  %v733 = vpack.c.b16 %v537, %v530
  %v734 = vpack.c.b16 %v538, %v531
  %v735 = vpack.c.b16 %v539, %v532
  %v736 = vpack.c.b16 %v540, %v533
  %v737 = vpack.c.b16 %v548, %v541
  %v738 = vpack.c.b16 %v549, %v542
  %v739 = vpack.c.b16 %v550, %v543
  %v740 = vpack.c.b16 %v551, %v544
  %v741 = vpack.c.b16 %v552, %v545
  %v742 = vpack.c.b16 %v553, %v546
  %v743 = vpack.c.b16 %v554, %v547
  %v744 = vpack.c.b16 %v562, %v555
  %v745 = vpack.c.b16 %v563, %v556
  %v746 = vpack.c.b16 %v564, %v557
  %v747 = vpack.c.b16 %v565, %v558
  %v748 = vpack.c.b16 %v566, %v559
  %v749 = vpack.c.b16 %v567, %v560
  %v750 = vpack.c.b16 %v568, %v561
  %v751 = vpack.c.b16 %v576, %v569
  %v752 = vpack.c.b16 %v577, %v570
  %v753 = vpack.c.b16 %v578, %v571
  %v754 = vpack.c.b16 %v579, %v572
  %v755 = vpack.c.b16 %v580, %v573
  %v756 = vpack.c.b16 %v581, %v574
  %v757 = vpack.c.b16 %v582, %v575
  %v758 = vpack.c.b16 %v590, %v583
  %v759 = vpack.c.b16 %v591, %v584
  %v760 = vpack.c.b16 %v592, %v585
  %v761 = vpack.c.b16 %v593, %v586
  %v762 = vpack.c.b16 %v594, %v587
  %v763 = vpack.c.b16 %v595, %v588
  %v764 = vpack.c.b16 %v596, %v589
  %v765 = vpack.c.b16 %v604, %v597
  %v766 = vpack.c.b16 %v605, %v598
  %v767 = vpack.c.b16 %v606, %v599
  %v768 = vpack.c.b16 %v607, %v600
  %v769 = vpack.c.b16 %v608, %v601
  %v770 = vpack.c.b16 %v609, %v602
  %v771 = vpack.c.b16 %v610, %v603
  %v772 = vpack.c.b16 %v618, %v611
  %v773 = vpack.c.b16 %v619, %v612
  %v774 = vpack.c.b16 %v620, %v613
  %v775 = vpack.c.b16 %v621, %v614
  %v776 = vpack.c.b16 %v622, %v615
  %v777 = vpack.c.b16 %v623, %v616
  %v778 = vpack.c.b16 %v624, %v617
  %v779 = vpack.c.b16 %v632, %v625
  %v780 = vpack.c.b16 %v633, %v626
  %v781 = vpack.c.b16 %v634, %v627
  %v782 = vpack.c.b16 %v635, %v628
  %v783 = vpack.c.b16 %v636, %v629
  %v784 = vpack.c.b16 %v637, %v630
  %v785 = vpack.c.b16 %v638, %v631
  %v786 = vpack.c.b16 %v646, %v639
  %v787 = vpack.c.b16 %v647, %v640
  %v788 = vpack.c.b16 %v648, %v641
  %v789 = vpack.c.b16 %v649, %v642
  %v790 = vpack.c.b16 %v650, %v643
  %v791 = vpack.c.b16 %v651, %v644
  %v792 = vpack.c.b16 %v652, %v645
  %v793 = vpack.c.b16 %v660, %v653
  %v794 = vpack.c.b16 %v661, %v654
  %v795 = vpack.c.b16 %v662, %v655
  %v796 = vpack.c.b16 %v663, %v656
  %v797 = vpack.c.b16 %v664, %v657
  %v798 = vpack.c.b16 %v665, %v658
  %v799 = vpack.c.b16 %v666, %v659
  %v800 = vpack.c.b16 %v674, %v667
  %v801 = vpack.c.b16 %v675, %v668
  %v802 = vpack.c.b16 %v676, %v669
  %v803 = vpack.c.b16 %v677, %v670
  %v804 = vpack.c.b16 %v678, %v671
  %v805 = vpack.c.b16 %v679, %v672
  %v806 = vpack.c.b16 %v680, %v673
  %v807 = vpack.c.b16 %v688, %v681
  %v808 = vpack.c.b16 %v689, %v682
  %v809 = vpack.c.b16 %v690, %v683
  %v810 = vpack.c.b16 %v691, %v684
  %v811 = vpack.c.b16 %v692, %v685
  %v812 = vpack.c.b16 %v693, %v686
  %v813 = vpack.c.b16 %v694, %v687
  %v814 = vpack.c.b16 %v702, %v695
  %v815 = vpack.c.b16 %v703, %v696
  %v816 = vpack.c.b16 %v704, %v697
  %v817 = vpack.c.b16 %v705, %v698
  %v818 = vpack.c.b16 %v706, %v699
  %v819 = vpack.c.b16 %v707, %v700
  %v820 = vpack.c.b16 %v708, %v701
  %v1113 = vunpack.c.l.b16 %v161
  %v1114 = vunpack.c.h.b16 %v161
  %v1115 = vunpack.c.l.b16 %v162
  %v1116 = vunpack.c.h.b16 %v162
  %v1117 = vunpack.c.l.b16 %v163
  %v1118 = vunpack.c.h.b16 %v163
  %v1119 = vunpack.c.l.b16 %v164
  %v1120 = vunpack.c.h.b16 %v164
  %v1121 = vunpack.c.l.b16 %v165
  %v1122 = vunpack.c.h.b16 %v165
  %v1123 = vunpack.c.l.b16 %v166
  %v1124 = vunpack.c.h.b16 %v166
  %v1125 = vunpack.c.l.b16 %v167
  %v1126 = vunpack.c.h.b16 %v167
  %v1127 = vunpack.c.l.b16 %v168
  %v1128 = vunpack.c.h.b16 %v168
  %v1129 = vunpack.c.l.b16 %v169
  %v1130 = vunpack.c.h.b16 %v169
  %v1131 = vunpack.c.l.b16 %v170
  %v1132 = vunpack.c.h.b16 %v170
  %v1133 = vunpack.c.l.b16 %v171
  %v1134 = vunpack.c.h.b16 %v171
  %v1135 = vunpack.c.l.b16 %v172
  %v1136 = vunpack.c.h.b16 %v172
  %v1137 = vunpack.c.l.b16 %v173
  %v1138 = vunpack.c.h.b16 %v173
  %v1139 = vunpack.c.l.b16 %v174
  %v1140 = vunpack.c.h.b16 %v174
  %v1141 = vunpack.c.l.b16 %v175
  %v1142 = vunpack.c.h.b16 %v175
  %v1143 = vunpack.c.l.b16 %v176
  %v1144 = vunpack.c.h.b16 %v176
  %v1145 = vunpack.c.l.b16 %v177
  %v1146 = vunpack.c.h.b16 %v177
  %v1147 = vunpack.c.l.b16 %v178
  %v1148 = vunpack.c.h.b16 %v178
  %v1149 = vunpack.c.l.b16 %v179
  %v1150 = vunpack.c.h.b16 %v179
  %v1151 = vunpack.c.l.b16 %v180
  %v1152 = vunpack.c.h.b16 %v180
  %v1153 = vunpack.c.l.b16 %v181
  %v1154 = vunpack.c.h.b16 %v181
  %v1155 = vunpack.c.l.b16 %v182
  %v1156 = vunpack.c.h.b16 %v182
  %v1157 = vunpack.c.l.b16 %v183
  %v1158 = vunpack.c.h.b16 %v183
  %v1159 = vunpack.c.l.b16 %v184
  %v1160 = vunpack.c.h.b16 %v184
  %v1161 = vunpack.c.l.b16 %v185
  %v1162 = vunpack.c.h.b16 %v185
  %v1163 = vunpack.c.l.b16 %v186
  %v1164 = vunpack.c.h.b16 %v186
  %v1165 = vunpack.c.l.b16 %v187
  %v1166 = vunpack.c.h.b16 %v187
  %v1167 = vunpack.c.l.b16 %v188
  %v1168 = vunpack.c.h.b16 %v188
  %v1169 = vunpack.c.l.b16 %v189
  %v1170 = vunpack.c.h.b16 %v189
  %v1171 = vunpack.c.l.b16 %v190
  %v1172 = vunpack.c.h.b16 %v190
  %v1173 = vunpack.c.l.b16 %v191
  %v1174 = vunpack.c.h.b16 %v191
  %v1175 = vunpack.c.l.b16 %v192
  %v1176 = vunpack.c.h.b16 %v192
  %v1177 = vunpack.c.l.b16 %v193
  %v1178 = vunpack.c.h.b16 %v193
  %v1179 = vunpack.c.l.b16 %v194
  %v1180 = vunpack.c.h.b16 %v194
  %v1181 = vunpack.c.l.b16 %v195
  %v1182 = vunpack.c.h.b16 %v195
  %v1183 = vunpack.c.l.b16 %v196
  %v1184 = vunpack.c.h.b16 %v196
  %v1185 = vunpack.c.l.b16 %v197
  %v1186 = vunpack.c.h.b16 %v197
  %v1187 = vunpack.c.l.b16 %v198
  %v1188 = vunpack.c.h.b16 %v198
  %v1189 = vunpack.c.l.b16 %v199
  %v1190 = vunpack.c.h.b16 %v199
  %v1191 = vunpack.c.l.b16 %v200
  %v1192 = vunpack.c.h.b16 %v200
  %v1193 = vunpack.c.l.b16 %v201
  %v1194 = vunpack.c.h.b16 %v201
  %v1195 = vunpack.c.l.b16 %v202
  %v1196 = vunpack.c.h.b16 %v202
  %v1197 = vunpack.c.l.b16 %v203
  %v1198 = vunpack.c.h.b16 %v203
  %v1199 = vunpack.c.l.b16 %v204
  %v1200 = vunpack.c.h.b16 %v204
  %v1201 = vunpack.c.l.b16 %v205
  %v1202 = vunpack.c.h.b16 %v205
  %v1203 = vunpack.c.l.b16 %v206
  %v1204 = vunpack.c.h.b16 %v206
  %v1205 = vunpack.c.l.b16 %v207
  %v1206 = vunpack.c.h.b16 %v207
  %v1207 = vunpack.c.l.b16 %v208
  %v1208 = vunpack.c.h.b16 %v208
  %v1209 = vunpack.c.l.b16 %v209
  %v1210 = vunpack.c.h.b16 %v209
  %v1211 = vunpack.c.l.b16 %v210
  %v1212 = vunpack.c.h.b16 %v210
  %v1213 = vunpack.c.l.b16 %v211
  %v1214 = vunpack.c.h.b16 %v211
  %v1215 = vunpack.c.l.b16 %v212
  %v1216 = vunpack.c.h.b16 %v212
  %v1217 = vunpack.c.l.b16 %v213
  %v1218 = vunpack.c.h.b16 %v213
  %v1219 = vunpack.c.l.b16 %v214
  %v1220 = vunpack.c.h.b16 %v214
  %v1221 = vunpack.c.l.b16 %v215
  %v1222 = vunpack.c.h.b16 %v215
  %v1223 = vunpack.c.l.b16 %v216
  %v1224 = vunpack.c.h.b16 %v216
  %v1225 = vunpack.c.l.b16 %v217
  %v1226 = vunpack.c.h.b16 %v217
  %v1227 = vunpack.c.l.b16 %v218
  %v1228 = vunpack.c.h.b16 %v218
  %v1229 = vunpack.c.l.b16 %v219
  %v1230 = vunpack.c.h.b16 %v219
  %v1231 = vunpack.c.l.b16 %v220
  %v1232 = vunpack.c.h.b16 %v220
  %v1233 = vunpack.c.l.b16 %v221
  %v1234 = vunpack.c.h.b16 %v221
  %v1235 = vunpack.c.l.b16 %v222
  %v1236 = vunpack.c.h.b16 %v222
  %v1237 = vunpack.c.l.b16 %v223
  %v1238 = vunpack.c.h.b16 %v223
  %v1239 = vunpack.c.l.b16 %v224
  %v1240 = vunpack.c.h.b16 %v224
  %v1241 = vunpack.c.l.b16 %v225
  %v1242 = vunpack.c.h.b16 %v225
  %v1243 = vunpack.c.l.b16 %v226
  %v1244 = vunpack.c.h.b16 %v226
  %v1245 = vunpack.c.l.b16 %v227
  %v1246 = vunpack.c.h.b16 %v227
  %v1247 = vunpack.c.l.b16 %v228
  %v1248 = vunpack.c.h.b16 %v228
  %v1249 = vunpack.c.l.b16 %v229
  %v1250 = vunpack.c.h.b16 %v229
  %v1251 = vunpack.c.l.b16 %v230
  %v1252 = vunpack.c.h.b16 %v230
  %v1253 = vunpack.c.l.b16 %v231
  %v1254 = vunpack.c.h.b16 %v231
  %v1255 = vunpack.c.l.b16 %v232
  %v1256 = vunpack.c.h.b16 %v232
  %v1257 = vunpack.c.l.b16 %v233
  %v1258 = vunpack.c.h.b16 %v233
  %v1259 = vunpack.c.l.b16 %v234
  %v1260 = vunpack.c.h.b16 %v234
  %v1261 = vunpack.c.l.b16 %v235
  %v1262 = vunpack.c.h.b16 %v235
  %v1263 = vunpack.c.l.b16 %v236
  %v1264 = vunpack.c.h.b16 %v236
  %v1265 = vunpack.c.l.b16 %v237
  %v1266 = vunpack.c.h.b16 %v237
  %v1267 = vunpack.c.l.b16 %v238
  %v1268 = vunpack.c.h.b16 %v238
  %v1269 = vunpack.c.l.b16 %v239
  %v1270 = vunpack.c.h.b16 %v239
  %v1271 = vunpack.c.l.b16 %v240
  %v1272 = vunpack.c.h.b16 %v240
  %v1273 = vunpack.c.l.b16 %v241
  %v1274 = vunpack.c.h.b16 %v241
  %v1275 = vunpack.c.l.b16 %v242
  %v1276 = vunpack.c.h.b16 %v242
  %v1277 = vunpack.c.l.b16 %v243
  %v1278 = vunpack.c.h.b16 %v243
  %v1279 = vunpack.c.l.b16 %v244
  %v1280 = vunpack.c.h.b16 %v244
  %v1281 = vunpack.c.l.b16 %v245
  %v1282 = vunpack.c.h.b16 %v245
  %v1283 = vunpack.c.l.b16 %v246
  %v1284 = vunpack.c.h.b16 %v246
  %v1285 = vunpack.c.l.b16 %v247
  %v1286 = vunpack.c.h.b16 %v247
  %v1287 = vunpack.c.l.b16 %v248
  %v1288 = vunpack.c.h.b16 %v248
  %v1289 = vunpack.c.l.b16 %v249
  %v1290 = vunpack.c.h.b16 %v249
  %v1291 = vunpack.c.l.b16 %v250
  %v1292 = vunpack.c.h.b16 %v250
  %v1293 = vunpack.c.l.b16 %v251
  %v1294 = vunpack.c.h.b16 %v251
  %v1295 = vunpack.c.l.b16 %v252
  %v1296 = vunpack.c.h.b16 %v252
  %v1297 = vunpack.c.l.b16 %v253
  %v1298 = vunpack.c.h.b16 %v253
  %v1299 = vunpack.c.l.b16 %v254
  %v1300 = vunpack.c.h.b16 %v254
  %v1301 = vunpack.c.l.b16 %v255
  %v1302 = vunpack.c.h.b16 %v255
  %v1303 = vunpack.c.l.b16 %v256
  %v1304 = vunpack.c.h.b16 %v256
  %v1305 = vunpack.c.l.b16 %v257
  %v1306 = vunpack.c.h.b16 %v257
  %v1307 = vunpack.c.l.b16 %v258
  %v1308 = vunpack.c.h.b16 %v258
  %v1309 = vunpack.c.l.b16 %v259
  %v1310 = vunpack.c.h.b16 %v259
  %v1311 = vunpack.c.l.b16 %v260
  %v1312 = vunpack.c.h.b16 %v260
  %v1313 = vunpack.c.l.b16 %v261
  %v1314 = vunpack.c.h.b16 %v261
  %v1315 = vunpack.c.l.b16 %v262
  %v1316 = vunpack.c.h.b16 %v262
  %v1317 = vunpack.c.l.b16 %v263
  %v1318 = vunpack.c.h.b16 %v263
  %v1319 = vunpack.c.l.b16 %v264
  %v1320 = vunpack.c.h.b16 %v264
  %v1321 = vunpack.c.l.b16 %v265
  %v1322 = vunpack.c.h.b16 %v265
  %v1323 = vunpack.c.l.b16 %v266
  %v1324 = vunpack.c.h.b16 %v266
  %v1325 = vunpack.c.l.b16 %v267
  %v1326 = vunpack.c.h.b16 %v267
  %v1327 = vunpack.c.l.b16 %v268
  %v1328 = vunpack.c.h.b16 %v268
  %v1329 = vunpack.c.l.b16 %v269
  %v1330 = vunpack.c.h.b16 %v269
  %v1331 = vunpack.c.l.b16 %v270
  %v1332 = vunpack.c.h.b16 %v270
  %v1333 = vunpack.c.l.b16 %v271
  %v1334 = vunpack.c.h.b16 %v271
  %v1335 = vunpack.c.l.b16 %v272
  %v1336 = vunpack.c.h.b16 %v272
  %v1337 = vunpack.c.l.b16 %v273
  %v1338 = vunpack.c.h.b16 %v273
  %v1339 = vunpack.c.l.b16 %v274
  %v1340 = vunpack.c.h.b16 %v274
  %v1341 = vunpack.c.l.b16 %v275
  %v1342 = vunpack.c.h.b16 %v275
  %v1343 = vunpack.c.l.b16 %v276
  %v1344 = vunpack.c.h.b16 %v276
  %v1345 = vunpack.c.l.b16 %v277
  %v1346 = vunpack.c.h.b16 %v277
  %v1347 = vunpack.c.l.b16 %v278
  %v1348 = vunpack.c.h.b16 %v278
  %v1349 = vunpack.c.l.b16 %v279
  %v1350 = vunpack.c.h.b16 %v279
  %v1351 = vunpack.c.l.b16 %v280
  %v1352 = vunpack.c.h.b16 %v280
  %v1353 = vunpack.c.l.b16 %v281
  %v1354 = vunpack.c.h.b16 %v281
  %v1355 = vunpack.c.l.b16 %v282
  %v1356 = vunpack.c.h.b16 %v282
  %v1357 = vunpack.c.l.b16 %v283
  %v1358 = vunpack.c.h.b16 %v283
  %v1359 = vunpack.c.l.b16 %v284
  %v1360 = vunpack.c.h.b16 %v284
  %v1361 = vunpack.c.l.b16 %v285
  %v1362 = vunpack.c.h.b16 %v285
  %v1363 = vunpack.c.l.b16 %v286
  %v1364 = vunpack.c.h.b16 %v286
  %v1365 = vunpack.c.l.b16 %v287
  %v1366 = vunpack.c.h.b16 %v287
  %v1367 = vunpack.c.l.b16 %v288
  %v1368 = vunpack.c.h.b16 %v288
  %v1369 = vunpack.c.l.b16 %v289
  %v1370 = vunpack.c.h.b16 %v289
  %v1371 = vunpack.c.l.b16 %v290
  %v1372 = vunpack.c.h.b16 %v290
  %v1373 = vunpack.c.l.b16 %v291
  %v1374 = vunpack.c.h.b16 %v291
  %v1375 = vunpack.c.l.b16 %v292
  %v1376 = vunpack.c.h.b16 %v292
  %v1377 = vunpack.c.l.b16 %v293
  %v1378 = vunpack.c.h.b16 %v293
  %v1379 = vunpack.c.l.b16 %v294
  %v1380 = vunpack.c.h.b16 %v294
  %v1381 = vunpack.c.l.b16 %v295
  %v1382 = vunpack.c.h.b16 %v295
  %v1383 = vunpack.c.l.b16 %v296
  %v1384 = vunpack.c.h.b16 %v296
  %v1385 = vunpack.c.l.b16 %v297
  %v1386 = vunpack.c.h.b16 %v297
  %v1387 = vunpack.c.l.b16 %v298
  %v1388 = vunpack.c.h.b16 %v298
  %v1389 = vunpack.c.l.b16 %v299
  %v1390 = vunpack.c.h.b16 %v299
  %v1391 = vunpack.c.l.b16 %v300
  %v1392 = vunpack.c.h.b16 %v300
  %v1393 = vunpack.c.l.b16 %v301
  %v1394 = vunpack.c.h.b16 %v301
  %v1395 = vunpack.c.l.b16 %v302
  %v1396 = vunpack.c.h.b16 %v302
  %v1397 = vunpack.c.l.b16 %v303
  %v1398 = vunpack.c.h.b16 %v303
  %v1399 = vunpack.c.l.b16 %v304
  %v1400 = vunpack.c.h.b16 %v304
  %v1401 = vunpack.c.l.b16 %v305
  %v1402 = vunpack.c.h.b16 %v305
  %v1403 = vunpack.c.l.b16 %v306
  %v1404 = vunpack.c.h.b16 %v306
  %v1405 = vunpack.c.l.b16 %v307
  %v1406 = vunpack.c.h.b16 %v307
  %v1407 = vunpack.c.l.b16 %v308
  %v1408 = vunpack.c.h.b16 %v308
  %v1409 = vunpack.c.l.b16 %v309
  %v1410 = vunpack.c.h.b16 %v309
  %v1411 = vunpack.c.l.b16 %v310
  %v1412 = vunpack.c.h.b16 %v310
  %v1413 = vunpack.c.l.b16 %v311
  %v1414 = vunpack.c.h.b16 %v311
  %v1415 = vunpack.c.l.b16 %v312
  %v1416 = vunpack.c.h.b16 %v312
  %v1417 = vunpack.c.l.b16 %v313
  %v1418 = vunpack.c.h.b16 %v313
  %v1419 = vunpack.c.l.b16 %v314
  %v1420 = vunpack.c.h.b16 %v314
  %v1421 = vunpack.c.l.b16 %v315
  %v1422 = vunpack.c.h.b16 %v315
  %v1423 = vunpack.c.l.b16 %v316
  %v1424 = vunpack.c.h.b16 %v316
  %v1425 = vunpack.c.l.b16 %v317
  %v1426 = vunpack.c.h.b16 %v317
  %v1427 = vunpack.c.l.b16 %v318
  %v1428 = vunpack.c.h.b16 %v318
  %v1429 = vunpack.c.l.b16 %v319
  %v1430 = vunpack.c.h.b16 %v319
  %v1431 = vunpack.c.l.b16 %v320
  %v1432 = vunpack.c.h.b16 %v320
  %v1433 = vunpack.c.l.b16 %v321
  %v1434 = vunpack.c.h.b16 %v321
  %v1435 = vunpack.c.l.b16 %v322
  %v1436 = vunpack.c.h.b16 %v322
  %v1437 = vunpack.c.l.b16 %v323
  %v1438 = vunpack.c.h.b16 %v323
  %v1439 = vunpack.c.l.b16 %v324
  %v1440 = vunpack.c.h.b16 %v324
  %v1441 = vunpack.c.l.b16 %v325
  %v1442 = vunpack.c.h.b16 %v325
  %v1443 = vunpack.c.l.b16 %v326
  %v1444 = vunpack.c.h.b16 %v326
  %v1445 = vunpack.c.l.b16 %v327
  %v1446 = vunpack.c.h.b16 %v327
  %v1447 = vunpack.c.l.b16 %v328
  %v1448 = vunpack.c.h.b16 %v328
  %v1449 = vunpack.c.l.b16 %v329
  %v1450 = vunpack.c.h.b16 %v329
  %v1451 = vunpack.c.l.b16 %v330
  %v1452 = vunpack.c.h.b16 %v330
  %v1453 = vunpack.c.l.b16 %v331
  %v1454 = vunpack.c.h.b16 %v331
  %v1455 = vunpack.c.l.b16 %v332
  %v1456 = vunpack.c.h.b16 %v332
  %v1457 = vunpack.c.l.b16 %v333
  %v1458 = vunpack.c.h.b16 %v333
  %v1459 = vunpack.c.l.b16 %v334
  %v1460 = vunpack.c.h.b16 %v334
  %v1461 = vunpack.c.l.b16 %v335
  %v1462 = vunpack.c.h.b16 %v335
  %v1463 = vunpack.c.l.b16 %v336
  %v1464 = vunpack.c.h.b16 %v336
  %v1465 = vunpack.c.l.b16 %v337
  %v1466 = vunpack.c.h.b16 %v337
  %v1467 = vunpack.c.l.b16 %v338
  %v1468 = vunpack.c.h.b16 %v338
  %v1469 = vunpack.c.l.b16 %v339
  %v1470 = vunpack.c.h.b16 %v339
  %v1471 = vunpack.c.l.b16 %v340
  %v1472 = vunpack.c.h.b16 %v340
  %v1473 = vunpack.c.l.b16 %v341
  %v1474 = vunpack.c.h.b16 %v341
  %v1475 = vunpack.c.l.b16 %v342
  %v1476 = vunpack.c.h.b16 %v342
  %v1477 = vunpack.c.l.b16 %v343
  %v1478 = vunpack.c.h.b16 %v343
  %v1479 = vunpack.c.l.b16 %v344
  %v1480 = vunpack.c.h.b16 %v344
  %v1481 = vunpack.c.l.b16 %v345
  %v1482 = vunpack.c.h.b16 %v345
  %v1483 = vunpack.c.l.b16 %v346
  %v1484 = vunpack.c.h.b16 %v346
  %v1485 = vunpack.c.l.b16 %v347
  %v1486 = vunpack.c.h.b16 %v347
  %v1487 = vunpack.c.l.b16 %v348
  %v1488 = vunpack.c.h.b16 %v348
  %v1489 = vunpack.c.l.b16 %v349
  %v1490 = vunpack.c.h.b16 %v349
  %v1491 = vunpack.c.l.b16 %v350
  %v1492 = vunpack.c.h.b16 %v350
  %v1493 = vunpack.c.l.b16 %v351
  %v1494 = vunpack.c.h.b16 %v351
  %v1495 = vunpack.c.l.b16 %v352
  %v1496 = vunpack.c.h.b16 %v352
  %v1497 = vunpack.c.l.b16 %v353
  %v1498 = vunpack.c.h.b16 %v353
  %v1499 = vunpack.c.l.b16 %v354
  %v1500 = vunpack.c.h.b16 %v354
  %v1501 = vunpack.c.l.b16 %v355
  %v1502 = vunpack.c.h.b16 %v355
  %v1503 = vunpack.c.l.b16 %v356
  %v1504 = vunpack.c.h.b16 %v356
  %v1505 = vpack.c.b16 %v1117, %v1113
  %v1506 = vpack.c.b16 %v1118, %v1114
  %v1507 = vpack.c.b16 %v1119, %v1115
  %v1508 = vpack.c.b16 %v1120, %v1116
  %v1509 = vpack.c.b16 %v1125, %v1121
  %v1510 = vpack.c.b16 %v1126, %v1122
  %v1511 = vpack.c.b16 %v1127, %v1123
  %v1512 = vpack.c.b16 %v1128, %v1124
  %v1513 = vpack.c.b16 %v1133, %v1129
  %v1514 = vpack.c.b16 %v1134, %v1130
  %v1515 = vpack.c.b16 %v1135, %v1131
  %v1516 = vpack.c.b16 %v1136, %v1132
  %v1517 = vpack.c.b16 %v1141, %v1137
  %v1518 = vpack.c.b16 %v1142, %v1138
  %v1519 = vpack.c.b16 %v1143, %v1139
  %v1520 = vpack.c.b16 %v1144, %v1140
  %v1521 = vpack.c.b16 %v1149, %v1145
  %v1522 = vpack.c.b16 %v1150, %v1146
  %v1523 = vpack.c.b16 %v1151, %v1147
  %v1524 = vpack.c.b16 %v1152, %v1148
  %v1525 = vpack.c.b16 %v1157, %v1153
  %v1526 = vpack.c.b16 %v1158, %v1154
  %v1527 = vpack.c.b16 %v1159, %v1155
  %v1528 = vpack.c.b16 %v1160, %v1156
  %v1529 = vpack.c.b16 %v1165, %v1161
  %v1530 = vpack.c.b16 %v1166, %v1162
  %v1531 = vpack.c.b16 %v1167, %v1163
  %v1532 = vpack.c.b16 %v1168, %v1164
  %v1533 = vpack.c.b16 %v1173, %v1169
  %v1534 = vpack.c.b16 %v1174, %v1170
  %v1535 = vpack.c.b16 %v1175, %v1171
  %v1536 = vpack.c.b16 %v1176, %v1172
  %v1537 = vpack.c.b16 %v1181, %v1177
  %v1538 = vpack.c.b16 %v1182, %v1178
  %v1539 = vpack.c.b16 %v1183, %v1179
  %v1540 = vpack.c.b16 %v1184, %v1180
  %v1541 = vpack.c.b16 %v1189, %v1185
  %v1542 = vpack.c.b16 %v1190, %v1186
  %v1543 = vpack.c.b16 %v1191, %v1187
  %v1544 = vpack.c.b16 %v1192, %v1188
  %v1545 = vpack.c.b16 %v1197, %v1193
  %v1546 = vpack.c.b16 %v1198, %v1194
  %v1547 = vpack.c.b16 %v1199, %v1195
  %v1548 = vpack.c.b16 %v1200, %v1196
  %v1549 = vpack.c.b16 %v1205, %v1201
  %v1550 = vpack.c.b16 %v1206, %v1202
  %v1551 = vpack.c.b16 %v1207, %v1203
  %v1552 = vpack.c.b16 %v1208, %v1204
  %v1553 = vpack.c.b16 %v1213, %v1209
  %v1554 = vpack.c.b16 %v1214, %v1210
  %v1555 = vpack.c.b16 %v1215, %v1211
  %v1556 = vpack.c.b16 %v1216, %v1212
  %v1557 = vpack.c.b16 %v1221, %v1217
  %v1558 = vpack.c.b16 %v1222, %v1218
  %v1559 = vpack.c.b16 %v1223, %v1219
  %v1560 = vpack.c.b16 %v1224, %v1220
  %v1561 = vpack.c.b16 %v1229, %v1225
  %v1562 = vpack.c.b16 %v1230, %v1226
  %v1563 = vpack.c.b16 %v1231, %v1227
  %v1564 = vpack.c.b16 %v1232, %v1228
  %v1565 = vpack.c.b16 %v1237, %v1233
  %v1566 = vpack.c.b16 %v1238, %v1234
  %v1567 = vpack.c.b16 %v1239, %v1235
  %v1568 = vpack.c.b16 %v1240, %v1236
  %v1569 = vpack.c.b16 %v1245, %v1241
  %v1570 = vpack.c.b16 %v1246, %v1242
  %v1571 = vpack.c.b16 %v1247, %v1243
  %v1572 = vpack.c.b16 %v1248, %v1244
  %v1573 = vpack.c.b16 %v1253, %v1249
  %v1574 = vpack.c.b16 %v1254, %v1250
  %v1575 = vpack.c.b16 %v1255, %v1251
  %v1576 = vpack.c.b16 %v1256, %v1252
  %v1577 = vpack.c.b16 %v1261, %v1257
  %v1578 = vpack.c.b16 %v1262, %v1258
  %v1579 = vpack.c.b16 %v1263, %v1259
  %v1580 = vpack.c.b16 %v1264, %v1260
  %v1581 = vpack.c.b16 %v1269, %v1265
  %v1582 = vpack.c.b16 %v1270, %v1266
  %v1583 = vpack.c.b16 %v1271, %v1267
  %v1584 = vpack.c.b16 %v1272, %v1268
  %v1585 = vpack.c.b16 %v1277, %v1273
  %v1586 = vpack.c.b16 %v1278, %v1274
  %v1587 = vpack.c.b16 %v1279, %v1275
  %v1588 = vpack.c.b16 %v1280, %v1276
  %v1589 = vpack.c.b16 %v1285, %v1281
  %v1590 = vpack.c.b16 %v1286, %v1282
  %v1591 = vpack.c.b16 %v1287, %v1283
  %v1592 = vpack.c.b16 %v1288, %v1284
  %v1593 = vpack.c.b16 %v1293, %v1289
  %v1594 = vpack.c.b16 %v1294, %v1290
  %v1595 = vpack.c.b16 %v1295, %v1291
  %v1596 = vpack.c.b16 %v1296, %v1292
  %v1597 = vpack.c.b16 %v1301, %v1297
  %v1598 = vpack.c.b16 %v1302, %v1298
  %v1599 = vpack.c.b16 %v1303, %v1299
  %v1600 = vpack.c.b16 %v1304, %v1300
  %v1601 = vpack.c.b16 %v1309, %v1305
  %v1602 = vpack.c.b16 %v1310, %v1306
  %v1603 = vpack.c.b16 %v1311, %v1307
  %v1604 = vpack.c.b16 %v1312, %v1308
  %v1605 = vpack.c.b16 %v1317, %v1313
  %v1606 = vpack.c.b16 %v1318, %v1314
  %v1607 = vpack.c.b16 %v1319, %v1315
  %v1608 = vpack.c.b16 %v1320, %v1316
  %v1609 = vpack.c.b16 %v1325, %v1321
  %v1610 = vpack.c.b16 %v1326, %v1322
  %v1611 = vpack.c.b16 %v1327, %v1323
  %v1612 = vpack.c.b16 %v1328, %v1324
  %v1613 = vpack.c.b16 %v1333, %v1329
  %v1614 = vpack.c.b16 %v1334, %v1330
  %v1615 = vpack.c.b16 %v1335, %v1331
  %v1616 = vpack.c.b16 %v1336, %v1332
  %v1617 = vpack.c.b16 %v1341, %v1337
  %v1618 = vpack.c.b16 %v1342, %v1338
  %v1619 = vpack.c.b16 %v1343, %v1339
  %v1620 = vpack.c.b16 %v1344, %v1340
  %v1621 = vpack.c.b16 %v1349, %v1345
  %v1622 = vpack.c.b16 %v1350, %v1346
  %v1623 = vpack.c.b16 %v1351, %v1347
  %v1624 = vpack.c.b16 %v1352, %v1348
  %v1625 = vpack.c.b16 %v1357, %v1353
  %v1626 = vpack.c.b16 %v1358, %v1354
  %v1627 = vpack.c.b16 %v1359, %v1355
  %v1628 = vpack.c.b16 %v1360, %v1356
  %v1629 = vpack.c.b16 %v1365, %v1361
  %v1630 = vpack.c.b16 %v1366, %v1362
  %v1631 = vpack.c.b16 %v1367, %v1363
  %v1632 = vpack.c.b16 %v1368, %v1364
  %v1633 = vpack.c.b16 %v1373, %v1369
  %v1634 = vpack.c.b16 %v1374, %v1370
  %v1635 = vpack.c.b16 %v1375, %v1371
  %v1636 = vpack.c.b16 %v1376, %v1372
  %v1637 = vpack.c.b16 %v1381, %v1377
  %v1638 = vpack.c.b16 %v1382, %v1378
  %v1639 = vpack.c.b16 %v1383, %v1379
  %v1640 = vpack.c.b16 %v1384, %v1380
  %v1641 = vpack.c.b16 %v1389, %v1385
  %v1642 = vpack.c.b16 %v1390, %v1386
  %v1643 = vpack.c.b16 %v1391, %v1387
  %v1644 = vpack.c.b16 %v1392, %v1388
  %v1645 = vpack.c.b16 %v1397, %v1393
  %v1646 = vpack.c.b16 %v1398, %v1394
  %v1647 = vpack.c.b16 %v1399, %v1395
  %v1648 = vpack.c.b16 %v1400, %v1396
  %v1649 = vpack.c.b16 %v1405, %v1401
  %v1650 = vpack.c.b16 %v1406, %v1402
  %v1651 = vpack.c.b16 %v1407, %v1403
  %v1652 = vpack.c.b16 %v1408, %v1404
  %v1653 = vpack.c.b16 %v1413, %v1409
  %v1654 = vpack.c.b16 %v1414, %v1410
  %v1655 = vpack.c.b16 %v1415, %v1411
  %v1656 = vpack.c.b16 %v1416, %v1412
  %v1657 = vpack.c.b16 %v1421, %v1417
  %v1658 = vpack.c.b16 %v1422, %v1418
  %v1659 = vpack.c.b16 %v1423, %v1419
  %v1660 = vpack.c.b16 %v1424, %v1420
  %v1661 = vpack.c.b16 %v1429, %v1425
  %v1662 = vpack.c.b16 %v1430, %v1426
  %v1663 = vpack.c.b16 %v1431, %v1427
  %v1664 = vpack.c.b16 %v1432, %v1428
  %v1665 = vpack.c.b16 %v1437, %v1433
  %v1666 = vpack.c.b16 %v1438, %v1434
  %v1667 = vpack.c.b16 %v1439, %v1435
  %v1668 = vpack.c.b16 %v1440, %v1436
  %v1669 = vpack.c.b16 %v1445, %v1441
  %v1670 = vpack.c.b16 %v1446, %v1442
  %v1671 = vpack.c.b16 %v1447, %v1443
  %v1672 = vpack.c.b16 %v1448, %v1444
  %v1673 = vpack.c.b16 %v1453, %v1449
  %v1674 = vpack.c.b16 %v1454, %v1450
  %v1675 = vpack.c.b16 %v1455, %v1451
  %v1676 = vpack.c.b16 %v1456, %v1452
  %v1677 = vpack.c.b16 %v1461, %v1457
  %v1678 = vpack.c.b16 %v1462, %v1458
  %v1679 = vpack.c.b16 %v1463, %v1459
  %v1680 = vpack.c.b16 %v1464, %v1460
  %v1681 = vpack.c.b16 %v1469, %v1465
  %v1682 = vpack.c.b16 %v1470, %v1466
  %v1683 = vpack.c.b16 %v1471, %v1467
  %v1684 = vpack.c.b16 %v1472, %v1468
  %v1685 = vpack.c.b16 %v1477, %v1473
  %v1686 = vpack.c.b16 %v1478, %v1474
  %v1687 = vpack.c.b16 %v1479, %v1475
  %v1688 = vpack.c.b16 %v1480, %v1476
  %v1689 = vpack.c.b16 %v1485, %v1481
  %v1690 = vpack.c.b16 %v1486, %v1482
  %v1691 = vpack.c.b16 %v1487, %v1483
  %v1692 = vpack.c.b16 %v1488, %v1484
  %v1693 = vpack.c.b16 %v1493, %v1489
  %v1694 = vpack.c.b16 %v1494, %v1490
  %v1695 = vpack.c.b16 %v1495, %v1491
  %v1696 = vpack.c.b16 %v1496, %v1492
  %v1697 = vpack.c.b16 %v1501, %v1497
  %v1698 = vpack.c.b16 %v1502, %v1498
  %v1699 = vpack.c.b16 %v1503, %v1499
  %v1700 = vpack.c.b16 %v1504, %v1500
  %vm1897 = vcmask 130048
  %v1899 = vsel %vm1897, %v715, 0
  %v1902 = vsel %vm1897, %v722, 0
  %v1905 = vsel %vm1897, %v729, 0
  %v1908 = vsel %vm1897, %v736, 0
  %v1911 = vsel %vm1897, %v743, 0
  %v1914 = vsel %vm1897, %v750, 0
  %v1917 = vsel %vm1897, %v757, 0
  %v1920 = vsel %vm1897, %v764, 0
  %v1923 = vsel %vm1897, %v771, 0
  %v1926 = vsel %vm1897, %v778, 0
  %v1929 = vsel %vm1897, %v785, 0
  %v1932 = vsel %vm1897, %v792, 0
  %v1935 = vsel %vm1897, %v799, 0
  %v1938 = vsel %vm1897, %v806, 0
  %v1941 = vsel %vm1897, %v813, 0
  %v1944 = vsel %vm1897, %v820, 0
  %1946 = vmatpush.bf16.msra.mxu0 %v1533
  %1947 = vmatpush.bf16.msra.mxu0 %v1529
  %1948 = vmatpush.bf16.msra.mxu0 %v1525
  %1949 = vmatpush.bf16.msra.mxu0 %v1521
  %1950 = vmatpush.bf16.msra.mxu0 %v1517
  %1951 = vmatpush.bf16.msra.mxu0 %v1513
  %1952 = vmatpush.bf16.msra.mxu0 %v1509
  %1953 = vmatpush.bf16.msra.mxu0 %v1505
  %1954 = vmatmul.bf16.gmra.mxu0 %v709
  %v1955 = vpop.f32.mrf.mxu0
  %v1956 = vadd.f32 0.0, %v1955
  %v1957 = vpop.f32.mrf.mxu0
  %v1958 = vadd.f32 0.0, %v1957
  %1959 = vmatmul.bf16.gmra.mxu0 %v716
  %v1960 = vpop.f32.mrf.mxu0
  %v1961 = vadd.f32 0.0, %v1960
  %v1962 = vpop.f32.mrf.mxu0
  %v1963 = vadd.f32 0.0, %v1962
  %1964 = vmatmul.bf16.gmra.mxu0 %v723
  %v1965 = vpop.f32.mrf.mxu0
  %v1966 = vadd.f32 0.0, %v1965
  %v1967 = vpop.f32.mrf.mxu0
  %v1968 = vadd.f32 0.0, %v1967
  %1969 = vmatmul.bf16.gmra.mxu0 %v730
  %v1970 = vpop.f32.mrf.mxu0
  %v1971 = vadd.f32 0.0, %v1970
  %v1972 = vpop.f32.mrf.mxu0
  %v1973 = vadd.f32 0.0, %v1972
  %1974 = vmatmul.bf16.gmra.mxu0 %v737
  %v1975 = vpop.f32.mrf.mxu0
  %v1976 = vadd.f32 0.0, %v1975
  %v1977 = vpop.f32.mrf.mxu0
  %v1978 = vadd.f32 0.0, %v1977
  %1979 = vmatmul.bf16.gmra.mxu0 %v744
  %v1980 = vpop.f32.mrf.mxu0
  %v1981 = vadd.f32 0.0, %v1980
  %v1982 = vpop.f32.mrf.mxu0
  %v1983 = vadd.f32 0.0, %v1982
  %1984 = vmatmul.bf16.gmra.mxu0 %v751
  %v1985 = vpop.f32.mrf.mxu0
  %v1986 = vadd.f32 0.0, %v1985
  %v1987 = vpop.f32.mrf.mxu0
  %v1988 = vadd.f32 0.0, %v1987
  %1989 = vmatmul.bf16.gmra.mxu0 %v758
  %v1990 = vpop.f32.mrf.mxu0
  %v1991 = vadd.f32 0.0, %v1990
  %v1992 = vpop.f32.mrf.mxu0
  %v1993 = vadd.f32 0.0, %v1992
  %1994 = vmatmul.bf16.gmra.mxu0 %v765
  %v1995 = vpop.f32.mrf.mxu0
  %v1996 = vadd.f32 0.0, %v1995
  %v1997 = vpop.f32.mrf.mxu0
  %v1998 = vadd.f32 0.0, %v1997
  %1999 = vmatmul.bf16.gmra.mxu0 %v772
  %v2000 = vpop.f32.mrf.mxu0
  %v2001 = vadd.f32 0.0, %v2000
  %v2002 = vpop.f32.mrf.mxu0
  %v2003 = vadd.f32 0.0, %v2002
  %2004 = vmatmul.bf16.gmra.mxu0 %v779
  %v2005 = vpop.f32.mrf.mxu0
  %v2006 = vadd.f32 0.0, %v2005
  %v2007 = vpop.f32.mrf.mxu0
  %v2008 = vadd.f32 0.0, %v2007
  %2009 = vmatmul.bf16.gmra.mxu0 %v786
  %v2010 = vpop.f32.mrf.mxu0
  %v2011 = vadd.f32 0.0, %v2010
  %v2012 = vpop.f32.mrf.mxu0
  %v2013 = vadd.f32 0.0, %v2012
  %2014 = vmatmul.bf16.gmra.mxu0 %v793
  %v2015 = vpop.f32.mrf.mxu0
  %v2016 = vadd.f32 0.0, %v2015
  %v2017 = vpop.f32.mrf.mxu0
  %v2018 = vadd.f32 0.0, %v2017
  %2019 = vmatmul.bf16.gmra.mxu0 %v800
  %v2020 = vpop.f32.mrf.mxu0
  %v2021 = vadd.f32 0.0, %v2020
  %v2022 = vpop.f32.mrf.mxu0
  %v2023 = vadd.f32 0.0, %v2022
  %2024 = vmatmul.bf16.gmra.mxu0 %v807
  %v2025 = vpop.f32.mrf.mxu0
  %v2026 = vadd.f32 0.0, %v2025
  %v2027 = vpop.f32.mrf.mxu0
  %v2028 = vadd.f32 0.0, %v2027
  %2029 = vmatmul.bf16.gmra.mxu0 %v814
  %v2030 = vpop.f32.mrf.mxu0
  %v2031 = vadd.f32 0.0, %v2030
  %v2032 = vpop.f32.mrf.mxu0
  %v2033 = vadd.f32 0.0, %v2032
  %2034 = vdwg.mxu0
  %2035 = vmatpush.bf16.msra.mxu0 %v1565
  %2036 = vmatpush.bf16.msra.mxu0 %v1561
  %2037 = vmatpush.bf16.msra.mxu0 %v1557
  %2038 = vmatpush.bf16.msra.mxu0 %v1553
  %2039 = vmatpush.bf16.msra.mxu0 %v1549
  %2040 = vmatpush.bf16.msra.mxu0 %v1545
  %2041 = vmatpush.bf16.msra.mxu0 %v1541
  %2042 = vmatpush.bf16.msra.mxu0 %v1537
  %2043 = vmatmul.bf16.gmra.mxu0 %v710
  %v2044 = vpop.f32.mrf.mxu0
  %v2045 = vadd.f32 %v1956, %v2044
  %v2046 = vpop.f32.mrf.mxu0
  %v2047 = vadd.f32 %v1958, %v2046
  %2048 = vmatmul.bf16.gmra.mxu0 %v717
  %v2049 = vpop.f32.mrf.mxu0
  %v2050 = vadd.f32 %v1961, %v2049
  %v2051 = vpop.f32.mrf.mxu0
  %v2052 = vadd.f32 %v1963, %v2051
  %2053 = vmatmul.bf16.gmra.mxu0 %v724
  %v2054 = vpop.f32.mrf.mxu0
  %v2055 = vadd.f32 %v1966, %v2054
  %v2056 = vpop.f32.mrf.mxu0
  %v2057 = vadd.f32 %v1968, %v2056
  %2058 = vmatmul.bf16.gmra.mxu0 %v731
  %v2059 = vpop.f32.mrf.mxu0
  %v2060 = vadd.f32 %v1971, %v2059
  %v2061 = vpop.f32.mrf.mxu0
  %v2062 = vadd.f32 %v1973, %v2061
  %2063 = vmatmul.bf16.gmra.mxu0 %v738
  %v2064 = vpop.f32.mrf.mxu0
  %v2065 = vadd.f32 %v1976, %v2064
  %v2066 = vpop.f32.mrf.mxu0
  %v2067 = vadd.f32 %v1978, %v2066
  %2068 = vmatmul.bf16.gmra.mxu0 %v745
  %v2069 = vpop.f32.mrf.mxu0
  %v2070 = vadd.f32 %v1981, %v2069
  %v2071 = vpop.f32.mrf.mxu0
  %v2072 = vadd.f32 %v1983, %v2071
  %2073 = vmatmul.bf16.gmra.mxu0 %v752
  %v2074 = vpop.f32.mrf.mxu0
  %v2075 = vadd.f32 %v1986, %v2074
  %v2076 = vpop.f32.mrf.mxu0
  %v2077 = vadd.f32 %v1988, %v2076
  %2078 = vmatmul.bf16.gmra.mxu0 %v759
  %v2079 = vpop.f32.mrf.mxu0
  %v2080 = vadd.f32 %v1991, %v2079
  %v2081 = vpop.f32.mrf.mxu0
  %v2082 = vadd.f32 %v1993, %v2081
  %2083 = vmatmul.bf16.gmra.mxu0 %v766
  %v2084 = vpop.f32.mrf.mxu0
  %v2085 = vadd.f32 %v1996, %v2084
  %v2086 = vpop.f32.mrf.mxu0
  %v2087 = vadd.f32 %v1998, %v2086
  %2088 = vmatmul.bf16.gmra.mxu0 %v773
  %v2089 = vpop.f32.mrf.mxu0
  %v2090 = vadd.f32 %v2001, %v2089
  %v2091 = vpop.f32.mrf.mxu0
  %v2092 = vadd.f32 %v2003, %v2091
  %2093 = vmatmul.bf16.gmra.mxu0 %v780
  %v2094 = vpop.f32.mrf.mxu0
  %v2095 = vadd.f32 %v2006, %v2094
  %v2096 = vpop.f32.mrf.mxu0
  %v2097 = vadd.f32 %v2008, %v2096
  %2098 = vmatmul.bf16.gmra.mxu0 %v787
  %v2099 = vpop.f32.mrf.mxu0
  %v2100 = vadd.f32 %v2011, %v2099
  %v2101 = vpop.f32.mrf.mxu0
  %v2102 = vadd.f32 %v2013, %v2101
  %2103 = vmatmul.bf16.gmra.mxu0 %v794
  %v2104 = vpop.f32.mrf.mxu0
  %v2105 = vadd.f32 %v2016, %v2104
  %v2106 = vpop.f32.mrf.mxu0
  %v2107 = vadd.f32 %v2018, %v2106
  %2108 = vmatmul.bf16.gmra.mxu0 %v801
  %v2109 = vpop.f32.mrf.mxu0
  %v2110 = vadd.f32 %v2021, %v2109
  %v2111 = vpop.f32.mrf.mxu0
  %v2112 = vadd.f32 %v2023, %v2111
  %2113 = vmatmul.bf16.gmra.mxu0 %v808
  %v2114 = vpop.f32.mrf.mxu0
  %v2115 = vadd.f32 %v2026, %v2114
  %v2116 = vpop.f32.mrf.mxu0
  %v2117 = vadd.f32 %v2028, %v2116
  %2118 = vmatmul.bf16.gmra.mxu0 %v815
  %v2119 = vpop.f32.mrf.mxu0
  %v2120 = vadd.f32 %v2031, %v2119
  %v2121 = vpop.f32.mrf.mxu0
  %v2122 = vadd.f32 %v2033, %v2121
  %2123 = vdwg.mxu0
  %2124 = vmatpush.bf16.msra.mxu0 %v1597
  %2125 = vmatpush.bf16.msra.mxu0 %v1593
  %2126 = vmatpush.bf16.msra.mxu0 %v1589
  %2127 = vmatpush.bf16.msra.mxu0 %v1585
  %2128 = vmatpush.bf16.msra.mxu0 %v1581
  %2129 = vmatpush.bf16.msra.mxu0 %v1577
  %2130 = vmatpush.bf16.msra.mxu0 %v1573
  %2131 = vmatpush.bf16.msra.mxu0 %v1569
  %2132 = vmatmul.bf16.gmra.mxu0 %v711
  %v2133 = vpop.f32.mrf.mxu0
  %v2134 = vadd.f32 %v2045, %v2133
  %v2135 = vpop.f32.mrf.mxu0
  %v2136 = vadd.f32 %v2047, %v2135
  %2137 = vmatmul.bf16.gmra.mxu0 %v718
  %v2138 = vpop.f32.mrf.mxu0
  %v2139 = vadd.f32 %v2050, %v2138
  %v2140 = vpop.f32.mrf.mxu0
  %v2141 = vadd.f32 %v2052, %v2140
  %2142 = vmatmul.bf16.gmra.mxu0 %v725
  %v2143 = vpop.f32.mrf.mxu0
  %v2144 = vadd.f32 %v2055, %v2143
  %v2145 = vpop.f32.mrf.mxu0
  %v2146 = vadd.f32 %v2057, %v2145
  %2147 = vmatmul.bf16.gmra.mxu0 %v732
  %v2148 = vpop.f32.mrf.mxu0
  %v2149 = vadd.f32 %v2060, %v2148
  %v2150 = vpop.f32.mrf.mxu0
  %v2151 = vadd.f32 %v2062, %v2150
  %2152 = vmatmul.bf16.gmra.mxu0 %v739
  %v2153 = vpop.f32.mrf.mxu0
  %v2154 = vadd.f32 %v2065, %v2153
  %v2155 = vpop.f32.mrf.mxu0
  %v2156 = vadd.f32 %v2067, %v2155
  %2157 = vmatmul.bf16.gmra.mxu0 %v746
  %v2158 = vpop.f32.mrf.mxu0
  %v2159 = vadd.f32 %v2070, %v2158
  %v2160 = vpop.f32.mrf.mxu0
  %v2161 = vadd.f32 %v2072, %v2160
  %2162 = vmatmul.bf16.gmra.mxu0 %v753
  %v2163 = vpop.f32.mrf.mxu0
  %v2164 = vadd.f32 %v2075, %v2163
  %v2165 = vpop.f32.mrf.mxu0
  %v2166 = vadd.f32 %v2077, %v2165
  %2167 = vmatmul.bf16.gmra.mxu0 %v760
  %v2168 = vpop.f32.mrf.mxu0
  %v2169 = vadd.f32 %v2080, %v2168
  %v2170 = vpop.f32.mrf.mxu0
  %v2171 = vadd.f32 %v2082, %v2170
  %2172 = vmatmul.bf16.gmra.mxu0 %v767
  %v2173 = vpop.f32.mrf.mxu0
  %v2174 = vadd.f32 %v2085, %v2173
  %v2175 = vpop.f32.mrf.mxu0
  %v2176 = vadd.f32 %v2087, %v2175
  %2177 = vmatmul.bf16.gmra.mxu0 %v774
  %v2178 = vpop.f32.mrf.mxu0
  %v2179 = vadd.f32 %v2090, %v2178
  %v2180 = vpop.f32.mrf.mxu0
  %v2181 = vadd.f32 %v2092, %v2180
  %2182 = vmatmul.bf16.gmra.mxu0 %v781
  %v2183 = vpop.f32.mrf.mxu0
  %v2184 = vadd.f32 %v2095, %v2183
  %v2185 = vpop.f32.mrf.mxu0
  %v2186 = vadd.f32 %v2097, %v2185
  %2187 = vmatmul.bf16.gmra.mxu0 %v788
  %v2188 = vpop.f32.mrf.mxu0
  %v2189 = vadd.f32 %v2100, %v2188
  %v2190 = vpop.f32.mrf.mxu0
  %v2191 = vadd.f32 %v2102, %v2190
  %2192 = vmatmul.bf16.gmra.mxu0 %v795
  %v2193 = vpop.f32.mrf.mxu0
  %v2194 = vadd.f32 %v2105, %v2193
  %v2195 = vpop.f32.mrf.mxu0
  %v2196 = vadd.f32 %v2107, %v2195
  %2197 = vmatmul.bf16.gmra.mxu0 %v802
  %v2198 = vpop.f32.mrf.mxu0
  %v2199 = vadd.f32 %v2110, %v2198
  %v2200 = vpop.f32.mrf.mxu0
  %v2201 = vadd.f32 %v2112, %v2200
  %2202 = vmatmul.bf16.gmra.mxu0 %v809
  %v2203 = vpop.f32.mrf.mxu0
  %v2204 = vadd.f32 %v2115, %v2203
  %v2205 = vpop.f32.mrf.mxu0
  %v2206 = vadd.f32 %v2117, %v2205
  %2207 = vmatmul.bf16.gmra.mxu0 %v816
  %v2208 = vpop.f32.mrf.mxu0
  %v2209 = vadd.f32 %v2120, %v2208
  %v2210 = vpop.f32.mrf.mxu0
  %v2211 = vadd.f32 %v2122, %v2210
  %2212 = vdwg.mxu0
  %2213 = vmatpush.bf16.msra.mxu0 %v1629
  %2214 = vmatpush.bf16.msra.mxu0 %v1625
  %2215 = vmatpush.bf16.msra.mxu0 %v1621
  %2216 = vmatpush.bf16.msra.mxu0 %v1617
  %2217 = vmatpush.bf16.msra.mxu0 %v1613
  %2218 = vmatpush.bf16.msra.mxu0 %v1609
  %2219 = vmatpush.bf16.msra.mxu0 %v1605
  %2220 = vmatpush.bf16.msra.mxu0 %v1601
  %2221 = vmatmul.bf16.gmra.mxu0 %v712
  %v2222 = vpop.f32.mrf.mxu0
  %v2223 = vadd.f32 %v2134, %v2222
  %v2224 = vpop.f32.mrf.mxu0
  %v2225 = vadd.f32 %v2136, %v2224
  %2226 = vmatmul.bf16.gmra.mxu0 %v719
  %v2227 = vpop.f32.mrf.mxu0
  %v2228 = vadd.f32 %v2139, %v2227
  %v2229 = vpop.f32.mrf.mxu0
  %v2230 = vadd.f32 %v2141, %v2229
  %2231 = vmatmul.bf16.gmra.mxu0 %v726
  %v2232 = vpop.f32.mrf.mxu0
  %v2233 = vadd.f32 %v2144, %v2232
  %v2234 = vpop.f32.mrf.mxu0
  %v2235 = vadd.f32 %v2146, %v2234
  %2236 = vmatmul.bf16.gmra.mxu0 %v733
  %v2237 = vpop.f32.mrf.mxu0
  %v2238 = vadd.f32 %v2149, %v2237
  %v2239 = vpop.f32.mrf.mxu0
  %v2240 = vadd.f32 %v2151, %v2239
  %2241 = vmatmul.bf16.gmra.mxu0 %v740
  %v2242 = vpop.f32.mrf.mxu0
  %v2243 = vadd.f32 %v2154, %v2242
  %v2244 = vpop.f32.mrf.mxu0
  %v2245 = vadd.f32 %v2156, %v2244
  %2246 = vmatmul.bf16.gmra.mxu0 %v747
  %v2247 = vpop.f32.mrf.mxu0
  %v2248 = vadd.f32 %v2159, %v2247
  %v2249 = vpop.f32.mrf.mxu0
  %v2250 = vadd.f32 %v2161, %v2249
  %2251 = vmatmul.bf16.gmra.mxu0 %v754
  %v2252 = vpop.f32.mrf.mxu0
  %v2253 = vadd.f32 %v2164, %v2252
  %v2254 = vpop.f32.mrf.mxu0
  %v2255 = vadd.f32 %v2166, %v2254
  %2256 = vmatmul.bf16.gmra.mxu0 %v761
  %v2257 = vpop.f32.mrf.mxu0
  %v2258 = vadd.f32 %v2169, %v2257
  %v2259 = vpop.f32.mrf.mxu0
  %v2260 = vadd.f32 %v2171, %v2259
  %2261 = vmatmul.bf16.gmra.mxu0 %v768
  %v2262 = vpop.f32.mrf.mxu0
  %v2263 = vadd.f32 %v2174, %v2262
  %v2264 = vpop.f32.mrf.mxu0
  %v2265 = vadd.f32 %v2176, %v2264
  %2266 = vmatmul.bf16.gmra.mxu0 %v775
  %v2267 = vpop.f32.mrf.mxu0
  %v2268 = vadd.f32 %v2179, %v2267
  %v2269 = vpop.f32.mrf.mxu0
  %v2270 = vadd.f32 %v2181, %v2269
  %2271 = vmatmul.bf16.gmra.mxu0 %v782
  %v2272 = vpop.f32.mrf.mxu0
  %v2273 = vadd.f32 %v2184, %v2272
  %v2274 = vpop.f32.mrf.mxu0
  %v2275 = vadd.f32 %v2186, %v2274
  %2276 = vmatmul.bf16.gmra.mxu0 %v789
  %v2277 = vpop.f32.mrf.mxu0
  %v2278 = vadd.f32 %v2189, %v2277
  %v2279 = vpop.f32.mrf.mxu0
  %v2280 = vadd.f32 %v2191, %v2279
  %2281 = vmatmul.bf16.gmra.mxu0 %v796
  %v2282 = vpop.f32.mrf.mxu0
  %v2283 = vadd.f32 %v2194, %v2282
  %v2284 = vpop.f32.mrf.mxu0
  %v2285 = vadd.f32 %v2196, %v2284
  %2286 = vmatmul.bf16.gmra.mxu0 %v803
  %v2287 = vpop.f32.mrf.mxu0
  %v2288 = vadd.f32 %v2199, %v2287
  %v2289 = vpop.f32.mrf.mxu0
  %v2290 = vadd.f32 %v2201, %v2289
  %2291 = vmatmul.bf16.gmra.mxu0 %v810
  %v2292 = vpop.f32.mrf.mxu0
  %v2293 = vadd.f32 %v2204, %v2292
  %v2294 = vpop.f32.mrf.mxu0
  %v2295 = vadd.f32 %v2206, %v2294
  %2296 = vmatmul.bf16.gmra.mxu0 %v817
  %v2297 = vpop.f32.mrf.mxu0
  %v2298 = vadd.f32 %v2209, %v2297
  %v2299 = vpop.f32.mrf.mxu0
  %v2300 = vadd.f32 %v2211, %v2299
  %2301 = vdwg.mxu0
  %2302 = vmatpush.bf16.msra.mxu0 %v1661
  %2303 = vmatpush.bf16.msra.mxu0 %v1657
  %2304 = vmatpush.bf16.msra.mxu0 %v1653
  %2305 = vmatpush.bf16.msra.mxu0 %v1649
  %2306 = vmatpush.bf16.msra.mxu0 %v1645
  %2307 = vmatpush.bf16.msra.mxu0 %v1641
  %2308 = vmatpush.bf16.msra.mxu0 %v1637
  %2309 = vmatpush.bf16.msra.mxu0 %v1633
  %2310 = vmatmul.bf16.gmra.mxu0 %v713
  %v2311 = vpop.f32.mrf.mxu0
  %v2312 = vadd.f32 %v2223, %v2311
  %v2313 = vpop.f32.mrf.mxu0
  %v2314 = vadd.f32 %v2225, %v2313
  %2315 = vmatmul.bf16.gmra.mxu0 %v720
  %v2316 = vpop.f32.mrf.mxu0
  %v2317 = vadd.f32 %v2228, %v2316
  %v2318 = vpop.f32.mrf.mxu0
  %v2319 = vadd.f32 %v2230, %v2318
  %2320 = vmatmul.bf16.gmra.mxu0 %v727
  %v2321 = vpop.f32.mrf.mxu0
  %v2322 = vadd.f32 %v2233, %v2321
  %v2323 = vpop.f32.mrf.mxu0
  %v2324 = vadd.f32 %v2235, %v2323
  %2325 = vmatmul.bf16.gmra.mxu0 %v734
  %v2326 = vpop.f32.mrf.mxu0
  %v2327 = vadd.f32 %v2238, %v2326
  %v2328 = vpop.f32.mrf.mxu0
  %v2329 = vadd.f32 %v2240, %v2328
  %2330 = vmatmul.bf16.gmra.mxu0 %v741
  %v2331 = vpop.f32.mrf.mxu0
  %v2332 = vadd.f32 %v2243, %v2331
  %v2333 = vpop.f32.mrf.mxu0
  %v2334 = vadd.f32 %v2245, %v2333
  %2335 = vmatmul.bf16.gmra.mxu0 %v748
  %v2336 = vpop.f32.mrf.mxu0
  %v2337 = vadd.f32 %v2248, %v2336
  %v2338 = vpop.f32.mrf.mxu0
  %v2339 = vadd.f32 %v2250, %v2338
  %2340 = vmatmul.bf16.gmra.mxu0 %v755
  %v2341 = vpop.f32.mrf.mxu0
  %v2342 = vadd.f32 %v2253, %v2341
  %v2343 = vpop.f32.mrf.mxu0
  %v2344 = vadd.f32 %v2255, %v2343
  %2345 = vmatmul.bf16.gmra.mxu0 %v762
  %v2346 = vpop.f32.mrf.mxu0
  %v2347 = vadd.f32 %v2258, %v2346
  %v2348 = vpop.f32.mrf.mxu0
  %v2349 = vadd.f32 %v2260, %v2348
  %2350 = vmatmul.bf16.gmra.mxu0 %v769
  %v2351 = vpop.f32.mrf.mxu0
  %v2352 = vadd.f32 %v2263, %v2351
  %v2353 = vpop.f32.mrf.mxu0
  %v2354 = vadd.f32 %v2265, %v2353
  %2355 = vmatmul.bf16.gmra.mxu0 %v776
  %v2356 = vpop.f32.mrf.mxu0
  %v2357 = vadd.f32 %v2268, %v2356
  %v2358 = vpop.f32.mrf.mxu0
  %v2359 = vadd.f32 %v2270, %v2358
  %2360 = vmatmul.bf16.gmra.mxu0 %v783
  %v2361 = vpop.f32.mrf.mxu0
  %v2362 = vadd.f32 %v2273, %v2361
  %v2363 = vpop.f32.mrf.mxu0
  %v2364 = vadd.f32 %v2275, %v2363
  %2365 = vmatmul.bf16.gmra.mxu0 %v790
  %v2366 = vpop.f32.mrf.mxu0
  %v2367 = vadd.f32 %v2278, %v2366
  %v2368 = vpop.f32.mrf.mxu0
  %v2369 = vadd.f32 %v2280, %v2368
  %2370 = vmatmul.bf16.gmra.mxu0 %v797
  %v2371 = vpop.f32.mrf.mxu0
  %v2372 = vadd.f32 %v2283, %v2371
  %v2373 = vpop.f32.mrf.mxu0
  %v2374 = vadd.f32 %v2285, %v2373
  %2375 = vmatmul.bf16.gmra.mxu0 %v804
  %v2376 = vpop.f32.mrf.mxu0
  %v2377 = vadd.f32 %v2288, %v2376
  %v2378 = vpop.f32.mrf.mxu0
  %v2379 = vadd.f32 %v2290, %v2378
  %2380 = vmatmul.bf16.gmra.mxu0 %v811
  %v2381 = vpop.f32.mrf.mxu0
  %v2382 = vadd.f32 %v2293, %v2381
  %v2383 = vpop.f32.mrf.mxu0
  %v2384 = vadd.f32 %v2295, %v2383
  %2385 = vmatmul.bf16.gmra.mxu0 %v818
  %v2386 = vpop.f32.mrf.mxu0
  %v2387 = vadd.f32 %v2298, %v2386
  %v2388 = vpop.f32.mrf.mxu0
  %v2389 = vadd.f32 %v2300, %v2388
  %2390 = vdwg.mxu0
  %2391 = vmatpush.bf16.msra.mxu0 %v1693
  %2392 = vmatpush.bf16.msra.mxu0 %v1689
  %2393 = vmatpush.bf16.msra.mxu0 %v1685
  %2394 = vmatpush.bf16.msra.mxu0 %v1681
  %2395 = vmatpush.bf16.msra.mxu0 %v1677
  %2396 = vmatpush.bf16.msra.mxu0 %v1673
  %2397 = vmatpush.bf16.msra.mxu0 %v1669
  %2398 = vmatpush.bf16.msra.mxu0 %v1665
  %2399 = vmatmul.bf16.gmra.mxu0 %v714
  %v2400 = vpop.f32.mrf.mxu0
  %v2401 = vadd.f32 %v2312, %v2400
  %v2402 = vpop.f32.mrf.mxu0
  %v2403 = vadd.f32 %v2314, %v2402
  %2404 = vmatmul.bf16.gmra.mxu0 %v721
  %v2405 = vpop.f32.mrf.mxu0
  %v2406 = vadd.f32 %v2317, %v2405
  %v2407 = vpop.f32.mrf.mxu0
  %v2408 = vadd.f32 %v2319, %v2407
  %2409 = vmatmul.bf16.gmra.mxu0 %v728
  %v2410 = vpop.f32.mrf.mxu0
  %v2411 = vadd.f32 %v2322, %v2410
  %v2412 = vpop.f32.mrf.mxu0
  %v2413 = vadd.f32 %v2324, %v2412
  %2414 = vmatmul.bf16.gmra.mxu0 %v735
  %v2415 = vpop.f32.mrf.mxu0
  %v2416 = vadd.f32 %v2327, %v2415
  %v2417 = vpop.f32.mrf.mxu0
  %v2418 = vadd.f32 %v2329, %v2417
  %2419 = vmatmul.bf16.gmra.mxu0 %v742
  %v2420 = vpop.f32.mrf.mxu0
  %v2421 = vadd.f32 %v2332, %v2420
  %v2422 = vpop.f32.mrf.mxu0
  %v2423 = vadd.f32 %v2334, %v2422
  %2424 = vmatmul.bf16.gmra.mxu0 %v749
  %v2425 = vpop.f32.mrf.mxu0
  %v2426 = vadd.f32 %v2337, %v2425
  %v2427 = vpop.f32.mrf.mxu0
  %v2428 = vadd.f32 %v2339, %v2427
  %2429 = vmatmul.bf16.gmra.mxu0 %v756
  %v2430 = vpop.f32.mrf.mxu0
  %v2431 = vadd.f32 %v2342, %v2430
  %v2432 = vpop.f32.mrf.mxu0
  %v2433 = vadd.f32 %v2344, %v2432
  %2434 = vmatmul.bf16.gmra.mxu0 %v763
  %v2435 = vpop.f32.mrf.mxu0
  %v2436 = vadd.f32 %v2347, %v2435
  %v2437 = vpop.f32.mrf.mxu0
  %v2438 = vadd.f32 %v2349, %v2437
  %2439 = vmatmul.bf16.gmra.mxu0 %v770
  %v2440 = vpop.f32.mrf.mxu0
  %v2441 = vadd.f32 %v2352, %v2440
  %v2442 = vpop.f32.mrf.mxu0
  %v2443 = vadd.f32 %v2354, %v2442
  %2444 = vmatmul.bf16.gmra.mxu0 %v777
  %v2445 = vpop.f32.mrf.mxu0
  %v2446 = vadd.f32 %v2357, %v2445
  %v2447 = vpop.f32.mrf.mxu0
  %v2448 = vadd.f32 %v2359, %v2447
  %2449 = vmatmul.bf16.gmra.mxu0 %v784
  %v2450 = vpop.f32.mrf.mxu0
  %v2451 = vadd.f32 %v2362, %v2450
  %v2452 = vpop.f32.mrf.mxu0
  %v2453 = vadd.f32 %v2364, %v2452
  %2454 = vmatmul.bf16.gmra.mxu0 %v791
  %v2455 = vpop.f32.mrf.mxu0
  %v2456 = vadd.f32 %v2367, %v2455
  %v2457 = vpop.f32.mrf.mxu0
  %v2458 = vadd.f32 %v2369, %v2457
  %2459 = vmatmul.bf16.gmra.mxu0 %v798
  %v2460 = vpop.f32.mrf.mxu0
  %v2461 = vadd.f32 %v2372, %v2460
  %v2462 = vpop.f32.mrf.mxu0
  %v2463 = vadd.f32 %v2374, %v2462
  %2464 = vmatmul.bf16.gmra.mxu0 %v805
  %v2465 = vpop.f32.mrf.mxu0
  %v2466 = vadd.f32 %v2377, %v2465
  %v2467 = vpop.f32.mrf.mxu0
  %v2468 = vadd.f32 %v2379, %v2467
  %2469 = vmatmul.bf16.gmra.mxu0 %v812
  %v2470 = vpop.f32.mrf.mxu0
  %v2471 = vadd.f32 %v2382, %v2470
  %v2472 = vpop.f32.mrf.mxu0
  %v2473 = vadd.f32 %v2384, %v2472
  %2474 = vmatmul.bf16.gmra.mxu0 %v819
  %v2475 = vpop.f32.mrf.mxu0
  %v2476 = vadd.f32 %v2387, %v2475
  %v2477 = vpop.f32.mrf.mxu0
  %v2478 = vadd.f32 %v2389, %v2477
  %2479 = vdwg.mxu0
  %2480 = vmatpush.bf16.msra.mxu0 0
  %2481 = vmatpush.bf16.msra.mxu0 0
  %2482 = vmatpush.bf16.msra.mxu0 0
  %2483 = vmatpush.bf16.msra.mxu0 0
  %2484 = vmatpush.bf16.msra.mxu0 0
  %2485 = vmatpush.bf16.msra.mxu0 0
  %2486 = vmatpush.bf16.msra.mxu0 0
  %2487 = vmatpush.bf16.msra.mxu0 %v1697
  %2488 = vmatmul.bf16.gmra.mxu0 %v1899
  %v2489 = vpop.f32.mrf.mxu0
  %v2490 = vadd.f32 %v2401, %v2489
  %v2491 = vpop.f32.mrf.mxu0
  %v2492 = vadd.f32 %v2403, %v2491
  %2493 = vmatmul.bf16.gmra.mxu0 %v1902
  %v2494 = vpop.f32.mrf.mxu0
  %v2495 = vadd.f32 %v2406, %v2494
  %v2496 = vpop.f32.mrf.mxu0
  %v2497 = vadd.f32 %v2408, %v2496
  %2498 = vmatmul.bf16.gmra.mxu0 %v1905
  %v2499 = vpop.f32.mrf.mxu0
  %v2500 = vadd.f32 %v2411, %v2499
  %v2501 = vpop.f32.mrf.mxu0
  %v2502 = vadd.f32 %v2413, %v2501
  %2503 = vmatmul.bf16.gmra.mxu0 %v1908
  %v2504 = vpop.f32.mrf.mxu0
  %v2505 = vadd.f32 %v2416, %v2504
  %v2506 = vpop.f32.mrf.mxu0
  %v2507 = vadd.f32 %v2418, %v2506
  %2508 = vmatmul.bf16.gmra.mxu0 %v1911
  %v2509 = vpop.f32.mrf.mxu0
  %v2510 = vadd.f32 %v2421, %v2509
  %v2511 = vpop.f32.mrf.mxu0
  %v2512 = vadd.f32 %v2423, %v2511
  %2513 = vmatmul.bf16.gmra.mxu0 %v1914
  %v2514 = vpop.f32.mrf.mxu0
  %v2515 = vadd.f32 %v2426, %v2514
  %v2516 = vpop.f32.mrf.mxu0
  %v2517 = vadd.f32 %v2428, %v2516
  %2518 = vmatmul.bf16.gmra.mxu0 %v1917
  %v2519 = vpop.f32.mrf.mxu0
  %v2520 = vadd.f32 %v2431, %v2519
  %v2521 = vpop.f32.mrf.mxu0
  %v2522 = vadd.f32 %v2433, %v2521
  %2523 = vmatmul.bf16.gmra.mxu0 %v1920
  %v2524 = vpop.f32.mrf.mxu0
  %v2525 = vadd.f32 %v2436, %v2524
  %v2526 = vpop.f32.mrf.mxu0
  %v2527 = vadd.f32 %v2438, %v2526
  %2528 = vmatmul.bf16.gmra.mxu0 %v1923
  %v2529 = vpop.f32.mrf.mxu0
  %v2530 = vadd.f32 %v2441, %v2529
  %v2531 = vpop.f32.mrf.mxu0
  %v2532 = vadd.f32 %v2443, %v2531
  %2533 = vmatmul.bf16.gmra.mxu0 %v1926
  %v2534 = vpop.f32.mrf.mxu0
  %v2535 = vadd.f32 %v2446, %v2534
  %v2536 = vpop.f32.mrf.mxu0
  %v2537 = vadd.f32 %v2448, %v2536
  %2538 = vmatmul.bf16.gmra.mxu0 %v1929
  %v2539 = vpop.f32.mrf.mxu0
  %v2540 = vadd.f32 %v2451, %v2539
  %v2541 = vpop.f32.mrf.mxu0
  %v2542 = vadd.f32 %v2453, %v2541
  %2543 = vmatmul.bf16.gmra.mxu0 %v1932
  %v2544 = vpop.f32.mrf.mxu0
  %v2545 = vadd.f32 %v2456, %v2544
  %v2546 = vpop.f32.mrf.mxu0
  %v2547 = vadd.f32 %v2458, %v2546
  %2548 = vmatmul.bf16.gmra.mxu0 %v1935
  %v2549 = vpop.f32.mrf.mxu0
  %v2550 = vadd.f32 %v2461, %v2549
  %v2551 = vpop.f32.mrf.mxu0
  %v2552 = vadd.f32 %v2463, %v2551
  %2553 = vmatmul.bf16.gmra.mxu0 %v1938
  %v2554 = vpop.f32.mrf.mxu0
  %v2555 = vadd.f32 %v2466, %v2554
  %v2556 = vpop.f32.mrf.mxu0
  %v2557 = vadd.f32 %v2468, %v2556
  %2558 = vmatmul.bf16.gmra.mxu0 %v1941
  %v2559 = vpop.f32.mrf.mxu0
  %v2560 = vadd.f32 %v2471, %v2559
  %v2561 = vpop.f32.mrf.mxu0
  %v2562 = vadd.f32 %v2473, %v2561
  %2563 = vmatmul.bf16.gmra.mxu0 %v1944
  %v2564 = vpop.f32.mrf.mxu0
  %v2565 = vadd.f32 %v2476, %v2564
  %v2566 = vpop.f32.mrf.mxu0
  %v2567 = vadd.f32 %v2478, %v2566
  %2568 = vdwg.mxu0
  %2569 = vmatpush.bf16.msra.mxu0 %v1534
  %2570 = vmatpush.bf16.msra.mxu0 %v1530
  %2571 = vmatpush.bf16.msra.mxu0 %v1526
  %2572 = vmatpush.bf16.msra.mxu0 %v1522
  %2573 = vmatpush.bf16.msra.mxu0 %v1518
  %2574 = vmatpush.bf16.msra.mxu0 %v1514
  %2575 = vmatpush.bf16.msra.mxu0 %v1510
  %2576 = vmatpush.bf16.msra.mxu0 %v1506
  %2577 = vmatmul.bf16.gmra.mxu0 %v709
  %v2578 = vpop.f32.mrf.mxu0
  %v2579 = vadd.f32 0.0, %v2578
  %v2580 = vpop.f32.mrf.mxu0
  %v2581 = vadd.f32 0.0, %v2580
  %2582 = vmatmul.bf16.gmra.mxu0 %v716
  %v2583 = vpop.f32.mrf.mxu0
  %v2584 = vadd.f32 0.0, %v2583
  %v2585 = vpop.f32.mrf.mxu0
  %v2586 = vadd.f32 0.0, %v2585
  %2587 = vmatmul.bf16.gmra.mxu0 %v723
  %v2588 = vpop.f32.mrf.mxu0
  %v2589 = vadd.f32 0.0, %v2588
  %v2590 = vpop.f32.mrf.mxu0
  %v2591 = vadd.f32 0.0, %v2590
  %2592 = vmatmul.bf16.gmra.mxu0 %v730
  %v2593 = vpop.f32.mrf.mxu0
  %v2594 = vadd.f32 0.0, %v2593
  %v2595 = vpop.f32.mrf.mxu0
  %v2596 = vadd.f32 0.0, %v2595
  %2597 = vmatmul.bf16.gmra.mxu0 %v737
  %v2598 = vpop.f32.mrf.mxu0
  %v2599 = vadd.f32 0.0, %v2598
  %v2600 = vpop.f32.mrf.mxu0
  %v2601 = vadd.f32 0.0, %v2600
  %2602 = vmatmul.bf16.gmra.mxu0 %v744
  %v2603 = vpop.f32.mrf.mxu0
  %v2604 = vadd.f32 0.0, %v2603
  %v2605 = vpop.f32.mrf.mxu0
  %v2606 = vadd.f32 0.0, %v2605
  %2607 = vmatmul.bf16.gmra.mxu0 %v751
  %v2608 = vpop.f32.mrf.mxu0
  %v2609 = vadd.f32 0.0, %v2608
  %v2610 = vpop.f32.mrf.mxu0
  %v2611 = vadd.f32 0.0, %v2610
  %2612 = vmatmul.bf16.gmra.mxu0 %v758
  %v2613 = vpop.f32.mrf.mxu0
  %v2614 = vadd.f32 0.0, %v2613
  %v2615 = vpop.f32.mrf.mxu0
  %v2616 = vadd.f32 0.0, %v2615
  %2617 = vmatmul.bf16.gmra.mxu0 %v765
  %v2618 = vpop.f32.mrf.mxu0
  %v2619 = vadd.f32 0.0, %v2618
  %v2620 = vpop.f32.mrf.mxu0
  %v2621 = vadd.f32 0.0, %v2620
  %2622 = vmatmul.bf16.gmra.mxu0 %v772
  %v2623 = vpop.f32.mrf.mxu0
  %v2624 = vadd.f32 0.0, %v2623
  %v2625 = vpop.f32.mrf.mxu0
  %v2626 = vadd.f32 0.0, %v2625
  %2627 = vmatmul.bf16.gmra.mxu0 %v779
  %v2628 = vpop.f32.mrf.mxu0
  %v2629 = vadd.f32 0.0, %v2628
  %v2630 = vpop.f32.mrf.mxu0
  %v2631 = vadd.f32 0.0, %v2630
  %2632 = vmatmul.bf16.gmra.mxu0 %v786
  %v2633 = vpop.f32.mrf.mxu0
  %v2634 = vadd.f32 0.0, %v2633
  %v2635 = vpop.f32.mrf.mxu0
  %v2636 = vadd.f32 0.0, %v2635
  %2637 = vmatmul.bf16.gmra.mxu0 %v793
  %v2638 = vpop.f32.mrf.mxu0
  %v2639 = vadd.f32 0.0, %v2638
  %v2640 = vpop.f32.mrf.mxu0
  %v2641 = vadd.f32 0.0, %v2640
  %2642 = vmatmul.bf16.gmra.mxu0 %v800
  %v2643 = vpop.f32.mrf.mxu0
  %v2644 = vadd.f32 0.0, %v2643
  %v2645 = vpop.f32.mrf.mxu0
  %v2646 = vadd.f32 0.0, %v2645
  %2647 = vmatmul.bf16.gmra.mxu0 %v807
  %v2648 = vpop.f32.mrf.mxu0
  %v2649 = vadd.f32 0.0, %v2648
  %v2650 = vpop.f32.mrf.mxu0
  %v2651 = vadd.f32 0.0, %v2650
  %2652 = vmatmul.bf16.gmra.mxu0 %v814
  %v2653 = vpop.f32.mrf.mxu0
  %v2654 = vadd.f32 0.0, %v2653
  %v2655 = vpop.f32.mrf.mxu0
  %v2656 = vadd.f32 0.0, %v2655
  %2657 = vdwg.mxu0
  %2658 = vmatpush.bf16.msra.mxu0 %v1566
  %2659 = vmatpush.bf16.msra.mxu0 %v1562
  %2660 = vmatpush.bf16.msra.mxu0 %v1558
  %2661 = vmatpush.bf16.msra.mxu0 %v1554
  %2662 = vmatpush.bf16.msra.mxu0 %v1550
  %2663 = vmatpush.bf16.msra.mxu0 %v1546
  %2664 = vmatpush.bf16.msra.mxu0 %v1542
  %2665 = vmatpush.bf16.msra.mxu0 %v1538
  %2666 = vmatmul.bf16.gmra.mxu0 %v710
  %v2667 = vpop.f32.mrf.mxu0
  %v2668 = vadd.f32 %v2579, %v2667
  %v2669 = vpop.f32.mrf.mxu0
  %v2670 = vadd.f32 %v2581, %v2669
  %2671 = vmatmul.bf16.gmra.mxu0 %v717
  %v2672 = vpop.f32.mrf.mxu0
  %v2673 = vadd.f32 %v2584, %v2672
  %v2674 = vpop.f32.mrf.mxu0
  %v2675 = vadd.f32 %v2586, %v2674
  %2676 = vmatmul.bf16.gmra.mxu0 %v724
  %v2677 = vpop.f32.mrf.mxu0
  %v2678 = vadd.f32 %v2589, %v2677
  %v2679 = vpop.f32.mrf.mxu0
  %v2680 = vadd.f32 %v2591, %v2679
  %2681 = vmatmul.bf16.gmra.mxu0 %v731
  %v2682 = vpop.f32.mrf.mxu0
  %v2683 = vadd.f32 %v2594, %v2682
  %v2684 = vpop.f32.mrf.mxu0
  %v2685 = vadd.f32 %v2596, %v2684
  %2686 = vmatmul.bf16.gmra.mxu0 %v738
  %v2687 = vpop.f32.mrf.mxu0
  %v2688 = vadd.f32 %v2599, %v2687
  %v2689 = vpop.f32.mrf.mxu0
  %v2690 = vadd.f32 %v2601, %v2689
  %2691 = vmatmul.bf16.gmra.mxu0 %v745
  %v2692 = vpop.f32.mrf.mxu0
  %v2693 = vadd.f32 %v2604, %v2692
  %v2694 = vpop.f32.mrf.mxu0
  %v2695 = vadd.f32 %v2606, %v2694
  %2696 = vmatmul.bf16.gmra.mxu0 %v752
  %v2697 = vpop.f32.mrf.mxu0
  %v2698 = vadd.f32 %v2609, %v2697
  %v2699 = vpop.f32.mrf.mxu0
  %v2700 = vadd.f32 %v2611, %v2699
  %2701 = vmatmul.bf16.gmra.mxu0 %v759
  %v2702 = vpop.f32.mrf.mxu0
  %v2703 = vadd.f32 %v2614, %v2702
  %v2704 = vpop.f32.mrf.mxu0
  %v2705 = vadd.f32 %v2616, %v2704
  %2706 = vmatmul.bf16.gmra.mxu0 %v766
  %v2707 = vpop.f32.mrf.mxu0
  %v2708 = vadd.f32 %v2619, %v2707
  %v2709 = vpop.f32.mrf.mxu0
  %v2710 = vadd.f32 %v2621, %v2709
  %2711 = vmatmul.bf16.gmra.mxu0 %v773
  %v2712 = vpop.f32.mrf.mxu0
  %v2713 = vadd.f32 %v2624, %v2712
  %v2714 = vpop.f32.mrf.mxu0
  %v2715 = vadd.f32 %v2626, %v2714
  %2716 = vmatmul.bf16.gmra.mxu0 %v780
  %v2717 = vpop.f32.mrf.mxu0
  %v2718 = vadd.f32 %v2629, %v2717
  %v2719 = vpop.f32.mrf.mxu0
  %v2720 = vadd.f32 %v2631, %v2719
  %2721 = vmatmul.bf16.gmra.mxu0 %v787
  %v2722 = vpop.f32.mrf.mxu0
  %v2723 = vadd.f32 %v2634, %v2722
  %v2724 = vpop.f32.mrf.mxu0
  %v2725 = vadd.f32 %v2636, %v2724
  %2726 = vmatmul.bf16.gmra.mxu0 %v794
  %v2727 = vpop.f32.mrf.mxu0
  %v2728 = vadd.f32 %v2639, %v2727
  %v2729 = vpop.f32.mrf.mxu0
  %v2730 = vadd.f32 %v2641, %v2729
  %2731 = vmatmul.bf16.gmra.mxu0 %v801
  %v2732 = vpop.f32.mrf.mxu0
  %v2733 = vadd.f32 %v2644, %v2732
  %v2734 = vpop.f32.mrf.mxu0
  %v2735 = vadd.f32 %v2646, %v2734
  %2736 = vmatmul.bf16.gmra.mxu0 %v808
  %v2737 = vpop.f32.mrf.mxu0
  %v2738 = vadd.f32 %v2649, %v2737
  %v2739 = vpop.f32.mrf.mxu0
  %v2740 = vadd.f32 %v2651, %v2739
  %2741 = vmatmul.bf16.gmra.mxu0 %v815
  %v2742 = vpop.f32.mrf.mxu0
  %v2743 = vadd.f32 %v2654, %v2742
  %v2744 = vpop.f32.mrf.mxu0
  %v2745 = vadd.f32 %v2656, %v2744
  %2746 = vdwg.mxu0
  %2747 = vmatpush.bf16.msra.mxu0 %v1598
  %2748 = vmatpush.bf16.msra.mxu0 %v1594
  %2749 = vmatpush.bf16.msra.mxu0 %v1590
  %2750 = vmatpush.bf16.msra.mxu0 %v1586
  %2751 = vmatpush.bf16.msra.mxu0 %v1582
  %2752 = vmatpush.bf16.msra.mxu0 %v1578
  %2753 = vmatpush.bf16.msra.mxu0 %v1574
  %2754 = vmatpush.bf16.msra.mxu0 %v1570
  %2755 = vmatmul.bf16.gmra.mxu0 %v711
  %v2756 = vpop.f32.mrf.mxu0
  %v2757 = vadd.f32 %v2668, %v2756
  %v2758 = vpop.f32.mrf.mxu0
  %v2759 = vadd.f32 %v2670, %v2758
  %2760 = vmatmul.bf16.gmra.mxu0 %v718
  %v2761 = vpop.f32.mrf.mxu0
  %v2762 = vadd.f32 %v2673, %v2761
  %v2763 = vpop.f32.mrf.mxu0
  %v2764 = vadd.f32 %v2675, %v2763
  %2765 = vmatmul.bf16.gmra.mxu0 %v725
  %v2766 = vpop.f32.mrf.mxu0
  %v2767 = vadd.f32 %v2678, %v2766
  %v2768 = vpop.f32.mrf.mxu0
  %v2769 = vadd.f32 %v2680, %v2768
  %2770 = vmatmul.bf16.gmra.mxu0 %v732
  %v2771 = vpop.f32.mrf.mxu0
  %v2772 = vadd.f32 %v2683, %v2771
  %v2773 = vpop.f32.mrf.mxu0
  %v2774 = vadd.f32 %v2685, %v2773
  %2775 = vmatmul.bf16.gmra.mxu0 %v739
  %v2776 = vpop.f32.mrf.mxu0
  %v2777 = vadd.f32 %v2688, %v2776
  %v2778 = vpop.f32.mrf.mxu0
  %v2779 = vadd.f32 %v2690, %v2778
  %2780 = vmatmul.bf16.gmra.mxu0 %v746
  %v2781 = vpop.f32.mrf.mxu0
  %v2782 = vadd.f32 %v2693, %v2781
  %v2783 = vpop.f32.mrf.mxu0
  %v2784 = vadd.f32 %v2695, %v2783
  %2785 = vmatmul.bf16.gmra.mxu0 %v753
  %v2786 = vpop.f32.mrf.mxu0
  %v2787 = vadd.f32 %v2698, %v2786
  %v2788 = vpop.f32.mrf.mxu0
  %v2789 = vadd.f32 %v2700, %v2788
  %2790 = vmatmul.bf16.gmra.mxu0 %v760
  %v2791 = vpop.f32.mrf.mxu0
  %v2792 = vadd.f32 %v2703, %v2791
  %v2793 = vpop.f32.mrf.mxu0
  %v2794 = vadd.f32 %v2705, %v2793
  %2795 = vmatmul.bf16.gmra.mxu0 %v767
  %v2796 = vpop.f32.mrf.mxu0
  %v2797 = vadd.f32 %v2708, %v2796
  %v2798 = vpop.f32.mrf.mxu0
  %v2799 = vadd.f32 %v2710, %v2798
  %2800 = vmatmul.bf16.gmra.mxu0 %v774
  %v2801 = vpop.f32.mrf.mxu0
  %v2802 = vadd.f32 %v2713, %v2801
  %v2803 = vpop.f32.mrf.mxu0
  %v2804 = vadd.f32 %v2715, %v2803
  %2805 = vmatmul.bf16.gmra.mxu0 %v781
  %v2806 = vpop.f32.mrf.mxu0
  %v2807 = vadd.f32 %v2718, %v2806
  %v2808 = vpop.f32.mrf.mxu0
  %v2809 = vadd.f32 %v2720, %v2808
  %2810 = vmatmul.bf16.gmra.mxu0 %v788
  %v2811 = vpop.f32.mrf.mxu0
  %v2812 = vadd.f32 %v2723, %v2811
  %v2813 = vpop.f32.mrf.mxu0
  %v2814 = vadd.f32 %v2725, %v2813
  %2815 = vmatmul.bf16.gmra.mxu0 %v795
  %v2816 = vpop.f32.mrf.mxu0
  %v2817 = vadd.f32 %v2728, %v2816
  %v2818 = vpop.f32.mrf.mxu0
  %v2819 = vadd.f32 %v2730, %v2818
  %2820 = vmatmul.bf16.gmra.mxu0 %v802
  %v2821 = vpop.f32.mrf.mxu0
  %v2822 = vadd.f32 %v2733, %v2821
  %v2823 = vpop.f32.mrf.mxu0
  %v2824 = vadd.f32 %v2735, %v2823
  %2825 = vmatmul.bf16.gmra.mxu0 %v809
  %v2826 = vpop.f32.mrf.mxu0
  %v2827 = vadd.f32 %v2738, %v2826
  %v2828 = vpop.f32.mrf.mxu0
  %v2829 = vadd.f32 %v2740, %v2828
  %2830 = vmatmul.bf16.gmra.mxu0 %v816
  %v2831 = vpop.f32.mrf.mxu0
  %v2832 = vadd.f32 %v2743, %v2831
  %v2833 = vpop.f32.mrf.mxu0
  %v2834 = vadd.f32 %v2745, %v2833
  %2835 = vdwg.mxu0
  %2836 = vmatpush.bf16.msra.mxu0 %v1630
  %2837 = vmatpush.bf16.msra.mxu0 %v1626
  %2838 = vmatpush.bf16.msra.mxu0 %v1622
  %2839 = vmatpush.bf16.msra.mxu0 %v1618
  %2840 = vmatpush.bf16.msra.mxu0 %v1614
  %2841 = vmatpush.bf16.msra.mxu0 %v1610
  %2842 = vmatpush.bf16.msra.mxu0 %v1606
  %2843 = vmatpush.bf16.msra.mxu0 %v1602
  %2844 = vmatmul.bf16.gmra.mxu0 %v712
  %v2845 = vpop.f32.mrf.mxu0
  %v2846 = vadd.f32 %v2757, %v2845
  %v2847 = vpop.f32.mrf.mxu0
  %v2848 = vadd.f32 %v2759, %v2847
  %2849 = vmatmul.bf16.gmra.mxu0 %v719
  %v2850 = vpop.f32.mrf.mxu0
  %v2851 = vadd.f32 %v2762, %v2850
  %v2852 = vpop.f32.mrf.mxu0
  %v2853 = vadd.f32 %v2764, %v2852
  %2854 = vmatmul.bf16.gmra.mxu0 %v726
  %v2855 = vpop.f32.mrf.mxu0
  %v2856 = vadd.f32 %v2767, %v2855
  %v2857 = vpop.f32.mrf.mxu0
  %v2858 = vadd.f32 %v2769, %v2857
  %2859 = vmatmul.bf16.gmra.mxu0 %v733
  %v2860 = vpop.f32.mrf.mxu0
  %v2861 = vadd.f32 %v2772, %v2860
  %v2862 = vpop.f32.mrf.mxu0
  %v2863 = vadd.f32 %v2774, %v2862
  %2864 = vmatmul.bf16.gmra.mxu0 %v740
  %v2865 = vpop.f32.mrf.mxu0
  %v2866 = vadd.f32 %v2777, %v2865
  %v2867 = vpop.f32.mrf.mxu0
  %v2868 = vadd.f32 %v2779, %v2867
  %2869 = vmatmul.bf16.gmra.mxu0 %v747
  %v2870 = vpop.f32.mrf.mxu0
  %v2871 = vadd.f32 %v2782, %v2870
  %v2872 = vpop.f32.mrf.mxu0
  %v2873 = vadd.f32 %v2784, %v2872
  %2874 = vmatmul.bf16.gmra.mxu0 %v754
  %v2875 = vpop.f32.mrf.mxu0
  %v2876 = vadd.f32 %v2787, %v2875
  %v2877 = vpop.f32.mrf.mxu0
  %v2878 = vadd.f32 %v2789, %v2877
  %2879 = vmatmul.bf16.gmra.mxu0 %v761
  %v2880 = vpop.f32.mrf.mxu0
  %v2881 = vadd.f32 %v2792, %v2880
  %v2882 = vpop.f32.mrf.mxu0
  %v2883 = vadd.f32 %v2794, %v2882
  %2884 = vmatmul.bf16.gmra.mxu0 %v768
  %v2885 = vpop.f32.mrf.mxu0
  %v2886 = vadd.f32 %v2797, %v2885
  %v2887 = vpop.f32.mrf.mxu0
  %v2888 = vadd.f32 %v2799, %v2887
  %2889 = vmatmul.bf16.gmra.mxu0 %v775
  %v2890 = vpop.f32.mrf.mxu0
  %v2891 = vadd.f32 %v2802, %v2890
  %v2892 = vpop.f32.mrf.mxu0
  %v2893 = vadd.f32 %v2804, %v2892
  %2894 = vmatmul.bf16.gmra.mxu0 %v782
  %v2895 = vpop.f32.mrf.mxu0
  %v2896 = vadd.f32 %v2807, %v2895
  %v2897 = vpop.f32.mrf.mxu0
  %v2898 = vadd.f32 %v2809, %v2897
  %2899 = vmatmul.bf16.gmra.mxu0 %v789
  %v2900 = vpop.f32.mrf.mxu0
  %v2901 = vadd.f32 %v2812, %v2900
  %v2902 = vpop.f32.mrf.mxu0
  %v2903 = vadd.f32 %v2814, %v2902
  %2904 = vmatmul.bf16.gmra.mxu0 %v796
  %v2905 = vpop.f32.mrf.mxu0
  %v2906 = vadd.f32 %v2817, %v2905
  %v2907 = vpop.f32.mrf.mxu0
  %v2908 = vadd.f32 %v2819, %v2907
  %2909 = vmatmul.bf16.gmra.mxu0 %v803
  %v2910 = vpop.f32.mrf.mxu0
  %v2911 = vadd.f32 %v2822, %v2910
  %v2912 = vpop.f32.mrf.mxu0
  %v2913 = vadd.f32 %v2824, %v2912
  %2914 = vmatmul.bf16.gmra.mxu0 %v810
  %v2915 = vpop.f32.mrf.mxu0
  %v2916 = vadd.f32 %v2827, %v2915
  %v2917 = vpop.f32.mrf.mxu0
  %v2918 = vadd.f32 %v2829, %v2917
  %2919 = vmatmul.bf16.gmra.mxu0 %v817
  %v2920 = vpop.f32.mrf.mxu0
  %v2921 = vadd.f32 %v2832, %v2920
  %v2922 = vpop.f32.mrf.mxu0
  %v2923 = vadd.f32 %v2834, %v2922
  %2924 = vdwg.mxu0
  %2925 = vmatpush.bf16.msra.mxu0 %v1662
  %2926 = vmatpush.bf16.msra.mxu0 %v1658
  %2927 = vmatpush.bf16.msra.mxu0 %v1654
  %2928 = vmatpush.bf16.msra.mxu0 %v1650
  %2929 = vmatpush.bf16.msra.mxu0 %v1646
  %2930 = vmatpush.bf16.msra.mxu0 %v1642
  %2931 = vmatpush.bf16.msra.mxu0 %v1638
  %2932 = vmatpush.bf16.msra.mxu0 %v1634
  %2933 = vmatmul.bf16.gmra.mxu0 %v713
  %v2934 = vpop.f32.mrf.mxu0
  %v2935 = vadd.f32 %v2846, %v2934
  %v2936 = vpop.f32.mrf.mxu0
  %v2937 = vadd.f32 %v2848, %v2936
  %2938 = vmatmul.bf16.gmra.mxu0 %v720
  %v2939 = vpop.f32.mrf.mxu0
  %v2940 = vadd.f32 %v2851, %v2939
  %v2941 = vpop.f32.mrf.mxu0
  %v2942 = vadd.f32 %v2853, %v2941
  %2943 = vmatmul.bf16.gmra.mxu0 %v727
  %v2944 = vpop.f32.mrf.mxu0
  %v2945 = vadd.f32 %v2856, %v2944
  %v2946 = vpop.f32.mrf.mxu0
  %v2947 = vadd.f32 %v2858, %v2946
  %2948 = vmatmul.bf16.gmra.mxu0 %v734
  %v2949 = vpop.f32.mrf.mxu0
  %v2950 = vadd.f32 %v2861, %v2949
  %v2951 = vpop.f32.mrf.mxu0
  %v2952 = vadd.f32 %v2863, %v2951
  %2953 = vmatmul.bf16.gmra.mxu0 %v741
  %v2954 = vpop.f32.mrf.mxu0
  %v2955 = vadd.f32 %v2866, %v2954
  %v2956 = vpop.f32.mrf.mxu0
  %v2957 = vadd.f32 %v2868, %v2956
  %2958 = vmatmul.bf16.gmra.mxu0 %v748
  %v2959 = vpop.f32.mrf.mxu0
  %v2960 = vadd.f32 %v2871, %v2959
  %v2961 = vpop.f32.mrf.mxu0
  %v2962 = vadd.f32 %v2873, %v2961
  %2963 = vmatmul.bf16.gmra.mxu0 %v755
  %v2964 = vpop.f32.mrf.mxu0
  %v2965 = vadd.f32 %v2876, %v2964
  %v2966 = vpop.f32.mrf.mxu0
  %v2967 = vadd.f32 %v2878, %v2966
  %2968 = vmatmul.bf16.gmra.mxu0 %v762
  %v2969 = vpop.f32.mrf.mxu0
  %v2970 = vadd.f32 %v2881, %v2969
  %v2971 = vpop.f32.mrf.mxu0
  %v2972 = vadd.f32 %v2883, %v2971
  %2973 = vmatmul.bf16.gmra.mxu0 %v769
  %v2974 = vpop.f32.mrf.mxu0
  %v2975 = vadd.f32 %v2886, %v2974
  %v2976 = vpop.f32.mrf.mxu0
  %v2977 = vadd.f32 %v2888, %v2976
  %2978 = vmatmul.bf16.gmra.mxu0 %v776
  %v2979 = vpop.f32.mrf.mxu0
  %v2980 = vadd.f32 %v2891, %v2979
  %v2981 = vpop.f32.mrf.mxu0
  %v2982 = vadd.f32 %v2893, %v2981
  %2983 = vmatmul.bf16.gmra.mxu0 %v783
  %v2984 = vpop.f32.mrf.mxu0
  %v2985 = vadd.f32 %v2896, %v2984
  %v2986 = vpop.f32.mrf.mxu0
  %v2987 = vadd.f32 %v2898, %v2986
  %2988 = vmatmul.bf16.gmra.mxu0 %v790
  %v2989 = vpop.f32.mrf.mxu0
  %v2990 = vadd.f32 %v2901, %v2989
  %v2991 = vpop.f32.mrf.mxu0
  %v2992 = vadd.f32 %v2903, %v2991
  %2993 = vmatmul.bf16.gmra.mxu0 %v797
  %v2994 = vpop.f32.mrf.mxu0
  %v2995 = vadd.f32 %v2906, %v2994
  %v2996 = vpop.f32.mrf.mxu0
  %v2997 = vadd.f32 %v2908, %v2996
  %2998 = vmatmul.bf16.gmra.mxu0 %v804
  %v2999 = vpop.f32.mrf.mxu0
  %v3000 = vadd.f32 %v2911, %v2999
  %v3001 = vpop.f32.mrf.mxu0
  %v3002 = vadd.f32 %v2913, %v3001
  %3003 = vmatmul.bf16.gmra.mxu0 %v811
  %v3004 = vpop.f32.mrf.mxu0
  %v3005 = vadd.f32 %v2916, %v3004
  %v3006 = vpop.f32.mrf.mxu0
  %v3007 = vadd.f32 %v2918, %v3006
  %3008 = vmatmul.bf16.gmra.mxu0 %v818
  %v3009 = vpop.f32.mrf.mxu0
  %v3010 = vadd.f32 %v2921, %v3009
  %v3011 = vpop.f32.mrf.mxu0
  %v3012 = vadd.f32 %v2923, %v3011
  %3013 = vdwg.mxu0
  %3014 = vmatpush.bf16.msra.mxu0 %v1694
  %3015 = vmatpush.bf16.msra.mxu0 %v1690
  %3016 = vmatpush.bf16.msra.mxu0 %v1686
  %3017 = vmatpush.bf16.msra.mxu0 %v1682
  %3018 = vmatpush.bf16.msra.mxu0 %v1678
  %3019 = vmatpush.bf16.msra.mxu0 %v1674
  %3020 = vmatpush.bf16.msra.mxu0 %v1670
  %3021 = vmatpush.bf16.msra.mxu0 %v1666
  %3022 = vmatmul.bf16.gmra.mxu0 %v714
  %v3023 = vpop.f32.mrf.mxu0
  %v3024 = vadd.f32 %v2935, %v3023
  %v3025 = vpop.f32.mrf.mxu0
  %v3026 = vadd.f32 %v2937, %v3025
  %3027 = vmatmul.bf16.gmra.mxu0 %v721
  %v3028 = vpop.f32.mrf.mxu0
  %v3029 = vadd.f32 %v2940, %v3028
  %v3030 = vpop.f32.mrf.mxu0
  %v3031 = vadd.f32 %v2942, %v3030
  %3032 = vmatmul.bf16.gmra.mxu0 %v728
  %v3033 = vpop.f32.mrf.mxu0
  %v3034 = vadd.f32 %v2945, %v3033
  %v3035 = vpop.f32.mrf.mxu0
  %v3036 = vadd.f32 %v2947, %v3035
  %3037 = vmatmul.bf16.gmra.mxu0 %v735
  %v3038 = vpop.f32.mrf.mxu0
  %v3039 = vadd.f32 %v2950, %v3038
  %v3040 = vpop.f32.mrf.mxu0
  %v3041 = vadd.f32 %v2952, %v3040
  %3042 = vmatmul.bf16.gmra.mxu0 %v742
  %v3043 = vpop.f32.mrf.mxu0
  %v3044 = vadd.f32 %v2955, %v3043
  %v3045 = vpop.f32.mrf.mxu0
  %v3046 = vadd.f32 %v2957, %v3045
  %3047 = vmatmul.bf16.gmra.mxu0 %v749
  %v3048 = vpop.f32.mrf.mxu0
  %v3049 = vadd.f32 %v2960, %v3048
  %v3050 = vpop.f32.mrf.mxu0
  %v3051 = vadd.f32 %v2962, %v3050
  %3052 = vmatmul.bf16.gmra.mxu0 %v756
  %v3053 = vpop.f32.mrf.mxu0
  %v3054 = vadd.f32 %v2965, %v3053
  %v3055 = vpop.f32.mrf.mxu0
  %v3056 = vadd.f32 %v2967, %v3055
  %3057 = vmatmul.bf16.gmra.mxu0 %v763
  %v3058 = vpop.f32.mrf.mxu0
  %v3059 = vadd.f32 %v2970, %v3058
  %v3060 = vpop.f32.mrf.mxu0
  %v3061 = vadd.f32 %v2972, %v3060
  %3062 = vmatmul.bf16.gmra.mxu0 %v770
  %v3063 = vpop.f32.mrf.mxu0
  %v3064 = vadd.f32 %v2975, %v3063
  %v3065 = vpop.f32.mrf.mxu0
  %v3066 = vadd.f32 %v2977, %v3065
  %3067 = vmatmul.bf16.gmra.mxu0 %v777
  %v3068 = vpop.f32.mrf.mxu0
  %v3069 = vadd.f32 %v2980, %v3068
  %v3070 = vpop.f32.mrf.mxu0
  %v3071 = vadd.f32 %v2982, %v3070
  %3072 = vmatmul.bf16.gmra.mxu0 %v784
  %v3073 = vpop.f32.mrf.mxu0
  %v3074 = vadd.f32 %v2985, %v3073
  %v3075 = vpop.f32.mrf.mxu0
  %v3076 = vadd.f32 %v2987, %v3075
  %3077 = vmatmul.bf16.gmra.mxu0 %v791
  %v3078 = vpop.f32.mrf.mxu0
  %v3079 = vadd.f32 %v2990, %v3078
  %v3080 = vpop.f32.mrf.mxu0
  %v3081 = vadd.f32 %v2992, %v3080
  %3082 = vmatmul.bf16.gmra.mxu0 %v798
  %v3083 = vpop.f32.mrf.mxu0
  %v3084 = vadd.f32 %v2995, %v3083
  %v3085 = vpop.f32.mrf.mxu0
  %v3086 = vadd.f32 %v2997, %v3085
  %3087 = vmatmul.bf16.gmra.mxu0 %v805
  %v3088 = vpop.f32.mrf.mxu0
  %v3089 = vadd.f32 %v3000, %v3088
  %v3090 = vpop.f32.mrf.mxu0
  %v3091 = vadd.f32 %v3002, %v3090
  %3092 = vmatmul.bf16.gmra.mxu0 %v812
  %v3093 = vpop.f32.mrf.mxu0
  %v3094 = vadd.f32 %v3005, %v3093
  %v3095 = vpop.f32.mrf.mxu0
  %v3096 = vadd.f32 %v3007, %v3095
  %3097 = vmatmul.bf16.gmra.mxu0 %v819
  %v3098 = vpop.f32.mrf.mxu0
  %v3099 = vadd.f32 %v3010, %v3098
  %v3100 = vpop.f32.mrf.mxu0
  %v3101 = vadd.f32 %v3012, %v3100
  %3102 = vdwg.mxu0
  %3103 = vmatpush.bf16.msra.mxu0 0
  %3104 = vmatpush.bf16.msra.mxu0 0
  %3105 = vmatpush.bf16.msra.mxu0 0
  %3106 = vmatpush.bf16.msra.mxu0 0
  %3107 = vmatpush.bf16.msra.mxu0 0
  %3108 = vmatpush.bf16.msra.mxu0 0
  %3109 = vmatpush.bf16.msra.mxu0 0
  %3110 = vmatpush.bf16.msra.mxu0 %v1698
  %3111 = vmatmul.bf16.gmra.mxu0 %v1899
  %v3112 = vpop.f32.mrf.mxu0
  %v3113 = vadd.f32 %v3024, %v3112
  %v3114 = vpop.f32.mrf.mxu0
  %v3115 = vadd.f32 %v3026, %v3114
  %3116 = vmatmul.bf16.gmra.mxu0 %v1902
  %v3117 = vpop.f32.mrf.mxu0
  %v3118 = vadd.f32 %v3029, %v3117
  %v3119 = vpop.f32.mrf.mxu0
  %v3120 = vadd.f32 %v3031, %v3119
  %3121 = vmatmul.bf16.gmra.mxu0 %v1905
  %v3122 = vpop.f32.mrf.mxu0
  %v3123 = vadd.f32 %v3034, %v3122
  %v3124 = vpop.f32.mrf.mxu0
  %v3125 = vadd.f32 %v3036, %v3124
  %3126 = vmatmul.bf16.gmra.mxu0 %v1908
  %v3127 = vpop.f32.mrf.mxu0
  %v3128 = vadd.f32 %v3039, %v3127
  %v3129 = vpop.f32.mrf.mxu0
  %v3130 = vadd.f32 %v3041, %v3129
  %3131 = vmatmul.bf16.gmra.mxu0 %v1911
  %v3132 = vpop.f32.mrf.mxu0
  %v3133 = vadd.f32 %v3044, %v3132
  %v3134 = vpop.f32.mrf.mxu0
  %v3135 = vadd.f32 %v3046, %v3134
  %3136 = vmatmul.bf16.gmra.mxu0 %v1914
  %v3137 = vpop.f32.mrf.mxu0
  %v3138 = vadd.f32 %v3049, %v3137
  %v3139 = vpop.f32.mrf.mxu0
  %v3140 = vadd.f32 %v3051, %v3139
  %3141 = vmatmul.bf16.gmra.mxu0 %v1917
  %v3142 = vpop.f32.mrf.mxu0
  %v3143 = vadd.f32 %v3054, %v3142
  %v3144 = vpop.f32.mrf.mxu0
  %v3145 = vadd.f32 %v3056, %v3144
  %3146 = vmatmul.bf16.gmra.mxu0 %v1920
  %v3147 = vpop.f32.mrf.mxu0
  %v3148 = vadd.f32 %v3059, %v3147
  %v3149 = vpop.f32.mrf.mxu0
  %v3150 = vadd.f32 %v3061, %v3149
  %3151 = vmatmul.bf16.gmra.mxu0 %v1923
  %v3152 = vpop.f32.mrf.mxu0
  %v3153 = vadd.f32 %v3064, %v3152
  %v3154 = vpop.f32.mrf.mxu0
  %v3155 = vadd.f32 %v3066, %v3154
  %3156 = vmatmul.bf16.gmra.mxu0 %v1926
  %v3157 = vpop.f32.mrf.mxu0
  %v3158 = vadd.f32 %v3069, %v3157
  %v3159 = vpop.f32.mrf.mxu0
  %v3160 = vadd.f32 %v3071, %v3159
  %3161 = vmatmul.bf16.gmra.mxu0 %v1929
  %v3162 = vpop.f32.mrf.mxu0
  %v3163 = vadd.f32 %v3074, %v3162
  %v3164 = vpop.f32.mrf.mxu0
  %v3165 = vadd.f32 %v3076, %v3164
  %3166 = vmatmul.bf16.gmra.mxu0 %v1932
  %v3167 = vpop.f32.mrf.mxu0
  %v3168 = vadd.f32 %v3079, %v3167
  %v3169 = vpop.f32.mrf.mxu0
  %v3170 = vadd.f32 %v3081, %v3169
  %3171 = vmatmul.bf16.gmra.mxu0 %v1935
  %v3172 = vpop.f32.mrf.mxu0
  %v3173 = vadd.f32 %v3084, %v3172
  %v3174 = vpop.f32.mrf.mxu0
  %v3175 = vadd.f32 %v3086, %v3174
  %3176 = vmatmul.bf16.gmra.mxu0 %v1938
  %v3177 = vpop.f32.mrf.mxu0
  %v3178 = vadd.f32 %v3089, %v3177
  %v3179 = vpop.f32.mrf.mxu0
  %v3180 = vadd.f32 %v3091, %v3179
  %3181 = vmatmul.bf16.gmra.mxu0 %v1941
  %v3182 = vpop.f32.mrf.mxu0
  %v3183 = vadd.f32 %v3094, %v3182
  %v3184 = vpop.f32.mrf.mxu0
  %v3185 = vadd.f32 %v3096, %v3184
  %3186 = vmatmul.bf16.gmra.mxu0 %v1944
  %v3187 = vpop.f32.mrf.mxu0
  %v3188 = vadd.f32 %v3099, %v3187
  %v3189 = vpop.f32.mrf.mxu0
  %v3190 = vadd.f32 %v3101, %v3189
  %3191 = vdwg.mxu0
  %3192 = vmatpush.bf16.msra.mxu0 %v1535
  %3193 = vmatpush.bf16.msra.mxu0 %v1531
  %3194 = vmatpush.bf16.msra.mxu0 %v1527
  %3195 = vmatpush.bf16.msra.mxu0 %v1523
  %3196 = vmatpush.bf16.msra.mxu0 %v1519
  %3197 = vmatpush.bf16.msra.mxu0 %v1515
  %3198 = vmatpush.bf16.msra.mxu0 %v1511
  %3199 = vmatpush.bf16.msra.mxu0 %v1507
  %3200 = vmatmul.bf16.gmra.mxu0 %v709
  %v3201 = vpop.f32.mrf.mxu0
  %v3202 = vadd.f32 0.0, %v3201
  %v3203 = vpop.f32.mrf.mxu0
  %v3204 = vadd.f32 0.0, %v3203
  %3205 = vmatmul.bf16.gmra.mxu0 %v716
  %v3206 = vpop.f32.mrf.mxu0
  %v3207 = vadd.f32 0.0, %v3206
  %v3208 = vpop.f32.mrf.mxu0
  %v3209 = vadd.f32 0.0, %v3208
  %3210 = vmatmul.bf16.gmra.mxu0 %v723
  %v3211 = vpop.f32.mrf.mxu0
  %v3212 = vadd.f32 0.0, %v3211
  %v3213 = vpop.f32.mrf.mxu0
  %v3214 = vadd.f32 0.0, %v3213
  %3215 = vmatmul.bf16.gmra.mxu0 %v730
  %v3216 = vpop.f32.mrf.mxu0
  %v3217 = vadd.f32 0.0, %v3216
  %v3218 = vpop.f32.mrf.mxu0
  %v3219 = vadd.f32 0.0, %v3218
  %3220 = vmatmul.bf16.gmra.mxu0 %v737
  %v3221 = vpop.f32.mrf.mxu0
  %v3222 = vadd.f32 0.0, %v3221
  %v3223 = vpop.f32.mrf.mxu0
  %v3224 = vadd.f32 0.0, %v3223
  %3225 = vmatmul.bf16.gmra.mxu0 %v744
  %v3226 = vpop.f32.mrf.mxu0
  %v3227 = vadd.f32 0.0, %v3226
  %v3228 = vpop.f32.mrf.mxu0
  %v3229 = vadd.f32 0.0, %v3228
  %3230 = vmatmul.bf16.gmra.mxu0 %v751
  %v3231 = vpop.f32.mrf.mxu0
  %v3232 = vadd.f32 0.0, %v3231
  %v3233 = vpop.f32.mrf.mxu0
  %v3234 = vadd.f32 0.0, %v3233
  %3235 = vmatmul.bf16.gmra.mxu0 %v758
  %v3236 = vpop.f32.mrf.mxu0
  %v3237 = vadd.f32 0.0, %v3236
  %v3238 = vpop.f32.mrf.mxu0
  %v3239 = vadd.f32 0.0, %v3238
  %3240 = vmatmul.bf16.gmra.mxu0 %v765
  %v3241 = vpop.f32.mrf.mxu0
  %v3242 = vadd.f32 0.0, %v3241
  %v3243 = vpop.f32.mrf.mxu0
  %v3244 = vadd.f32 0.0, %v3243
  %3245 = vmatmul.bf16.gmra.mxu0 %v772
  %v3246 = vpop.f32.mrf.mxu0
  %v3247 = vadd.f32 0.0, %v3246
  %v3248 = vpop.f32.mrf.mxu0
  %v3249 = vadd.f32 0.0, %v3248
  %3250 = vmatmul.bf16.gmra.mxu0 %v779
  %v3251 = vpop.f32.mrf.mxu0
  %v3252 = vadd.f32 0.0, %v3251
  %v3253 = vpop.f32.mrf.mxu0
  %v3254 = vadd.f32 0.0, %v3253
  %3255 = vmatmul.bf16.gmra.mxu0 %v786
  %v3256 = vpop.f32.mrf.mxu0
  %v3257 = vadd.f32 0.0, %v3256
  %v3258 = vpop.f32.mrf.mxu0
  %v3259 = vadd.f32 0.0, %v3258
  %3260 = vmatmul.bf16.gmra.mxu0 %v793
  %v3261 = vpop.f32.mrf.mxu0
  %v3262 = vadd.f32 0.0, %v3261
  %v3263 = vpop.f32.mrf.mxu0
  %v3264 = vadd.f32 0.0, %v3263
  %3265 = vmatmul.bf16.gmra.mxu0 %v800
  %v3266 = vpop.f32.mrf.mxu0
  %v3267 = vadd.f32 0.0, %v3266
  %v3268 = vpop.f32.mrf.mxu0
  %v3269 = vadd.f32 0.0, %v3268
  %3270 = vmatmul.bf16.gmra.mxu0 %v807
  %v3271 = vpop.f32.mrf.mxu0
  %v3272 = vadd.f32 0.0, %v3271
  %v3273 = vpop.f32.mrf.mxu0
  %v3274 = vadd.f32 0.0, %v3273
  %3275 = vmatmul.bf16.gmra.mxu0 %v814
  %v3276 = vpop.f32.mrf.mxu0
  %v3277 = vadd.f32 0.0, %v3276
  %v3278 = vpop.f32.mrf.mxu0
  %v3279 = vadd.f32 0.0, %v3278
  %3280 = vdwg.mxu0
  %3281 = vmatpush.bf16.msra.mxu0 %v1567
  %3282 = vmatpush.bf16.msra.mxu0 %v1563
  %3283 = vmatpush.bf16.msra.mxu0 %v1559
  %3284 = vmatpush.bf16.msra.mxu0 %v1555
  %3285 = vmatpush.bf16.msra.mxu0 %v1551
  %3286 = vmatpush.bf16.msra.mxu0 %v1547
  %3287 = vmatpush.bf16.msra.mxu0 %v1543
  %3288 = vmatpush.bf16.msra.mxu0 %v1539
  %3289 = vmatmul.bf16.gmra.mxu0 %v710
  %v3290 = vpop.f32.mrf.mxu0
  %v3291 = vadd.f32 %v3202, %v3290
  %v3292 = vpop.f32.mrf.mxu0
  %v3293 = vadd.f32 %v3204, %v3292
  %3294 = vmatmul.bf16.gmra.mxu0 %v717
  %v3295 = vpop.f32.mrf.mxu0
  %v3296 = vadd.f32 %v3207, %v3295
  %v3297 = vpop.f32.mrf.mxu0
  %v3298 = vadd.f32 %v3209, %v3297
  %3299 = vmatmul.bf16.gmra.mxu0 %v724
  %v3300 = vpop.f32.mrf.mxu0
  %v3301 = vadd.f32 %v3212, %v3300
  %v3302 = vpop.f32.mrf.mxu0
  %v3303 = vadd.f32 %v3214, %v3302
  %3304 = vmatmul.bf16.gmra.mxu0 %v731
  %v3305 = vpop.f32.mrf.mxu0
  %v3306 = vadd.f32 %v3217, %v3305
  %v3307 = vpop.f32.mrf.mxu0
  %v3308 = vadd.f32 %v3219, %v3307
  %3309 = vmatmul.bf16.gmra.mxu0 %v738
  %v3310 = vpop.f32.mrf.mxu0
  %v3311 = vadd.f32 %v3222, %v3310
  %v3312 = vpop.f32.mrf.mxu0
  %v3313 = vadd.f32 %v3224, %v3312
  %3314 = vmatmul.bf16.gmra.mxu0 %v745
  %v3315 = vpop.f32.mrf.mxu0
  %v3316 = vadd.f32 %v3227, %v3315
  %v3317 = vpop.f32.mrf.mxu0
  %v3318 = vadd.f32 %v3229, %v3317
  %3319 = vmatmul.bf16.gmra.mxu0 %v752
  %v3320 = vpop.f32.mrf.mxu0
  %v3321 = vadd.f32 %v3232, %v3320
  %v3322 = vpop.f32.mrf.mxu0
  %v3323 = vadd.f32 %v3234, %v3322
  %3324 = vmatmul.bf16.gmra.mxu0 %v759
  %v3325 = vpop.f32.mrf.mxu0
  %v3326 = vadd.f32 %v3237, %v3325
  %v3327 = vpop.f32.mrf.mxu0
  %v3328 = vadd.f32 %v3239, %v3327
  %3329 = vmatmul.bf16.gmra.mxu0 %v766
  %v3330 = vpop.f32.mrf.mxu0
  %v3331 = vadd.f32 %v3242, %v3330
  %v3332 = vpop.f32.mrf.mxu0
  %v3333 = vadd.f32 %v3244, %v3332
  %3334 = vmatmul.bf16.gmra.mxu0 %v773
  %v3335 = vpop.f32.mrf.mxu0
  %v3336 = vadd.f32 %v3247, %v3335
  %v3337 = vpop.f32.mrf.mxu0
  %v3338 = vadd.f32 %v3249, %v3337
  %3339 = vmatmul.bf16.gmra.mxu0 %v780
  %v3340 = vpop.f32.mrf.mxu0
  %v3341 = vadd.f32 %v3252, %v3340
  %v3342 = vpop.f32.mrf.mxu0
  %v3343 = vadd.f32 %v3254, %v3342
  %3344 = vmatmul.bf16.gmra.mxu0 %v787
  %v3345 = vpop.f32.mrf.mxu0
  %v3346 = vadd.f32 %v3257, %v3345
  %v3347 = vpop.f32.mrf.mxu0
  %v3348 = vadd.f32 %v3259, %v3347
  %3349 = vmatmul.bf16.gmra.mxu0 %v794
  %v3350 = vpop.f32.mrf.mxu0
  %v3351 = vadd.f32 %v3262, %v3350
  %v3352 = vpop.f32.mrf.mxu0
  %v3353 = vadd.f32 %v3264, %v3352
  %3354 = vmatmul.bf16.gmra.mxu0 %v801
  %v3355 = vpop.f32.mrf.mxu0
  %v3356 = vadd.f32 %v3267, %v3355
  %v3357 = vpop.f32.mrf.mxu0
  %v3358 = vadd.f32 %v3269, %v3357
  %3359 = vmatmul.bf16.gmra.mxu0 %v808
  %v3360 = vpop.f32.mrf.mxu0
  %v3361 = vadd.f32 %v3272, %v3360
  %v3362 = vpop.f32.mrf.mxu0
  %v3363 = vadd.f32 %v3274, %v3362
  %3364 = vmatmul.bf16.gmra.mxu0 %v815
  %v3365 = vpop.f32.mrf.mxu0
  %v3366 = vadd.f32 %v3277, %v3365
  %v3367 = vpop.f32.mrf.mxu0
  %v3368 = vadd.f32 %v3279, %v3367
  %3369 = vdwg.mxu0
  %3370 = vmatpush.bf16.msra.mxu0 %v1599
  %3371 = vmatpush.bf16.msra.mxu0 %v1595
  %3372 = vmatpush.bf16.msra.mxu0 %v1591
  %3373 = vmatpush.bf16.msra.mxu0 %v1587
  %3374 = vmatpush.bf16.msra.mxu0 %v1583
  %3375 = vmatpush.bf16.msra.mxu0 %v1579
  %3376 = vmatpush.bf16.msra.mxu0 %v1575
  %3377 = vmatpush.bf16.msra.mxu0 %v1571
  %3378 = vmatmul.bf16.gmra.mxu0 %v711
  %v3379 = vpop.f32.mrf.mxu0
  %v3380 = vadd.f32 %v3291, %v3379
  %v3381 = vpop.f32.mrf.mxu0
  %v3382 = vadd.f32 %v3293, %v3381
  %3383 = vmatmul.bf16.gmra.mxu0 %v718
  %v3384 = vpop.f32.mrf.mxu0
  %v3385 = vadd.f32 %v3296, %v3384
  %v3386 = vpop.f32.mrf.mxu0
  %v3387 = vadd.f32 %v3298, %v3386
  %3388 = vmatmul.bf16.gmra.mxu0 %v725
  %v3389 = vpop.f32.mrf.mxu0
  %v3390 = vadd.f32 %v3301, %v3389
  %v3391 = vpop.f32.mrf.mxu0
  %v3392 = vadd.f32 %v3303, %v3391
  %3393 = vmatmul.bf16.gmra.mxu0 %v732
  %v3394 = vpop.f32.mrf.mxu0
  %v3395 = vadd.f32 %v3306, %v3394
  %v3396 = vpop.f32.mrf.mxu0
  %v3397 = vadd.f32 %v3308, %v3396
  %3398 = vmatmul.bf16.gmra.mxu0 %v739
  %v3399 = vpop.f32.mrf.mxu0
  %v3400 = vadd.f32 %v3311, %v3399
  %v3401 = vpop.f32.mrf.mxu0
  %v3402 = vadd.f32 %v3313, %v3401
  %3403 = vmatmul.bf16.gmra.mxu0 %v746
  %v3404 = vpop.f32.mrf.mxu0
  %v3405 = vadd.f32 %v3316, %v3404
  %v3406 = vpop.f32.mrf.mxu0
  %v3407 = vadd.f32 %v3318, %v3406
  %3408 = vmatmul.bf16.gmra.mxu0 %v753
  %v3409 = vpop.f32.mrf.mxu0
  %v3410 = vadd.f32 %v3321, %v3409
  %v3411 = vpop.f32.mrf.mxu0
  %v3412 = vadd.f32 %v3323, %v3411
  %3413 = vmatmul.bf16.gmra.mxu0 %v760
  %v3414 = vpop.f32.mrf.mxu0
  %v3415 = vadd.f32 %v3326, %v3414
  %v3416 = vpop.f32.mrf.mxu0
  %v3417 = vadd.f32 %v3328, %v3416
  %3418 = vmatmul.bf16.gmra.mxu0 %v767
  %v3419 = vpop.f32.mrf.mxu0
  %v3420 = vadd.f32 %v3331, %v3419
  %v3421 = vpop.f32.mrf.mxu0
  %v3422 = vadd.f32 %v3333, %v3421
  %3423 = vmatmul.bf16.gmra.mxu0 %v774
  %v3424 = vpop.f32.mrf.mxu0
  %v3425 = vadd.f32 %v3336, %v3424
  %v3426 = vpop.f32.mrf.mxu0
  %v3427 = vadd.f32 %v3338, %v3426
  %3428 = vmatmul.bf16.gmra.mxu0 %v781
  %v3429 = vpop.f32.mrf.mxu0
  %v3430 = vadd.f32 %v3341, %v3429
  %v3431 = vpop.f32.mrf.mxu0
  %v3432 = vadd.f32 %v3343, %v3431
  %3433 = vmatmul.bf16.gmra.mxu0 %v788
  %v3434 = vpop.f32.mrf.mxu0
  %v3435 = vadd.f32 %v3346, %v3434
  %v3436 = vpop.f32.mrf.mxu0
  %v3437 = vadd.f32 %v3348, %v3436
  %3438 = vmatmul.bf16.gmra.mxu0 %v795
  %v3439 = vpop.f32.mrf.mxu0
  %v3440 = vadd.f32 %v3351, %v3439
  %v3441 = vpop.f32.mrf.mxu0
  %v3442 = vadd.f32 %v3353, %v3441
  %3443 = vmatmul.bf16.gmra.mxu0 %v802
  %v3444 = vpop.f32.mrf.mxu0
  %v3445 = vadd.f32 %v3356, %v3444
  %v3446 = vpop.f32.mrf.mxu0
  %v3447 = vadd.f32 %v3358, %v3446
  %3448 = vmatmul.bf16.gmra.mxu0 %v809
  %v3449 = vpop.f32.mrf.mxu0
  %v3450 = vadd.f32 %v3361, %v3449
  %v3451 = vpop.f32.mrf.mxu0
  %v3452 = vadd.f32 %v3363, %v3451
  %3453 = vmatmul.bf16.gmra.mxu0 %v816
  %v3454 = vpop.f32.mrf.mxu0
  %v3455 = vadd.f32 %v3366, %v3454
  %v3456 = vpop.f32.mrf.mxu0
  %v3457 = vadd.f32 %v3368, %v3456
  %3458 = vdwg.mxu0
  %3459 = vmatpush.bf16.msra.mxu0 %v1631
  %3460 = vmatpush.bf16.msra.mxu0 %v1627
  %3461 = vmatpush.bf16.msra.mxu0 %v1623
  %3462 = vmatpush.bf16.msra.mxu0 %v1619
  %3463 = vmatpush.bf16.msra.mxu0 %v1615
  %3464 = vmatpush.bf16.msra.mxu0 %v1611
  %3465 = vmatpush.bf16.msra.mxu0 %v1607
  %3466 = vmatpush.bf16.msra.mxu0 %v1603
  %3467 = vmatmul.bf16.gmra.mxu0 %v712
  %v3468 = vpop.f32.mrf.mxu0
  %v3469 = vadd.f32 %v3380, %v3468
  %v3470 = vpop.f32.mrf.mxu0
  %v3471 = vadd.f32 %v3382, %v3470
  %3472 = vmatmul.bf16.gmra.mxu0 %v719
  %v3473 = vpop.f32.mrf.mxu0
  %v3474 = vadd.f32 %v3385, %v3473
  %v3475 = vpop.f32.mrf.mxu0
  %v3476 = vadd.f32 %v3387, %v3475
  %3477 = vmatmul.bf16.gmra.mxu0 %v726
  %v3478 = vpop.f32.mrf.mxu0
  %v3479 = vadd.f32 %v3390, %v3478
  %v3480 = vpop.f32.mrf.mxu0
  %v3481 = vadd.f32 %v3392, %v3480
  %3482 = vmatmul.bf16.gmra.mxu0 %v733
  %v3483 = vpop.f32.mrf.mxu0
  %v3484 = vadd.f32 %v3395, %v3483
  %v3485 = vpop.f32.mrf.mxu0
  %v3486 = vadd.f32 %v3397, %v3485
  %3487 = vmatmul.bf16.gmra.mxu0 %v740
  %v3488 = vpop.f32.mrf.mxu0
  %v3489 = vadd.f32 %v3400, %v3488
  %v3490 = vpop.f32.mrf.mxu0
  %v3491 = vadd.f32 %v3402, %v3490
  %3492 = vmatmul.bf16.gmra.mxu0 %v747
  %v3493 = vpop.f32.mrf.mxu0
  %v3494 = vadd.f32 %v3405, %v3493
  %v3495 = vpop.f32.mrf.mxu0
  %v3496 = vadd.f32 %v3407, %v3495
  %3497 = vmatmul.bf16.gmra.mxu0 %v754
  %v3498 = vpop.f32.mrf.mxu0
  %v3499 = vadd.f32 %v3410, %v3498
  %v3500 = vpop.f32.mrf.mxu0
  %v3501 = vadd.f32 %v3412, %v3500
  %3502 = vmatmul.bf16.gmra.mxu0 %v761
  %v3503 = vpop.f32.mrf.mxu0
  %v3504 = vadd.f32 %v3415, %v3503
  %v3505 = vpop.f32.mrf.mxu0
  %v3506 = vadd.f32 %v3417, %v3505
  %3507 = vmatmul.bf16.gmra.mxu0 %v768
  %v3508 = vpop.f32.mrf.mxu0
  %v3509 = vadd.f32 %v3420, %v3508
  %v3510 = vpop.f32.mrf.mxu0
  %v3511 = vadd.f32 %v3422, %v3510
  %3512 = vmatmul.bf16.gmra.mxu0 %v775
  %v3513 = vpop.f32.mrf.mxu0
  %v3514 = vadd.f32 %v3425, %v3513
  %v3515 = vpop.f32.mrf.mxu0
  %v3516 = vadd.f32 %v3427, %v3515
  %3517 = vmatmul.bf16.gmra.mxu0 %v782
  %v3518 = vpop.f32.mrf.mxu0
  %v3519 = vadd.f32 %v3430, %v3518
  %v3520 = vpop.f32.mrf.mxu0
  %v3521 = vadd.f32 %v3432, %v3520
  %3522 = vmatmul.bf16.gmra.mxu0 %v789
  %v3523 = vpop.f32.mrf.mxu0
  %v3524 = vadd.f32 %v3435, %v3523
  %v3525 = vpop.f32.mrf.mxu0
  %v3526 = vadd.f32 %v3437, %v3525
  %3527 = vmatmul.bf16.gmra.mxu0 %v796
  %v3528 = vpop.f32.mrf.mxu0
  %v3529 = vadd.f32 %v3440, %v3528
  %v3530 = vpop.f32.mrf.mxu0
  %v3531 = vadd.f32 %v3442, %v3530
  %3532 = vmatmul.bf16.gmra.mxu0 %v803
  %v3533 = vpop.f32.mrf.mxu0
  %v3534 = vadd.f32 %v3445, %v3533
  %v3535 = vpop.f32.mrf.mxu0
  %v3536 = vadd.f32 %v3447, %v3535
  %3537 = vmatmul.bf16.gmra.mxu0 %v810
  %v3538 = vpop.f32.mrf.mxu0
  %v3539 = vadd.f32 %v3450, %v3538
  %v3540 = vpop.f32.mrf.mxu0
  %v3541 = vadd.f32 %v3452, %v3540
  %3542 = vmatmul.bf16.gmra.mxu0 %v817
  %v3543 = vpop.f32.mrf.mxu0
  %v3544 = vadd.f32 %v3455, %v3543
  %v3545 = vpop.f32.mrf.mxu0
  %v3546 = vadd.f32 %v3457, %v3545
  %3547 = vdwg.mxu0
  %3548 = vmatpush.bf16.msra.mxu0 %v1663
  %3549 = vmatpush.bf16.msra.mxu0 %v1659
  %3550 = vmatpush.bf16.msra.mxu0 %v1655
  %3551 = vmatpush.bf16.msra.mxu0 %v1651
  %3552 = vmatpush.bf16.msra.mxu0 %v1647
  %3553 = vmatpush.bf16.msra.mxu0 %v1643
  %3554 = vmatpush.bf16.msra.mxu0 %v1639
  %3555 = vmatpush.bf16.msra.mxu0 %v1635
  %3556 = vmatmul.bf16.gmra.mxu0 %v713
  %v3557 = vpop.f32.mrf.mxu0
  %v3558 = vadd.f32 %v3469, %v3557
  %v3559 = vpop.f32.mrf.mxu0
  %v3560 = vadd.f32 %v3471, %v3559
  %3561 = vmatmul.bf16.gmra.mxu0 %v720
  %v3562 = vpop.f32.mrf.mxu0
  %v3563 = vadd.f32 %v3474, %v3562
  %v3564 = vpop.f32.mrf.mxu0
  %v3565 = vadd.f32 %v3476, %v3564
  %3566 = vmatmul.bf16.gmra.mxu0 %v727
  %v3567 = vpop.f32.mrf.mxu0
  %v3568 = vadd.f32 %v3479, %v3567
  %v3569 = vpop.f32.mrf.mxu0
  %v3570 = vadd.f32 %v3481, %v3569
  %3571 = vmatmul.bf16.gmra.mxu0 %v734
  %v3572 = vpop.f32.mrf.mxu0
  %v3573 = vadd.f32 %v3484, %v3572
  %v3574 = vpop.f32.mrf.mxu0
  %v3575 = vadd.f32 %v3486, %v3574
  %3576 = vmatmul.bf16.gmra.mxu0 %v741
  %v3577 = vpop.f32.mrf.mxu0
  %v3578 = vadd.f32 %v3489, %v3577
  %v3579 = vpop.f32.mrf.mxu0
  %v3580 = vadd.f32 %v3491, %v3579
  %3581 = vmatmul.bf16.gmra.mxu0 %v748
  %v3582 = vpop.f32.mrf.mxu0
  %v3583 = vadd.f32 %v3494, %v3582
  %v3584 = vpop.f32.mrf.mxu0
  %v3585 = vadd.f32 %v3496, %v3584
  %3586 = vmatmul.bf16.gmra.mxu0 %v755
  %v3587 = vpop.f32.mrf.mxu0
  %v3588 = vadd.f32 %v3499, %v3587
  %v3589 = vpop.f32.mrf.mxu0
  %v3590 = vadd.f32 %v3501, %v3589
  %3591 = vmatmul.bf16.gmra.mxu0 %v762
  %v3592 = vpop.f32.mrf.mxu0
  %v3593 = vadd.f32 %v3504, %v3592
  %v3594 = vpop.f32.mrf.mxu0
  %v3595 = vadd.f32 %v3506, %v3594
  %3596 = vmatmul.bf16.gmra.mxu0 %v769
  %v3597 = vpop.f32.mrf.mxu0
  %v3598 = vadd.f32 %v3509, %v3597
  %v3599 = vpop.f32.mrf.mxu0
  %v3600 = vadd.f32 %v3511, %v3599
  %3601 = vmatmul.bf16.gmra.mxu0 %v776
  %v3602 = vpop.f32.mrf.mxu0
  %v3603 = vadd.f32 %v3514, %v3602
  %v3604 = vpop.f32.mrf.mxu0
  %v3605 = vadd.f32 %v3516, %v3604
  %3606 = vmatmul.bf16.gmra.mxu0 %v783
  %v3607 = vpop.f32.mrf.mxu0
  %v3608 = vadd.f32 %v3519, %v3607
  %v3609 = vpop.f32.mrf.mxu0
  %v3610 = vadd.f32 %v3521, %v3609
  %3611 = vmatmul.bf16.gmra.mxu0 %v790
  %v3612 = vpop.f32.mrf.mxu0
  %v3613 = vadd.f32 %v3524, %v3612
  %v3614 = vpop.f32.mrf.mxu0
  %v3615 = vadd.f32 %v3526, %v3614
  %3616 = vmatmul.bf16.gmra.mxu0 %v797
  %v3617 = vpop.f32.mrf.mxu0
  %v3618 = vadd.f32 %v3529, %v3617
  %v3619 = vpop.f32.mrf.mxu0
  %v3620 = vadd.f32 %v3531, %v3619
  %3621 = vmatmul.bf16.gmra.mxu0 %v804
  %v3622 = vpop.f32.mrf.mxu0
  %v3623 = vadd.f32 %v3534, %v3622
  %v3624 = vpop.f32.mrf.mxu0
  %v3625 = vadd.f32 %v3536, %v3624
  %3626 = vmatmul.bf16.gmra.mxu0 %v811
  %v3627 = vpop.f32.mrf.mxu0
  %v3628 = vadd.f32 %v3539, %v3627
  %v3629 = vpop.f32.mrf.mxu0
  %v3630 = vadd.f32 %v3541, %v3629
  %3631 = vmatmul.bf16.gmra.mxu0 %v818
  %v3632 = vpop.f32.mrf.mxu0
  %v3633 = vadd.f32 %v3544, %v3632
  %v3634 = vpop.f32.mrf.mxu0
  %v3635 = vadd.f32 %v3546, %v3634
  %3636 = vdwg.mxu0
  %3637 = vmatpush.bf16.msra.mxu0 %v1695
  %3638 = vmatpush.bf16.msra.mxu0 %v1691
  %3639 = vmatpush.bf16.msra.mxu0 %v1687
  %3640 = vmatpush.bf16.msra.mxu0 %v1683
  %3641 = vmatpush.bf16.msra.mxu0 %v1679
  %3642 = vmatpush.bf16.msra.mxu0 %v1675
  %3643 = vmatpush.bf16.msra.mxu0 %v1671
  %3644 = vmatpush.bf16.msra.mxu0 %v1667
  %3645 = vmatmul.bf16.gmra.mxu0 %v714
  %v3646 = vpop.f32.mrf.mxu0
  %v3647 = vadd.f32 %v3558, %v3646
  %v3648 = vpop.f32.mrf.mxu0
  %v3649 = vadd.f32 %v3560, %v3648
  %3650 = vmatmul.bf16.gmra.mxu0 %v721
  %v3651 = vpop.f32.mrf.mxu0
  %v3652 = vadd.f32 %v3563, %v3651
  %v3653 = vpop.f32.mrf.mxu0
  %v3654 = vadd.f32 %v3565, %v3653
  %3655 = vmatmul.bf16.gmra.mxu0 %v728
  %v3656 = vpop.f32.mrf.mxu0
  %v3657 = vadd.f32 %v3568, %v3656
  %v3658 = vpop.f32.mrf.mxu0
  %v3659 = vadd.f32 %v3570, %v3658
  %3660 = vmatmul.bf16.gmra.mxu0 %v735
  %v3661 = vpop.f32.mrf.mxu0
  %v3662 = vadd.f32 %v3573, %v3661
  %v3663 = vpop.f32.mrf.mxu0
  %v3664 = vadd.f32 %v3575, %v3663
  %3665 = vmatmul.bf16.gmra.mxu0 %v742
  %v3666 = vpop.f32.mrf.mxu0
  %v3667 = vadd.f32 %v3578, %v3666
  %v3668 = vpop.f32.mrf.mxu0
  %v3669 = vadd.f32 %v3580, %v3668
  %3670 = vmatmul.bf16.gmra.mxu0 %v749
  %v3671 = vpop.f32.mrf.mxu0
  %v3672 = vadd.f32 %v3583, %v3671
  %v3673 = vpop.f32.mrf.mxu0
  %v3674 = vadd.f32 %v3585, %v3673
  %3675 = vmatmul.bf16.gmra.mxu0 %v756
  %v3676 = vpop.f32.mrf.mxu0
  %v3677 = vadd.f32 %v3588, %v3676
  %v3678 = vpop.f32.mrf.mxu0
  %v3679 = vadd.f32 %v3590, %v3678
  %3680 = vmatmul.bf16.gmra.mxu0 %v763
  %v3681 = vpop.f32.mrf.mxu0
  %v3682 = vadd.f32 %v3593, %v3681
  %v3683 = vpop.f32.mrf.mxu0
  %v3684 = vadd.f32 %v3595, %v3683
  %3685 = vmatmul.bf16.gmra.mxu0 %v770
  %v3686 = vpop.f32.mrf.mxu0
  %v3687 = vadd.f32 %v3598, %v3686
  %v3688 = vpop.f32.mrf.mxu0
  %v3689 = vadd.f32 %v3600, %v3688
  %3690 = vmatmul.bf16.gmra.mxu0 %v777
  %v3691 = vpop.f32.mrf.mxu0
  %v3692 = vadd.f32 %v3603, %v3691
  %v3693 = vpop.f32.mrf.mxu0
  %v3694 = vadd.f32 %v3605, %v3693
  %3695 = vmatmul.bf16.gmra.mxu0 %v784
  %v3696 = vpop.f32.mrf.mxu0
  %v3697 = vadd.f32 %v3608, %v3696
  %v3698 = vpop.f32.mrf.mxu0
  %v3699 = vadd.f32 %v3610, %v3698
  %3700 = vmatmul.bf16.gmra.mxu0 %v791
  %v3701 = vpop.f32.mrf.mxu0
  %v3702 = vadd.f32 %v3613, %v3701
  %v3703 = vpop.f32.mrf.mxu0
  %v3704 = vadd.f32 %v3615, %v3703
  %3705 = vmatmul.bf16.gmra.mxu0 %v798
  %v3706 = vpop.f32.mrf.mxu0
  %v3707 = vadd.f32 %v3618, %v3706
  %v3708 = vpop.f32.mrf.mxu0
  %v3709 = vadd.f32 %v3620, %v3708
  %3710 = vmatmul.bf16.gmra.mxu0 %v805
  %v3711 = vpop.f32.mrf.mxu0
  %v3712 = vadd.f32 %v3623, %v3711
  %v3713 = vpop.f32.mrf.mxu0
  %v3714 = vadd.f32 %v3625, %v3713
  %3715 = vmatmul.bf16.gmra.mxu0 %v812
  %v3716 = vpop.f32.mrf.mxu0
  %v3717 = vadd.f32 %v3628, %v3716
  %v3718 = vpop.f32.mrf.mxu0
  %v3719 = vadd.f32 %v3630, %v3718
  %3720 = vmatmul.bf16.gmra.mxu0 %v819
  %v3721 = vpop.f32.mrf.mxu0
  %v3722 = vadd.f32 %v3633, %v3721
  %v3723 = vpop.f32.mrf.mxu0
  %v3724 = vadd.f32 %v3635, %v3723
  %3725 = vdwg.mxu0
  %3726 = vmatpush.bf16.msra.mxu0 0
  %3727 = vmatpush.bf16.msra.mxu0 0
  %3728 = vmatpush.bf16.msra.mxu0 0
  %3729 = vmatpush.bf16.msra.mxu0 0
  %3730 = vmatpush.bf16.msra.mxu0 0
  %3731 = vmatpush.bf16.msra.mxu0 0
  %3732 = vmatpush.bf16.msra.mxu0 0
  %3733 = vmatpush.bf16.msra.mxu0 %v1699
  %3734 = vmatmul.bf16.gmra.mxu0 %v1899
  %v3735 = vpop.f32.mrf.mxu0
  %v3736 = vadd.f32 %v3647, %v3735
  %v3737 = vpop.f32.mrf.mxu0
  %v3738 = vadd.f32 %v3649, %v3737
  %3739 = vmatmul.bf16.gmra.mxu0 %v1902
  %v3740 = vpop.f32.mrf.mxu0
  %v3741 = vadd.f32 %v3652, %v3740
  %v3742 = vpop.f32.mrf.mxu0
  %v3743 = vadd.f32 %v3654, %v3742
  %3744 = vmatmul.bf16.gmra.mxu0 %v1905
  %v3745 = vpop.f32.mrf.mxu0
  %v3746 = vadd.f32 %v3657, %v3745
  %v3747 = vpop.f32.mrf.mxu0
  %v3748 = vadd.f32 %v3659, %v3747
  %3749 = vmatmul.bf16.gmra.mxu0 %v1908
  %v3750 = vpop.f32.mrf.mxu0
  %v3751 = vadd.f32 %v3662, %v3750
  %v3752 = vpop.f32.mrf.mxu0
  %v3753 = vadd.f32 %v3664, %v3752
  %3754 = vmatmul.bf16.gmra.mxu0 %v1911
  %v3755 = vpop.f32.mrf.mxu0
  %v3756 = vadd.f32 %v3667, %v3755
  %v3757 = vpop.f32.mrf.mxu0
  %v3758 = vadd.f32 %v3669, %v3757
  %3759 = vmatmul.bf16.gmra.mxu0 %v1914
  %v3760 = vpop.f32.mrf.mxu0
  %v3761 = vadd.f32 %v3672, %v3760
  %v3762 = vpop.f32.mrf.mxu0
  %v3763 = vadd.f32 %v3674, %v3762
  %3764 = vmatmul.bf16.gmra.mxu0 %v1917
  %v3765 = vpop.f32.mrf.mxu0
  %v3766 = vadd.f32 %v3677, %v3765
  %v3767 = vpop.f32.mrf.mxu0
  %v3768 = vadd.f32 %v3679, %v3767
  %3769 = vmatmul.bf16.gmra.mxu0 %v1920
  %v3770 = vpop.f32.mrf.mxu0
  %v3771 = vadd.f32 %v3682, %v3770
  %v3772 = vpop.f32.mrf.mxu0
  %v3773 = vadd.f32 %v3684, %v3772
  %3774 = vmatmul.bf16.gmra.mxu0 %v1923
  %v3775 = vpop.f32.mrf.mxu0
  %v3776 = vadd.f32 %v3687, %v3775
  %v3777 = vpop.f32.mrf.mxu0
  %v3778 = vadd.f32 %v3689, %v3777
  %3779 = vmatmul.bf16.gmra.mxu0 %v1926
  %v3780 = vpop.f32.mrf.mxu0
  %v3781 = vadd.f32 %v3692, %v3780
  %v3782 = vpop.f32.mrf.mxu0
  %v3783 = vadd.f32 %v3694, %v3782
  %3784 = vmatmul.bf16.gmra.mxu0 %v1929
  %v3785 = vpop.f32.mrf.mxu0
  %v3786 = vadd.f32 %v3697, %v3785
  %v3787 = vpop.f32.mrf.mxu0
  %v3788 = vadd.f32 %v3699, %v3787
  %3789 = vmatmul.bf16.gmra.mxu0 %v1932
  %v3790 = vpop.f32.mrf.mxu0
  %v3791 = vadd.f32 %v3702, %v3790
  %v3792 = vpop.f32.mrf.mxu0
  %v3793 = vadd.f32 %v3704, %v3792
  %3794 = vmatmul.bf16.gmra.mxu0 %v1935
  %v3795 = vpop.f32.mrf.mxu0
  %v3796 = vadd.f32 %v3707, %v3795
  %v3797 = vpop.f32.mrf.mxu0
  %v3798 = vadd.f32 %v3709, %v3797
  %3799 = vmatmul.bf16.gmra.mxu0 %v1938
  %v3800 = vpop.f32.mrf.mxu0
  %v3801 = vadd.f32 %v3712, %v3800
  %v3802 = vpop.f32.mrf.mxu0
  %v3803 = vadd.f32 %v3714, %v3802
  %3804 = vmatmul.bf16.gmra.mxu0 %v1941
  %v3805 = vpop.f32.mrf.mxu0
  %v3806 = vadd.f32 %v3717, %v3805
  %v3807 = vpop.f32.mrf.mxu0
  %v3808 = vadd.f32 %v3719, %v3807
  %3809 = vmatmul.bf16.gmra.mxu0 %v1944
  %v3810 = vpop.f32.mrf.mxu0
  %v3811 = vadd.f32 %v3722, %v3810
  %v3812 = vpop.f32.mrf.mxu0
  %v3813 = vadd.f32 %v3724, %v3812
  %3814 = vdwg.mxu0
  %3815 = vmatpush.bf16.msra.mxu0 %v1536
  %3816 = vmatpush.bf16.msra.mxu0 %v1532
  %3817 = vmatpush.bf16.msra.mxu0 %v1528
  %3818 = vmatpush.bf16.msra.mxu0 %v1524
  %3819 = vmatpush.bf16.msra.mxu0 %v1520
  %3820 = vmatpush.bf16.msra.mxu0 %v1516
  %3821 = vmatpush.bf16.msra.mxu0 %v1512
  %3822 = vmatpush.bf16.msra.mxu0 %v1508
  %3823 = vmatmul.bf16.gmra.mxu0 %v709
  %v3824 = vpop.f32.mrf.mxu0
  %v3825 = vadd.f32 0.0, %v3824
  %v3826 = vpop.f32.mrf.mxu0
  %v3827 = vadd.f32 0.0, %v3826
  %3828 = vmatmul.bf16.gmra.mxu0 %v716
  %v3829 = vpop.f32.mrf.mxu0
  %v3830 = vadd.f32 0.0, %v3829
  %v3831 = vpop.f32.mrf.mxu0
  %v3832 = vadd.f32 0.0, %v3831
  %3833 = vmatmul.bf16.gmra.mxu0 %v723
  %v3834 = vpop.f32.mrf.mxu0
  %v3835 = vadd.f32 0.0, %v3834
  %v3836 = vpop.f32.mrf.mxu0
  %v3837 = vadd.f32 0.0, %v3836
  %3838 = vmatmul.bf16.gmra.mxu0 %v730
  %v3839 = vpop.f32.mrf.mxu0
  %v3840 = vadd.f32 0.0, %v3839
  %v3841 = vpop.f32.mrf.mxu0
  %v3842 = vadd.f32 0.0, %v3841
  %3843 = vmatmul.bf16.gmra.mxu0 %v737
  %v3844 = vpop.f32.mrf.mxu0
  %v3845 = vadd.f32 0.0, %v3844
  %v3846 = vpop.f32.mrf.mxu0
  %v3847 = vadd.f32 0.0, %v3846
  %3848 = vmatmul.bf16.gmra.mxu0 %v744
  %v3849 = vpop.f32.mrf.mxu0
  %v3850 = vadd.f32 0.0, %v3849
  %v3851 = vpop.f32.mrf.mxu0
  %v3852 = vadd.f32 0.0, %v3851
  %3853 = vmatmul.bf16.gmra.mxu0 %v751
  %v3854 = vpop.f32.mrf.mxu0
  %v3855 = vadd.f32 0.0, %v3854
  %v3856 = vpop.f32.mrf.mxu0
  %v3857 = vadd.f32 0.0, %v3856
  %3858 = vmatmul.bf16.gmra.mxu0 %v758
  %v3859 = vpop.f32.mrf.mxu0
  %v3860 = vadd.f32 0.0, %v3859
  %v3861 = vpop.f32.mrf.mxu0
  %v3862 = vadd.f32 0.0, %v3861
  %3863 = vmatmul.bf16.gmra.mxu0 %v765
  %v3864 = vpop.f32.mrf.mxu0
  %v3865 = vadd.f32 0.0, %v3864
  %v3866 = vpop.f32.mrf.mxu0
  %v3867 = vadd.f32 0.0, %v3866
  %3868 = vmatmul.bf16.gmra.mxu0 %v772
  %v3869 = vpop.f32.mrf.mxu0
  %v3870 = vadd.f32 0.0, %v3869
  %v3871 = vpop.f32.mrf.mxu0
  %v3872 = vadd.f32 0.0, %v3871
  %3873 = vmatmul.bf16.gmra.mxu0 %v779
  %v3874 = vpop.f32.mrf.mxu0
  %v3875 = vadd.f32 0.0, %v3874
  %v3876 = vpop.f32.mrf.mxu0
  %v3877 = vadd.f32 0.0, %v3876
  %3878 = vmatmul.bf16.gmra.mxu0 %v786
  %v3879 = vpop.f32.mrf.mxu0
  %v3880 = vadd.f32 0.0, %v3879
  %v3881 = vpop.f32.mrf.mxu0
  %v3882 = vadd.f32 0.0, %v3881
  %3883 = vmatmul.bf16.gmra.mxu0 %v793
  %v3884 = vpop.f32.mrf.mxu0
  %v3885 = vadd.f32 0.0, %v3884
  %v3886 = vpop.f32.mrf.mxu0
  %v3887 = vadd.f32 0.0, %v3886
  %3888 = vmatmul.bf16.gmra.mxu0 %v800
  %v3889 = vpop.f32.mrf.mxu0
  %v3890 = vadd.f32 0.0, %v3889
  %v3891 = vpop.f32.mrf.mxu0
  %v3892 = vadd.f32 0.0, %v3891
  %3893 = vmatmul.bf16.gmra.mxu0 %v807
  %v3894 = vpop.f32.mrf.mxu0
  %v3895 = vadd.f32 0.0, %v3894
  %v3896 = vpop.f32.mrf.mxu0
  %v3897 = vadd.f32 0.0, %v3896
  %3898 = vmatmul.bf16.gmra.mxu0 %v814
  %v3899 = vpop.f32.mrf.mxu0
  %v3900 = vadd.f32 0.0, %v3899
  %v3901 = vpop.f32.mrf.mxu0
  %v3902 = vadd.f32 0.0, %v3901
  %3903 = vdwg.mxu0
  %3904 = vmatpush.bf16.msra.mxu0 %v1568
  %3905 = vmatpush.bf16.msra.mxu0 %v1564
  %3906 = vmatpush.bf16.msra.mxu0 %v1560
  %3907 = vmatpush.bf16.msra.mxu0 %v1556
  %3908 = vmatpush.bf16.msra.mxu0 %v1552
  %3909 = vmatpush.bf16.msra.mxu0 %v1548
  %3910 = vmatpush.bf16.msra.mxu0 %v1544
  %3911 = vmatpush.bf16.msra.mxu0 %v1540
  %3912 = vmatmul.bf16.gmra.mxu0 %v710
  %v3913 = vpop.f32.mrf.mxu0
  %v3914 = vadd.f32 %v3825, %v3913
  %v3915 = vpop.f32.mrf.mxu0
  %v3916 = vadd.f32 %v3827, %v3915
  %3917 = vmatmul.bf16.gmra.mxu0 %v717
  %v3918 = vpop.f32.mrf.mxu0
  %v3919 = vadd.f32 %v3830, %v3918
  %v3920 = vpop.f32.mrf.mxu0
  %v3921 = vadd.f32 %v3832, %v3920
  %3922 = vmatmul.bf16.gmra.mxu0 %v724
  %v3923 = vpop.f32.mrf.mxu0
  %v3924 = vadd.f32 %v3835, %v3923
  %v3925 = vpop.f32.mrf.mxu0
  %v3926 = vadd.f32 %v3837, %v3925
  %3927 = vmatmul.bf16.gmra.mxu0 %v731
  %v3928 = vpop.f32.mrf.mxu0
  %v3929 = vadd.f32 %v3840, %v3928
  %v3930 = vpop.f32.mrf.mxu0
  %v3931 = vadd.f32 %v3842, %v3930
  %3932 = vmatmul.bf16.gmra.mxu0 %v738
  %v3933 = vpop.f32.mrf.mxu0
  %v3934 = vadd.f32 %v3845, %v3933
  %v3935 = vpop.f32.mrf.mxu0
  %v3936 = vadd.f32 %v3847, %v3935
  %3937 = vmatmul.bf16.gmra.mxu0 %v745
  %v3938 = vpop.f32.mrf.mxu0
  %v3939 = vadd.f32 %v3850, %v3938
  %v3940 = vpop.f32.mrf.mxu0
  %v3941 = vadd.f32 %v3852, %v3940
  %3942 = vmatmul.bf16.gmra.mxu0 %v752
  %v3943 = vpop.f32.mrf.mxu0
  %v3944 = vadd.f32 %v3855, %v3943
  %v3945 = vpop.f32.mrf.mxu0
  %v3946 = vadd.f32 %v3857, %v3945
  %3947 = vmatmul.bf16.gmra.mxu0 %v759
  %v3948 = vpop.f32.mrf.mxu0
  %v3949 = vadd.f32 %v3860, %v3948
  %v3950 = vpop.f32.mrf.mxu0
  %v3951 = vadd.f32 %v3862, %v3950
  %3952 = vmatmul.bf16.gmra.mxu0 %v766
  %v3953 = vpop.f32.mrf.mxu0
  %v3954 = vadd.f32 %v3865, %v3953
  %v3955 = vpop.f32.mrf.mxu0
  %v3956 = vadd.f32 %v3867, %v3955
  %3957 = vmatmul.bf16.gmra.mxu0 %v773
  %v3958 = vpop.f32.mrf.mxu0
  %v3959 = vadd.f32 %v3870, %v3958
  %v3960 = vpop.f32.mrf.mxu0
  %v3961 = vadd.f32 %v3872, %v3960
  %3962 = vmatmul.bf16.gmra.mxu0 %v780
  %v3963 = vpop.f32.mrf.mxu0
  %v3964 = vadd.f32 %v3875, %v3963
  %v3965 = vpop.f32.mrf.mxu0
  %v3966 = vadd.f32 %v3877, %v3965
  %3967 = vmatmul.bf16.gmra.mxu0 %v787
  %v3968 = vpop.f32.mrf.mxu0
  %v3969 = vadd.f32 %v3880, %v3968
  %v3970 = vpop.f32.mrf.mxu0
  %v3971 = vadd.f32 %v3882, %v3970
  %3972 = vmatmul.bf16.gmra.mxu0 %v794
  %v3973 = vpop.f32.mrf.mxu0
  %v3974 = vadd.f32 %v3885, %v3973
  %v3975 = vpop.f32.mrf.mxu0
  %v3976 = vadd.f32 %v3887, %v3975
  %3977 = vmatmul.bf16.gmra.mxu0 %v801
  %v3978 = vpop.f32.mrf.mxu0
  %v3979 = vadd.f32 %v3890, %v3978
  %v3980 = vpop.f32.mrf.mxu0
  %v3981 = vadd.f32 %v3892, %v3980
  %3982 = vmatmul.bf16.gmra.mxu0 %v808
  %v3983 = vpop.f32.mrf.mxu0
  %v3984 = vadd.f32 %v3895, %v3983
  %v3985 = vpop.f32.mrf.mxu0
  %v3986 = vadd.f32 %v3897, %v3985
  %3987 = vmatmul.bf16.gmra.mxu0 %v815
  %v3988 = vpop.f32.mrf.mxu0
  %v3989 = vadd.f32 %v3900, %v3988
  %v3990 = vpop.f32.mrf.mxu0
  %v3991 = vadd.f32 %v3902, %v3990
  %3992 = vdwg.mxu0
  %3993 = vmatpush.bf16.msra.mxu0 %v1600
  %3994 = vmatpush.bf16.msra.mxu0 %v1596
  %3995 = vmatpush.bf16.msra.mxu0 %v1592
  %3996 = vmatpush.bf16.msra.mxu0 %v1588
  %3997 = vmatpush.bf16.msra.mxu0 %v1584
  %3998 = vmatpush.bf16.msra.mxu0 %v1580
  %3999 = vmatpush.bf16.msra.mxu0 %v1576
  %4000 = vmatpush.bf16.msra.mxu0 %v1572
  %4001 = vmatmul.bf16.gmra.mxu0 %v711
  %v4002 = vpop.f32.mrf.mxu0
  %v4003 = vadd.f32 %v3914, %v4002
  %v4004 = vpop.f32.mrf.mxu0
  %v4005 = vadd.f32 %v3916, %v4004
  %4006 = vmatmul.bf16.gmra.mxu0 %v718
  %v4007 = vpop.f32.mrf.mxu0
  %v4008 = vadd.f32 %v3919, %v4007
  %v4009 = vpop.f32.mrf.mxu0
  %v4010 = vadd.f32 %v3921, %v4009
  %4011 = vmatmul.bf16.gmra.mxu0 %v725
  %v4012 = vpop.f32.mrf.mxu0
  %v4013 = vadd.f32 %v3924, %v4012
  %v4014 = vpop.f32.mrf.mxu0
  %v4015 = vadd.f32 %v3926, %v4014
  %4016 = vmatmul.bf16.gmra.mxu0 %v732
  %v4017 = vpop.f32.mrf.mxu0
  %v4018 = vadd.f32 %v3929, %v4017
  %v4019 = vpop.f32.mrf.mxu0
  %v4020 = vadd.f32 %v3931, %v4019
  %4021 = vmatmul.bf16.gmra.mxu0 %v739
  %v4022 = vpop.f32.mrf.mxu0
  %v4023 = vadd.f32 %v3934, %v4022
  %v4024 = vpop.f32.mrf.mxu0
  %v4025 = vadd.f32 %v3936, %v4024
  %4026 = vmatmul.bf16.gmra.mxu0 %v746
  %v4027 = vpop.f32.mrf.mxu0
  %v4028 = vadd.f32 %v3939, %v4027
  %v4029 = vpop.f32.mrf.mxu0
  %v4030 = vadd.f32 %v3941, %v4029
  %4031 = vmatmul.bf16.gmra.mxu0 %v753
  %v4032 = vpop.f32.mrf.mxu0
  %v4033 = vadd.f32 %v3944, %v4032
  %v4034 = vpop.f32.mrf.mxu0
  %v4035 = vadd.f32 %v3946, %v4034
  %4036 = vmatmul.bf16.gmra.mxu0 %v760
  %v4037 = vpop.f32.mrf.mxu0
  %v4038 = vadd.f32 %v3949, %v4037
  %v4039 = vpop.f32.mrf.mxu0
  %v4040 = vadd.f32 %v3951, %v4039
  %4041 = vmatmul.bf16.gmra.mxu0 %v767
  %v4042 = vpop.f32.mrf.mxu0
  %v4043 = vadd.f32 %v3954, %v4042
  %v4044 = vpop.f32.mrf.mxu0
  %v4045 = vadd.f32 %v3956, %v4044
  %4046 = vmatmul.bf16.gmra.mxu0 %v774
  %v4047 = vpop.f32.mrf.mxu0
  %v4048 = vadd.f32 %v3959, %v4047
  %v4049 = vpop.f32.mrf.mxu0
  %v4050 = vadd.f32 %v3961, %v4049
  %4051 = vmatmul.bf16.gmra.mxu0 %v781
  %v4052 = vpop.f32.mrf.mxu0
  %v4053 = vadd.f32 %v3964, %v4052
  %v4054 = vpop.f32.mrf.mxu0
  %v4055 = vadd.f32 %v3966, %v4054
  %4056 = vmatmul.bf16.gmra.mxu0 %v788
  %v4057 = vpop.f32.mrf.mxu0
  %v4058 = vadd.f32 %v3969, %v4057
  %v4059 = vpop.f32.mrf.mxu0
  %v4060 = vadd.f32 %v3971, %v4059
  %4061 = vmatmul.bf16.gmra.mxu0 %v795
  %v4062 = vpop.f32.mrf.mxu0
  %v4063 = vadd.f32 %v3974, %v4062
  %v4064 = vpop.f32.mrf.mxu0
  %v4065 = vadd.f32 %v3976, %v4064
  %4066 = vmatmul.bf16.gmra.mxu0 %v802
  %v4067 = vpop.f32.mrf.mxu0
  %v4068 = vadd.f32 %v3979, %v4067
  %v4069 = vpop.f32.mrf.mxu0
  %v4070 = vadd.f32 %v3981, %v4069
  %4071 = vmatmul.bf16.gmra.mxu0 %v809
  %v4072 = vpop.f32.mrf.mxu0
  %v4073 = vadd.f32 %v3984, %v4072
  %v4074 = vpop.f32.mrf.mxu0
  %v4075 = vadd.f32 %v3986, %v4074
  %4076 = vmatmul.bf16.gmra.mxu0 %v816
  %v4077 = vpop.f32.mrf.mxu0
  %v4078 = vadd.f32 %v3989, %v4077
  %v4079 = vpop.f32.mrf.mxu0
  %v4080 = vadd.f32 %v3991, %v4079
  %4081 = vdwg.mxu0
  %4082 = vmatpush.bf16.msra.mxu0 %v1632
  %4083 = vmatpush.bf16.msra.mxu0 %v1628
  %4084 = vmatpush.bf16.msra.mxu0 %v1624
  %4085 = vmatpush.bf16.msra.mxu0 %v1620
  %4086 = vmatpush.bf16.msra.mxu0 %v1616
  %4087 = vmatpush.bf16.msra.mxu0 %v1612
  %4088 = vmatpush.bf16.msra.mxu0 %v1608
  %4089 = vmatpush.bf16.msra.mxu0 %v1604
  %4090 = vmatmul.bf16.gmra.mxu0 %v712
  %v4091 = vpop.f32.mrf.mxu0
  %v4092 = vadd.f32 %v4003, %v4091
  %v4093 = vpop.f32.mrf.mxu0
  %v4094 = vadd.f32 %v4005, %v4093
  %4095 = vmatmul.bf16.gmra.mxu0 %v719
  %v4096 = vpop.f32.mrf.mxu0
  %v4097 = vadd.f32 %v4008, %v4096
  %v4098 = vpop.f32.mrf.mxu0
  %v4099 = vadd.f32 %v4010, %v4098
  %4100 = vmatmul.bf16.gmra.mxu0 %v726
  %v4101 = vpop.f32.mrf.mxu0
  %v4102 = vadd.f32 %v4013, %v4101
  %v4103 = vpop.f32.mrf.mxu0
  %v4104 = vadd.f32 %v4015, %v4103
  %4105 = vmatmul.bf16.gmra.mxu0 %v733
  %v4106 = vpop.f32.mrf.mxu0
  %v4107 = vadd.f32 %v4018, %v4106
  %v4108 = vpop.f32.mrf.mxu0
  %v4109 = vadd.f32 %v4020, %v4108
  %4110 = vmatmul.bf16.gmra.mxu0 %v740
  %v4111 = vpop.f32.mrf.mxu0
  %v4112 = vadd.f32 %v4023, %v4111
  %v4113 = vpop.f32.mrf.mxu0
  %v4114 = vadd.f32 %v4025, %v4113
  %4115 = vmatmul.bf16.gmra.mxu0 %v747
  %v4116 = vpop.f32.mrf.mxu0
  %v4117 = vadd.f32 %v4028, %v4116
  %v4118 = vpop.f32.mrf.mxu0
  %v4119 = vadd.f32 %v4030, %v4118
  %4120 = vmatmul.bf16.gmra.mxu0 %v754
  %v4121 = vpop.f32.mrf.mxu0
  %v4122 = vadd.f32 %v4033, %v4121
  %v4123 = vpop.f32.mrf.mxu0
  %v4124 = vadd.f32 %v4035, %v4123
  %4125 = vmatmul.bf16.gmra.mxu0 %v761
  %v4126 = vpop.f32.mrf.mxu0
  %v4127 = vadd.f32 %v4038, %v4126
  %v4128 = vpop.f32.mrf.mxu0
  %v4129 = vadd.f32 %v4040, %v4128
  %4130 = vmatmul.bf16.gmra.mxu0 %v768
  %v4131 = vpop.f32.mrf.mxu0
  %v4132 = vadd.f32 %v4043, %v4131
  %v4133 = vpop.f32.mrf.mxu0
  %v4134 = vadd.f32 %v4045, %v4133
  %4135 = vmatmul.bf16.gmra.mxu0 %v775
  %v4136 = vpop.f32.mrf.mxu0
  %v4137 = vadd.f32 %v4048, %v4136
  %v4138 = vpop.f32.mrf.mxu0
  %v4139 = vadd.f32 %v4050, %v4138
  %4140 = vmatmul.bf16.gmra.mxu0 %v782
  %v4141 = vpop.f32.mrf.mxu0
  %v4142 = vadd.f32 %v4053, %v4141
  %v4143 = vpop.f32.mrf.mxu0
  %v4144 = vadd.f32 %v4055, %v4143
  %4145 = vmatmul.bf16.gmra.mxu0 %v789
  %v4146 = vpop.f32.mrf.mxu0
  %v4147 = vadd.f32 %v4058, %v4146
  %v4148 = vpop.f32.mrf.mxu0
  %v4149 = vadd.f32 %v4060, %v4148
  %4150 = vmatmul.bf16.gmra.mxu0 %v796
  %v4151 = vpop.f32.mrf.mxu0
  %v4152 = vadd.f32 %v4063, %v4151
  %v4153 = vpop.f32.mrf.mxu0
  %v4154 = vadd.f32 %v4065, %v4153
  %4155 = vmatmul.bf16.gmra.mxu0 %v803
  %v4156 = vpop.f32.mrf.mxu0
  %v4157 = vadd.f32 %v4068, %v4156
  %v4158 = vpop.f32.mrf.mxu0
  %v4159 = vadd.f32 %v4070, %v4158
  %4160 = vmatmul.bf16.gmra.mxu0 %v810
  %v4161 = vpop.f32.mrf.mxu0
  %v4162 = vadd.f32 %v4073, %v4161
  %v4163 = vpop.f32.mrf.mxu0
  %v4164 = vadd.f32 %v4075, %v4163
  %4165 = vmatmul.bf16.gmra.mxu0 %v817
  %v4166 = vpop.f32.mrf.mxu0
  %v4167 = vadd.f32 %v4078, %v4166
  %v4168 = vpop.f32.mrf.mxu0
  %v4169 = vadd.f32 %v4080, %v4168
  %4170 = vdwg.mxu0
  %4171 = vmatpush.bf16.msra.mxu0 %v1664
  %4172 = vmatpush.bf16.msra.mxu0 %v1660
  %4173 = vmatpush.bf16.msra.mxu0 %v1656
  %4174 = vmatpush.bf16.msra.mxu0 %v1652
  %4175 = vmatpush.bf16.msra.mxu0 %v1648
  %4176 = vmatpush.bf16.msra.mxu0 %v1644
  %4177 = vmatpush.bf16.msra.mxu0 %v1640
  %4178 = vmatpush.bf16.msra.mxu0 %v1636
  %4179 = vmatmul.bf16.gmra.mxu0 %v713
  %v4180 = vpop.f32.mrf.mxu0
  %v4181 = vadd.f32 %v4092, %v4180
  %v4182 = vpop.f32.mrf.mxu0
  %v4183 = vadd.f32 %v4094, %v4182
  %4184 = vmatmul.bf16.gmra.mxu0 %v720
  %v4185 = vpop.f32.mrf.mxu0
  %v4186 = vadd.f32 %v4097, %v4185
  %v4187 = vpop.f32.mrf.mxu0
  %v4188 = vadd.f32 %v4099, %v4187
  %4189 = vmatmul.bf16.gmra.mxu0 %v727
  %v4190 = vpop.f32.mrf.mxu0
  %v4191 = vadd.f32 %v4102, %v4190
  %v4192 = vpop.f32.mrf.mxu0
  %v4193 = vadd.f32 %v4104, %v4192
  %4194 = vmatmul.bf16.gmra.mxu0 %v734
  %v4195 = vpop.f32.mrf.mxu0
  %v4196 = vadd.f32 %v4107, %v4195
  %v4197 = vpop.f32.mrf.mxu0
  %v4198 = vadd.f32 %v4109, %v4197
  %4199 = vmatmul.bf16.gmra.mxu0 %v741
  %v4200 = vpop.f32.mrf.mxu0
  %v4201 = vadd.f32 %v4112, %v4200
  %v4202 = vpop.f32.mrf.mxu0
  %v4203 = vadd.f32 %v4114, %v4202
  %4204 = vmatmul.bf16.gmra.mxu0 %v748
  %v4205 = vpop.f32.mrf.mxu0
  %v4206 = vadd.f32 %v4117, %v4205
  %v4207 = vpop.f32.mrf.mxu0
  %v4208 = vadd.f32 %v4119, %v4207
  %4209 = vmatmul.bf16.gmra.mxu0 %v755
  %v4210 = vpop.f32.mrf.mxu0
  %v4211 = vadd.f32 %v4122, %v4210
  %v4212 = vpop.f32.mrf.mxu0
  %v4213 = vadd.f32 %v4124, %v4212
  %4214 = vmatmul.bf16.gmra.mxu0 %v762
  %v4215 = vpop.f32.mrf.mxu0
  %v4216 = vadd.f32 %v4127, %v4215
  %v4217 = vpop.f32.mrf.mxu0
  %v4218 = vadd.f32 %v4129, %v4217
  %4219 = vmatmul.bf16.gmra.mxu0 %v769
  %v4220 = vpop.f32.mrf.mxu0
  %v4221 = vadd.f32 %v4132, %v4220
  %v4222 = vpop.f32.mrf.mxu0
  %v4223 = vadd.f32 %v4134, %v4222
  %4224 = vmatmul.bf16.gmra.mxu0 %v776
  %v4225 = vpop.f32.mrf.mxu0
  %v4226 = vadd.f32 %v4137, %v4225
  %v4227 = vpop.f32.mrf.mxu0
  %v4228 = vadd.f32 %v4139, %v4227
  %4229 = vmatmul.bf16.gmra.mxu0 %v783
  %v4230 = vpop.f32.mrf.mxu0
  %v4231 = vadd.f32 %v4142, %v4230
  %v4232 = vpop.f32.mrf.mxu0
  %v4233 = vadd.f32 %v4144, %v4232
  %4234 = vmatmul.bf16.gmra.mxu0 %v790
  %v4235 = vpop.f32.mrf.mxu0
  %v4236 = vadd.f32 %v4147, %v4235
  %v4237 = vpop.f32.mrf.mxu0
  %v4238 = vadd.f32 %v4149, %v4237
  %4239 = vmatmul.bf16.gmra.mxu0 %v797
  %v4240 = vpop.f32.mrf.mxu0
  %v4241 = vadd.f32 %v4152, %v4240
  %v4242 = vpop.f32.mrf.mxu0
  %v4243 = vadd.f32 %v4154, %v4242
  %4244 = vmatmul.bf16.gmra.mxu0 %v804
  %v4245 = vpop.f32.mrf.mxu0
  %v4246 = vadd.f32 %v4157, %v4245
  %v4247 = vpop.f32.mrf.mxu0
  %v4248 = vadd.f32 %v4159, %v4247
  %4249 = vmatmul.bf16.gmra.mxu0 %v811
  %v4250 = vpop.f32.mrf.mxu0
  %v4251 = vadd.f32 %v4162, %v4250
  %v4252 = vpop.f32.mrf.mxu0
  %v4253 = vadd.f32 %v4164, %v4252
  %4254 = vmatmul.bf16.gmra.mxu0 %v818
  %v4255 = vpop.f32.mrf.mxu0
  %v4256 = vadd.f32 %v4167, %v4255
  %v4257 = vpop.f32.mrf.mxu0
  %v4258 = vadd.f32 %v4169, %v4257
  %4259 = vdwg.mxu0
  %4260 = vmatpush.bf16.msra.mxu0 %v1696
  %4261 = vmatpush.bf16.msra.mxu0 %v1692
  %4262 = vmatpush.bf16.msra.mxu0 %v1688
  %4263 = vmatpush.bf16.msra.mxu0 %v1684
  %4264 = vmatpush.bf16.msra.mxu0 %v1680
  %4265 = vmatpush.bf16.msra.mxu0 %v1676
  %4266 = vmatpush.bf16.msra.mxu0 %v1672
  %4267 = vmatpush.bf16.msra.mxu0 %v1668
  %4268 = vmatmul.bf16.gmra.mxu0 %v714
  %v4269 = vpop.f32.mrf.mxu0
  %v4270 = vadd.f32 %v4181, %v4269
  %v4271 = vpop.f32.mrf.mxu0
  %v4272 = vadd.f32 %v4183, %v4271
  %4273 = vmatmul.bf16.gmra.mxu0 %v721
  %v4274 = vpop.f32.mrf.mxu0
  %v4275 = vadd.f32 %v4186, %v4274
  %v4276 = vpop.f32.mrf.mxu0
  %v4277 = vadd.f32 %v4188, %v4276
  %4278 = vmatmul.bf16.gmra.mxu0 %v728
  %v4279 = vpop.f32.mrf.mxu0
  %v4280 = vadd.f32 %v4191, %v4279
  %v4281 = vpop.f32.mrf.mxu0
  %v4282 = vadd.f32 %v4193, %v4281
  %4283 = vmatmul.bf16.gmra.mxu0 %v735
  %v4284 = vpop.f32.mrf.mxu0
  %v4285 = vadd.f32 %v4196, %v4284
  %v4286 = vpop.f32.mrf.mxu0
  %v4287 = vadd.f32 %v4198, %v4286
  %4288 = vmatmul.bf16.gmra.mxu0 %v742
  %v4289 = vpop.f32.mrf.mxu0
  %v4290 = vadd.f32 %v4201, %v4289
  %v4291 = vpop.f32.mrf.mxu0
  %v4292 = vadd.f32 %v4203, %v4291
  %4293 = vmatmul.bf16.gmra.mxu0 %v749
  %v4294 = vpop.f32.mrf.mxu0
  %v4295 = vadd.f32 %v4206, %v4294
  %v4296 = vpop.f32.mrf.mxu0
  %v4297 = vadd.f32 %v4208, %v4296
  %4298 = vmatmul.bf16.gmra.mxu0 %v756
  %v4299 = vpop.f32.mrf.mxu0
  %v4300 = vadd.f32 %v4211, %v4299
  %v4301 = vpop.f32.mrf.mxu0
  %v4302 = vadd.f32 %v4213, %v4301
  %4303 = vmatmul.bf16.gmra.mxu0 %v763
  %v4304 = vpop.f32.mrf.mxu0
  %v4305 = vadd.f32 %v4216, %v4304
  %v4306 = vpop.f32.mrf.mxu0
  %v4307 = vadd.f32 %v4218, %v4306
  %4308 = vmatmul.bf16.gmra.mxu0 %v770
  %v4309 = vpop.f32.mrf.mxu0
  %v4310 = vadd.f32 %v4221, %v4309
  %v4311 = vpop.f32.mrf.mxu0
  %v4312 = vadd.f32 %v4223, %v4311
  %4313 = vmatmul.bf16.gmra.mxu0 %v777
  %v4314 = vpop.f32.mrf.mxu0
  %v4315 = vadd.f32 %v4226, %v4314
  %v4316 = vpop.f32.mrf.mxu0
  %v4317 = vadd.f32 %v4228, %v4316
  %4318 = vmatmul.bf16.gmra.mxu0 %v784
  %v4319 = vpop.f32.mrf.mxu0
  %v4320 = vadd.f32 %v4231, %v4319
  %v4321 = vpop.f32.mrf.mxu0
  %v4322 = vadd.f32 %v4233, %v4321
  %4323 = vmatmul.bf16.gmra.mxu0 %v791
  %v4324 = vpop.f32.mrf.mxu0
  %v4325 = vadd.f32 %v4236, %v4324
  %v4326 = vpop.f32.mrf.mxu0
  %v4327 = vadd.f32 %v4238, %v4326
  %4328 = vmatmul.bf16.gmra.mxu0 %v798
  %v4329 = vpop.f32.mrf.mxu0
  %v4330 = vadd.f32 %v4241, %v4329
  %v4331 = vpop.f32.mrf.mxu0
  %v4332 = vadd.f32 %v4243, %v4331
  %4333 = vmatmul.bf16.gmra.mxu0 %v805
  %v4334 = vpop.f32.mrf.mxu0
  %v4335 = vadd.f32 %v4246, %v4334
  %v4336 = vpop.f32.mrf.mxu0
  %v4337 = vadd.f32 %v4248, %v4336
  %4338 = vmatmul.bf16.gmra.mxu0 %v812
  %v4339 = vpop.f32.mrf.mxu0
  %v4340 = vadd.f32 %v4251, %v4339
  %v4341 = vpop.f32.mrf.mxu0
  %v4342 = vadd.f32 %v4253, %v4341
  %4343 = vmatmul.bf16.gmra.mxu0 %v819
  %v4344 = vpop.f32.mrf.mxu0
  %v4345 = vadd.f32 %v4256, %v4344
  %v4346 = vpop.f32.mrf.mxu0
  %v4347 = vadd.f32 %v4258, %v4346
  %4348 = vdwg.mxu0
  %4349 = vmatpush.bf16.msra.mxu0 0
  %4350 = vmatpush.bf16.msra.mxu0 0
  %4351 = vmatpush.bf16.msra.mxu0 0
  %4352 = vmatpush.bf16.msra.mxu0 0
  %4353 = vmatpush.bf16.msra.mxu0 0
  %4354 = vmatpush.bf16.msra.mxu0 0
  %4355 = vmatpush.bf16.msra.mxu0 0
  %4356 = vmatpush.bf16.msra.mxu0 %v1700
  %4357 = vmatmul.bf16.gmra.mxu0 %v1899
  %v4358 = vpop.f32.mrf.mxu0
  %v4359 = vadd.f32 %v4270, %v4358
  %v4360 = vpop.f32.mrf.mxu0
  %v4361 = vadd.f32 %v4272, %v4360
  %4362 = vmatmul.bf16.gmra.mxu0 %v1902
  %v4363 = vpop.f32.mrf.mxu0
  %v4364 = vadd.f32 %v4275, %v4363
  %v4365 = vpop.f32.mrf.mxu0
  %v4366 = vadd.f32 %v4277, %v4365
  %4367 = vmatmul.bf16.gmra.mxu0 %v1905
  %v4368 = vpop.f32.mrf.mxu0
  %v4369 = vadd.f32 %v4280, %v4368
  %v4370 = vpop.f32.mrf.mxu0
  %v4371 = vadd.f32 %v4282, %v4370
  %4372 = vmatmul.bf16.gmra.mxu0 %v1908
  %v4373 = vpop.f32.mrf.mxu0
  %v4374 = vadd.f32 %v4285, %v4373
  %v4375 = vpop.f32.mrf.mxu0
  %v4376 = vadd.f32 %v4287, %v4375
  %4377 = vmatmul.bf16.gmra.mxu0 %v1911
  %v4378 = vpop.f32.mrf.mxu0
  %v4379 = vadd.f32 %v4290, %v4378
  %v4380 = vpop.f32.mrf.mxu0
  %v4381 = vadd.f32 %v4292, %v4380
  %4382 = vmatmul.bf16.gmra.mxu0 %v1914
  %v4383 = vpop.f32.mrf.mxu0
  %v4384 = vadd.f32 %v4295, %v4383
  %v4385 = vpop.f32.mrf.mxu0
  %v4386 = vadd.f32 %v4297, %v4385
  %4387 = vmatmul.bf16.gmra.mxu0 %v1917
  %v4388 = vpop.f32.mrf.mxu0
  %v4389 = vadd.f32 %v4300, %v4388
  %v4390 = vpop.f32.mrf.mxu0
  %v4391 = vadd.f32 %v4302, %v4390
  %4392 = vmatmul.bf16.gmra.mxu0 %v1920
  %v4393 = vpop.f32.mrf.mxu0
  %v4394 = vadd.f32 %v4305, %v4393
  %v4395 = vpop.f32.mrf.mxu0
  %v4396 = vadd.f32 %v4307, %v4395
  %4397 = vmatmul.bf16.gmra.mxu0 %v1923
  %v4398 = vpop.f32.mrf.mxu0
  %v4399 = vadd.f32 %v4310, %v4398
  %v4400 = vpop.f32.mrf.mxu0
  %v4401 = vadd.f32 %v4312, %v4400
  %4402 = vmatmul.bf16.gmra.mxu0 %v1926
  %v4403 = vpop.f32.mrf.mxu0
  %v4404 = vadd.f32 %v4315, %v4403
  %v4405 = vpop.f32.mrf.mxu0
  %v4406 = vadd.f32 %v4317, %v4405
  %4407 = vmatmul.bf16.gmra.mxu0 %v1929
  %v4408 = vpop.f32.mrf.mxu0
  %v4409 = vadd.f32 %v4320, %v4408
  %v4410 = vpop.f32.mrf.mxu0
  %v4411 = vadd.f32 %v4322, %v4410
  %4412 = vmatmul.bf16.gmra.mxu0 %v1932
  %v4413 = vpop.f32.mrf.mxu0
  %v4414 = vadd.f32 %v4325, %v4413
  %v4415 = vpop.f32.mrf.mxu0
  %v4416 = vadd.f32 %v4327, %v4415
  %4417 = vmatmul.bf16.gmra.mxu0 %v1935
  %v4418 = vpop.f32.mrf.mxu0
  %v4419 = vadd.f32 %v4330, %v4418
  %v4420 = vpop.f32.mrf.mxu0
  %v4421 = vadd.f32 %v4332, %v4420
  %4422 = vmatmul.bf16.gmra.mxu0 %v1938
  %v4423 = vpop.f32.mrf.mxu0
  %v4424 = vadd.f32 %v4335, %v4423
  %v4425 = vpop.f32.mrf.mxu0
  %v4426 = vadd.f32 %v4337, %v4425
  %4427 = vmatmul.bf16.gmra.mxu0 %v1941
  %v4428 = vpop.f32.mrf.mxu0
  %v4429 = vadd.f32 %v4340, %v4428
  %v4430 = vpop.f32.mrf.mxu0
  %v4431 = vadd.f32 %v4342, %v4430
  %4432 = vmatmul.bf16.gmra.mxu0 %v1944
  %v4433 = vpop.f32.mrf.mxu0
  %v4434 = vadd.f32 %v4345, %v4433
  %v4435 = vpop.f32.mrf.mxu0
  %v4436 = vadd.f32 %v4347, %v4435
  %4437 = vdwg.mxu0
  %v4438 = vpack.c.bf16 %v3113, %v2490
  %v4439 = vpack.c.bf16 %v4359, %v3736
  %v4440 = vpack.c.bf16 %v3115, %v2492
  %v4441 = vpack.c.bf16 %v4361, %v3738
  %v4442 = vpack.c.bf16 %v3118, %v2495
  %v4443 = vpack.c.bf16 %v4364, %v3741
  %v4444 = vpack.c.bf16 %v3120, %v2497
  %v4445 = vpack.c.bf16 %v4366, %v3743
  %v4446 = vpack.c.bf16 %v3123, %v2500
  %v4447 = vpack.c.bf16 %v4369, %v3746
  %v4448 = vpack.c.bf16 %v3125, %v2502
  %v4449 = vpack.c.bf16 %v4371, %v3748
  %v4450 = vpack.c.bf16 %v3128, %v2505
  %v4451 = vpack.c.bf16 %v4374, %v3751
  %v4452 = vpack.c.bf16 %v3130, %v2507
  %v4453 = vpack.c.bf16 %v4376, %v3753
  %v4454 = vpack.c.bf16 %v3133, %v2510
  %v4455 = vpack.c.bf16 %v4379, %v3756
  %v4456 = vpack.c.bf16 %v3135, %v2512
  %v4457 = vpack.c.bf16 %v4381, %v3758
  %v4458 = vpack.c.bf16 %v3138, %v2515
  %v4459 = vpack.c.bf16 %v4384, %v3761
  %v4460 = vpack.c.bf16 %v3140, %v2517
  %v4461 = vpack.c.bf16 %v4386, %v3763
  %v4462 = vpack.c.bf16 %v3143, %v2520
  %v4463 = vpack.c.bf16 %v4389, %v3766
  %v4464 = vpack.c.bf16 %v3145, %v2522
  %v4465 = vpack.c.bf16 %v4391, %v3768
  %v4466 = vpack.c.bf16 %v3148, %v2525
  %v4467 = vpack.c.bf16 %v4394, %v3771
  %v4468 = vpack.c.bf16 %v3150, %v2527
  %v4469 = vpack.c.bf16 %v4396, %v3773
  %v4470 = vpack.c.bf16 %v3153, %v2530
  %v4471 = vpack.c.bf16 %v4399, %v3776
  %v4472 = vpack.c.bf16 %v3155, %v2532
  %v4473 = vpack.c.bf16 %v4401, %v3778
  %v4474 = vpack.c.bf16 %v3158, %v2535
  %v4475 = vpack.c.bf16 %v4404, %v3781
  %v4476 = vpack.c.bf16 %v3160, %v2537
  %v4477 = vpack.c.bf16 %v4406, %v3783
  %v4478 = vpack.c.bf16 %v3163, %v2540
  %v4479 = vpack.c.bf16 %v4409, %v3786
  %v4480 = vpack.c.bf16 %v3165, %v2542
  %v4481 = vpack.c.bf16 %v4411, %v3788
  %v4482 = vpack.c.bf16 %v3168, %v2545
  %v4483 = vpack.c.bf16 %v4414, %v3791
  %v4484 = vpack.c.bf16 %v3170, %v2547
  %v4485 = vpack.c.bf16 %v4416, %v3793
  %v4486 = vpack.c.bf16 %v3173, %v2550
  %v4487 = vpack.c.bf16 %v4419, %v3796
  %v4488 = vpack.c.bf16 %v3175, %v2552
  %v4489 = vpack.c.bf16 %v4421, %v3798
  %v4490 = vpack.c.bf16 %v3178, %v2555
  %v4491 = vpack.c.bf16 %v4424, %v3801
  %v4492 = vpack.c.bf16 %v3180, %v2557
  %v4493 = vpack.c.bf16 %v4426, %v3803
  %v4494 = vpack.c.bf16 %v3183, %v2560
  %v4495 = vpack.c.bf16 %v4429, %v3806
  %v4496 = vpack.c.bf16 %v3185, %v2562
  %v4497 = vpack.c.bf16 %v4431, %v3808
  %v4498 = vpack.c.bf16 %v3188, %v2565
  %v4499 = vpack.c.bf16 %v4434, %v3811
  %v4500 = vpack.c.bf16 %v3190, %v2567
  %v4501 = vpack.c.bf16 %v4436, %v3813
  %v4502 = vld [vmem:[%s2] sm:$0xf]
  %4504 = vst [vmem:[#allocation1] ss:$9 sm:$0xff] %v4502
  %v4505 = vld [vmem:[#allocation1] sm:$0xff]
  %v4506 = vld [vmem:[#allocation1 + $0x9] sm:$0xff]
  %v4507 = vld [vmem:[#allocation1 + $0x12] sm:$0xff]
  %v4508 = vld [vmem:[#allocation1 + $0x1b] sm:$0xff]
  %v4509 = vpack.i.b16 %v4505, %v4505
  %v4511 = vperm.slane %v4509, 0
  %v4512 = vpack.i.b16 %v4506, %v4506
  %v4514 = vperm.slane %v4512, 0
  %v4515 = vpack.i.b16 %v4507, %v4507
  %v4517 = vperm.slane %v4515, 0
  %v4518 = vpack.i.b16 %v4508, %v4508
  %v4520 = vperm.slane %v4518, 0
  %v4521 = vunpack.c.l.bf16 %v4438
  %v4522 = vunpack.c.h.bf16 %v4438
  %v4523 = vunpack.c.l.bf16 %v4439
  %v4524 = vunpack.c.h.bf16 %v4439
  %v4525 = vunpack.c.l.bf16 %v4440
  %v4526 = vunpack.c.h.bf16 %v4440
  %v4527 = vunpack.c.l.bf16 %v4441
  %v4528 = vunpack.c.h.bf16 %v4441
  %v4529 = vunpack.c.l.bf16 %v4442
  %v4530 = vunpack.c.h.bf16 %v4442
  %v4531 = vunpack.c.l.bf16 %v4443
  %v4532 = vunpack.c.h.bf16 %v4443
  %v4533 = vunpack.c.l.bf16 %v4444
  %v4534 = vunpack.c.h.bf16 %v4444
  %v4535 = vunpack.c.l.bf16 %v4445
  %v4536 = vunpack.c.h.bf16 %v4445
  %v4537 = vunpack.c.l.bf16 %v4446
  %v4538 = vunpack.c.h.bf16 %v4446
  %v4539 = vunpack.c.l.bf16 %v4447
  %v4540 = vunpack.c.h.bf16 %v4447
  %v4541 = vunpack.c.l.bf16 %v4448
  %v4542 = vunpack.c.h.bf16 %v4448
  %v4543 = vunpack.c.l.bf16 %v4449
  %v4544 = vunpack.c.h.bf16 %v4449
  %v4545 = vunpack.c.l.bf16 %v4450
  %v4546 = vunpack.c.h.bf16 %v4450
  %v4547 = vunpack.c.l.bf16 %v4451
  %v4548 = vunpack.c.h.bf16 %v4451
  %v4549 = vunpack.c.l.bf16 %v4452
  %v4550 = vunpack.c.h.bf16 %v4452
  %v4551 = vunpack.c.l.bf16 %v4453
  %v4552 = vunpack.c.h.bf16 %v4453
  %v4553 = vunpack.c.l.bf16 %v4454
  %v4554 = vunpack.c.h.bf16 %v4454
  %v4555 = vunpack.c.l.bf16 %v4455
  %v4556 = vunpack.c.h.bf16 %v4455
  %v4557 = vunpack.c.l.bf16 %v4456
  %v4558 = vunpack.c.h.bf16 %v4456
  %v4559 = vunpack.c.l.bf16 %v4457
  %v4560 = vunpack.c.h.bf16 %v4457
  %v4561 = vunpack.c.l.bf16 %v4458
  %v4562 = vunpack.c.h.bf16 %v4458
  %v4563 = vunpack.c.l.bf16 %v4459
  %v4564 = vunpack.c.h.bf16 %v4459
  %v4565 = vunpack.c.l.bf16 %v4460
  %v4566 = vunpack.c.h.bf16 %v4460
  %v4567 = vunpack.c.l.bf16 %v4461
  %v4568 = vunpack.c.h.bf16 %v4461
  %v4569 = vunpack.c.l.bf16 %v4462
  %v4570 = vunpack.c.h.bf16 %v4462
  %v4571 = vunpack.c.l.bf16 %v4463
  %v4572 = vunpack.c.h.bf16 %v4463
  %v4573 = vunpack.c.l.bf16 %v4464
  %v4574 = vunpack.c.h.bf16 %v4464
  %v4575 = vunpack.c.l.bf16 %v4465
  %v4576 = vunpack.c.h.bf16 %v4465
  %v4577 = vunpack.c.l.bf16 %v4466
  %v4578 = vunpack.c.h.bf16 %v4466
  %v4579 = vunpack.c.l.bf16 %v4467
  %v4580 = vunpack.c.h.bf16 %v4467
  %v4581 = vunpack.c.l.bf16 %v4468
  %v4582 = vunpack.c.h.bf16 %v4468
  %v4583 = vunpack.c.l.bf16 %v4469
  %v4584 = vunpack.c.h.bf16 %v4469
  %v4585 = vunpack.c.l.bf16 %v4470
  %v4586 = vunpack.c.h.bf16 %v4470
  %v4587 = vunpack.c.l.bf16 %v4471
  %v4588 = vunpack.c.h.bf16 %v4471
  %v4589 = vunpack.c.l.bf16 %v4472
  %v4590 = vunpack.c.h.bf16 %v4472
  %v4591 = vunpack.c.l.bf16 %v4473
  %v4592 = vunpack.c.h.bf16 %v4473
  %v4593 = vunpack.c.l.bf16 %v4474
  %v4594 = vunpack.c.h.bf16 %v4474
  %v4595 = vunpack.c.l.bf16 %v4475
  %v4596 = vunpack.c.h.bf16 %v4475
  %v4597 = vunpack.c.l.bf16 %v4476
  %v4598 = vunpack.c.h.bf16 %v4476
  %v4599 = vunpack.c.l.bf16 %v4477
  %v4600 = vunpack.c.h.bf16 %v4477
  %v4601 = vunpack.c.l.bf16 %v4478
  %v4602 = vunpack.c.h.bf16 %v4478
  %v4603 = vunpack.c.l.bf16 %v4479
  %v4604 = vunpack.c.h.bf16 %v4479
  %v4605 = vunpack.c.l.bf16 %v4480
  %v4606 = vunpack.c.h.bf16 %v4480
  %v4607 = vunpack.c.l.bf16 %v4481
  %v4608 = vunpack.c.h.bf16 %v4481
  %v4609 = vunpack.c.l.bf16 %v4482
  %v4610 = vunpack.c.h.bf16 %v4482
  %v4611 = vunpack.c.l.bf16 %v4483
  %v4612 = vunpack.c.h.bf16 %v4483
  %v4613 = vunpack.c.l.bf16 %v4484
  %v4614 = vunpack.c.h.bf16 %v4484
  %v4615 = vunpack.c.l.bf16 %v4485
  %v4616 = vunpack.c.h.bf16 %v4485
  %v4617 = vunpack.c.l.bf16 %v4486
  %v4618 = vunpack.c.h.bf16 %v4486
  %v4619 = vunpack.c.l.bf16 %v4487
  %v4620 = vunpack.c.h.bf16 %v4487
  %v4621 = vunpack.c.l.bf16 %v4488
  %v4622 = vunpack.c.h.bf16 %v4488
  %v4623 = vunpack.c.l.bf16 %v4489
  %v4624 = vunpack.c.h.bf16 %v4489
  %v4625 = vunpack.c.l.bf16 %v4490
  %v4626 = vunpack.c.h.bf16 %v4490
  %v4627 = vunpack.c.l.bf16 %v4491
  %v4628 = vunpack.c.h.bf16 %v4491
  %v4629 = vunpack.c.l.bf16 %v4492
  %v4630 = vunpack.c.h.bf16 %v4492
  %v4631 = vunpack.c.l.bf16 %v4493
  %v4632 = vunpack.c.h.bf16 %v4493
  %v4633 = vunpack.c.l.bf16 %v4494
  %v4634 = vunpack.c.h.bf16 %v4494
  %v4635 = vunpack.c.l.bf16 %v4495
  %v4636 = vunpack.c.h.bf16 %v4495
  %v4637 = vunpack.c.l.bf16 %v4496
  %v4638 = vunpack.c.h.bf16 %v4496
  %v4639 = vunpack.c.l.bf16 %v4497
  %v4640 = vunpack.c.h.bf16 %v4497
  %v4641 = vunpack.c.l.bf16 %v4498
  %v4642 = vunpack.c.h.bf16 %v4498
  %v4643 = vunpack.c.l.bf16 %v4499
  %v4644 = vunpack.c.h.bf16 %v4499
  %v4645 = vunpack.c.l.bf16 %v4500
  %v4646 = vunpack.c.h.bf16 %v4500
  %v4647 = vunpack.c.l.bf16 %v4501
  %v4648 = vunpack.c.h.bf16 %v4501
  %v4649 = vunpack.c.l.bf16 %v4511
  %v4650 = vunpack.c.l.bf16 %v4514
  %v4651 = vunpack.c.l.bf16 %v4517
  %v4652 = vunpack.c.l.bf16 %v4520
  %v4653 = vadd.f32 %v4521, %v4649
  %v4654 = vadd.f32 %v4522, %v4650
  %v4655 = vadd.f32 %v4523, %v4651
  %v4656 = vadd.f32 %v4524, %v4652
  %v4657 = vadd.f32 %v4525, %v4649
  %v4658 = vadd.f32 %v4526, %v4650
  %v4659 = vadd.f32 %v4527, %v4651
  %v4660 = vadd.f32 %v4528, %v4652
  %v4661 = vadd.f32 %v4529, %v4649
  %v4662 = vadd.f32 %v4530, %v4650
  %v4663 = vadd.f32 %v4531, %v4651
  %v4664 = vadd.f32 %v4532, %v4652
  %v4665 = vadd.f32 %v4533, %v4649
  %v4666 = vadd.f32 %v4534, %v4650
  %v4667 = vadd.f32 %v4535, %v4651
  %v4668 = vadd.f32 %v4536, %v4652
  %v4669 = vadd.f32 %v4537, %v4649
  %v4670 = vadd.f32 %v4538, %v4650
  %v4671 = vadd.f32 %v4539, %v4651
  %v4672 = vadd.f32 %v4540, %v4652
  %v4673 = vadd.f32 %v4541, %v4649
  %v4674 = vadd.f32 %v4542, %v4650
  %v4675 = vadd.f32 %v4543, %v4651
  %v4676 = vadd.f32 %v4544, %v4652
  %v4677 = vadd.f32 %v4545, %v4649
  %v4678 = vadd.f32 %v4546, %v4650
  %v4679 = vadd.f32 %v4547, %v4651
  %v4680 = vadd.f32 %v4548, %v4652
  %v4681 = vadd.f32 %v4549, %v4649
  %v4682 = vadd.f32 %v4550, %v4650
  %v4683 = vadd.f32 %v4551, %v4651
  %v4684 = vadd.f32 %v4552, %v4652
  %v4685 = vadd.f32 %v4553, %v4649
  %v4686 = vadd.f32 %v4554, %v4650
  %v4687 = vadd.f32 %v4555, %v4651
  %v4688 = vadd.f32 %v4556, %v4652
  %v4689 = vadd.f32 %v4557, %v4649
  %v4690 = vadd.f32 %v4558, %v4650
  %v4691 = vadd.f32 %v4559, %v4651
  %v4692 = vadd.f32 %v4560, %v4652
  %v4693 = vadd.f32 %v4561, %v4649
  %v4694 = vadd.f32 %v4562, %v4650
  %v4695 = vadd.f32 %v4563, %v4651
  %v4696 = vadd.f32 %v4564, %v4652
  %v4697 = vadd.f32 %v4565, %v4649
  %v4698 = vadd.f32 %v4566, %v4650
  %v4699 = vadd.f32 %v4567, %v4651
  %v4700 = vadd.f32 %v4568, %v4652
  %v4701 = vadd.f32 %v4569, %v4649
  %v4702 = vadd.f32 %v4570, %v4650
  %v4703 = vadd.f32 %v4571, %v4651
  %v4704 = vadd.f32 %v4572, %v4652
  %v4705 = vadd.f32 %v4573, %v4649
  %v4706 = vadd.f32 %v4574, %v4650
  %v4707 = vadd.f32 %v4575, %v4651
  %v4708 = vadd.f32 %v4576, %v4652
  %v4709 = vadd.f32 %v4577, %v4649
  %v4710 = vadd.f32 %v4578, %v4650
  %v4711 = vadd.f32 %v4579, %v4651
  %v4712 = vadd.f32 %v4580, %v4652
  %v4713 = vadd.f32 %v4581, %v4649
  %v4714 = vadd.f32 %v4582, %v4650
  %v4715 = vadd.f32 %v4583, %v4651
  %v4716 = vadd.f32 %v4584, %v4652
  %v4717 = vadd.f32 %v4585, %v4649
  %v4718 = vadd.f32 %v4586, %v4650
  %v4719 = vadd.f32 %v4587, %v4651
  %v4720 = vadd.f32 %v4588, %v4652
  %v4721 = vadd.f32 %v4589, %v4649
  %v4722 = vadd.f32 %v4590, %v4650
  %v4723 = vadd.f32 %v4591, %v4651
  %v4724 = vadd.f32 %v4592, %v4652
  %v4725 = vadd.f32 %v4593, %v4649
  %v4726 = vadd.f32 %v4594, %v4650
  %v4727 = vadd.f32 %v4595, %v4651
  %v4728 = vadd.f32 %v4596, %v4652
  %v4729 = vadd.f32 %v4597, %v4649
  %v4730 = vadd.f32 %v4598, %v4650
  %v4731 = vadd.f32 %v4599, %v4651
  %v4732 = vadd.f32 %v4600, %v4652
  %v4733 = vadd.f32 %v4601, %v4649
  %v4734 = vadd.f32 %v4602, %v4650
  %v4735 = vadd.f32 %v4603, %v4651
  %v4736 = vadd.f32 %v4604, %v4652
  %v4737 = vadd.f32 %v4605, %v4649
  %v4738 = vadd.f32 %v4606, %v4650
  %v4739 = vadd.f32 %v4607, %v4651
  %v4740 = vadd.f32 %v4608, %v4652
  %v4741 = vadd.f32 %v4609, %v4649
  %v4742 = vadd.f32 %v4610, %v4650
  %v4743 = vadd.f32 %v4611, %v4651
  %v4744 = vadd.f32 %v4612, %v4652
  %v4745 = vadd.f32 %v4613, %v4649
  %v4746 = vadd.f32 %v4614, %v4650
  %v4747 = vadd.f32 %v4615, %v4651
  %v4748 = vadd.f32 %v4616, %v4652
  %v4749 = vadd.f32 %v4617, %v4649
  %v4750 = vadd.f32 %v4618, %v4650
  %v4751 = vadd.f32 %v4619, %v4651
  %v4752 = vadd.f32 %v4620, %v4652
  %v4753 = vadd.f32 %v4621, %v4649
  %v4754 = vadd.f32 %v4622, %v4650
  %v4755 = vadd.f32 %v4623, %v4651
  %v4756 = vadd.f32 %v4624, %v4652
  %v4757 = vadd.f32 %v4625, %v4649
  %v4758 = vadd.f32 %v4626, %v4650
  %v4759 = vadd.f32 %v4627, %v4651
  %v4760 = vadd.f32 %v4628, %v4652
  %v4761 = vadd.f32 %v4629, %v4649
  %v4762 = vadd.f32 %v4630, %v4650
  %v4763 = vadd.f32 %v4631, %v4651
  %v4764 = vadd.f32 %v4632, %v4652
  %v4765 = vadd.f32 %v4633, %v4649
  %v4766 = vadd.f32 %v4634, %v4650
  %v4767 = vadd.f32 %v4635, %v4651
  %v4768 = vadd.f32 %v4636, %v4652
  %v4769 = vadd.f32 %v4637, %v4649
  %v4770 = vadd.f32 %v4638, %v4650
  %v4771 = vadd.f32 %v4639, %v4651
  %v4772 = vadd.f32 %v4640, %v4652
  %v4773 = vadd.f32 %v4641, %v4649
  %v4774 = vadd.f32 %v4642, %v4650
  %v4775 = vadd.f32 %v4643, %v4651
  %v4776 = vadd.f32 %v4644, %v4652
  %v4777 = vadd.f32 %v4645, %v4649
  %v4778 = vadd.f32 %v4646, %v4650
  %v4779 = vadd.f32 %v4647, %v4651
  %v4780 = vadd.f32 %v4648, %v4652
  %v4781 = vpack.c.bf16 %v4654, %v4653
  %v4782 = vpack.c.bf16 %v4656, %v4655
  %v4783 = vpack.c.bf16 %v4658, %v4657
  %v4784 = vpack.c.bf16 %v4660, %v4659
  %v4785 = vpack.c.bf16 %v4662, %v4661
  %v4786 = vpack.c.bf16 %v4664, %v4663
  %v4787 = vpack.c.bf16 %v4666, %v4665
  %v4788 = vpack.c.bf16 %v4668, %v4667
  %v4789 = vpack.c.bf16 %v4670, %v4669
  %v4790 = vpack.c.bf16 %v4672, %v4671
  %v4791 = vpack.c.bf16 %v4674, %v4673
  %v4792 = vpack.c.bf16 %v4676, %v4675
  %v4793 = vpack.c.bf16 %v4678, %v4677
  %v4794 = vpack.c.bf16 %v4680, %v4679
  %v4795 = vpack.c.bf16 %v4682, %v4681
  %v4796 = vpack.c.bf16 %v4684, %v4683
  %v4797 = vpack.c.bf16 %v4686, %v4685
  %v4798 = vpack.c.bf16 %v4688, %v4687
  %v4799 = vpack.c.bf16 %v4690, %v4689
  %v4800 = vpack.c.bf16 %v4692, %v4691
  %v4801 = vpack.c.bf16 %v4694, %v4693
  %v4802 = vpack.c.bf16 %v4696, %v4695
  %v4803 = vpack.c.bf16 %v4698, %v4697
  %v4804 = vpack.c.bf16 %v4700, %v4699
  %v4805 = vpack.c.bf16 %v4702, %v4701
  %v4806 = vpack.c.bf16 %v4704, %v4703
  %v4807 = vpack.c.bf16 %v4706, %v4705
  %v4808 = vpack.c.bf16 %v4708, %v4707
  %v4809 = vpack.c.bf16 %v4710, %v4709
  %v4810 = vpack.c.bf16 %v4712, %v4711
  %v4811 = vpack.c.bf16 %v4714, %v4713
  %v4812 = vpack.c.bf16 %v4716, %v4715
  %v4813 = vpack.c.bf16 %v4718, %v4717
  %v4814 = vpack.c.bf16 %v4720, %v4719
  %v4815 = vpack.c.bf16 %v4722, %v4721
  %v4816 = vpack.c.bf16 %v4724, %v4723
  %v4817 = vpack.c.bf16 %v4726, %v4725
  %v4818 = vpack.c.bf16 %v4728, %v4727
  %v4819 = vpack.c.bf16 %v4730, %v4729
  %v4820 = vpack.c.bf16 %v4732, %v4731
  %v4821 = vpack.c.bf16 %v4734, %v4733
  %v4822 = vpack.c.bf16 %v4736, %v4735
  %v4823 = vpack.c.bf16 %v4738, %v4737
  %v4824 = vpack.c.bf16 %v4740, %v4739
  %v4825 = vpack.c.bf16 %v4742, %v4741
  %v4826 = vpack.c.bf16 %v4744, %v4743
  %v4827 = vpack.c.bf16 %v4746, %v4745
  %v4828 = vpack.c.bf16 %v4748, %v4747
  %v4829 = vpack.c.bf16 %v4750, %v4749
  %v4830 = vpack.c.bf16 %v4752, %v4751
  %v4831 = vpack.c.bf16 %v4754, %v4753
  %v4832 = vpack.c.bf16 %v4756, %v4755
  %v4833 = vpack.c.bf16 %v4758, %v4757
  %v4834 = vpack.c.bf16 %v4760, %v4759
  %v4835 = vpack.c.bf16 %v4762, %v4761
  %v4836 = vpack.c.bf16 %v4764, %v4763
  %v4837 = vpack.c.bf16 %v4766, %v4765
  %v4838 = vpack.c.bf16 %v4768, %v4767
  %v4839 = vpack.c.bf16 %v4770, %v4769
  %v4840 = vpack.c.bf16 %v4772, %v4771
  %v4841 = vpack.c.bf16 %v4774, %v4773
  %v4842 = vpack.c.bf16 %v4776, %v4775
  %v4843 = vpack.c.bf16 %v4778, %v4777
  %v4844 = vpack.c.bf16 %v4780, %v4779
  %v4845 = vunpack.c.l.bf16 %v4781
  %v4846 = vunpack.c.h.bf16 %v4781
  %v4847 = vunpack.c.l.bf16 %v4782
  %v4848 = vunpack.c.h.bf16 %v4782
  %v4849 = vunpack.c.l.bf16 %v4783
  %v4850 = vunpack.c.h.bf16 %v4783
  %v4851 = vunpack.c.l.bf16 %v4784
  %v4852 = vunpack.c.h.bf16 %v4784
  %v4853 = vunpack.c.l.bf16 %v4785
  %v4854 = vunpack.c.h.bf16 %v4785
  %v4855 = vunpack.c.l.bf16 %v4786
  %v4856 = vunpack.c.h.bf16 %v4786
  %v4857 = vunpack.c.l.bf16 %v4787
  %v4858 = vunpack.c.h.bf16 %v4787
  %v4859 = vunpack.c.l.bf16 %v4788
  %v4860 = vunpack.c.h.bf16 %v4788
  %v4861 = vunpack.c.l.bf16 %v4789
  %v4862 = vunpack.c.h.bf16 %v4789
  %v4863 = vunpack.c.l.bf16 %v4790
  %v4864 = vunpack.c.h.bf16 %v4790
  %v4865 = vunpack.c.l.bf16 %v4791
  %v4866 = vunpack.c.h.bf16 %v4791
  %v4867 = vunpack.c.l.bf16 %v4792
  %v4868 = vunpack.c.h.bf16 %v4792
  %v4869 = vunpack.c.l.bf16 %v4793
  %v4870 = vunpack.c.h.bf16 %v4793
  %v4871 = vunpack.c.l.bf16 %v4794
  %v4872 = vunpack.c.h.bf16 %v4794
  %v4873 = vunpack.c.l.bf16 %v4795
  %v4874 = vunpack.c.h.bf16 %v4795
  %v4875 = vunpack.c.l.bf16 %v4796
  %v4876 = vunpack.c.h.bf16 %v4796
  %v4877 = vunpack.c.l.bf16 %v4797
  %v4878 = vunpack.c.h.bf16 %v4797
  %v4879 = vunpack.c.l.bf16 %v4798
  %v4880 = vunpack.c.h.bf16 %v4798
  %v4881 = vunpack.c.l.bf16 %v4799
  %v4882 = vunpack.c.h.bf16 %v4799
  %v4883 = vunpack.c.l.bf16 %v4800
  %v4884 = vunpack.c.h.bf16 %v4800
  %v4885 = vunpack.c.l.bf16 %v4801
  %v4886 = vunpack.c.h.bf16 %v4801
  %v4887 = vunpack.c.l.bf16 %v4802
  %v4888 = vunpack.c.h.bf16 %v4802
  %v4889 = vunpack.c.l.bf16 %v4803
  %v4890 = vunpack.c.h.bf16 %v4803
  %v4891 = vunpack.c.l.bf16 %v4804
  %v4892 = vunpack.c.h.bf16 %v4804
  %v4893 = vunpack.c.l.bf16 %v4805
  %v4894 = vunpack.c.h.bf16 %v4805
  %v4895 = vunpack.c.l.bf16 %v4806
  %v4896 = vunpack.c.h.bf16 %v4806
  %v4897 = vunpack.c.l.bf16 %v4807
  %v4898 = vunpack.c.h.bf16 %v4807
  %v4899 = vunpack.c.l.bf16 %v4808
  %v4900 = vunpack.c.h.bf16 %v4808
  %v4901 = vunpack.c.l.bf16 %v4809
  %v4902 = vunpack.c.h.bf16 %v4809
  %v4903 = vunpack.c.l.bf16 %v4810
  %v4904 = vunpack.c.h.bf16 %v4810
  %v4905 = vunpack.c.l.bf16 %v4811
  %v4906 = vunpack.c.h.bf16 %v4811
  %v4907 = vunpack.c.l.bf16 %v4812
  %v4908 = vunpack.c.h.bf16 %v4812
  %v4909 = vunpack.c.l.bf16 %v4813
  %v4910 = vunpack.c.h.bf16 %v4813
  %v4911 = vunpack.c.l.bf16 %v4814
  %v4912 = vunpack.c.h.bf16 %v4814
  %v4913 = vunpack.c.l.bf16 %v4815
  %v4914 = vunpack.c.h.bf16 %v4815
  %v4915 = vunpack.c.l.bf16 %v4816
  %v4916 = vunpack.c.h.bf16 %v4816
  %v4917 = vunpack.c.l.bf16 %v4817
  %v4918 = vunpack.c.h.bf16 %v4817
  %v4919 = vunpack.c.l.bf16 %v4818
  %v4920 = vunpack.c.h.bf16 %v4818
  %v4921 = vunpack.c.l.bf16 %v4819
  %v4922 = vunpack.c.h.bf16 %v4819
  %v4923 = vunpack.c.l.bf16 %v4820
  %v4924 = vunpack.c.h.bf16 %v4820
  %v4925 = vunpack.c.l.bf16 %v4821
  %v4926 = vunpack.c.h.bf16 %v4821
  %v4927 = vunpack.c.l.bf16 %v4822
  %v4928 = vunpack.c.h.bf16 %v4822
  %v4929 = vunpack.c.l.bf16 %v4823
  %v4930 = vunpack.c.h.bf16 %v4823
  %v4931 = vunpack.c.l.bf16 %v4824
  %v4932 = vunpack.c.h.bf16 %v4824
  %v4933 = vunpack.c.l.bf16 %v4825
  %v4934 = vunpack.c.h.bf16 %v4825
  %v4935 = vunpack.c.l.bf16 %v4826
  %v4936 = vunpack.c.h.bf16 %v4826
  %v4937 = vunpack.c.l.bf16 %v4827
  %v4938 = vunpack.c.h.bf16 %v4827
  %v4939 = vunpack.c.l.bf16 %v4828
  %v4940 = vunpack.c.h.bf16 %v4828
  %v4941 = vunpack.c.l.bf16 %v4829
  %v4942 = vunpack.c.h.bf16 %v4829
  %v4943 = vunpack.c.l.bf16 %v4830
  %v4944 = vunpack.c.h.bf16 %v4830
  %v4945 = vunpack.c.l.bf16 %v4831
  %v4946 = vunpack.c.h.bf16 %v4831
  %v4947 = vunpack.c.l.bf16 %v4832
  %v4948 = vunpack.c.h.bf16 %v4832
  %v4949 = vunpack.c.l.bf16 %v4833
  %v4950 = vunpack.c.h.bf16 %v4833
  %v4951 = vunpack.c.l.bf16 %v4834
  %v4952 = vunpack.c.h.bf16 %v4834
  %v4953 = vunpack.c.l.bf16 %v4835
  %v4954 = vunpack.c.h.bf16 %v4835
  %v4955 = vunpack.c.l.bf16 %v4836
  %v4956 = vunpack.c.h.bf16 %v4836
  %v4957 = vunpack.c.l.bf16 %v4837
  %v4958 = vunpack.c.h.bf16 %v4837
  %v4959 = vunpack.c.l.bf16 %v4838
  %v4960 = vunpack.c.h.bf16 %v4838
  %v4961 = vunpack.c.l.bf16 %v4839
  %v4962 = vunpack.c.h.bf16 %v4839
  %v4963 = vunpack.c.l.bf16 %v4840
  %v4964 = vunpack.c.h.bf16 %v4840
  %v4965 = vunpack.c.l.bf16 %v4841
  %v4966 = vunpack.c.h.bf16 %v4841
  %v4967 = vunpack.c.l.bf16 %v4842
  %v4968 = vunpack.c.h.bf16 %v4842
  %v4969 = vunpack.c.l.bf16 %v4843
  %v4970 = vunpack.c.h.bf16 %v4843
  %v4971 = vunpack.c.l.bf16 %v4844
  %v4972 = vunpack.c.h.bf16 %v4844
  %v4973 = vmax.f32 %v4845, 0.0
  %v4974 = vmax.f32 %v4846, 0.0
  %v4975 = vmax.f32 %v4847, 0.0
  %v4976 = vmax.f32 %v4848, 0.0
  %v4977 = vmax.f32 %v4849, 0.0
  %v4978 = vmax.f32 %v4850, 0.0
  %v4979 = vmax.f32 %v4851, 0.0
  %v4980 = vmax.f32 %v4852, 0.0
  %v4981 = vmax.f32 %v4853, 0.0
  %v4982 = vmax.f32 %v4854, 0.0
  %v4983 = vmax.f32 %v4855, 0.0
  %v4984 = vmax.f32 %v4856, 0.0
  %v4985 = vmax.f32 %v4857, 0.0
  %v4986 = vmax.f32 %v4858, 0.0
  %v4987 = vmax.f32 %v4859, 0.0
  %v4988 = vmax.f32 %v4860, 0.0
  %v4989 = vmax.f32 %v4861, 0.0
  %v4990 = vmax.f32 %v4862, 0.0
  %v4991 = vmax.f32 %v4863, 0.0
  %v4992 = vmax.f32 %v4864, 0.0
  %v4993 = vmax.f32 %v4865, 0.0
  %v4994 = vmax.f32 %v4866, 0.0
  %v4995 = vmax.f32 %v4867, 0.0
  %v4996 = vmax.f32 %v4868, 0.0
  %v4997 = vmax.f32 %v4869, 0.0
  %v4998 = vmax.f32 %v4870, 0.0
  %v4999 = vmax.f32 %v4871, 0.0
  %v5000 = vmax.f32 %v4872, 0.0
  %v5001 = vmax.f32 %v4873, 0.0
  %v5002 = vmax.f32 %v4874, 0.0
  %v5003 = vmax.f32 %v4875, 0.0
  %v5004 = vmax.f32 %v4876, 0.0
  %v5005 = vmax.f32 %v4877, 0.0
  %v5006 = vmax.f32 %v4878, 0.0
  %v5007 = vmax.f32 %v4879, 0.0
  %v5008 = vmax.f32 %v4880, 0.0
  %v5009 = vmax.f32 %v4881, 0.0
  %v5010 = vmax.f32 %v4882, 0.0
  %v5011 = vmax.f32 %v4883, 0.0
  %v5012 = vmax.f32 %v4884, 0.0
  %v5013 = vmax.f32 %v4885, 0.0
  %v5014 = vmax.f32 %v4886, 0.0
  %v5015 = vmax.f32 %v4887, 0.0
  %v5016 = vmax.f32 %v4888, 0.0
  %v5017 = vmax.f32 %v4889, 0.0
  %v5018 = vmax.f32 %v4890, 0.0
  %v5019 = vmax.f32 %v4891, 0.0
  %v5020 = vmax.f32 %v4892, 0.0
  %v5021 = vmax.f32 %v4893, 0.0
  %v5022 = vmax.f32 %v4894, 0.0
  %v5023 = vmax.f32 %v4895, 0.0
  %v5024 = vmax.f32 %v4896, 0.0
  %v5025 = vmax.f32 %v4897, 0.0
  %v5026 = vmax.f32 %v4898, 0.0
  %v5027 = vmax.f32 %v4899, 0.0
  %v5028 = vmax.f32 %v4900, 0.0
  %v5029 = vmax.f32 %v4901, 0.0
  %v5030 = vmax.f32 %v4902, 0.0
  %v5031 = vmax.f32 %v4903, 0.0
  %v5032 = vmax.f32 %v4904, 0.0
  %v5033 = vmax.f32 %v4905, 0.0
  %v5034 = vmax.f32 %v4906, 0.0
  %v5035 = vmax.f32 %v4907, 0.0
  %v5036 = vmax.f32 %v4908, 0.0
  %v5037 = vmax.f32 %v4909, 0.0
  %v5038 = vmax.f32 %v4910, 0.0
  %v5039 = vmax.f32 %v4911, 0.0
  %v5040 = vmax.f32 %v4912, 0.0
  %v5041 = vmax.f32 %v4913, 0.0
  %v5042 = vmax.f32 %v4914, 0.0
  %v5043 = vmax.f32 %v4915, 0.0
  %v5044 = vmax.f32 %v4916, 0.0
  %v5045 = vmax.f32 %v4917, 0.0
  %v5046 = vmax.f32 %v4918, 0.0
  %v5047 = vmax.f32 %v4919, 0.0
  %v5048 = vmax.f32 %v4920, 0.0
  %v5049 = vmax.f32 %v4921, 0.0
  %v5050 = vmax.f32 %v4922, 0.0
  %v5051 = vmax.f32 %v4923, 0.0
  %v5052 = vmax.f32 %v4924, 0.0
  %v5053 = vmax.f32 %v4925, 0.0
  %v5054 = vmax.f32 %v4926, 0.0
  %v5055 = vmax.f32 %v4927, 0.0
  %v5056 = vmax.f32 %v4928, 0.0
  %v5057 = vmax.f32 %v4929, 0.0
  %v5058 = vmax.f32 %v4930, 0.0
  %v5059 = vmax.f32 %v4931, 0.0
  %v5060 = vmax.f32 %v4932, 0.0
  %v5061 = vmax.f32 %v4933, 0.0
  %v5062 = vmax.f32 %v4934, 0.0
  %v5063 = vmax.f32 %v4935, 0.0
  %v5064 = vmax.f32 %v4936, 0.0
  %v5065 = vmax.f32 %v4937, 0.0
  %v5066 = vmax.f32 %v4938, 0.0
  %v5067 = vmax.f32 %v4939, 0.0
  %v5068 = vmax.f32 %v4940, 0.0
  %v5069 = vmax.f32 %v4941, 0.0
  %v5070 = vmax.f32 %v4942, 0.0
  %v5071 = vmax.f32 %v4943, 0.0
  %v5072 = vmax.f32 %v4944, 0.0
  %v5073 = vmax.f32 %v4945, 0.0
  %v5074 = vmax.f32 %v4946, 0.0
  %v5075 = vmax.f32 %v4947, 0.0
  %v5076 = vmax.f32 %v4948, 0.0
  %v5077 = vmax.f32 %v4949, 0.0
  %v5078 = vmax.f32 %v4950, 0.0
  %v5079 = vmax.f32 %v4951, 0.0
  %v5080 = vmax.f32 %v4952, 0.0
  %v5081 = vmax.f32 %v4953, 0.0
  %v5082 = vmax.f32 %v4954, 0.0
  %v5083 = vmax.f32 %v4955, 0.0
  %v5084 = vmax.f32 %v4956, 0.0
  %v5085 = vmax.f32 %v4957, 0.0
  %v5086 = vmax.f32 %v4958, 0.0
  %v5087 = vmax.f32 %v4959, 0.0
  %v5088 = vmax.f32 %v4960, 0.0
  %v5089 = vmax.f32 %v4961, 0.0
  %v5090 = vmax.f32 %v4962, 0.0
  %v5091 = vmax.f32 %v4963, 0.0
  %v5092 = vmax.f32 %v4964, 0.0
  %v5093 = vmax.f32 %v4965, 0.0
  %v5094 = vmax.f32 %v4966, 0.0
  %v5095 = vmax.f32 %v4967, 0.0
  %v5096 = vmax.f32 %v4968, 0.0
  %v5097 = vmax.f32 %v4969, 0.0
  %v5098 = vmax.f32 %v4970, 0.0
  %v5099 = vmax.f32 %v4971, 0.0
  %v5100 = vmax.f32 %v4972, 0.0
  %v5101 = vpack.c.bf16 %v4977, %v4973
  %v5102 = vpack.c.bf16 %v4978, %v4974
  %v5103 = vpack.c.bf16 %v4979, %v4975
  %v5104 = vpack.c.bf16 %v4980, %v4976
  %v5105 = vpack.c.bf16 %v4985, %v4981
  %v5106 = vpack.c.bf16 %v4986, %v4982
  %v5107 = vpack.c.bf16 %v4987, %v4983
  %v5108 = vpack.c.bf16 %v4988, %v4984
  %v5109 = vpack.c.bf16 %v4993, %v4989
  %v5110 = vpack.c.bf16 %v4994, %v4990
  %v5111 = vpack.c.bf16 %v4995, %v4991
  %v5112 = vpack.c.bf16 %v4996, %v4992
  %v5113 = vpack.c.bf16 %v5001, %v4997
  %v5114 = vpack.c.bf16 %v5002, %v4998
  %v5115 = vpack.c.bf16 %v5003, %v4999
  %v5116 = vpack.c.bf16 %v5004, %v5000
  %v5117 = vpack.c.bf16 %v5009, %v5005
  %v5118 = vpack.c.bf16 %v5010, %v5006
  %v5119 = vpack.c.bf16 %v5011, %v5007
  %v5120 = vpack.c.bf16 %v5012, %v5008
  %v5121 = vpack.c.bf16 %v5017, %v5013
  %v5122 = vpack.c.bf16 %v5018, %v5014
  %v5123 = vpack.c.bf16 %v5019, %v5015
  %v5124 = vpack.c.bf16 %v5020, %v5016
  %v5125 = vpack.c.bf16 %v5025, %v5021
  %v5126 = vpack.c.bf16 %v5026, %v5022
  %v5127 = vpack.c.bf16 %v5027, %v5023
  %v5128 = vpack.c.bf16 %v5028, %v5024
  %v5129 = vpack.c.bf16 %v5033, %v5029
  %v5130 = vpack.c.bf16 %v5034, %v5030
  %v5131 = vpack.c.bf16 %v5035, %v5031
  %v5132 = vpack.c.bf16 %v5036, %v5032
  %v5133 = vpack.c.bf16 %v5041, %v5037
  %v5134 = vpack.c.bf16 %v5042, %v5038
  %v5135 = vpack.c.bf16 %v5043, %v5039
  %v5136 = vpack.c.bf16 %v5044, %v5040
  %v5137 = vpack.c.bf16 %v5049, %v5045
  %v5138 = vpack.c.bf16 %v5050, %v5046
  %v5139 = vpack.c.bf16 %v5051, %v5047
  %v5140 = vpack.c.bf16 %v5052, %v5048
  %v5141 = vpack.c.bf16 %v5057, %v5053
  %v5142 = vpack.c.bf16 %v5058, %v5054
  %v5143 = vpack.c.bf16 %v5059, %v5055
  %v5144 = vpack.c.bf16 %v5060, %v5056
  %v5145 = vpack.c.bf16 %v5065, %v5061
  %v5146 = vpack.c.bf16 %v5066, %v5062
  %v5147 = vpack.c.bf16 %v5067, %v5063
  %v5148 = vpack.c.bf16 %v5068, %v5064
  %v5149 = vpack.c.bf16 %v5073, %v5069
  %v5150 = vpack.c.bf16 %v5074, %v5070
  %v5151 = vpack.c.bf16 %v5075, %v5071
  %v5152 = vpack.c.bf16 %v5076, %v5072
  %v5153 = vpack.c.bf16 %v5081, %v5077
  %v5154 = vpack.c.bf16 %v5082, %v5078
  %v5155 = vpack.c.bf16 %v5083, %v5079
  %v5156 = vpack.c.bf16 %v5084, %v5080
  %v5157 = vpack.c.bf16 %v5089, %v5085
  %v5158 = vpack.c.bf16 %v5090, %v5086
  %v5159 = vpack.c.bf16 %v5091, %v5087
  %v5160 = vpack.c.bf16 %v5092, %v5088
  %v5161 = vpack.c.bf16 %v5097, %v5093
  %v5162 = vpack.c.bf16 %v5098, %v5094
  %v5163 = vpack.c.bf16 %v5099, %v5095
  %v5164 = vpack.c.bf16 %v5100, %v5096
  %v5165 = vld [vmem:[%s3] sm:$0xff]
  %v5166 = vld [vmem:[%s3 + $0x8] sm:$0xff]
  %v5167 = vld [vmem:[%s3 + $0x10] sm:$0xff]
  %v5168 = vld [vmem:[%s3 + $0x18] sm:$0xff]
  %v5169 = vld [vmem:[%s3 + $0x20] sm:$0xff]
  %v5170 = vld [vmem:[%s3 + $0x28] sm:$0xff]
  %v5171 = vld [vmem:[%s3 + $0x30] sm:$0xff]
  %v5172 = vld [vmem:[%s3 + $0x38] sm:$0xff]
  %v5173 = vld [vmem:[%s3 + $0x40] sm:$0xff]
  %v5174 = vld [vmem:[%s3 + $0x48] sm:$0xff]
  %v5175 = vld [vmem:[%s3 + $0x50] sm:$0xff]
  %v5176 = vld [vmem:[%s3 + $0x58] sm:$0xff]
  %v5177 = vld [vmem:[%s3 + $0x60] sm:$0xff]
  %v5178 = vld [vmem:[%s3 + $0x68] sm:$0xff]
  %v5179 = vld [vmem:[%s3 + $0x70] sm:$0xff]
  %v5180 = vld [vmem:[%s3 + $0x78] sm:$0xff]
  %v5181 = vld [vmem:[%s3 + $0x80] sm:$0xff]
  %v5182 = vld [vmem:[%s3 + $0x88] sm:$0xff]
  %v5183 = vld [vmem:[%s3 + $0x90] sm:$0xff]
  %v5184 = vld [vmem:[%s3 + $0x98] sm:$0xff]
  %v5185 = vld [vmem:[%s3 + $0xa0] sm:$0xff]
  %v5186 = vld [vmem:[%s3 + $0xa8] sm:$0xff]
  %v5187 = vld [vmem:[%s3 + $0xb0] sm:$0xff]
  %v5188 = vld [vmem:[%s3 + $0xb8] sm:$0xff]
  %v5189 = vld [vmem:[%s3 + $0xc0] sm:$0xff]
  %v5190 = vld [vmem:[%s3 + $0xc8] sm:$0xff]
  %v5191 = vld [vmem:[%s3 + $0xd0] sm:$0xff]
  %v5192 = vld [vmem:[%s3 + $0xd8] sm:$0xff]
  %v5193 = vld [vmem:[%s3 + $0xe0] sm:$0xff]
  %v5194 = vld [vmem:[%s3 + $0xe8] sm:$0xff]
  %v5195 = vld [vmem:[%s3 + $0xf0] sm:$0xff]
  %v5196 = vld [vmem:[%s3 + $0xf8] sm:$0xff]
  %v5197 = vld [vmem:[%s3 + $0x100] sm:$0xff]
  %v5198 = vld [vmem:[%s3 + $0x108] sm:$0xff]
  %v5199 = vld [vmem:[%s3 + $0x110] sm:$0xff]
  %v5200 = vld [vmem:[%s3 + $0x118] sm:$0xff]
  %v5201 = vld [vmem:[%s3 + $0x120] sm:$0xff]
  %v5202 = vld [vmem:[%s3 + $0x128] sm:$0xff]
  %v5203 = vld [vmem:[%s3 + $0x130] sm:$0xff]
  %v5204 = vld [vmem:[%s3 + $0x138] sm:$0xff]
  %v5205 = vld [vmem:[%s3 + $0x140] sm:$0xff]
  %v5206 = vld [vmem:[%s3 + $0x148] sm:$0xff]
  %v5207 = vld [vmem:[%s3 + $0x150] sm:$0xff]
  %v5208 = vld [vmem:[%s3 + $0x158] sm:$0xff]
  %v5209 = vld [vmem:[%s3 + $0x160] sm:$0xff]
  %v5210 = vld [vmem:[%s3 + $0x168] sm:$0xff]
  %v5211 = vld [vmem:[%s3 + $0x170] sm:$0xff]
  %v5212 = vld [vmem:[%s3 + $0x178] sm:$0xff]
  %v5213 = vld [vmem:[%s3 + $0x180] sm:$0xff]
  %v5214 = vld [vmem:[%s3 + $0x188] sm:$0xff]
  %v5215 = vld [vmem:[%s3 + $0x190] sm:$0xff]
  %v5216 = vld [vmem:[%s3 + $0x198] sm:$0xff]
  %v5217 = vld [vmem:[%s3 + $0x1a0] sm:$0xff]
  %v5218 = vld [vmem:[%s3 + $0x1a8] sm:$0xff]
  %v5219 = vld [vmem:[%s3 + $0x1b0] sm:$0xff]
  %v5220 = vld [vmem:[%s3 + $0x1b8] sm:$0xff]
  %v5221 = vld [vmem:[%s3 + $0x1c0] sm:$0xff]
  %v5222 = vld [vmem:[%s3 + $0x1c8] sm:$0xff]
  %v5223 = vld [vmem:[%s3 + $0x1d0] sm:$0xff]
  %v5224 = vld [vmem:[%s3 + $0x1d8] sm:$0xff]
  %v5225 = vld [vmem:[%s3 + $0x1e0] sm:$0xff]
  %v5226 = vld [vmem:[%s3 + $0x1e8] sm:$0xff]
  %v5227 = vld [vmem:[%s3 + $0x1f0] sm:$0xff]
  %v5228 = vld [vmem:[%s3 + $0x1f8] sm:$0xff]
  %v5293 = vunpack.c.l.b16 %v5165
  %v5294 = vunpack.c.h.b16 %v5165
  %v5295 = vunpack.c.l.b16 %v5166
  %v5296 = vunpack.c.h.b16 %v5166
  %v5297 = vunpack.c.l.b16 %v5167
  %v5298 = vunpack.c.h.b16 %v5167
  %v5299 = vunpack.c.l.b16 %v5168
  %v5300 = vunpack.c.h.b16 %v5168
  %v5301 = vunpack.c.l.b16 %v5169
  %v5302 = vunpack.c.h.b16 %v5169
  %v5303 = vunpack.c.l.b16 %v5170
  %v5304 = vunpack.c.h.b16 %v5170
  %v5305 = vunpack.c.l.b16 %v5171
  %v5306 = vunpack.c.h.b16 %v5171
  %v5307 = vunpack.c.l.b16 %v5172
  %v5308 = vunpack.c.h.b16 %v5172
  %v5309 = vunpack.c.l.b16 %v5173
  %v5310 = vunpack.c.h.b16 %v5173
  %v5311 = vunpack.c.l.b16 %v5174
  %v5312 = vunpack.c.h.b16 %v5174
  %v5313 = vunpack.c.l.b16 %v5175
  %v5314 = vunpack.c.h.b16 %v5175
  %v5315 = vunpack.c.l.b16 %v5176
  %v5316 = vunpack.c.h.b16 %v5176
  %v5317 = vunpack.c.l.b16 %v5177
  %v5318 = vunpack.c.h.b16 %v5177
  %v5319 = vunpack.c.l.b16 %v5178
  %v5320 = vunpack.c.h.b16 %v5178
  %v5321 = vunpack.c.l.b16 %v5179
  %v5322 = vunpack.c.h.b16 %v5179
  %v5323 = vunpack.c.l.b16 %v5180
  %v5324 = vunpack.c.h.b16 %v5180
  %v5325 = vunpack.c.l.b16 %v5181
  %v5326 = vunpack.c.h.b16 %v5181
  %v5327 = vunpack.c.l.b16 %v5182
  %v5328 = vunpack.c.h.b16 %v5182
  %v5329 = vunpack.c.l.b16 %v5183
  %v5330 = vunpack.c.h.b16 %v5183
  %v5331 = vunpack.c.l.b16 %v5184
  %v5332 = vunpack.c.h.b16 %v5184
  %v5333 = vunpack.c.l.b16 %v5185
  %v5334 = vunpack.c.h.b16 %v5185
  %v5335 = vunpack.c.l.b16 %v5186
  %v5336 = vunpack.c.h.b16 %v5186
  %v5337 = vunpack.c.l.b16 %v5187
  %v5338 = vunpack.c.h.b16 %v5187
  %v5339 = vunpack.c.l.b16 %v5188
  %v5340 = vunpack.c.h.b16 %v5188
  %v5341 = vunpack.c.l.b16 %v5189
  %v5342 = vunpack.c.h.b16 %v5189
  %v5343 = vunpack.c.l.b16 %v5190
  %v5344 = vunpack.c.h.b16 %v5190
  %v5345 = vunpack.c.l.b16 %v5191
  %v5346 = vunpack.c.h.b16 %v5191
  %v5347 = vunpack.c.l.b16 %v5192
  %v5348 = vunpack.c.h.b16 %v5192
  %v5349 = vunpack.c.l.b16 %v5193
  %v5350 = vunpack.c.h.b16 %v5193
  %v5351 = vunpack.c.l.b16 %v5194
  %v5352 = vunpack.c.h.b16 %v5194
  %v5353 = vunpack.c.l.b16 %v5195
  %v5354 = vunpack.c.h.b16 %v5195
  %v5355 = vunpack.c.l.b16 %v5196
  %v5356 = vunpack.c.h.b16 %v5196
  %v5357 = vunpack.c.l.b16 %v5197
  %v5358 = vunpack.c.h.b16 %v5197
  %v5359 = vunpack.c.l.b16 %v5198
  %v5360 = vunpack.c.h.b16 %v5198
  %v5361 = vunpack.c.l.b16 %v5199
  %v5362 = vunpack.c.h.b16 %v5199
  %v5363 = vunpack.c.l.b16 %v5200
  %v5364 = vunpack.c.h.b16 %v5200
  %v5365 = vunpack.c.l.b16 %v5201
  %v5366 = vunpack.c.h.b16 %v5201
  %v5367 = vunpack.c.l.b16 %v5202
  %v5368 = vunpack.c.h.b16 %v5202
  %v5369 = vunpack.c.l.b16 %v5203
  %v5370 = vunpack.c.h.b16 %v5203
  %v5371 = vunpack.c.l.b16 %v5204
  %v5372 = vunpack.c.h.b16 %v5204
  %v5373 = vunpack.c.l.b16 %v5205
  %v5374 = vunpack.c.h.b16 %v5205
  %v5375 = vunpack.c.l.b16 %v5206
  %v5376 = vunpack.c.h.b16 %v5206
  %v5377 = vunpack.c.l.b16 %v5207
  %v5378 = vunpack.c.h.b16 %v5207
  %v5379 = vunpack.c.l.b16 %v5208
  %v5380 = vunpack.c.h.b16 %v5208
  %v5381 = vunpack.c.l.b16 %v5209
  %v5382 = vunpack.c.h.b16 %v5209
  %v5383 = vunpack.c.l.b16 %v5210
  %v5384 = vunpack.c.h.b16 %v5210
  %v5385 = vunpack.c.l.b16 %v5211
  %v5386 = vunpack.c.h.b16 %v5211
  %v5387 = vunpack.c.l.b16 %v5212
  %v5388 = vunpack.c.h.b16 %v5212
  %v5389 = vunpack.c.l.b16 %v5213
  %v5390 = vunpack.c.h.b16 %v5213
  %v5391 = vunpack.c.l.b16 %v5214
  %v5392 = vunpack.c.h.b16 %v5214
  %v5393 = vunpack.c.l.b16 %v5215
  %v5394 = vunpack.c.h.b16 %v5215
  %v5395 = vunpack.c.l.b16 %v5216
  %v5396 = vunpack.c.h.b16 %v5216
  %v5397 = vunpack.c.l.b16 %v5217
  %v5398 = vunpack.c.h.b16 %v5217
  %v5399 = vunpack.c.l.b16 %v5218
  %v5400 = vunpack.c.h.b16 %v5218
  %v5401 = vunpack.c.l.b16 %v5219
  %v5402 = vunpack.c.h.b16 %v5219
  %v5403 = vunpack.c.l.b16 %v5220
  %v5404 = vunpack.c.h.b16 %v5220
  %v5405 = vunpack.c.l.b16 %v5221
  %v5406 = vunpack.c.h.b16 %v5221
  %v5407 = vunpack.c.l.b16 %v5222
  %v5408 = vunpack.c.h.b16 %v5222
  %v5409 = vunpack.c.l.b16 %v5223
  %v5410 = vunpack.c.h.b16 %v5223
  %v5411 = vunpack.c.l.b16 %v5224
  %v5412 = vunpack.c.h.b16 %v5224
  %v5413 = vunpack.c.l.b16 %v5225
  %v5414 = vunpack.c.h.b16 %v5225
  %v5415 = vunpack.c.l.b16 %v5226
  %v5416 = vunpack.c.h.b16 %v5226
  %v5417 = vunpack.c.l.b16 %v5227
  %v5418 = vunpack.c.h.b16 %v5227
  %v5419 = vunpack.c.l.b16 %v5228
  %v5420 = vunpack.c.h.b16 %v5228
  %v5421 = vpack.c.b16 %v5295, %v5293
  %v5422 = vpack.c.b16 %v5296, %v5294
  %v5423 = vpack.c.b16 %v5299, %v5297
  %v5424 = vpack.c.b16 %v5300, %v5298
  %v5425 = vpack.c.b16 %v5303, %v5301
  %v5426 = vpack.c.b16 %v5304, %v5302
  %v5427 = vpack.c.b16 %v5307, %v5305
  %v5428 = vpack.c.b16 %v5308, %v5306
  %v5429 = vpack.c.b16 %v5311, %v5309
  %v5430 = vpack.c.b16 %v5312, %v5310
  %v5431 = vpack.c.b16 %v5315, %v5313
  %v5432 = vpack.c.b16 %v5316, %v5314
  %v5433 = vpack.c.b16 %v5319, %v5317
  %v5434 = vpack.c.b16 %v5320, %v5318
  %v5435 = vpack.c.b16 %v5323, %v5321
  %v5436 = vpack.c.b16 %v5324, %v5322
  %v5437 = vpack.c.b16 %v5327, %v5325
  %v5438 = vpack.c.b16 %v5328, %v5326
  %v5439 = vpack.c.b16 %v5331, %v5329
  %v5440 = vpack.c.b16 %v5332, %v5330
  %v5441 = vpack.c.b16 %v5335, %v5333
  %v5442 = vpack.c.b16 %v5336, %v5334
  %v5443 = vpack.c.b16 %v5339, %v5337
  %v5444 = vpack.c.b16 %v5340, %v5338
  %v5445 = vpack.c.b16 %v5343, %v5341
  %v5446 = vpack.c.b16 %v5344, %v5342
  %v5447 = vpack.c.b16 %v5347, %v5345
  %v5448 = vpack.c.b16 %v5348, %v5346
  %v5449 = vpack.c.b16 %v5351, %v5349
  %v5450 = vpack.c.b16 %v5352, %v5350
  %v5451 = vpack.c.b16 %v5355, %v5353
  %v5452 = vpack.c.b16 %v5356, %v5354
  %v5453 = vpack.c.b16 %v5359, %v5357
  %v5454 = vpack.c.b16 %v5360, %v5358
  %v5455 = vpack.c.b16 %v5363, %v5361
  %v5456 = vpack.c.b16 %v5364, %v5362
  %v5457 = vpack.c.b16 %v5367, %v5365
  %v5458 = vpack.c.b16 %v5368, %v5366
  %v5459 = vpack.c.b16 %v5371, %v5369
  %v5460 = vpack.c.b16 %v5372, %v5370
  %v5461 = vpack.c.b16 %v5375, %v5373
  %v5462 = vpack.c.b16 %v5376, %v5374
  %v5463 = vpack.c.b16 %v5379, %v5377
  %v5464 = vpack.c.b16 %v5380, %v5378
  %v5465 = vpack.c.b16 %v5383, %v5381
  %v5466 = vpack.c.b16 %v5384, %v5382
  %v5467 = vpack.c.b16 %v5387, %v5385
  %v5468 = vpack.c.b16 %v5388, %v5386
  %v5469 = vpack.c.b16 %v5391, %v5389
  %v5470 = vpack.c.b16 %v5392, %v5390
  %v5471 = vpack.c.b16 %v5395, %v5393
  %v5472 = vpack.c.b16 %v5396, %v5394
  %v5473 = vpack.c.b16 %v5399, %v5397
  %v5474 = vpack.c.b16 %v5400, %v5398
  %v5475 = vpack.c.b16 %v5403, %v5401
  %v5476 = vpack.c.b16 %v5404, %v5402
  %v5477 = vpack.c.b16 %v5407, %v5405
  %v5478 = vpack.c.b16 %v5408, %v5406
  %v5479 = vpack.c.b16 %v5411, %v5409
  %v5480 = vpack.c.b16 %v5412, %v5410
  %v5481 = vpack.c.b16 %v5415, %v5413
  %v5482 = vpack.c.b16 %v5416, %v5414
  %v5483 = vpack.c.b16 %v5419, %v5417
  %v5484 = vpack.c.b16 %v5420, %v5418
  %5549 = vmatpush.bf16.msra.mxu0 %v5435
  %5550 = vmatpush.bf16.msra.mxu0 %v5433
  %5551 = vmatpush.bf16.msra.mxu0 %v5431
  %5552 = vmatpush.bf16.msra.mxu0 %v5429
  %5553 = vmatpush.bf16.msra.mxu0 %v5427
  %5554 = vmatpush.bf16.msra.mxu0 %v5425
  %5555 = vmatpush.bf16.msra.mxu0 %v5423
  %5556 = vmatpush.bf16.msra.mxu0 %v5421
  %5557 = vmatmul.bf16.gmra.mxu0 %v5101
  %v5558 = vpop.f32.mrf.mxu0
  %v5559 = vadd.f32 0.0, %v5558
  %v5560 = vpop.f32.mrf.mxu0
  %v5561 = vadd.f32 0.0, %v5560
  %5562 = vmatmul.bf16.gmra.mxu0 %v5105
  %v5563 = vpop.f32.mrf.mxu0
  %v5564 = vadd.f32 0.0, %v5563
  %v5565 = vpop.f32.mrf.mxu0
  %v5566 = vadd.f32 0.0, %v5565
  %5567 = vmatmul.bf16.gmra.mxu0 %v5109
  %v5568 = vpop.f32.mrf.mxu0
  %v5569 = vadd.f32 0.0, %v5568
  %v5570 = vpop.f32.mrf.mxu0
  %v5571 = vadd.f32 0.0, %v5570
  %5572 = vmatmul.bf16.gmra.mxu0 %v5113
  %v5573 = vpop.f32.mrf.mxu0
  %v5574 = vadd.f32 0.0, %v5573
  %v5575 = vpop.f32.mrf.mxu0
  %v5576 = vadd.f32 0.0, %v5575
  %5577 = vmatmul.bf16.gmra.mxu0 %v5117
  %v5578 = vpop.f32.mrf.mxu0
  %v5579 = vadd.f32 0.0, %v5578
  %v5580 = vpop.f32.mrf.mxu0
  %v5581 = vadd.f32 0.0, %v5580
  %5582 = vmatmul.bf16.gmra.mxu0 %v5121
  %v5583 = vpop.f32.mrf.mxu0
  %v5584 = vadd.f32 0.0, %v5583
  %v5585 = vpop.f32.mrf.mxu0
  %v5586 = vadd.f32 0.0, %v5585
  %5587 = vmatmul.bf16.gmra.mxu0 %v5125
  %v5588 = vpop.f32.mrf.mxu0
  %v5589 = vadd.f32 0.0, %v5588
  %v5590 = vpop.f32.mrf.mxu0
  %v5591 = vadd.f32 0.0, %v5590
  %5592 = vmatmul.bf16.gmra.mxu0 %v5129
  %v5593 = vpop.f32.mrf.mxu0
  %v5594 = vadd.f32 0.0, %v5593
  %v5595 = vpop.f32.mrf.mxu0
  %v5596 = vadd.f32 0.0, %v5595
  %5597 = vmatmul.bf16.gmra.mxu0 %v5133
  %v5598 = vpop.f32.mrf.mxu0
  %v5599 = vadd.f32 0.0, %v5598
  %v5600 = vpop.f32.mrf.mxu0
  %v5601 = vadd.f32 0.0, %v5600
  %5602 = vmatmul.bf16.gmra.mxu0 %v5137
  %v5603 = vpop.f32.mrf.mxu0
  %v5604 = vadd.f32 0.0, %v5603
  %v5605 = vpop.f32.mrf.mxu0
  %v5606 = vadd.f32 0.0, %v5605
  %5607 = vmatmul.bf16.gmra.mxu0 %v5141
  %v5608 = vpop.f32.mrf.mxu0
  %v5609 = vadd.f32 0.0, %v5608
  %v5610 = vpop.f32.mrf.mxu0
  %v5611 = vadd.f32 0.0, %v5610
  %5612 = vmatmul.bf16.gmra.mxu0 %v5145
  %v5613 = vpop.f32.mrf.mxu0
  %v5614 = vadd.f32 0.0, %v5613
  %v5615 = vpop.f32.mrf.mxu0
  %v5616 = vadd.f32 0.0, %v5615
  %5617 = vmatmul.bf16.gmra.mxu0 %v5149
  %v5618 = vpop.f32.mrf.mxu0
  %v5619 = vadd.f32 0.0, %v5618
  %v5620 = vpop.f32.mrf.mxu0
  %v5621 = vadd.f32 0.0, %v5620
  %5622 = vmatmul.bf16.gmra.mxu0 %v5153
  %v5623 = vpop.f32.mrf.mxu0
  %v5624 = vadd.f32 0.0, %v5623
  %v5625 = vpop.f32.mrf.mxu0
  %v5626 = vadd.f32 0.0, %v5625
  %5627 = vmatmul.bf16.gmra.mxu0 %v5157
  %v5628 = vpop.f32.mrf.mxu0
  %v5629 = vadd.f32 0.0, %v5628
  %v5630 = vpop.f32.mrf.mxu0
  %v5631 = vadd.f32 0.0, %v5630
  %5632 = vmatmul.bf16.gmra.mxu0 %v5161
  %v5633 = vpop.f32.mrf.mxu0
  %v5634 = vadd.f32 0.0, %v5633
  %v5635 = vpop.f32.mrf.mxu0
  %v5636 = vadd.f32 0.0, %v5635
  %5637 = vdwg.mxu0
  %5638 = vmatpush.bf16.msra.mxu0 %v5451
  %5639 = vmatpush.bf16.msra.mxu0 %v5449
  %5640 = vmatpush.bf16.msra.mxu0 %v5447
  %5641 = vmatpush.bf16.msra.mxu0 %v5445
  %5642 = vmatpush.bf16.msra.mxu0 %v5443
  %5643 = vmatpush.bf16.msra.mxu0 %v5441
  %5644 = vmatpush.bf16.msra.mxu0 %v5439
  %5645 = vmatpush.bf16.msra.mxu0 %v5437
  %5646 = vmatmul.bf16.gmra.mxu0 %v5102
  %v5647 = vpop.f32.mrf.mxu0
  %v5648 = vadd.f32 %v5559, %v5647
  %v5649 = vpop.f32.mrf.mxu0
  %v5650 = vadd.f32 %v5561, %v5649
  %5651 = vmatmul.bf16.gmra.mxu0 %v5106
  %v5652 = vpop.f32.mrf.mxu0
  %v5653 = vadd.f32 %v5564, %v5652
  %v5654 = vpop.f32.mrf.mxu0
  %v5655 = vadd.f32 %v5566, %v5654
  %5656 = vmatmul.bf16.gmra.mxu0 %v5110
  %v5657 = vpop.f32.mrf.mxu0
  %v5658 = vadd.f32 %v5569, %v5657
  %v5659 = vpop.f32.mrf.mxu0
  %v5660 = vadd.f32 %v5571, %v5659
  %5661 = vmatmul.bf16.gmra.mxu0 %v5114
  %v5662 = vpop.f32.mrf.mxu0
  %v5663 = vadd.f32 %v5574, %v5662
  %v5664 = vpop.f32.mrf.mxu0
  %v5665 = vadd.f32 %v5576, %v5664
  %5666 = vmatmul.bf16.gmra.mxu0 %v5118
  %v5667 = vpop.f32.mrf.mxu0
  %v5668 = vadd.f32 %v5579, %v5667
  %v5669 = vpop.f32.mrf.mxu0
  %v5670 = vadd.f32 %v5581, %v5669
  %5671 = vmatmul.bf16.gmra.mxu0 %v5122
  %v5672 = vpop.f32.mrf.mxu0
  %v5673 = vadd.f32 %v5584, %v5672
  %v5674 = vpop.f32.mrf.mxu0
  %v5675 = vadd.f32 %v5586, %v5674
  %5676 = vmatmul.bf16.gmra.mxu0 %v5126
  %v5677 = vpop.f32.mrf.mxu0
  %v5678 = vadd.f32 %v5589, %v5677
  %v5679 = vpop.f32.mrf.mxu0
  %v5680 = vadd.f32 %v5591, %v5679
  %5681 = vmatmul.bf16.gmra.mxu0 %v5130
  %v5682 = vpop.f32.mrf.mxu0
  %v5683 = vadd.f32 %v5594, %v5682
  %v5684 = vpop.f32.mrf.mxu0
  %v5685 = vadd.f32 %v5596, %v5684
  %5686 = vmatmul.bf16.gmra.mxu0 %v5134
  %v5687 = vpop.f32.mrf.mxu0
  %v5688 = vadd.f32 %v5599, %v5687
  %v5689 = vpop.f32.mrf.mxu0
  %v5690 = vadd.f32 %v5601, %v5689
  %5691 = vmatmul.bf16.gmra.mxu0 %v5138
  %v5692 = vpop.f32.mrf.mxu0
  %v5693 = vadd.f32 %v5604, %v5692
  %v5694 = vpop.f32.mrf.mxu0
  %v5695 = vadd.f32 %v5606, %v5694
  %5696 = vmatmul.bf16.gmra.mxu0 %v5142
  %v5697 = vpop.f32.mrf.mxu0
  %v5698 = vadd.f32 %v5609, %v5697
  %v5699 = vpop.f32.mrf.mxu0
  %v5700 = vadd.f32 %v5611, %v5699
  %5701 = vmatmul.bf16.gmra.mxu0 %v5146
  %v5702 = vpop.f32.mrf.mxu0
  %v5703 = vadd.f32 %v5614, %v5702
  %v5704 = vpop.f32.mrf.mxu0
  %v5705 = vadd.f32 %v5616, %v5704
  %5706 = vmatmul.bf16.gmra.mxu0 %v5150
  %v5707 = vpop.f32.mrf.mxu0
  %v5708 = vadd.f32 %v5619, %v5707
  %v5709 = vpop.f32.mrf.mxu0
  %v5710 = vadd.f32 %v5621, %v5709
  %5711 = vmatmul.bf16.gmra.mxu0 %v5154
  %v5712 = vpop.f32.mrf.mxu0
  %v5713 = vadd.f32 %v5624, %v5712
  %v5714 = vpop.f32.mrf.mxu0
  %v5715 = vadd.f32 %v5626, %v5714
  %5716 = vmatmul.bf16.gmra.mxu0 %v5158
  %v5717 = vpop.f32.mrf.mxu0
  %v5718 = vadd.f32 %v5629, %v5717
  %v5719 = vpop.f32.mrf.mxu0
  %v5720 = vadd.f32 %v5631, %v5719
  %5721 = vmatmul.bf16.gmra.mxu0 %v5162
  %v5722 = vpop.f32.mrf.mxu0
  %v5723 = vadd.f32 %v5634, %v5722
  %v5724 = vpop.f32.mrf.mxu0
  %v5725 = vadd.f32 %v5636, %v5724
  %5726 = vdwg.mxu0
  %5727 = vmatpush.bf16.msra.mxu0 %v5467
  %5728 = vmatpush.bf16.msra.mxu0 %v5465
  %5729 = vmatpush.bf16.msra.mxu0 %v5463
  %5730 = vmatpush.bf16.msra.mxu0 %v5461
  %5731 = vmatpush.bf16.msra.mxu0 %v5459
  %5732 = vmatpush.bf16.msra.mxu0 %v5457
  %5733 = vmatpush.bf16.msra.mxu0 %v5455
  %5734 = vmatpush.bf16.msra.mxu0 %v5453
  %5735 = vmatmul.bf16.gmra.mxu0 %v5103
  %v5736 = vpop.f32.mrf.mxu0
  %v5737 = vadd.f32 %v5648, %v5736
  %v5738 = vpop.f32.mrf.mxu0
  %v5739 = vadd.f32 %v5650, %v5738
  %5740 = vmatmul.bf16.gmra.mxu0 %v5107
  %v5741 = vpop.f32.mrf.mxu0
  %v5742 = vadd.f32 %v5653, %v5741
  %v5743 = vpop.f32.mrf.mxu0
  %v5744 = vadd.f32 %v5655, %v5743
  %5745 = vmatmul.bf16.gmra.mxu0 %v5111
  %v5746 = vpop.f32.mrf.mxu0
  %v5747 = vadd.f32 %v5658, %v5746
  %v5748 = vpop.f32.mrf.mxu0
  %v5749 = vadd.f32 %v5660, %v5748
  %5750 = vmatmul.bf16.gmra.mxu0 %v5115
  %v5751 = vpop.f32.mrf.mxu0
  %v5752 = vadd.f32 %v5663, %v5751
  %v5753 = vpop.f32.mrf.mxu0
  %v5754 = vadd.f32 %v5665, %v5753
  %5755 = vmatmul.bf16.gmra.mxu0 %v5119
  %v5756 = vpop.f32.mrf.mxu0
  %v5757 = vadd.f32 %v5668, %v5756
  %v5758 = vpop.f32.mrf.mxu0
  %v5759 = vadd.f32 %v5670, %v5758
  %5760 = vmatmul.bf16.gmra.mxu0 %v5123
  %v5761 = vpop.f32.mrf.mxu0
  %v5762 = vadd.f32 %v5673, %v5761
  %v5763 = vpop.f32.mrf.mxu0
  %v5764 = vadd.f32 %v5675, %v5763
  %5765 = vmatmul.bf16.gmra.mxu0 %v5127
  %v5766 = vpop.f32.mrf.mxu0
  %v5767 = vadd.f32 %v5678, %v5766
  %v5768 = vpop.f32.mrf.mxu0
  %v5769 = vadd.f32 %v5680, %v5768
  %5770 = vmatmul.bf16.gmra.mxu0 %v5131
  %v5771 = vpop.f32.mrf.mxu0
  %v5772 = vadd.f32 %v5683, %v5771
  %v5773 = vpop.f32.mrf.mxu0
  %v5774 = vadd.f32 %v5685, %v5773
  %5775 = vmatmul.bf16.gmra.mxu0 %v5135
  %v5776 = vpop.f32.mrf.mxu0
  %v5777 = vadd.f32 %v5688, %v5776
  %v5778 = vpop.f32.mrf.mxu0
  %v5779 = vadd.f32 %v5690, %v5778
  %5780 = vmatmul.bf16.gmra.mxu0 %v5139
  %v5781 = vpop.f32.mrf.mxu0
  %v5782 = vadd.f32 %v5693, %v5781
  %v5783 = vpop.f32.mrf.mxu0
  %v5784 = vadd.f32 %v5695, %v5783
  %5785 = vmatmul.bf16.gmra.mxu0 %v5143
  %v5786 = vpop.f32.mrf.mxu0
  %v5787 = vadd.f32 %v5698, %v5786
  %v5788 = vpop.f32.mrf.mxu0
  %v5789 = vadd.f32 %v5700, %v5788
  %5790 = vmatmul.bf16.gmra.mxu0 %v5147
  %v5791 = vpop.f32.mrf.mxu0
  %v5792 = vadd.f32 %v5703, %v5791
  %v5793 = vpop.f32.mrf.mxu0
  %v5794 = vadd.f32 %v5705, %v5793
  %5795 = vmatmul.bf16.gmra.mxu0 %v5151
  %v5796 = vpop.f32.mrf.mxu0
  %v5797 = vadd.f32 %v5708, %v5796
  %v5798 = vpop.f32.mrf.mxu0
  %v5799 = vadd.f32 %v5710, %v5798
  %5800 = vmatmul.bf16.gmra.mxu0 %v5155
  %v5801 = vpop.f32.mrf.mxu0
  %v5802 = vadd.f32 %v5713, %v5801
  %v5803 = vpop.f32.mrf.mxu0
  %v5804 = vadd.f32 %v5715, %v5803
  %5805 = vmatmul.bf16.gmra.mxu0 %v5159
  %v5806 = vpop.f32.mrf.mxu0
  %v5807 = vadd.f32 %v5718, %v5806
  %v5808 = vpop.f32.mrf.mxu0
  %v5809 = vadd.f32 %v5720, %v5808
  %5810 = vmatmul.bf16.gmra.mxu0 %v5163
  %v5811 = vpop.f32.mrf.mxu0
  %v5812 = vadd.f32 %v5723, %v5811
  %v5813 = vpop.f32.mrf.mxu0
  %v5814 = vadd.f32 %v5725, %v5813
  %5815 = vdwg.mxu0
  %5816 = vmatpush.bf16.msra.mxu0 %v5483
  %5817 = vmatpush.bf16.msra.mxu0 %v5481
  %5818 = vmatpush.bf16.msra.mxu0 %v5479
  %5819 = vmatpush.bf16.msra.mxu0 %v5477
  %5820 = vmatpush.bf16.msra.mxu0 %v5475
  %5821 = vmatpush.bf16.msra.mxu0 %v5473
  %5822 = vmatpush.bf16.msra.mxu0 %v5471
  %5823 = vmatpush.bf16.msra.mxu0 %v5469
  %5824 = vmatmul.bf16.gmra.mxu0 %v5104
  %v5825 = vpop.f32.mrf.mxu0
  %v5826 = vadd.f32 %v5737, %v5825
  %v5827 = vpop.f32.mrf.mxu0
  %v5828 = vadd.f32 %v5739, %v5827
  %5829 = vmatmul.bf16.gmra.mxu0 %v5108
  %v5830 = vpop.f32.mrf.mxu0
  %v5831 = vadd.f32 %v5742, %v5830
  %v5832 = vpop.f32.mrf.mxu0
  %v5833 = vadd.f32 %v5744, %v5832
  %5834 = vmatmul.bf16.gmra.mxu0 %v5112
  %v5835 = vpop.f32.mrf.mxu0
  %v5836 = vadd.f32 %v5747, %v5835
  %v5837 = vpop.f32.mrf.mxu0
  %v5838 = vadd.f32 %v5749, %v5837
  %5839 = vmatmul.bf16.gmra.mxu0 %v5116
  %v5840 = vpop.f32.mrf.mxu0
  %v5841 = vadd.f32 %v5752, %v5840
  %v5842 = vpop.f32.mrf.mxu0
  %v5843 = vadd.f32 %v5754, %v5842
  %5844 = vmatmul.bf16.gmra.mxu0 %v5120
  %v5845 = vpop.f32.mrf.mxu0
  %v5846 = vadd.f32 %v5757, %v5845
  %v5847 = vpop.f32.mrf.mxu0
  %v5848 = vadd.f32 %v5759, %v5847
  %5849 = vmatmul.bf16.gmra.mxu0 %v5124
  %v5850 = vpop.f32.mrf.mxu0
  %v5851 = vadd.f32 %v5762, %v5850
  %v5852 = vpop.f32.mrf.mxu0
  %v5853 = vadd.f32 %v5764, %v5852
  %5854 = vmatmul.bf16.gmra.mxu0 %v5128
  %v5855 = vpop.f32.mrf.mxu0
  %v5856 = vadd.f32 %v5767, %v5855
  %v5857 = vpop.f32.mrf.mxu0
  %v5858 = vadd.f32 %v5769, %v5857
  %5859 = vmatmul.bf16.gmra.mxu0 %v5132
  %v5860 = vpop.f32.mrf.mxu0
  %v5861 = vadd.f32 %v5772, %v5860
  %v5862 = vpop.f32.mrf.mxu0
  %v5863 = vadd.f32 %v5774, %v5862
  %5864 = vmatmul.bf16.gmra.mxu0 %v5136
  %v5865 = vpop.f32.mrf.mxu0
  %v5866 = vadd.f32 %v5777, %v5865
  %v5867 = vpop.f32.mrf.mxu0
  %v5868 = vadd.f32 %v5779, %v5867
  %5869 = vmatmul.bf16.gmra.mxu0 %v5140
  %v5870 = vpop.f32.mrf.mxu0
  %v5871 = vadd.f32 %v5782, %v5870
  %v5872 = vpop.f32.mrf.mxu0
  %v5873 = vadd.f32 %v5784, %v5872
  %5874 = vmatmul.bf16.gmra.mxu0 %v5144
  %v5875 = vpop.f32.mrf.mxu0
  %v5876 = vadd.f32 %v5787, %v5875
  %v5877 = vpop.f32.mrf.mxu0
  %v5878 = vadd.f32 %v5789, %v5877
  %5879 = vmatmul.bf16.gmra.mxu0 %v5148
  %v5880 = vpop.f32.mrf.mxu0
  %v5881 = vadd.f32 %v5792, %v5880
  %v5882 = vpop.f32.mrf.mxu0
  %v5883 = vadd.f32 %v5794, %v5882
  %5884 = vmatmul.bf16.gmra.mxu0 %v5152
  %v5885 = vpop.f32.mrf.mxu0
  %v5886 = vadd.f32 %v5797, %v5885
  %v5887 = vpop.f32.mrf.mxu0
  %v5888 = vadd.f32 %v5799, %v5887
  %5889 = vmatmul.bf16.gmra.mxu0 %v5156
  %v5890 = vpop.f32.mrf.mxu0
  %v5891 = vadd.f32 %v5802, %v5890
  %v5892 = vpop.f32.mrf.mxu0
  %v5893 = vadd.f32 %v5804, %v5892
  %5894 = vmatmul.bf16.gmra.mxu0 %v5160
  %v5895 = vpop.f32.mrf.mxu0
  %v5896 = vadd.f32 %v5807, %v5895
  %v5897 = vpop.f32.mrf.mxu0
  %v5898 = vadd.f32 %v5809, %v5897
  %5899 = vmatmul.bf16.gmra.mxu0 %v5164
  %v5900 = vpop.f32.mrf.mxu0
  %v5901 = vadd.f32 %v5812, %v5900
  %v5902 = vpop.f32.mrf.mxu0
  %v5903 = vadd.f32 %v5814, %v5902
  %5904 = vdwg.mxu0
  %5905 = vmatpush.bf16.msra.mxu0 %v5436
  %5906 = vmatpush.bf16.msra.mxu0 %v5434
  %5907 = vmatpush.bf16.msra.mxu0 %v5432
  %5908 = vmatpush.bf16.msra.mxu0 %v5430
  %5909 = vmatpush.bf16.msra.mxu0 %v5428
  %5910 = vmatpush.bf16.msra.mxu0 %v5426
  %5911 = vmatpush.bf16.msra.mxu0 %v5424
  %5912 = vmatpush.bf16.msra.mxu0 %v5422
  %5913 = vmatmul.bf16.gmra.mxu0 %v5101
  %v5914 = vpop.f32.mrf.mxu0
  %v5915 = vadd.f32 0.0, %v5914
  %v5916 = vpop.f32.mrf.mxu0
  %v5917 = vadd.f32 0.0, %v5916
  %5918 = vmatmul.bf16.gmra.mxu0 %v5105
  %v5919 = vpop.f32.mrf.mxu0
  %v5920 = vadd.f32 0.0, %v5919
  %v5921 = vpop.f32.mrf.mxu0
  %v5922 = vadd.f32 0.0, %v5921
  %5923 = vmatmul.bf16.gmra.mxu0 %v5109
  %v5924 = vpop.f32.mrf.mxu0
  %v5925 = vadd.f32 0.0, %v5924
  %v5926 = vpop.f32.mrf.mxu0
  %v5927 = vadd.f32 0.0, %v5926
  %5928 = vmatmul.bf16.gmra.mxu0 %v5113
  %v5929 = vpop.f32.mrf.mxu0
  %v5930 = vadd.f32 0.0, %v5929
  %v5931 = vpop.f32.mrf.mxu0
  %v5932 = vadd.f32 0.0, %v5931
  %5933 = vmatmul.bf16.gmra.mxu0 %v5117
  %v5934 = vpop.f32.mrf.mxu0
  %v5935 = vadd.f32 0.0, %v5934
  %v5936 = vpop.f32.mrf.mxu0
  %v5937 = vadd.f32 0.0, %v5936
  %5938 = vmatmul.bf16.gmra.mxu0 %v5121
  %v5939 = vpop.f32.mrf.mxu0
  %v5940 = vadd.f32 0.0, %v5939
  %v5941 = vpop.f32.mrf.mxu0
  %v5942 = vadd.f32 0.0, %v5941
  %5943 = vmatmul.bf16.gmra.mxu0 %v5125
  %v5944 = vpop.f32.mrf.mxu0
  %v5945 = vadd.f32 0.0, %v5944
  %v5946 = vpop.f32.mrf.mxu0
  %v5947 = vadd.f32 0.0, %v5946
  %5948 = vmatmul.bf16.gmra.mxu0 %v5129
  %v5949 = vpop.f32.mrf.mxu0
  %v5950 = vadd.f32 0.0, %v5949
  %v5951 = vpop.f32.mrf.mxu0
  %v5952 = vadd.f32 0.0, %v5951
  %5953 = vmatmul.bf16.gmra.mxu0 %v5133
  %v5954 = vpop.f32.mrf.mxu0
  %v5955 = vadd.f32 0.0, %v5954
  %v5956 = vpop.f32.mrf.mxu0
  %v5957 = vadd.f32 0.0, %v5956
  %5958 = vmatmul.bf16.gmra.mxu0 %v5137
  %v5959 = vpop.f32.mrf.mxu0
  %v5960 = vadd.f32 0.0, %v5959
  %v5961 = vpop.f32.mrf.mxu0
  %v5962 = vadd.f32 0.0, %v5961
  %5963 = vmatmul.bf16.gmra.mxu0 %v5141
  %v5964 = vpop.f32.mrf.mxu0
  %v5965 = vadd.f32 0.0, %v5964
  %v5966 = vpop.f32.mrf.mxu0
  %v5967 = vadd.f32 0.0, %v5966
  %5968 = vmatmul.bf16.gmra.mxu0 %v5145
  %v5969 = vpop.f32.mrf.mxu0
  %v5970 = vadd.f32 0.0, %v5969
  %v5971 = vpop.f32.mrf.mxu0
  %v5972 = vadd.f32 0.0, %v5971
  %5973 = vmatmul.bf16.gmra.mxu0 %v5149
  %v5974 = vpop.f32.mrf.mxu0
  %v5975 = vadd.f32 0.0, %v5974
  %v5976 = vpop.f32.mrf.mxu0
  %v5977 = vadd.f32 0.0, %v5976
  %5978 = vmatmul.bf16.gmra.mxu0 %v5153
  %v5979 = vpop.f32.mrf.mxu0
  %v5980 = vadd.f32 0.0, %v5979
  %v5981 = vpop.f32.mrf.mxu0
  %v5982 = vadd.f32 0.0, %v5981
  %5983 = vmatmul.bf16.gmra.mxu0 %v5157
  %v5984 = vpop.f32.mrf.mxu0
  %v5985 = vadd.f32 0.0, %v5984
  %v5986 = vpop.f32.mrf.mxu0
  %v5987 = vadd.f32 0.0, %v5986
  %5988 = vmatmul.bf16.gmra.mxu0 %v5161
  %v5989 = vpop.f32.mrf.mxu0
  %v5990 = vadd.f32 0.0, %v5989
  %v5991 = vpop.f32.mrf.mxu0
  %v5992 = vadd.f32 0.0, %v5991
  %5993 = vdwg.mxu0
  %5994 = vmatpush.bf16.msra.mxu0 %v5452
  %5995 = vmatpush.bf16.msra.mxu0 %v5450
  %5996 = vmatpush.bf16.msra.mxu0 %v5448
  %5997 = vmatpush.bf16.msra.mxu0 %v5446
  %5998 = vmatpush.bf16.msra.mxu0 %v5444
  %5999 = vmatpush.bf16.msra.mxu0 %v5442
  %6000 = vmatpush.bf16.msra.mxu0 %v5440
  %6001 = vmatpush.bf16.msra.mxu0 %v5438
  %6002 = vmatmul.bf16.gmra.mxu0 %v5102
  %v6003 = vpop.f32.mrf.mxu0
  %v6004 = vadd.f32 %v5915, %v6003
  %v6005 = vpop.f32.mrf.mxu0
  %v6006 = vadd.f32 %v5917, %v6005
  %6007 = vmatmul.bf16.gmra.mxu0 %v5106
  %v6008 = vpop.f32.mrf.mxu0
  %v6009 = vadd.f32 %v5920, %v6008
  %v6010 = vpop.f32.mrf.mxu0
  %v6011 = vadd.f32 %v5922, %v6010
  %6012 = vmatmul.bf16.gmra.mxu0 %v5110
  %v6013 = vpop.f32.mrf.mxu0
  %v6014 = vadd.f32 %v5925, %v6013
  %v6015 = vpop.f32.mrf.mxu0
  %v6016 = vadd.f32 %v5927, %v6015
  %6017 = vmatmul.bf16.gmra.mxu0 %v5114
  %v6018 = vpop.f32.mrf.mxu0
  %v6019 = vadd.f32 %v5930, %v6018
  %v6020 = vpop.f32.mrf.mxu0
  %v6021 = vadd.f32 %v5932, %v6020
  %6022 = vmatmul.bf16.gmra.mxu0 %v5118
  %v6023 = vpop.f32.mrf.mxu0
  %v6024 = vadd.f32 %v5935, %v6023
  %v6025 = vpop.f32.mrf.mxu0
  %v6026 = vadd.f32 %v5937, %v6025
  %6027 = vmatmul.bf16.gmra.mxu0 %v5122
  %v6028 = vpop.f32.mrf.mxu0
  %v6029 = vadd.f32 %v5940, %v6028
  %v6030 = vpop.f32.mrf.mxu0
  %v6031 = vadd.f32 %v5942, %v6030
  %6032 = vmatmul.bf16.gmra.mxu0 %v5126
  %v6033 = vpop.f32.mrf.mxu0
  %v6034 = vadd.f32 %v5945, %v6033
  %v6035 = vpop.f32.mrf.mxu0
  %v6036 = vadd.f32 %v5947, %v6035
  %6037 = vmatmul.bf16.gmra.mxu0 %v5130
  %v6038 = vpop.f32.mrf.mxu0
  %v6039 = vadd.f32 %v5950, %v6038
  %v6040 = vpop.f32.mrf.mxu0
  %v6041 = vadd.f32 %v5952, %v6040
  %6042 = vmatmul.bf16.gmra.mxu0 %v5134
  %v6043 = vpop.f32.mrf.mxu0
  %v6044 = vadd.f32 %v5955, %v6043
  %v6045 = vpop.f32.mrf.mxu0
  %v6046 = vadd.f32 %v5957, %v6045
  %6047 = vmatmul.bf16.gmra.mxu0 %v5138
  %v6048 = vpop.f32.mrf.mxu0
  %v6049 = vadd.f32 %v5960, %v6048
  %v6050 = vpop.f32.mrf.mxu0
  %v6051 = vadd.f32 %v5962, %v6050
  %6052 = vmatmul.bf16.gmra.mxu0 %v5142
  %v6053 = vpop.f32.mrf.mxu0
  %v6054 = vadd.f32 %v5965, %v6053
  %v6055 = vpop.f32.mrf.mxu0
  %v6056 = vadd.f32 %v5967, %v6055
  %6057 = vmatmul.bf16.gmra.mxu0 %v5146
  %v6058 = vpop.f32.mrf.mxu0
  %v6059 = vadd.f32 %v5970, %v6058
  %v6060 = vpop.f32.mrf.mxu0
  %v6061 = vadd.f32 %v5972, %v6060
  %6062 = vmatmul.bf16.gmra.mxu0 %v5150
  %v6063 = vpop.f32.mrf.mxu0
  %v6064 = vadd.f32 %v5975, %v6063
  %v6065 = vpop.f32.mrf.mxu0
  %v6066 = vadd.f32 %v5977, %v6065
  %6067 = vmatmul.bf16.gmra.mxu0 %v5154
  %v6068 = vpop.f32.mrf.mxu0
  %v6069 = vadd.f32 %v5980, %v6068
  %v6070 = vpop.f32.mrf.mxu0
  %v6071 = vadd.f32 %v5982, %v6070
  %6072 = vmatmul.bf16.gmra.mxu0 %v5158
  %v6073 = vpop.f32.mrf.mxu0
  %v6074 = vadd.f32 %v5985, %v6073
  %v6075 = vpop.f32.mrf.mxu0
  %v6076 = vadd.f32 %v5987, %v6075
  %6077 = vmatmul.bf16.gmra.mxu0 %v5162
  %v6078 = vpop.f32.mrf.mxu0
  %v6079 = vadd.f32 %v5990, %v6078
  %v6080 = vpop.f32.mrf.mxu0
  %v6081 = vadd.f32 %v5992, %v6080
  %6082 = vdwg.mxu0
  %6083 = vmatpush.bf16.msra.mxu0 %v5468
  %6084 = vmatpush.bf16.msra.mxu0 %v5466
  %6085 = vmatpush.bf16.msra.mxu0 %v5464
  %6086 = vmatpush.bf16.msra.mxu0 %v5462
  %6087 = vmatpush.bf16.msra.mxu0 %v5460
  %6088 = vmatpush.bf16.msra.mxu0 %v5458
  %6089 = vmatpush.bf16.msra.mxu0 %v5456
  %6090 = vmatpush.bf16.msra.mxu0 %v5454
  %6091 = vmatmul.bf16.gmra.mxu0 %v5103
  %v6092 = vpop.f32.mrf.mxu0
  %v6093 = vadd.f32 %v6004, %v6092
  %v6094 = vpop.f32.mrf.mxu0
  %v6095 = vadd.f32 %v6006, %v6094
  %6096 = vmatmul.bf16.gmra.mxu0 %v5107
  %v6097 = vpop.f32.mrf.mxu0
  %v6098 = vadd.f32 %v6009, %v6097
  %v6099 = vpop.f32.mrf.mxu0
  %v6100 = vadd.f32 %v6011, %v6099
  %6101 = vmatmul.bf16.gmra.mxu0 %v5111
  %v6102 = vpop.f32.mrf.mxu0
  %v6103 = vadd.f32 %v6014, %v6102
  %v6104 = vpop.f32.mrf.mxu0
  %v6105 = vadd.f32 %v6016, %v6104
  %6106 = vmatmul.bf16.gmra.mxu0 %v5115
  %v6107 = vpop.f32.mrf.mxu0
  %v6108 = vadd.f32 %v6019, %v6107
  %v6109 = vpop.f32.mrf.mxu0
  %v6110 = vadd.f32 %v6021, %v6109
  %6111 = vmatmul.bf16.gmra.mxu0 %v5119
  %v6112 = vpop.f32.mrf.mxu0
  %v6113 = vadd.f32 %v6024, %v6112
  %v6114 = vpop.f32.mrf.mxu0
  %v6115 = vadd.f32 %v6026, %v6114
  %6116 = vmatmul.bf16.gmra.mxu0 %v5123
  %v6117 = vpop.f32.mrf.mxu0
  %v6118 = vadd.f32 %v6029, %v6117
  %v6119 = vpop.f32.mrf.mxu0
  %v6120 = vadd.f32 %v6031, %v6119
  %6121 = vmatmul.bf16.gmra.mxu0 %v5127
  %v6122 = vpop.f32.mrf.mxu0
  %v6123 = vadd.f32 %v6034, %v6122
  %v6124 = vpop.f32.mrf.mxu0
  %v6125 = vadd.f32 %v6036, %v6124
  %6126 = vmatmul.bf16.gmra.mxu0 %v5131
  %v6127 = vpop.f32.mrf.mxu0
  %v6128 = vadd.f32 %v6039, %v6127
  %v6129 = vpop.f32.mrf.mxu0
  %v6130 = vadd.f32 %v6041, %v6129
  %6131 = vmatmul.bf16.gmra.mxu0 %v5135
  %v6132 = vpop.f32.mrf.mxu0
  %v6133 = vadd.f32 %v6044, %v6132
  %v6134 = vpop.f32.mrf.mxu0
  %v6135 = vadd.f32 %v6046, %v6134
  %6136 = vmatmul.bf16.gmra.mxu0 %v5139
  %v6137 = vpop.f32.mrf.mxu0
  %v6138 = vadd.f32 %v6049, %v6137
  %v6139 = vpop.f32.mrf.mxu0
  %v6140 = vadd.f32 %v6051, %v6139
  %6141 = vmatmul.bf16.gmra.mxu0 %v5143
  %v6142 = vpop.f32.mrf.mxu0
  %v6143 = vadd.f32 %v6054, %v6142
  %v6144 = vpop.f32.mrf.mxu0
  %v6145 = vadd.f32 %v6056, %v6144
  %6146 = vmatmul.bf16.gmra.mxu0 %v5147
  %v6147 = vpop.f32.mrf.mxu0
  %v6148 = vadd.f32 %v6059, %v6147
  %v6149 = vpop.f32.mrf.mxu0
  %v6150 = vadd.f32 %v6061, %v6149
  %6151 = vmatmul.bf16.gmra.mxu0 %v5151
  %v6152 = vpop.f32.mrf.mxu0
  %v6153 = vadd.f32 %v6064, %v6152
  %v6154 = vpop.f32.mrf.mxu0
  %v6155 = vadd.f32 %v6066, %v6154
  %6156 = vmatmul.bf16.gmra.mxu0 %v5155
  %v6157 = vpop.f32.mrf.mxu0
  %v6158 = vadd.f32 %v6069, %v6157
  %v6159 = vpop.f32.mrf.mxu0
  %v6160 = vadd.f32 %v6071, %v6159
  %6161 = vmatmul.bf16.gmra.mxu0 %v5159
  %v6162 = vpop.f32.mrf.mxu0
  %v6163 = vadd.f32 %v6074, %v6162
  %v6164 = vpop.f32.mrf.mxu0
  %v6165 = vadd.f32 %v6076, %v6164
  %6166 = vmatmul.bf16.gmra.mxu0 %v5163
  %v6167 = vpop.f32.mrf.mxu0
  %v6168 = vadd.f32 %v6079, %v6167
  %v6169 = vpop.f32.mrf.mxu0
  %v6170 = vadd.f32 %v6081, %v6169
  %6171 = vdwg.mxu0
  %6172 = vmatpush.bf16.msra.mxu0 %v5484
  %6173 = vmatpush.bf16.msra.mxu0 %v5482
  %6174 = vmatpush.bf16.msra.mxu0 %v5480
  %6175 = vmatpush.bf16.msra.mxu0 %v5478
  %6176 = vmatpush.bf16.msra.mxu0 %v5476
  %6177 = vmatpush.bf16.msra.mxu0 %v5474
  %6178 = vmatpush.bf16.msra.mxu0 %v5472
  %6179 = vmatpush.bf16.msra.mxu0 %v5470
  %6180 = vmatmul.bf16.gmra.mxu0 %v5104
  %v6181 = vpop.f32.mrf.mxu0
  %v6182 = vadd.f32 %v6093, %v6181
  %v6183 = vpop.f32.mrf.mxu0
  %v6184 = vadd.f32 %v6095, %v6183
  %6185 = vmatmul.bf16.gmra.mxu0 %v5108
  %v6186 = vpop.f32.mrf.mxu0
  %v6187 = vadd.f32 %v6098, %v6186
  %v6188 = vpop.f32.mrf.mxu0
  %v6189 = vadd.f32 %v6100, %v6188
  %6190 = vmatmul.bf16.gmra.mxu0 %v5112
  %v6191 = vpop.f32.mrf.mxu0
  %v6192 = vadd.f32 %v6103, %v6191
  %v6193 = vpop.f32.mrf.mxu0
  %v6194 = vadd.f32 %v6105, %v6193
  %6195 = vmatmul.bf16.gmra.mxu0 %v5116
  %v6196 = vpop.f32.mrf.mxu0
  %v6197 = vadd.f32 %v6108, %v6196
  %v6198 = vpop.f32.mrf.mxu0
  %v6199 = vadd.f32 %v6110, %v6198
  %6200 = vmatmul.bf16.gmra.mxu0 %v5120
  %v6201 = vpop.f32.mrf.mxu0
  %v6202 = vadd.f32 %v6113, %v6201
  %v6203 = vpop.f32.mrf.mxu0
  %v6204 = vadd.f32 %v6115, %v6203
  %6205 = vmatmul.bf16.gmra.mxu0 %v5124
  %v6206 = vpop.f32.mrf.mxu0
  %v6207 = vadd.f32 %v6118, %v6206
  %v6208 = vpop.f32.mrf.mxu0
  %v6209 = vadd.f32 %v6120, %v6208
  %6210 = vmatmul.bf16.gmra.mxu0 %v5128
  %v6211 = vpop.f32.mrf.mxu0
  %v6212 = vadd.f32 %v6123, %v6211
  %v6213 = vpop.f32.mrf.mxu0
  %v6214 = vadd.f32 %v6125, %v6213
  %6215 = vmatmul.bf16.gmra.mxu0 %v5132
  %v6216 = vpop.f32.mrf.mxu0
  %v6217 = vadd.f32 %v6128, %v6216
  %v6218 = vpop.f32.mrf.mxu0
  %v6219 = vadd.f32 %v6130, %v6218
  %6220 = vmatmul.bf16.gmra.mxu0 %v5136
  %v6221 = vpop.f32.mrf.mxu0
  %v6222 = vadd.f32 %v6133, %v6221
  %v6223 = vpop.f32.mrf.mxu0
  %v6224 = vadd.f32 %v6135, %v6223
  %6225 = vmatmul.bf16.gmra.mxu0 %v5140
  %v6226 = vpop.f32.mrf.mxu0
  %v6227 = vadd.f32 %v6138, %v6226
  %v6228 = vpop.f32.mrf.mxu0
  %v6229 = vadd.f32 %v6140, %v6228
  %6230 = vmatmul.bf16.gmra.mxu0 %v5144
  %v6231 = vpop.f32.mrf.mxu0
  %v6232 = vadd.f32 %v6143, %v6231
  %v6233 = vpop.f32.mrf.mxu0
  %v6234 = vadd.f32 %v6145, %v6233
  %6235 = vmatmul.bf16.gmra.mxu0 %v5148
  %v6236 = vpop.f32.mrf.mxu0
  %v6237 = vadd.f32 %v6148, %v6236
  %v6238 = vpop.f32.mrf.mxu0
  %v6239 = vadd.f32 %v6150, %v6238
  %6240 = vmatmul.bf16.gmra.mxu0 %v5152
  %v6241 = vpop.f32.mrf.mxu0
  %v6242 = vadd.f32 %v6153, %v6241
  %v6243 = vpop.f32.mrf.mxu0
  %v6244 = vadd.f32 %v6155, %v6243
  %6245 = vmatmul.bf16.gmra.mxu0 %v5156
  %v6246 = vpop.f32.mrf.mxu0
  %v6247 = vadd.f32 %v6158, %v6246
  %v6248 = vpop.f32.mrf.mxu0
  %v6249 = vadd.f32 %v6160, %v6248
  %6250 = vmatmul.bf16.gmra.mxu0 %v5160
  %v6251 = vpop.f32.mrf.mxu0
  %v6252 = vadd.f32 %v6163, %v6251
  %v6253 = vpop.f32.mrf.mxu0
  %v6254 = vadd.f32 %v6165, %v6253
  %6255 = vmatmul.bf16.gmra.mxu0 %v5164
  %v6256 = vpop.f32.mrf.mxu0
  %v6257 = vadd.f32 %v6168, %v6256
  %v6258 = vpop.f32.mrf.mxu0
  %v6259 = vadd.f32 %v6170, %v6258
  %6260 = vdwg.mxu0
  %v6261 = vpack.c.bf16 %v6182, %v5826
  %v6262 = vpack.c.bf16 %v6184, %v5828
  %v6263 = vpack.c.bf16 %v6187, %v5831
  %v6264 = vpack.c.bf16 %v6189, %v5833
  %v6265 = vpack.c.bf16 %v6192, %v5836
  %v6266 = vpack.c.bf16 %v6194, %v5838
  %v6267 = vpack.c.bf16 %v6197, %v5841
  %v6268 = vpack.c.bf16 %v6199, %v5843
  %v6269 = vpack.c.bf16 %v6202, %v5846
  %v6270 = vpack.c.bf16 %v6204, %v5848
  %v6271 = vpack.c.bf16 %v6207, %v5851
  %v6272 = vpack.c.bf16 %v6209, %v5853
  %v6273 = vpack.c.bf16 %v6212, %v5856
  %v6274 = vpack.c.bf16 %v6214, %v5858
  %v6275 = vpack.c.bf16 %v6217, %v5861
  %v6276 = vpack.c.bf16 %v6219, %v5863
  %v6277 = vpack.c.bf16 %v6222, %v5866
  %v6278 = vpack.c.bf16 %v6224, %v5868
  %v6279 = vpack.c.bf16 %v6227, %v5871
  %v6280 = vpack.c.bf16 %v6229, %v5873
  %v6281 = vpack.c.bf16 %v6232, %v5876
  %v6282 = vpack.c.bf16 %v6234, %v5878
  %v6283 = vpack.c.bf16 %v6237, %v5881
  %v6284 = vpack.c.bf16 %v6239, %v5883
  %v6285 = vpack.c.bf16 %v6242, %v5886
  %v6286 = vpack.c.bf16 %v6244, %v5888
  %v6287 = vpack.c.bf16 %v6247, %v5891
  %v6288 = vpack.c.bf16 %v6249, %v5893
  %v6289 = vpack.c.bf16 %v6252, %v5896
  %v6290 = vpack.c.bf16 %v6254, %v5898
  %v6291 = vpack.c.bf16 %v6257, %v5901
  %v6292 = vpack.c.bf16 %v6259, %v5903
  %v6293 = vld [vmem:[%s4] sm:$0x3]
  %6295 = vst [vmem:[#allocation1] ss:$9 sm:$0xff] %v6293
  %v6296 = vld [vmem:[#allocation1] sm:$0xff]
  %v6297 = vld [vmem:[#allocation1 + $0x9] sm:$0xff]
  %v6298 = vpack.i.b16 %v6296, %v6296
  %v6300 = vperm.slane %v6298, 0
  %v6301 = vpack.i.b16 %v6297, %v6297
  %v6303 = vperm.slane %v6301, 0
  %v6304 = vunpack.c.l.bf16 %v6261
  %v6305 = vunpack.c.h.bf16 %v6261
  %v6306 = vunpack.c.l.bf16 %v6262
  %v6307 = vunpack.c.h.bf16 %v6262
  %v6308 = vunpack.c.l.bf16 %v6263
  %v6309 = vunpack.c.h.bf16 %v6263
  %v6310 = vunpack.c.l.bf16 %v6264
  %v6311 = vunpack.c.h.bf16 %v6264
  %v6312 = vunpack.c.l.bf16 %v6265
  %v6313 = vunpack.c.h.bf16 %v6265
  %v6314 = vunpack.c.l.bf16 %v6266
  %v6315 = vunpack.c.h.bf16 %v6266
  %v6316 = vunpack.c.l.bf16 %v6267
  %v6317 = vunpack.c.h.bf16 %v6267
  %v6318 = vunpack.c.l.bf16 %v6268
  %v6319 = vunpack.c.h.bf16 %v6268
  %v6320 = vunpack.c.l.bf16 %v6269
  %v6321 = vunpack.c.h.bf16 %v6269
  %v6322 = vunpack.c.l.bf16 %v6270
  %v6323 = vunpack.c.h.bf16 %v6270
  %v6324 = vunpack.c.l.bf16 %v6271
  %v6325 = vunpack.c.h.bf16 %v6271
  %v6326 = vunpack.c.l.bf16 %v6272
  %v6327 = vunpack.c.h.bf16 %v6272
  %v6328 = vunpack.c.l.bf16 %v6273
  %v6329 = vunpack.c.h.bf16 %v6273
  %v6330 = vunpack.c.l.bf16 %v6274
  %v6331 = vunpack.c.h.bf16 %v6274
  %v6332 = vunpack.c.l.bf16 %v6275
  %v6333 = vunpack.c.h.bf16 %v6275
  %v6334 = vunpack.c.l.bf16 %v6276
  %v6335 = vunpack.c.h.bf16 %v6276
  %v6336 = vunpack.c.l.bf16 %v6277
  %v6337 = vunpack.c.h.bf16 %v6277
  %v6338 = vunpack.c.l.bf16 %v6278
  %v6339 = vunpack.c.h.bf16 %v6278
  %v6340 = vunpack.c.l.bf16 %v6279
  %v6341 = vunpack.c.h.bf16 %v6279
  %v6342 = vunpack.c.l.bf16 %v6280
  %v6343 = vunpack.c.h.bf16 %v6280
  %v6344 = vunpack.c.l.bf16 %v6281
  %v6345 = vunpack.c.h.bf16 %v6281
  %v6346 = vunpack.c.l.bf16 %v6282
  %v6347 = vunpack.c.h.bf16 %v6282
  %v6348 = vunpack.c.l.bf16 %v6283
  %v6349 = vunpack.c.h.bf16 %v6283
  %v6350 = vunpack.c.l.bf16 %v6284
  %v6351 = vunpack.c.h.bf16 %v6284
  %v6352 = vunpack.c.l.bf16 %v6285
  %v6353 = vunpack.c.h.bf16 %v6285
  %v6354 = vunpack.c.l.bf16 %v6286
  %v6355 = vunpack.c.h.bf16 %v6286
  %v6356 = vunpack.c.l.bf16 %v6287
  %v6357 = vunpack.c.h.bf16 %v6287
  %v6358 = vunpack.c.l.bf16 %v6288
  %v6359 = vunpack.c.h.bf16 %v6288
  %v6360 = vunpack.c.l.bf16 %v6289
  %v6361 = vunpack.c.h.bf16 %v6289
  %v6362 = vunpack.c.l.bf16 %v6290
  %v6363 = vunpack.c.h.bf16 %v6290
  %v6364 = vunpack.c.l.bf16 %v6291
  %v6365 = vunpack.c.h.bf16 %v6291
  %v6366 = vunpack.c.l.bf16 %v6292
  %v6367 = vunpack.c.h.bf16 %v6292
  %v6368 = vunpack.c.l.bf16 %v6300
  %v6369 = vunpack.c.l.bf16 %v6303
  %v6370 = vadd.f32 %v6304, %v6368
  %v6371 = vadd.f32 %v6305, %v6369
  %v6372 = vadd.f32 %v6306, %v6368
  %v6373 = vadd.f32 %v6307, %v6369
  %v6374 = vadd.f32 %v6308, %v6368
  %v6375 = vadd.f32 %v6309, %v6369
  %v6376 = vadd.f32 %v6310, %v6368
  %v6377 = vadd.f32 %v6311, %v6369
  %v6378 = vadd.f32 %v6312, %v6368
  %v6379 = vadd.f32 %v6313, %v6369
  %v6380 = vadd.f32 %v6314, %v6368
  %v6381 = vadd.f32 %v6315, %v6369
  %v6382 = vadd.f32 %v6316, %v6368
  %v6383 = vadd.f32 %v6317, %v6369
  %v6384 = vadd.f32 %v6318, %v6368
  %v6385 = vadd.f32 %v6319, %v6369
  %v6386 = vadd.f32 %v6320, %v6368
  %v6387 = vadd.f32 %v6321, %v6369
  %v6388 = vadd.f32 %v6322, %v6368
  %v6389 = vadd.f32 %v6323, %v6369
  %v6390 = vadd.f32 %v6324, %v6368
  %v6391 = vadd.f32 %v6325, %v6369
  %v6392 = vadd.f32 %v6326, %v6368
  %v6393 = vadd.f32 %v6327, %v6369
  %v6394 = vadd.f32 %v6328, %v6368
  %v6395 = vadd.f32 %v6329, %v6369
  %v6396 = vadd.f32 %v6330, %v6368
  %v6397 = vadd.f32 %v6331, %v6369
  %v6398 = vadd.f32 %v6332, %v6368
  %v6399 = vadd.f32 %v6333, %v6369
  %v6400 = vadd.f32 %v6334, %v6368
  %v6401 = vadd.f32 %v6335, %v6369
  %v6402 = vadd.f32 %v6336, %v6368
  %v6403 = vadd.f32 %v6337, %v6369
  %v6404 = vadd.f32 %v6338, %v6368
  %v6405 = vadd.f32 %v6339, %v6369
  %v6406 = vadd.f32 %v6340, %v6368
  %v6407 = vadd.f32 %v6341, %v6369
  %v6408 = vadd.f32 %v6342, %v6368
  %v6409 = vadd.f32 %v6343, %v6369
  %v6410 = vadd.f32 %v6344, %v6368
  %v6411 = vadd.f32 %v6345, %v6369
  %v6412 = vadd.f32 %v6346, %v6368
  %v6413 = vadd.f32 %v6347, %v6369
  %v6414 = vadd.f32 %v6348, %v6368
  %v6415 = vadd.f32 %v6349, %v6369
  %v6416 = vadd.f32 %v6350, %v6368
  %v6417 = vadd.f32 %v6351, %v6369
  %v6418 = vadd.f32 %v6352, %v6368
  %v6419 = vadd.f32 %v6353, %v6369
  %v6420 = vadd.f32 %v6354, %v6368
  %v6421 = vadd.f32 %v6355, %v6369
  %v6422 = vadd.f32 %v6356, %v6368
  %v6423 = vadd.f32 %v6357, %v6369
  %v6424 = vadd.f32 %v6358, %v6368
  %v6425 = vadd.f32 %v6359, %v6369
  %v6426 = vadd.f32 %v6360, %v6368
  %v6427 = vadd.f32 %v6361, %v6369
  %v6428 = vadd.f32 %v6362, %v6368
  %v6429 = vadd.f32 %v6363, %v6369
  %v6430 = vadd.f32 %v6364, %v6368
  %v6431 = vadd.f32 %v6365, %v6369
  %v6432 = vadd.f32 %v6366, %v6368
  %v6433 = vadd.f32 %v6367, %v6369
  %v6434 = vpack.c.bf16 %v6371, %v6370
  %v6435 = vpack.c.bf16 %v6373, %v6372
  %v6436 = vpack.c.bf16 %v6375, %v6374
  %v6437 = vpack.c.bf16 %v6377, %v6376
  %v6438 = vpack.c.bf16 %v6379, %v6378
  %v6439 = vpack.c.bf16 %v6381, %v6380
  %v6440 = vpack.c.bf16 %v6383, %v6382
  %v6441 = vpack.c.bf16 %v6385, %v6384
  %v6442 = vpack.c.bf16 %v6387, %v6386
  %v6443 = vpack.c.bf16 %v6389, %v6388
  %v6444 = vpack.c.bf16 %v6391, %v6390
  %v6445 = vpack.c.bf16 %v6393, %v6392
  %v6446 = vpack.c.bf16 %v6395, %v6394
  %v6447 = vpack.c.bf16 %v6397, %v6396
  %v6448 = vpack.c.bf16 %v6399, %v6398
  %v6449 = vpack.c.bf16 %v6401, %v6400
  %v6450 = vpack.c.bf16 %v6403, %v6402
  %v6451 = vpack.c.bf16 %v6405, %v6404
  %v6452 = vpack.c.bf16 %v6407, %v6406
  %v6453 = vpack.c.bf16 %v6409, %v6408
  %v6454 = vpack.c.bf16 %v6411, %v6410
  %v6455 = vpack.c.bf16 %v6413, %v6412
  %v6456 = vpack.c.bf16 %v6415, %v6414
  %v6457 = vpack.c.bf16 %v6417, %v6416
  %v6458 = vpack.c.bf16 %v6419, %v6418
  %v6459 = vpack.c.bf16 %v6421, %v6420
  %v6460 = vpack.c.bf16 %v6423, %v6422
  %v6461 = vpack.c.bf16 %v6425, %v6424
  %v6462 = vpack.c.bf16 %v6427, %v6426
  %v6463 = vpack.c.bf16 %v6429, %v6428
  %v6464 = vpack.c.bf16 %v6431, %v6430
  %v6465 = vpack.c.bf16 %v6433, %v6432
  %v6466 = vunpack.c.l.bf16 %v6434
  %v6467 = vunpack.c.h.bf16 %v6434
  %v6468 = vunpack.c.l.bf16 %v6435
  %v6469 = vunpack.c.h.bf16 %v6435
  %v6470 = vunpack.c.l.bf16 %v6436
  %v6471 = vunpack.c.h.bf16 %v6436
  %v6472 = vunpack.c.l.bf16 %v6437
  %v6473 = vunpack.c.h.bf16 %v6437
  %v6474 = vunpack.c.l.bf16 %v6438
  %v6475 = vunpack.c.h.bf16 %v6438
  %v6476 = vunpack.c.l.bf16 %v6439
  %v6477 = vunpack.c.h.bf16 %v6439
  %v6478 = vunpack.c.l.bf16 %v6440
  %v6479 = vunpack.c.h.bf16 %v6440
  %v6480 = vunpack.c.l.bf16 %v6441
  %v6481 = vunpack.c.h.bf16 %v6441
  %v6482 = vunpack.c.l.bf16 %v6442
  %v6483 = vunpack.c.h.bf16 %v6442
  %v6484 = vunpack.c.l.bf16 %v6443
  %v6485 = vunpack.c.h.bf16 %v6443
  %v6486 = vunpack.c.l.bf16 %v6444
  %v6487 = vunpack.c.h.bf16 %v6444
  %v6488 = vunpack.c.l.bf16 %v6445
  %v6489 = vunpack.c.h.bf16 %v6445
  %v6490 = vunpack.c.l.bf16 %v6446
  %v6491 = vunpack.c.h.bf16 %v6446
  %v6492 = vunpack.c.l.bf16 %v6447
  %v6493 = vunpack.c.h.bf16 %v6447
  %v6494 = vunpack.c.l.bf16 %v6448
  %v6495 = vunpack.c.h.bf16 %v6448
  %v6496 = vunpack.c.l.bf16 %v6449
  %v6497 = vunpack.c.h.bf16 %v6449
  %v6498 = vunpack.c.l.bf16 %v6450
  %v6499 = vunpack.c.h.bf16 %v6450
  %v6500 = vunpack.c.l.bf16 %v6451
  %v6501 = vunpack.c.h.bf16 %v6451
  %v6502 = vunpack.c.l.bf16 %v6452
  %v6503 = vunpack.c.h.bf16 %v6452
  %v6504 = vunpack.c.l.bf16 %v6453
  %v6505 = vunpack.c.h.bf16 %v6453
  %v6506 = vunpack.c.l.bf16 %v6454
  %v6507 = vunpack.c.h.bf16 %v6454
  %v6508 = vunpack.c.l.bf16 %v6455
  %v6509 = vunpack.c.h.bf16 %v6455
  %v6510 = vunpack.c.l.bf16 %v6456
  %v6511 = vunpack.c.h.bf16 %v6456
  %v6512 = vunpack.c.l.bf16 %v6457
  %v6513 = vunpack.c.h.bf16 %v6457
  %v6514 = vunpack.c.l.bf16 %v6458
  %v6515 = vunpack.c.h.bf16 %v6458
  %v6516 = vunpack.c.l.bf16 %v6459
  %v6517 = vunpack.c.h.bf16 %v6459
  %v6518 = vunpack.c.l.bf16 %v6460
  %v6519 = vunpack.c.h.bf16 %v6460
  %v6520 = vunpack.c.l.bf16 %v6461
  %v6521 = vunpack.c.h.bf16 %v6461
  %v6522 = vunpack.c.l.bf16 %v6462
  %v6523 = vunpack.c.h.bf16 %v6462
  %v6524 = vunpack.c.l.bf16 %v6463
  %v6525 = vunpack.c.h.bf16 %v6463
  %v6526 = vunpack.c.l.bf16 %v6464
  %v6527 = vunpack.c.h.bf16 %v6464
  %v6528 = vunpack.c.l.bf16 %v6465
  %v6529 = vunpack.c.h.bf16 %v6465
  %v6530 = vmax.f32 %v6466, 0.0
  %v6531 = vmax.f32 %v6467, 0.0
  %v6532 = vmax.f32 %v6468, 0.0
  %v6533 = vmax.f32 %v6469, 0.0
  %v6534 = vmax.f32 %v6470, 0.0
  %v6535 = vmax.f32 %v6471, 0.0
  %v6536 = vmax.f32 %v6472, 0.0
  %v6537 = vmax.f32 %v6473, 0.0
  %v6538 = vmax.f32 %v6474, 0.0
  %v6539 = vmax.f32 %v6475, 0.0
  %v6540 = vmax.f32 %v6476, 0.0
  %v6541 = vmax.f32 %v6477, 0.0
  %v6542 = vmax.f32 %v6478, 0.0
  %v6543 = vmax.f32 %v6479, 0.0
  %v6544 = vmax.f32 %v6480, 0.0
  %v6545 = vmax.f32 %v6481, 0.0
  %v6546 = vmax.f32 %v6482, 0.0
  %v6547 = vmax.f32 %v6483, 0.0
  %v6548 = vmax.f32 %v6484, 0.0
  %v6549 = vmax.f32 %v6485, 0.0
  %v6550 = vmax.f32 %v6486, 0.0
  %v6551 = vmax.f32 %v6487, 0.0
  %v6552 = vmax.f32 %v6488, 0.0
  %v6553 = vmax.f32 %v6489, 0.0
  %v6554 = vmax.f32 %v6490, 0.0
  %v6555 = vmax.f32 %v6491, 0.0
  %v6556 = vmax.f32 %v6492, 0.0
  %v6557 = vmax.f32 %v6493, 0.0
  %v6558 = vmax.f32 %v6494, 0.0
  %v6559 = vmax.f32 %v6495, 0.0
  %v6560 = vmax.f32 %v6496, 0.0
  %v6561 = vmax.f32 %v6497, 0.0
  %v6562 = vmax.f32 %v6498, 0.0
  %v6563 = vmax.f32 %v6499, 0.0
  %v6564 = vmax.f32 %v6500, 0.0
  %v6565 = vmax.f32 %v6501, 0.0
  %v6566 = vmax.f32 %v6502, 0.0
  %v6567 = vmax.f32 %v6503, 0.0
  %v6568 = vmax.f32 %v6504, 0.0
  %v6569 = vmax.f32 %v6505, 0.0
  %v6570 = vmax.f32 %v6506, 0.0
  %v6571 = vmax.f32 %v6507, 0.0
  %v6572 = vmax.f32 %v6508, 0.0
  %v6573 = vmax.f32 %v6509, 0.0
  %v6574 = vmax.f32 %v6510, 0.0
  %v6575 = vmax.f32 %v6511, 0.0
  %v6576 = vmax.f32 %v6512, 0.0
  %v6577 = vmax.f32 %v6513, 0.0
  %v6578 = vmax.f32 %v6514, 0.0
  %v6579 = vmax.f32 %v6515, 0.0
  %v6580 = vmax.f32 %v6516, 0.0
  %v6581 = vmax.f32 %v6517, 0.0
  %v6582 = vmax.f32 %v6518, 0.0
  %v6583 = vmax.f32 %v6519, 0.0
  %v6584 = vmax.f32 %v6520, 0.0
  %v6585 = vmax.f32 %v6521, 0.0
  %v6586 = vmax.f32 %v6522, 0.0
  %v6587 = vmax.f32 %v6523, 0.0
  %v6588 = vmax.f32 %v6524, 0.0
  %v6589 = vmax.f32 %v6525, 0.0
  %v6590 = vmax.f32 %v6526, 0.0
  %v6591 = vmax.f32 %v6527, 0.0
  %v6592 = vmax.f32 %v6528, 0.0
  %v6593 = vmax.f32 %v6529, 0.0
  %v6594 = vpack.c.bf16 %v6532, %v6530
  %v6595 = vpack.c.bf16 %v6533, %v6531
  %v6596 = vpack.c.bf16 %v6536, %v6534
  %v6597 = vpack.c.bf16 %v6537, %v6535
  %v6598 = vpack.c.bf16 %v6540, %v6538
  %v6599 = vpack.c.bf16 %v6541, %v6539
  %v6600 = vpack.c.bf16 %v6544, %v6542
  %v6601 = vpack.c.bf16 %v6545, %v6543
  %v6602 = vpack.c.bf16 %v6548, %v6546
  %v6603 = vpack.c.bf16 %v6549, %v6547
  %v6604 = vpack.c.bf16 %v6552, %v6550
  %v6605 = vpack.c.bf16 %v6553, %v6551
  %v6606 = vpack.c.bf16 %v6556, %v6554
  %v6607 = vpack.c.bf16 %v6557, %v6555
  %v6608 = vpack.c.bf16 %v6560, %v6558
  %v6609 = vpack.c.bf16 %v6561, %v6559
  %v6610 = vpack.c.bf16 %v6564, %v6562
  %v6611 = vpack.c.bf16 %v6565, %v6563
  %v6612 = vpack.c.bf16 %v6568, %v6566
  %v6613 = vpack.c.bf16 %v6569, %v6567
  %v6614 = vpack.c.bf16 %v6572, %v6570
  %v6615 = vpack.c.bf16 %v6573, %v6571
  %v6616 = vpack.c.bf16 %v6576, %v6574
  %v6617 = vpack.c.bf16 %v6577, %v6575
  %v6618 = vpack.c.bf16 %v6580, %v6578
  %v6619 = vpack.c.bf16 %v6581, %v6579
  %v6620 = vpack.c.bf16 %v6584, %v6582
  %v6621 = vpack.c.bf16 %v6585, %v6583
  %v6622 = vpack.c.bf16 %v6588, %v6586
  %v6623 = vpack.c.bf16 %v6589, %v6587
  %v6624 = vpack.c.bf16 %v6592, %v6590
  %v6625 = vpack.c.bf16 %v6593, %v6591
  %v6626 = vld [vmem:[%s5] sm:$0xf]
  %v6627 = vld [vmem:[%s5 + $0x4] sm:$0xf]
  %v6628 = vld [vmem:[%s5 + $0x8] sm:$0xf]
  %v6629 = vld [vmem:[%s5 + $0xc] sm:$0xf]
  %v6630 = vld [vmem:[%s5 + $0x10] sm:$0xf]
  %v6631 = vld [vmem:[%s5 + $0x14] sm:$0xf]
  %v6632 = vld [vmem:[%s5 + $0x18] sm:$0xf]
  %v6633 = vld [vmem:[%s5 + $0x1c] sm:$0xf]
  %v6634 = vld [vmem:[%s5 + $0x20] sm:$0xf]
  %v6635 = vld [vmem:[%s5 + $0x24] sm:$0xf]
  %v6636 = vld [vmem:[%s5 + $0x28] sm:$0xf]
  %v6637 = vld [vmem:[%s5 + $0x2c] sm:$0xf]
  %v6638 = vld [vmem:[%s5 + $0x30] sm:$0xf]
  %v6639 = vld [vmem:[%s5 + $0x34] sm:$0xf]
  %v6640 = vld [vmem:[%s5 + $0x38] sm:$0xf]
  %v6641 = vld [vmem:[%s5 + $0x3c] sm:$0xf]
  %v6642 = vld [vmem:[%s5 + $0x40] sm:$0xf]
  %v6643 = vld [vmem:[%s5 + $0x44] sm:$0xf]
  %v6644 = vld [vmem:[%s5 + $0x48] sm:$0xf]
  %v6645 = vld [vmem:[%s5 + $0x4c] sm:$0xf]
  %v6646 = vld [vmem:[%s5 + $0x50] sm:$0xf]
  %v6647 = vld [vmem:[%s5 + $0x54] sm:$0xf]
  %v6648 = vld [vmem:[%s5 + $0x58] sm:$0xf]
  %v6649 = vld [vmem:[%s5 + $0x5c] sm:$0xf]
  %v6650 = vld [vmem:[%s5 + $0x60] sm:$0xf]
  %v6651 = vld [vmem:[%s5 + $0x64] sm:$0xf]
  %v6652 = vld [vmem:[%s5 + $0x68] sm:$0xf]
  %v6653 = vld [vmem:[%s5 + $0x6c] sm:$0xf]
  %v6654 = vld [vmem:[%s5 + $0x70] sm:$0xf]
  %v6655 = vld [vmem:[%s5 + $0x74] sm:$0xf]
  %v6656 = vld [vmem:[%s5 + $0x78] sm:$0xf]
  %v6657 = vld [vmem:[%s5 + $0x7c] sm:$0xf]
  %v6690 = vunpack.c.l.b16 %v6626
  %v6691 = vunpack.c.l.b16 %v6627
  %v6692 = vunpack.c.l.b16 %v6628
  %v6693 = vunpack.c.l.b16 %v6629
  %v6694 = vunpack.c.l.b16 %v6630
  %v6695 = vunpack.c.l.b16 %v6631
  %v6696 = vunpack.c.l.b16 %v6632
  %v6697 = vunpack.c.l.b16 %v6633
  %v6698 = vunpack.c.l.b16 %v6634
  %v6699 = vunpack.c.l.b16 %v6635
  %v6700 = vunpack.c.l.b16 %v6636
  %v6701 = vunpack.c.l.b16 %v6637
  %v6702 = vunpack.c.l.b16 %v6638
  %v6703 = vunpack.c.l.b16 %v6639
  %v6704 = vunpack.c.l.b16 %v6640
  %v6705 = vunpack.c.l.b16 %v6641
  %v6706 = vunpack.c.l.b16 %v6642
  %v6707 = vunpack.c.l.b16 %v6643
  %v6708 = vunpack.c.l.b16 %v6644
  %v6709 = vunpack.c.l.b16 %v6645
  %v6710 = vunpack.c.l.b16 %v6646
  %v6711 = vunpack.c.l.b16 %v6647
  %v6712 = vunpack.c.l.b16 %v6648
  %v6713 = vunpack.c.l.b16 %v6649
  %v6714 = vunpack.c.l.b16 %v6650
  %v6715 = vunpack.c.l.b16 %v6651
  %v6716 = vunpack.c.l.b16 %v6652
  %v6717 = vunpack.c.l.b16 %v6653
  %v6718 = vunpack.c.l.b16 %v6654
  %v6719 = vunpack.c.l.b16 %v6655
  %v6720 = vunpack.c.l.b16 %v6656
  %v6721 = vunpack.c.l.b16 %v6657
  %v6722 = vpack.c.b16 %v6691, %v6690
  %v6723 = vpack.c.b16 %v6693, %v6692
  %v6724 = vpack.c.b16 %v6695, %v6694
  %v6725 = vpack.c.b16 %v6697, %v6696
  %v6726 = vpack.c.b16 %v6699, %v6698
  %v6727 = vpack.c.b16 %v6701, %v6700
  %v6728 = vpack.c.b16 %v6703, %v6702
  %v6729 = vpack.c.b16 %v6705, %v6704
  %v6730 = vpack.c.b16 %v6707, %v6706
  %v6731 = vpack.c.b16 %v6709, %v6708
  %v6732 = vpack.c.b16 %v6711, %v6710
  %v6733 = vpack.c.b16 %v6713, %v6712
  %v6734 = vpack.c.b16 %v6715, %v6714
  %v6735 = vpack.c.b16 %v6717, %v6716
  %v6736 = vpack.c.b16 %v6719, %v6718
  %v6737 = vpack.c.b16 %v6721, %v6720
  %6754 = vmatpush.bf16.msra.mxu0 %v6729
  %6755 = vmatpush.bf16.msra.mxu0 %v6728
  %6756 = vmatpush.bf16.msra.mxu0 %v6727
  %6757 = vmatpush.bf16.msra.mxu0 %v6726
  %6758 = vmatpush.bf16.msra.mxu0 %v6725
  %6759 = vmatpush.bf16.msra.mxu0 %v6724
  %6760 = vmatpush.bf16.msra.mxu0 %v6723
  %6761 = vmatpush.bf16.msra.mxu0 %v6722
  %6762 = vmatmul.bf16.gmra.mxu0 %v6594
  %v6763 = vpop.f32.mrf.mxu0
  %v6764 = vadd.f32 0.0, %v6763
  %v6765 = vpop.f32.mrf.mxu0
  %v6766 = vadd.f32 0.0, %v6765
  %6767 = vmatmul.bf16.gmra.mxu0 %v6596
  %v6768 = vpop.f32.mrf.mxu0
  %v6769 = vadd.f32 0.0, %v6768
  %v6770 = vpop.f32.mrf.mxu0
  %v6771 = vadd.f32 0.0, %v6770
  %6772 = vmatmul.bf16.gmra.mxu0 %v6598
  %v6773 = vpop.f32.mrf.mxu0
  %v6774 = vadd.f32 0.0, %v6773
  %v6775 = vpop.f32.mrf.mxu0
  %v6776 = vadd.f32 0.0, %v6775
  %6777 = vmatmul.bf16.gmra.mxu0 %v6600
  %v6778 = vpop.f32.mrf.mxu0
  %v6779 = vadd.f32 0.0, %v6778
  %v6780 = vpop.f32.mrf.mxu0
  %v6781 = vadd.f32 0.0, %v6780
  %6782 = vmatmul.bf16.gmra.mxu0 %v6602
  %v6783 = vpop.f32.mrf.mxu0
  %v6784 = vadd.f32 0.0, %v6783
  %v6785 = vpop.f32.mrf.mxu0
  %v6786 = vadd.f32 0.0, %v6785
  %6787 = vmatmul.bf16.gmra.mxu0 %v6604
  %v6788 = vpop.f32.mrf.mxu0
  %v6789 = vadd.f32 0.0, %v6788
  %v6790 = vpop.f32.mrf.mxu0
  %v6791 = vadd.f32 0.0, %v6790
  %6792 = vmatmul.bf16.gmra.mxu0 %v6606
  %v6793 = vpop.f32.mrf.mxu0
  %v6794 = vadd.f32 0.0, %v6793
  %v6795 = vpop.f32.mrf.mxu0
  %v6796 = vadd.f32 0.0, %v6795
  %6797 = vmatmul.bf16.gmra.mxu0 %v6608
  %v6798 = vpop.f32.mrf.mxu0
  %v6799 = vadd.f32 0.0, %v6798
  %v6800 = vpop.f32.mrf.mxu0
  %v6801 = vadd.f32 0.0, %v6800
  %6802 = vmatmul.bf16.gmra.mxu0 %v6610
  %v6803 = vpop.f32.mrf.mxu0
  %v6804 = vadd.f32 0.0, %v6803
  %v6805 = vpop.f32.mrf.mxu0
  %v6806 = vadd.f32 0.0, %v6805
  %6807 = vmatmul.bf16.gmra.mxu0 %v6612
  %v6808 = vpop.f32.mrf.mxu0
  %v6809 = vadd.f32 0.0, %v6808
  %v6810 = vpop.f32.mrf.mxu0
  %v6811 = vadd.f32 0.0, %v6810
  %6812 = vmatmul.bf16.gmra.mxu0 %v6614
  %v6813 = vpop.f32.mrf.mxu0
  %v6814 = vadd.f32 0.0, %v6813
  %v6815 = vpop.f32.mrf.mxu0
  %v6816 = vadd.f32 0.0, %v6815
  %6817 = vmatmul.bf16.gmra.mxu0 %v6616
  %v6818 = vpop.f32.mrf.mxu0
  %v6819 = vadd.f32 0.0, %v6818
  %v6820 = vpop.f32.mrf.mxu0
  %v6821 = vadd.f32 0.0, %v6820
  %6822 = vmatmul.bf16.gmra.mxu0 %v6618
  %v6823 = vpop.f32.mrf.mxu0
  %v6824 = vadd.f32 0.0, %v6823
  %v6825 = vpop.f32.mrf.mxu0
  %v6826 = vadd.f32 0.0, %v6825
  %6827 = vmatmul.bf16.gmra.mxu0 %v6620
  %v6828 = vpop.f32.mrf.mxu0
  %v6829 = vadd.f32 0.0, %v6828
  %v6830 = vpop.f32.mrf.mxu0
  %v6831 = vadd.f32 0.0, %v6830
  %6832 = vmatmul.bf16.gmra.mxu0 %v6622
  %v6833 = vpop.f32.mrf.mxu0
  %v6834 = vadd.f32 0.0, %v6833
  %v6835 = vpop.f32.mrf.mxu0
  %v6836 = vadd.f32 0.0, %v6835
  %6837 = vmatmul.bf16.gmra.mxu0 %v6624
  %v6838 = vpop.f32.mrf.mxu0
  %v6839 = vadd.f32 0.0, %v6838
  %v6840 = vpop.f32.mrf.mxu0
  %v6841 = vadd.f32 0.0, %v6840
  %6842 = vdwg.mxu0
  %6843 = vmatpush.bf16.msra.mxu0 %v6737
  %6844 = vmatpush.bf16.msra.mxu0 %v6736
  %6845 = vmatpush.bf16.msra.mxu0 %v6735
  %6846 = vmatpush.bf16.msra.mxu0 %v6734
  %6847 = vmatpush.bf16.msra.mxu0 %v6733
  %6848 = vmatpush.bf16.msra.mxu0 %v6732
  %6849 = vmatpush.bf16.msra.mxu0 %v6731
  %6850 = vmatpush.bf16.msra.mxu0 %v6730
  %6851 = vmatmul.bf16.gmra.mxu0 %v6595
  %v6852 = vpop.f32.mrf.mxu0
  %v6853 = vadd.f32 %v6764, %v6852
  %v6854 = vpop.f32.mrf.mxu0
  %v6855 = vadd.f32 %v6766, %v6854
  %6856 = vmatmul.bf16.gmra.mxu0 %v6597
  %v6857 = vpop.f32.mrf.mxu0
  %v6858 = vadd.f32 %v6769, %v6857
  %v6859 = vpop.f32.mrf.mxu0
  %v6860 = vadd.f32 %v6771, %v6859
  %6861 = vmatmul.bf16.gmra.mxu0 %v6599
  %v6862 = vpop.f32.mrf.mxu0
  %v6863 = vadd.f32 %v6774, %v6862
  %v6864 = vpop.f32.mrf.mxu0
  %v6865 = vadd.f32 %v6776, %v6864
  %6866 = vmatmul.bf16.gmra.mxu0 %v6601
  %v6867 = vpop.f32.mrf.mxu0
  %v6868 = vadd.f32 %v6779, %v6867
  %v6869 = vpop.f32.mrf.mxu0
  %v6870 = vadd.f32 %v6781, %v6869
  %6871 = vmatmul.bf16.gmra.mxu0 %v6603
  %v6872 = vpop.f32.mrf.mxu0
  %v6873 = vadd.f32 %v6784, %v6872
  %v6874 = vpop.f32.mrf.mxu0
  %v6875 = vadd.f32 %v6786, %v6874
  %6876 = vmatmul.bf16.gmra.mxu0 %v6605
  %v6877 = vpop.f32.mrf.mxu0
  %v6878 = vadd.f32 %v6789, %v6877
  %v6879 = vpop.f32.mrf.mxu0
  %v6880 = vadd.f32 %v6791, %v6879
  %6881 = vmatmul.bf16.gmra.mxu0 %v6607
  %v6882 = vpop.f32.mrf.mxu0
  %v6883 = vadd.f32 %v6794, %v6882
  %v6884 = vpop.f32.mrf.mxu0
  %v6885 = vadd.f32 %v6796, %v6884
  %6886 = vmatmul.bf16.gmra.mxu0 %v6609
  %v6887 = vpop.f32.mrf.mxu0
  %v6888 = vadd.f32 %v6799, %v6887
  %v6889 = vpop.f32.mrf.mxu0
  %v6890 = vadd.f32 %v6801, %v6889
  %6891 = vmatmul.bf16.gmra.mxu0 %v6611
  %v6892 = vpop.f32.mrf.mxu0
  %v6893 = vadd.f32 %v6804, %v6892
  %v6894 = vpop.f32.mrf.mxu0
  %v6895 = vadd.f32 %v6806, %v6894
  %6896 = vmatmul.bf16.gmra.mxu0 %v6613
  %v6897 = vpop.f32.mrf.mxu0
  %v6898 = vadd.f32 %v6809, %v6897
  %v6899 = vpop.f32.mrf.mxu0
  %v6900 = vadd.f32 %v6811, %v6899
  %6901 = vmatmul.bf16.gmra.mxu0 %v6615
  %v6902 = vpop.f32.mrf.mxu0
  %v6903 = vadd.f32 %v6814, %v6902
  %v6904 = vpop.f32.mrf.mxu0
  %v6905 = vadd.f32 %v6816, %v6904
  %6906 = vmatmul.bf16.gmra.mxu0 %v6617
  %v6907 = vpop.f32.mrf.mxu0
  %v6908 = vadd.f32 %v6819, %v6907
  %v6909 = vpop.f32.mrf.mxu0
  %v6910 = vadd.f32 %v6821, %v6909
  %6911 = vmatmul.bf16.gmra.mxu0 %v6619
  %v6912 = vpop.f32.mrf.mxu0
  %v6913 = vadd.f32 %v6824, %v6912
  %v6914 = vpop.f32.mrf.mxu0
  %v6915 = vadd.f32 %v6826, %v6914
  %6916 = vmatmul.bf16.gmra.mxu0 %v6621
  %v6917 = vpop.f32.mrf.mxu0
  %v6918 = vadd.f32 %v6829, %v6917
  %v6919 = vpop.f32.mrf.mxu0
  %v6920 = vadd.f32 %v6831, %v6919
  %6921 = vmatmul.bf16.gmra.mxu0 %v6623
  %v6922 = vpop.f32.mrf.mxu0
  %v6923 = vadd.f32 %v6834, %v6922
  %v6924 = vpop.f32.mrf.mxu0
  %v6925 = vadd.f32 %v6836, %v6924
  %6926 = vmatmul.bf16.gmra.mxu0 %v6625
  %v6927 = vpop.f32.mrf.mxu0
  %v6928 = vadd.f32 %v6839, %v6927
  %v6929 = vpop.f32.mrf.mxu0
  %v6930 = vadd.f32 %v6841, %v6929
  %6931 = vdwg.mxu0
  %v6932 = vpack.c.bf16 %v6853, %v6853
  %v6933 = vpack.c.bf16 %v6855, %v6855
  %v6934 = vpack.c.bf16 %v6858, %v6858
  %v6935 = vpack.c.bf16 %v6860, %v6860
  %v6936 = vpack.c.bf16 %v6863, %v6863
  %v6937 = vpack.c.bf16 %v6865, %v6865
  %v6938 = vpack.c.bf16 %v6868, %v6868
  %v6939 = vpack.c.bf16 %v6870, %v6870
  %v6940 = vpack.c.bf16 %v6873, %v6873
  %v6941 = vpack.c.bf16 %v6875, %v6875
  %v6942 = vpack.c.bf16 %v6878, %v6878
  %v6943 = vpack.c.bf16 %v6880, %v6880
  %v6944 = vpack.c.bf16 %v6883, %v6883
  %v6945 = vpack.c.bf16 %v6885, %v6885
  %v6946 = vpack.c.bf16 %v6888, %v6888
  %v6947 = vpack.c.bf16 %v6890, %v6890
  %v6948 = vpack.c.bf16 %v6893, %v6893
  %v6949 = vpack.c.bf16 %v6895, %v6895
  %v6950 = vpack.c.bf16 %v6898, %v6898
  %v6951 = vpack.c.bf16 %v6900, %v6900
  %v6952 = vpack.c.bf16 %v6903, %v6903
  %v6953 = vpack.c.bf16 %v6905, %v6905
  %v6954 = vpack.c.bf16 %v6908, %v6908
  %v6955 = vpack.c.bf16 %v6910, %v6910
  %v6956 = vpack.c.bf16 %v6913, %v6913
  %v6957 = vpack.c.bf16 %v6915, %v6915
  %v6958 = vpack.c.bf16 %v6918, %v6918
  %v6959 = vpack.c.bf16 %v6920, %v6920
  %v6960 = vpack.c.bf16 %v6923, %v6923
  %v6961 = vpack.c.bf16 %v6925, %v6925
  %v6962 = vpack.c.bf16 %v6928, %v6928
  %v6963 = vpack.c.bf16 %v6930, %v6930
  %v6964 = vld [vmem:[%s6] sm:$0x1]
  %v6966 = vpack.i.b16 %v6964, %v6964
  %v6968 = vperm.slane %v6966, 0
  %v6969 = vunpack.c.l.bf16 %v6932
  %v6970 = vunpack.c.l.bf16 %v6933
  %v6971 = vunpack.c.l.bf16 %v6934
  %v6972 = vunpack.c.l.bf16 %v6935
  %v6973 = vunpack.c.l.bf16 %v6936
  %v6974 = vunpack.c.l.bf16 %v6937
  %v6975 = vunpack.c.l.bf16 %v6938
  %v6976 = vunpack.c.l.bf16 %v6939
  %v6977 = vunpack.c.l.bf16 %v6940
  %v6978 = vunpack.c.l.bf16 %v6941
  %v6979 = vunpack.c.l.bf16 %v6942
  %v6980 = vunpack.c.l.bf16 %v6943
  %v6981 = vunpack.c.l.bf16 %v6944
  %v6982 = vunpack.c.l.bf16 %v6945
  %v6983 = vunpack.c.l.bf16 %v6946
  %v6984 = vunpack.c.l.bf16 %v6947
  %v6985 = vunpack.c.l.bf16 %v6948
  %v6986 = vunpack.c.l.bf16 %v6949
  %v6987 = vunpack.c.l.bf16 %v6950
  %v6988 = vunpack.c.l.bf16 %v6951
  %v6989 = vunpack.c.l.bf16 %v6952
  %v6990 = vunpack.c.l.bf16 %v6953
  %v6991 = vunpack.c.l.bf16 %v6954
  %v6992 = vunpack.c.l.bf16 %v6955
  %v6993 = vunpack.c.l.bf16 %v6956
  %v6994 = vunpack.c.l.bf16 %v6957
  %v6995 = vunpack.c.l.bf16 %v6958
  %v6996 = vunpack.c.l.bf16 %v6959
  %v6997 = vunpack.c.l.bf16 %v6960
  %v6998 = vunpack.c.l.bf16 %v6961
  %v6999 = vunpack.c.l.bf16 %v6962
  %v7000 = vunpack.c.l.bf16 %v6963
  %v7001 = vunpack.c.l.bf16 %v6968
  %v7002 = vadd.f32 %v6969, %v7001
  %v7003 = vadd.f32 %v6970, %v7001
  %v7004 = vadd.f32 %v6971, %v7001
  %v7005 = vadd.f32 %v6972, %v7001
  %v7006 = vadd.f32 %v6973, %v7001
  %v7007 = vadd.f32 %v6974, %v7001
  %v7008 = vadd.f32 %v6975, %v7001
  %v7009 = vadd.f32 %v6976, %v7001
  %v7010 = vadd.f32 %v6977, %v7001
  %v7011 = vadd.f32 %v6978, %v7001
  %v7012 = vadd.f32 %v6979, %v7001
  %v7013 = vadd.f32 %v6980, %v7001
  %v7014 = vadd.f32 %v6981, %v7001
  %v7015 = vadd.f32 %v6982, %v7001
  %v7016 = vadd.f32 %v6983, %v7001
  %v7017 = vadd.f32 %v6984, %v7001
  %v7018 = vadd.f32 %v6985, %v7001
  %v7019 = vadd.f32 %v6986, %v7001
  %v7020 = vadd.f32 %v6987, %v7001
  %v7021 = vadd.f32 %v6988, %v7001
  %v7022 = vadd.f32 %v6989, %v7001
  %v7023 = vadd.f32 %v6990, %v7001
  %v7024 = vadd.f32 %v6991, %v7001
  %v7025 = vadd.f32 %v6992, %v7001
  %v7026 = vadd.f32 %v6993, %v7001
  %v7027 = vadd.f32 %v6994, %v7001
  %v7028 = vadd.f32 %v6995, %v7001
  %v7029 = vadd.f32 %v6996, %v7001
  %v7030 = vadd.f32 %v6997, %v7001
  %v7031 = vadd.f32 %v6998, %v7001
  %v7032 = vadd.f32 %v6999, %v7001
  %v7033 = vadd.f32 %v7000, %v7001
  %v7034 = vpack.c.bf16 %v7002, %v7002
  %v7035 = vpack.c.bf16 %v7003, %v7003
  %v7036 = vpack.c.bf16 %v7004, %v7004
  %v7037 = vpack.c.bf16 %v7005, %v7005
  %v7038 = vpack.c.bf16 %v7006, %v7006
  %v7039 = vpack.c.bf16 %v7007, %v7007
  %v7040 = vpack.c.bf16 %v7008, %v7008
  %v7041 = vpack.c.bf16 %v7009, %v7009
  %v7042 = vpack.c.bf16 %v7010, %v7010
  %v7043 = vpack.c.bf16 %v7011, %v7011
  %v7044 = vpack.c.bf16 %v7012, %v7012
  %v7045 = vpack.c.bf16 %v7013, %v7013
  %v7046 = vpack.c.bf16 %v7014, %v7014
  %v7047 = vpack.c.bf16 %v7015, %v7015
  %v7048 = vpack.c.bf16 %v7016, %v7016
  %v7049 = vpack.c.bf16 %v7017, %v7017
  %v7050 = vpack.c.bf16 %v7018, %v7018
  %v7051 = vpack.c.bf16 %v7019, %v7019
  %v7052 = vpack.c.bf16 %v7020, %v7020
  %v7053 = vpack.c.bf16 %v7021, %v7021
  %v7054 = vpack.c.bf16 %v7022, %v7022
  %v7055 = vpack.c.bf16 %v7023, %v7023
  %v7056 = vpack.c.bf16 %v7024, %v7024
  %v7057 = vpack.c.bf16 %v7025, %v7025
  %v7058 = vpack.c.bf16 %v7026, %v7026
  %v7059 = vpack.c.bf16 %v7027, %v7027
  %v7060 = vpack.c.bf16 %v7028, %v7028
  %v7061 = vpack.c.bf16 %v7029, %v7029
  %v7062 = vpack.c.bf16 %v7030, %v7030
  %v7063 = vpack.c.bf16 %v7031, %v7031
  %v7064 = vpack.c.bf16 %v7032, %v7032
  %v7065 = vpack.c.bf16 %v7033, %v7033
  %v7066 = vunpack.c.l.bf16 %v7034
  %v7067 = vunpack.c.l.bf16 %v7035
  %v7068 = vunpack.c.l.bf16 %v7036
  %v7069 = vunpack.c.l.bf16 %v7037
  %v7070 = vunpack.c.l.bf16 %v7038
  %v7071 = vunpack.c.l.bf16 %v7039
  %v7072 = vunpack.c.l.bf16 %v7040
  %v7073 = vunpack.c.l.bf16 %v7041
  %v7074 = vunpack.c.l.bf16 %v7042
  %v7075 = vunpack.c.l.bf16 %v7043
  %v7076 = vunpack.c.l.bf16 %v7044
  %v7077 = vunpack.c.l.bf16 %v7045
  %v7078 = vunpack.c.l.bf16 %v7046
  %v7079 = vunpack.c.l.bf16 %v7047
  %v7080 = vunpack.c.l.bf16 %v7048
  %v7081 = vunpack.c.l.bf16 %v7049
  %v7082 = vunpack.c.l.bf16 %v7050
  %v7083 = vunpack.c.l.bf16 %v7051
  %v7084 = vunpack.c.l.bf16 %v7052
  %v7085 = vunpack.c.l.bf16 %v7053
  %v7086 = vunpack.c.l.bf16 %v7054
  %v7087 = vunpack.c.l.bf16 %v7055
  %v7088 = vunpack.c.l.bf16 %v7056
  %v7089 = vunpack.c.l.bf16 %v7057
  %v7090 = vunpack.c.l.bf16 %v7058
  %v7091 = vunpack.c.l.bf16 %v7059
  %v7092 = vunpack.c.l.bf16 %v7060
  %v7093 = vunpack.c.l.bf16 %v7061
  %v7094 = vunpack.c.l.bf16 %v7062
  %v7095 = vunpack.c.l.bf16 %v7063
  %v7096 = vunpack.c.l.bf16 %v7064
  %v7097 = vunpack.c.l.bf16 %v7065
  %v7098 = vmax.f32 %v7066, 0.0
  %v7099 = vmax.f32 %v7067, 0.0
  %v7100 = vmax.f32 %v7068, 0.0
  %v7101 = vmax.f32 %v7069, 0.0
  %v7102 = vmax.f32 %v7070, 0.0
  %v7103 = vmax.f32 %v7071, 0.0
  %v7104 = vmax.f32 %v7072, 0.0
  %v7105 = vmax.f32 %v7073, 0.0
  %v7106 = vmax.f32 %v7074, 0.0
  %v7107 = vmax.f32 %v7075, 0.0
  %v7108 = vmax.f32 %v7076, 0.0
  %v7109 = vmax.f32 %v7077, 0.0
  %v7110 = vmax.f32 %v7078, 0.0
  %v7111 = vmax.f32 %v7079, 0.0
  %v7112 = vmax.f32 %v7080, 0.0
  %v7113 = vmax.f32 %v7081, 0.0
  %v7114 = vmax.f32 %v7082, 0.0
  %v7115 = vmax.f32 %v7083, 0.0
  %v7116 = vmax.f32 %v7084, 0.0
  %v7117 = vmax.f32 %v7085, 0.0
  %v7118 = vmax.f32 %v7086, 0.0
  %v7119 = vmax.f32 %v7087, 0.0
  %v7120 = vmax.f32 %v7088, 0.0
  %v7121 = vmax.f32 %v7089, 0.0
  %v7122 = vmax.f32 %v7090, 0.0
  %v7123 = vmax.f32 %v7091, 0.0
  %v7124 = vmax.f32 %v7092, 0.0
  %v7125 = vmax.f32 %v7093, 0.0
  %v7126 = vmax.f32 %v7094, 0.0
  %v7127 = vmax.f32 %v7095, 0.0
  %v7128 = vmax.f32 %v7096, 0.0
  %v7129 = vmax.f32 %v7097, 0.0
  %v7130 = vpack.c.bf16 %v7099, %v7098
  %v7131 = vpack.c.bf16 %v7101, %v7100
  %v7132 = vpack.c.bf16 %v7103, %v7102
  %v7133 = vpack.c.bf16 %v7105, %v7104
  %v7134 = vpack.c.bf16 %v7107, %v7106
  %v7135 = vpack.c.bf16 %v7109, %v7108
  %v7136 = vpack.c.bf16 %v7111, %v7110
  %v7137 = vpack.c.bf16 %v7113, %v7112
  %v7138 = vpack.c.bf16 %v7115, %v7114
  %v7139 = vpack.c.bf16 %v7117, %v7116
  %v7140 = vpack.c.bf16 %v7119, %v7118
  %v7141 = vpack.c.bf16 %v7121, %v7120
  %v7142 = vpack.c.bf16 %v7123, %v7122
  %v7143 = vpack.c.bf16 %v7125, %v7124
  %v7144 = vpack.c.bf16 %v7127, %v7126
  %v7145 = vpack.c.bf16 %v7129, %v7128
  %v7146 = vld [vmem:[%s7] sm:$0xf]
  %v7147 = vld [vmem:[%s7 + $0x4] sm:$0xf]
  %v7148 = vld [vmem:[%s7 + $0x8] sm:$0xf]
  %v7149 = vld [vmem:[%s7 + $0xc] sm:$0xf]
  %v7150 = vld [vmem:[%s7 + $0x10] sm:$0xf]
  %v7151 = vld [vmem:[%s7 + $0x14] sm:$0xf]
  %v7152 = vld [vmem:[%s7 + $0x18] sm:$0xf]
  %v7153 = vld [vmem:[%s7 + $0x1c] sm:$0xf]
  %v7154 = vld [vmem:[%s7 + $0x20] sm:$0xf]
  %v7155 = vld [vmem:[%s7 + $0x24] sm:$0xf]
  %v7156 = vld [vmem:[%s7 + $0x28] sm:$0xf]
  %v7157 = vld [vmem:[%s7 + $0x2c] sm:$0xf]
  %v7158 = vld [vmem:[%s7 + $0x30] sm:$0xf]
  %v7159 = vld [vmem:[%s7 + $0x34] sm:$0xf]
  %v7160 = vld [vmem:[%s7 + $0x38] sm:$0xf]
  %v7161 = vld [vmem:[%s7 + $0x3c] sm:$0xf]
  %v7162 = vld [vmem:[%s8] sm:$0x1]
  %v7164 = vperm.slane %v7162, 0
  %v7182 = vunpack.c.l.b16 %v7146
  %v7183 = vunpack.c.l.b16 %v7147
  %v7184 = vunpack.c.l.b16 %v7148
  %v7185 = vunpack.c.l.b16 %v7149
  %v7186 = vunpack.c.l.b16 %v7150
  %v7187 = vunpack.c.l.b16 %v7151
  %v7188 = vunpack.c.l.b16 %v7152
  %v7189 = vunpack.c.l.b16 %v7153
  %v7190 = vunpack.c.l.b16 %v7154
  %v7191 = vunpack.c.l.b16 %v7155
  %v7192 = vunpack.c.l.b16 %v7156
  %v7193 = vunpack.c.l.b16 %v7157
  %v7194 = vunpack.c.l.b16 %v7158
  %v7195 = vunpack.c.l.b16 %v7159
  %v7196 = vunpack.c.l.b16 %v7160
  %v7197 = vunpack.c.l.b16 %v7161
  %v7198 = vpack.c.b16 %v7183, %v7182
  %v7199 = vpack.c.b16 %v7185, %v7184
  %v7200 = vpack.c.b16 %v7187, %v7186
  %v7201 = vpack.c.b16 %v7189, %v7188
  %v7202 = vpack.c.b16 %v7191, %v7190
  %v7203 = vpack.c.b16 %v7193, %v7192
  %v7204 = vpack.c.b16 %v7195, %v7194
  %v7205 = vpack.c.b16 %v7197, %v7196
  %7214 = vmatpush.bf16.msra.mxu0 %v7205
  %7215 = vmatpush.bf16.msra.mxu0 %v7204
  %7216 = vmatpush.bf16.msra.mxu0 %v7203
  %7217 = vmatpush.bf16.msra.mxu0 %v7202
  %7218 = vmatpush.bf16.msra.mxu0 %v7201
  %7219 = vmatpush.bf16.msra.mxu0 %v7200
  %7220 = vmatpush.bf16.msra.mxu0 %v7199
  %7221 = vmatpush.bf16.msra.mxu0 %v7198
  %7222 = vmatmul.bf16.gmra.mxu0 %v7130
  %v7223 = vpop.f32.mrf.mxu0
  %v7224 = vadd.f32 %v7164, %v7223
  %v7225 = vpop.f32.mrf.mxu0
  %v7226 = vadd.f32 %v7164, %v7225
  %7227 = vmatmul.bf16.gmra.mxu0 %v7131
  %v7228 = vpop.f32.mrf.mxu0
  %v7229 = vadd.f32 %v7164, %v7228
  %v7230 = vpop.f32.mrf.mxu0
  %v7231 = vadd.f32 %v7164, %v7230
  %7232 = vmatmul.bf16.gmra.mxu0 %v7132
  %v7233 = vpop.f32.mrf.mxu0
  %v7234 = vadd.f32 %v7164, %v7233
  %v7235 = vpop.f32.mrf.mxu0
  %v7236 = vadd.f32 %v7164, %v7235
  %7237 = vmatmul.bf16.gmra.mxu0 %v7133
  %v7238 = vpop.f32.mrf.mxu0
  %v7239 = vadd.f32 %v7164, %v7238
  %v7240 = vpop.f32.mrf.mxu0
  %v7241 = vadd.f32 %v7164, %v7240
  %7242 = vmatmul.bf16.gmra.mxu0 %v7134
  %v7243 = vpop.f32.mrf.mxu0
  %v7244 = vadd.f32 %v7164, %v7243
  %v7245 = vpop.f32.mrf.mxu0
  %v7246 = vadd.f32 %v7164, %v7245
  %7247 = vmatmul.bf16.gmra.mxu0 %v7135
  %v7248 = vpop.f32.mrf.mxu0
  %v7249 = vadd.f32 %v7164, %v7248
  %v7250 = vpop.f32.mrf.mxu0
  %v7251 = vadd.f32 %v7164, %v7250
  %7252 = vmatmul.bf16.gmra.mxu0 %v7136
  %v7253 = vpop.f32.mrf.mxu0
  %v7254 = vadd.f32 %v7164, %v7253
  %v7255 = vpop.f32.mrf.mxu0
  %v7256 = vadd.f32 %v7164, %v7255
  %7257 = vmatmul.bf16.gmra.mxu0 %v7137
  %v7258 = vpop.f32.mrf.mxu0
  %v7259 = vadd.f32 %v7164, %v7258
  %v7260 = vpop.f32.mrf.mxu0
  %v7261 = vadd.f32 %v7164, %v7260
  %7262 = vmatmul.bf16.gmra.mxu0 %v7138
  %v7263 = vpop.f32.mrf.mxu0
  %v7264 = vadd.f32 %v7164, %v7263
  %v7265 = vpop.f32.mrf.mxu0
  %v7266 = vadd.f32 %v7164, %v7265
  %7267 = vmatmul.bf16.gmra.mxu0 %v7139
  %v7268 = vpop.f32.mrf.mxu0
  %v7269 = vadd.f32 %v7164, %v7268
  %v7270 = vpop.f32.mrf.mxu0
  %v7271 = vadd.f32 %v7164, %v7270
  %7272 = vmatmul.bf16.gmra.mxu0 %v7140
  %v7273 = vpop.f32.mrf.mxu0
  %v7274 = vadd.f32 %v7164, %v7273
  %v7275 = vpop.f32.mrf.mxu0
  %v7276 = vadd.f32 %v7164, %v7275
  %7277 = vmatmul.bf16.gmra.mxu0 %v7141
  %v7278 = vpop.f32.mrf.mxu0
  %v7279 = vadd.f32 %v7164, %v7278
  %v7280 = vpop.f32.mrf.mxu0
  %v7281 = vadd.f32 %v7164, %v7280
  %7282 = vmatmul.bf16.gmra.mxu0 %v7142
  %v7283 = vpop.f32.mrf.mxu0
  %v7284 = vadd.f32 %v7164, %v7283
  %v7285 = vpop.f32.mrf.mxu0
  %v7286 = vadd.f32 %v7164, %v7285
  %7287 = vmatmul.bf16.gmra.mxu0 %v7143
  %v7288 = vpop.f32.mrf.mxu0
  %v7289 = vadd.f32 %v7164, %v7288
  %v7290 = vpop.f32.mrf.mxu0
  %v7291 = vadd.f32 %v7164, %v7290
  %7292 = vmatmul.bf16.gmra.mxu0 %v7144
  %v7293 = vpop.f32.mrf.mxu0
  %v7294 = vadd.f32 %v7164, %v7293
  %v7295 = vpop.f32.mrf.mxu0
  %v7296 = vadd.f32 %v7164, %v7295
  %7297 = vmatmul.bf16.gmra.mxu0 %v7145
  %v7298 = vpop.f32.mrf.mxu0
  %v7299 = vadd.f32 %v7164, %v7298
  %v7300 = vpop.f32.mrf.mxu0
  %v7301 = vadd.f32 %v7164, %v7300
  %7302 = vdwg.mxu0
  %7303 = vxpose.xlu0.b32.start [1/16] %v7224, 128
  %7304 = vxpose.xlu0.b32.cont [2/16] %v7226, 128
  %7305 = vxpose.xlu0.b32.cont [3/16] %v7229, 128
  %7306 = vxpose.xlu0.b32.cont [4/16] %v7231, 128
  %7307 = vxpose.xlu0.b32.cont [5/16] %v7234, 128
  %7308 = vxpose.xlu0.b32.cont [6/16] %v7236, 128
  %7309 = vxpose.xlu0.b32.cont [7/16] %v7239, 128
  %7310 = vxpose.xlu0.b32.cont [8/16] %v7241, 128
  %7311 = vxpose.xlu0.b32.cont [9/16] %v7244, 128
  %7312 = vxpose.xlu0.b32.cont [10/16] %v7246, 128
  %7313 = vxpose.xlu0.b32.cont [11/16] %v7249, 128
  %7314 = vxpose.xlu0.b32.cont [12/16] %v7251, 128
  %7315 = vxpose.xlu0.b32.cont [13/16] %v7254, 128
  %7316 = vxpose.xlu0.b32.cont [14/16] %v7256, 128
  %7317 = vxpose.xlu0.b32.cont [15/16] %v7259, 128
  %7318 = vxpose.xlu0.b32.end [16/16] %v7261, 128
  %v7319 = vpop.trf.xlu0
  %v7320 = vpop.trf.xlu0
  %v7321 = vpop.trf.xlu0
  %v7322 = vpop.trf.xlu0
  %v7323 = vpop.trf.xlu0
  %v7324 = vpop.trf.xlu0
  %v7325 = vpop.trf.xlu0
  %v7326 = vpop.trf.xlu0
  %v7327 = vpop.trf.xlu0
  %v7328 = vpop.trf.xlu0
  %v7329 = vpop.trf.xlu0
  %v7330 = vpop.trf.xlu0
  %v7331 = vpop.trf.xlu0
  %v7332 = vpop.trf.xlu0
  %v7333 = vpop.trf.xlu0
  %v7334 = vpop.trf.xlu0
  %7335 = vxpose.xlu0.b32.start [1/16] %v7264, 128
  %7336 = vxpose.xlu0.b32.cont [2/16] %v7266, 128
  %7337 = vxpose.xlu0.b32.cont [3/16] %v7269, 128
  %7338 = vxpose.xlu0.b32.cont [4/16] %v7271, 128
  %7339 = vxpose.xlu0.b32.cont [5/16] %v7274, 128
  %7340 = vxpose.xlu0.b32.cont [6/16] %v7276, 128
  %7341 = vxpose.xlu0.b32.cont [7/16] %v7279, 128
  %7342 = vxpose.xlu0.b32.cont [8/16] %v7281, 128
  %7343 = vxpose.xlu0.b32.cont [9/16] %v7284, 128
  %7344 = vxpose.xlu0.b32.cont [10/16] %v7286, 128
  %7345 = vxpose.xlu0.b32.cont [11/16] %v7289, 128
  %7346 = vxpose.xlu0.b32.cont [12/16] %v7291, 128
  %7347 = vxpose.xlu0.b32.cont [13/16] %v7294, 128
  %7348 = vxpose.xlu0.b32.cont [14/16] %v7296, 128
  %7349 = vxpose.xlu0.b32.cont [15/16] %v7299, 128
  %7350 = vxpose.xlu0.b32.end [16/16] %v7301, 128
  %v7351 = vpop.trf.xlu0
  %v7352 = vpop.trf.xlu0
  %v7353 = vpop.trf.xlu0
  %v7354 = vpop.trf.xlu0
  %v7355 = vpop.trf.xlu0
  %v7356 = vpop.trf.xlu0
  %v7357 = vpop.trf.xlu0
  %v7358 = vpop.trf.xlu0
  %v7359 = vpop.trf.xlu0
  %v7360 = vpop.trf.xlu0
  %v7361 = vpop.trf.xlu0
  %v7362 = vpop.trf.xlu0
  %v7363 = vpop.trf.xlu0
  %v7364 = vpop.trf.xlu0
  %v7365 = vpop.trf.xlu0
  %v7366 = vpop.trf.xlu0
  %v7368 = vrot.slane %v7351, 7
  %vm7370 = vcmask 1040384
  %v7371 = vsel %vm7370, %v7319, %v7368
  %v7372 = vsub.f32 0.0, %v7371
  %v7373 = vmul.f32 %v7372, 1.442695
  %v7374 = vpow.pop %v7373
  %v7375 = vadd.f32 %v7374, 1.0
  %v7376 = vrcp.pop %v7375
  %7377 = vst [vmem:[%s9] sm:$0x3] %v7376
  // Predicated region
  $region38: #{discriminator_forward.1} parent=0 // pred_check
    _
  $region39: #{discriminator_forward.1} parent=0 // pred_check_branch
    %7379 = sbr.rel (0) target = $region41
  $region40: #{discriminator_forward.1} parent=0 // pred_region
    _
  $region41: #{discriminator_forward.1} parent=0 // pred_fallthru
    _
  // Predicated region
  $region42: #{discriminator_forward.1} parent=0 // pred_check
    _
  $region43: #{discriminator_forward.1} parent=0 // pred_check_branch
    %7381 = sbr.rel (0) target = $region45
  $region44: #{discriminator_forward.1} parent=0 // pred_region
    _
  $region45: #{discriminator_forward.1} parent=0 // pred_fallthru
    _

</llo_original>
